<compile_context>
chip_gen: v7x
topology: tpu7x:2x2x1
jax: 0.10.0
libtpu: 0.0.40
codegen_flags: <defaults>
</compile_context>

<pallas_src>
import functools

import jax
import jax.numpy as jnp
from jax import lax
from jax.experimental import pallas as pl
from jax.experimental.pallas import tpu as pltpu

BN_EPS = 1e-5


# ----------------------------------------------------------------------------
# Fused Pallas kernel: dilated 3x3 + BN + ReLU, 3x3 + BN + ReLU, 1x1 + bias
# ----------------------------------------------------------------------------
def _block_type_c_kernel(x_ref, w1_ref, s1_ref, b1_ref,
                         w2_ref, s2_ref, b2_ref,
                         w3_ref, b3_ref,
                         o_ref,
                         y1pad_ref, *, H, W, C, Cout, dil):
    # ---- conv1: 3x3, dilation=dil, padding=dil (input window is spatially pre-padded)
    acc1 = jnp.zeros((H * W, C), jnp.float32)
    for kh in range(3):
        for kw in range(3):
            tap = x_ref[pl.ds(kh * dil, H), pl.ds(kw * dil, W), :]       # (H, W, C) f32
            tap = tap.reshape(H * W, C).astype(jnp.bfloat16)             # bf16 MXU operand
            acc1 = acc1 + jnp.dot(tap, w1_ref[kh * 3 + kw],
                                  preferred_element_type=jnp.float32)
    y1 = jnp.maximum(acc1 * s1_ref[...] + b1_ref[...], 0.0)              # f32 epilogue

    # ---- conv2: 3x3, padding=1 -- zero-pad conv1 output inside VMEM (no HBM trip)
    y1pad_ref[...] = jnp.zeros_like(y1pad_ref)
    y1pad_ref[pl.ds(1, H), pl.ds(1, W), :] = y1.reshape(H, W, C)
    acc2 = jnp.zeros((H * W, C), jnp.float32)
    for kh in range(3):
        for kw in range(3):
            tap = y1pad_ref[pl.ds(kh, H), pl.ds(kw, W), :]               # (H, W, C) f32
            tap = tap.reshape(H * W, C).astype(jnp.bfloat16)
            acc2 = acc2 + jnp.dot(tap, w2_ref[kh * 3 + kw],
                                  preferred_element_type=jnp.float32)
    y2 = jnp.maximum(acc2 * s2_ref[...] + b2_ref[...], 0.0)

    # ---- conv3: 1x1 + bias, fused into the same kernel
    out = jnp.dot(y2.astype(jnp.bfloat16), w3_ref[...],
                  preferred_element_type=jnp.float32) + b3_ref[...]
    o_ref[...] = out.reshape(H, W, Cout)


def block_type_c_forward(params, x_nchw):
    """BlockTypeC forward.  x_nchw: (N, C_in, H, W) f32  ->  (N, C_out, H, W) f32."""
    x = jnp.transpose(x_nchw, (0, 2, 3, 1)).astype(jnp.float32)          # NCHW -> NHWC
    N, H, W, C = x.shape
    dil = 5
    Cout = params["w3"].shape[-1]

    # One small spatial pad for the dilated conv (single copy of the *input* only;
    # intermediates are padded in VMEM inside the kernel).
    xp = jnp.pad(x, ((0, 0), (dil, dil), (dil, dil), (0, 0)))
    Hp, Wp = H + 2 * dil, W + 2 * dil

    kernel = functools.partial(_block_type_c_kernel,
                               H=H, W=W, C=C, Cout=Cout, dil=dil)
    out = pl.pallas_call(
        kernel,
        out_shape=jax.ShapeDtypeStruct((N, H, W, Cout), jnp.float32),
        grid=(N,),
        in_specs=[
            pl.BlockSpec((None, Hp, Wp, C), lambda n: (n, 0, 0, 0)),     # x (padded)
            pl.BlockSpec((9, C, C), lambda n: (0, 0, 0)),                # w1 (bf16)
            pl.BlockSpec((1, C), lambda n: (0, 0)),                      # s1
            pl.BlockSpec((1, C), lambda n: (0, 0)),                      # b1
            pl.BlockSpec((9, C, C), lambda n: (0, 0, 0)),                # w2 (bf16)
            pl.BlockSpec((1, C), lambda n: (0, 0)),                      # s2
            pl.BlockSpec((1, C), lambda n: (0, 0)),                      # b2
            pl.BlockSpec((C, Cout), lambda n: (0, 0)),                   # w3 (bf16)
            pl.BlockSpec((1, Cout), lambda n: (0, 0)),                   # b3
        ],
        out_specs=pl.BlockSpec((None, H, W, Cout), lambda n: (n, 0, 0, 0)),
        scratch_shapes=[pltpu.VMEM((H + 2, W + 2, C), jnp.float32)],      # padded conv1 out
        compiler_params=pltpu.CompilerParams(
            dimension_semantics=("parallel",)),
    )(xp,
      params["w1"], params["s1"], params["b1"],
      params["w2"], params["s2"], params["b2"],
      params["w3"], params["b3"])
    return jnp.transpose(out, (0, 3, 1, 2))                              # NHWC -> NCHW


# ----------------------------------------------------------------------------
# Deterministic parameter construction (PyTorch-default-style init, BN folded)
# ----------------------------------------------------------------------------
def build_params(key, in_c, out_c):
    ks = jax.random.split(key, 6)

    def uconv(k, taps, cin, cout):
        bound = 1.0 / float((cin * taps) ** 0.5)     # Conv2d default (kaiming_uniform, a=sqrt(5))
        return jax.random.uniform(k, (taps, cin, cout), jnp.float32, -bound, bound)

    def ubias(k, fan_in, cout):
        bound = 1.0 / float(fan_in ** 0.5)
        return jax.random.uniform(k, (1, cout), jnp.float32, -bound, bound)

    # eval-mode BN: gamma=1, beta=0, running_mean=0, running_var=1
    bn_scale = 1.0 / jnp.sqrt(1.0 + BN_EPS)

    w1 = uconv(ks[0], 9, in_c, in_c)
    cb1 = ubias(ks[1], 9 * in_c, in_c)
    w2 = uconv(ks[2], 9, in_c, in_c)
    cb2 = ubias(ks[3], 9 * in_c, in_c)
    w3 = uconv(ks[4], 1, in_c, out_c)[0]             # (in_c, out_c)
    cb3 = ubias(ks[5], in_c, out_c)

    return dict(
        w1=w1.astype(jnp.bfloat16),
        s1=jnp.full((1, in_c), bn_scale, jnp.float32),
        b1=(cb1 * bn_scale).astype(jnp.float32),     # conv bias folded into BN bias
        w2=w2.astype(jnp.bfloat16),
        s2=jnp.full((1, in_c), bn_scale, jnp.float32),
        b2=(cb2 * bn_scale).astype(jnp.float32),
        w3=w3.astype(jnp.bfloat16),
        b3=cb3.astype(jnp.float32),
    )


# ----------------------------------------------------------------------------
# Pure-JAX reference (same bf16 operand quantization, f32 accumulation)
# ----------------------------------------------------------------------------
def block_type_c_reference(params, x_nchw):
    x = jnp.transpose(x_nchw, (0, 2, 3, 1)).astype(jnp.float32)
    C = x.shape[-1]

    def q(a):  # bf16 quantization of MXU operands, as done in the kernel
        return a.astype(jnp.bfloat16).astype(jnp.float32)

    def conv3x3(x, w9, dil):
        w = w9.astype(jnp.float32).reshape(3, 3, C, -1)
        return lax.conv_general_dilated(
            q(x), w, window_strides=(1, 1),
            padding=[(dil, dil), (dil, dil)], rhs_dilation=(dil, dil),
            dimension_numbers=("NHWC", "HWIO", "NHWC"),
            precision=lax.Precision.HIGHEST)

    y = jnp.maximum(conv3x3(x, params["w1"], 5) * params["s1"] + params["b1"], 0.0)
    y = jnp.maximum(conv3x3(y, params["w2"], 1) * params["s2"] + params["b2"], 0.0)
    out = jnp.einsum("nhwc,cd->nhwd", q(y), params["w3"].astype(jnp.float32),
                     precision=lax.Precision.HIGHEST) + params["b3"]
    return jnp.transpose(out, (0, 3, 1, 2))


if __name__ == "__main__":
    key = jax.random.PRNGKey(0)
    pkey, xkey = jax.random.split(key)

    IN_C, OUT_C = 64, 16                 # BlockTypeC(64, 16) as used in MLSD-Large
    N, H, W = 2, 16, 16

    params = build_params(pkey, IN_C, OUT_C)
    x = jax.random.normal(xkey, (N, IN_C, H, W), jnp.float32)   # NCHW input

    fwd = jax.jit(block_type_c_forward)
    out = jax.block_until_ready(fwd(params, x))

    assert out.shape == (N, OUT_C, H, W), out.shape
    assert bool(jnp.all(jnp.isfinite(out)))

    ref = block_type_c_reference(params, x)
    max_err = float(jnp.max(jnp.abs(out - ref)))
    assert max_err < 2e-2, f"max abs error vs reference: {max_err}"

    print("KERNEL_OK")
</pallas_src>

<mosaic_0001>
module attributes {stable_mosaic.version = 11 : i64} {
  func.func @_block_type_c_kernel(%arg0: i32, %arg1: memref<1x26x26x64xf32, #tpu.memory_space<vmem>>, %arg2: memref<9x64x64xbf16, #tpu.memory_space<vmem>>, %arg3: memref<1x64xf32, #tpu.memory_space<vmem>>, %arg4: memref<1x64xf32, #tpu.memory_space<vmem>>, %arg5: memref<9x64x64xbf16, #tpu.memory_space<vmem>>, %arg6: memref<1x64xf32, #tpu.memory_space<vmem>>, %arg7: memref<1x64xf32, #tpu.memory_space<vmem>>, %arg8: memref<64x16xbf16, #tpu.memory_space<vmem>>, %arg9: memref<1x16xf32, #tpu.memory_space<vmem>>, %arg10: memref<1x16x16x16xf32, #tpu.memory_space<vmem>>, %arg11: memref<18x18x64xf32, #tpu.memory_space<vmem>>) attributes {dimension_semantics = [#tpu.dimension_semantics<parallel>], iteration_bounds = array<i64: 2>, scalar_prefetch = 0 : i64, scratch_operands = 1 : i64, tpu.core_type = #tpu.core_type<tc>, window_params = [{transform_indices = @transform_0, window_bounds = array<i64: 1, 26, 26, 64>}, {pipeline_mode = #tpu.pipeline_mode<synchronous>, transform_indices = @transform_1, window_bounds = array<i64: 9, 64, 64>}, {pipeline_mode = #tpu.pipeline_mode<synchronous>, transform_indices = @transform_2, window_bounds = array<i64: 1, 64>}, {pipeline_mode = #tpu.pipeline_mode<synchronous>, transform_indices = @transform_3, window_bounds = array<i64: 1, 64>}, {pipeline_mode = #tpu.pipeline_mode<synchronous>, transform_indices = @transform_4, window_bounds = array<i64: 9, 64, 64>}, {pipeline_mode = #tpu.pipeline_mode<synchronous>, transform_indices = @transform_5, window_bounds = array<i64: 1, 64>}, {pipeline_mode = #tpu.pipeline_mode<synchronous>, transform_indices = @transform_6, window_bounds = array<i64: 1, 64>}, {pipeline_mode = #tpu.pipeline_mode<synchronous>, transform_indices = @transform_7, window_bounds = array<i64: 64, 16>}, {pipeline_mode = #tpu.pipeline_mode<synchronous>, transform_indices = @transform_8, window_bounds = array<i64: 1, 16>}, {transform_indices = @transform_9, window_bounds = array<i64: 1, 16, 16, 16>}]} {
    %cst = arith.constant 0.000000e+00 : f32
    %0 = vector.broadcast %cst : f32 to vector<256x64xf32>
    %c0 = arith.constant 0 : index
    %c0_0 = arith.constant 0 : index
    %c0_1 = arith.constant 0 : index
    %c0_2 = arith.constant 0 : index
    %1 = vector.load %arg1[%c0, %c0_0, %c0_1, %c0_2] : memref<1x26x26x64xf32, #tpu.memory_space<vmem>>, vector<1x16x16x64xf32>
    %2 = vector.shape_cast %1 : vector<1x16x16x64xf32> to vector<16x16x64xf32>
    %3 = vector.shape_cast %2 : vector<16x16x64xf32> to vector<256x64xf32>
    %4 = arith.truncf %3 : vector<256x64xf32> to vector<256x64xbf16>
    %c0_3 = arith.constant 0 : index
    %c0_4 = arith.constant 0 : index
    %c0_5 = arith.constant 0 : index
    %5 = vector.load %arg2[%c0_3, %c0_4, %c0_5] : memref<9x64x64xbf16, #tpu.memory_space<vmem>>, vector<1x64x64xbf16>
    %6 = vector.shape_cast %5 : vector<1x64x64xbf16> to vector<64x64xbf16>
    %cst_6 = arith.constant dense<0.000000e+00> : vector<256x64xf32>
    %7 = tpu.matmul %4, %6, %cst_6 {dimension_numbers = #tpu.dot_dimension_numbers<[1], [0], [0], [1], [0, 0, 1, 1], [], []>} : vector<256x64xbf16>, vector<64x64xbf16>, vector<256x64xf32> -> vector<256x64xf32>
    %8 = arith.addf %0, %7 : vector<256x64xf32>
    %c0_7 = arith.constant 0 : index
    %c0_8 = arith.constant 0 : index
    %c5 = arith.constant 5 : index
    %c0_9 = arith.constant 0 : index
    %9 = vector.load %arg1[%c0_7, %c0_8, %c5, %c0_9] : memref<1x26x26x64xf32, #tpu.memory_space<vmem>>, vector<1x16x16x64xf32>
    %10 = vector.shape_cast %9 : vector<1x16x16x64xf32> to vector<16x16x64xf32>
    %11 = vector.shape_cast %10 : vector<16x16x64xf32> to vector<256x64xf32>
    %12 = arith.truncf %11 : vector<256x64xf32> to vector<256x64xbf16>
    %c1 = arith.constant 1 : index
    %c0_10 = arith.constant 0 : index
    %c0_11 = arith.constant 0 : index
    %13 = vector.load %arg2[%c1, %c0_10, %c0_11] : memref<9x64x64xbf16, #tpu.memory_space<vmem>>, vector<1x64x64xbf16>
    %14 = vector.shape_cast %13 : vector<1x64x64xbf16> to vector<64x64xbf16>
    %cst_12 = arith.constant dense<0.000000e+00> : vector<256x64xf32>
    %15 = tpu.matmul %12, %14, %cst_12 {dimension_numbers = #tpu.dot_dimension_numbers<[1], [0], [0], [1], [0, 0, 1, 1], [], []>} : vector<256x64xbf16>, vector<64x64xbf16>, vector<256x64xf32> -> vector<256x64xf32>
    %16 = arith.addf %8, %15 : vector<256x64xf32>
    %c0_13 = arith.constant 0 : index
    %c0_14 = arith.constant 0 : index
    %c10 = arith.constant 10 : index
    %c0_15 = arith.constant 0 : index
    %17 = vector.load %arg1[%c0_13, %c0_14, %c10, %c0_15] : memref<1x26x26x64xf32, #tpu.memory_space<vmem>>, vector<1x16x16x64xf32>
    %18 = vector.shape_cast %17 : vector<1x16x16x64xf32> to vector<16x16x64xf32>
    %19 = vector.shape_cast %18 : vector<16x16x64xf32> to vector<256x64xf32>
    %20 = arith.truncf %19 : vector<256x64xf32> to vector<256x64xbf16>
    %c2 = arith.constant 2 : index
    %c0_16 = arith.constant 0 : index
    %c0_17 = arith.constant 0 : index
    %21 = vector.load %arg2[%c2, %c0_16, %c0_17] : memref<9x64x64xbf16, #tpu.memory_space<vmem>>, vector<1x64x64xbf16>
    %22 = vector.shape_cast %21 : vector<1x64x64xbf16> to vector<64x64xbf16>
    %cst_18 = arith.constant dense<0.000000e+00> : vector<256x64xf32>
    %23 = tpu.matmul %20, %22, %cst_18 {dimension_numbers = #tpu.dot_dimension_numbers<[1], [0], [0], [1], [0, 0, 1, 1], [], []>} : vector<256x64xbf16>, vector<64x64xbf16>, vector<256x64xf32> -> vector<256x64xf32>
    %24 = arith.addf %16, %23 : vector<256x64xf32>
    %c0_19 = arith.constant 0 : index
    %c5_20 = arith.constant 5 : index
    %c0_21 = arith.constant 0 : index
    %c0_22 = arith.constant 0 : index
    %25 = vector.load %arg1[%c0_19, %c5_20, %c0_21, %c0_22] : memref<1x26x26x64xf32, #tpu.memory_space<vmem>>, vector<1x16x16x64xf32>
    %26 = vector.shape_cast %25 : vector<1x16x16x64xf32> to vector<16x16x64xf32>
    %27 = vector.shape_cast %26 : vector<16x16x64xf32> to vector<256x64xf32>
    %28 = arith.truncf %27 : vector<256x64xf32> to vector<256x64xbf16>
    %c3 = arith.constant 3 : index
    %c0_23 = arith.constant 0 : index
    %c0_24 = arith.constant 0 : index
    %29 = vector.load %arg2[%c3, %c0_23, %c0_24] : memref<9x64x64xbf16, #tpu.memory_space<vmem>>, vector<1x64x64xbf16>
    %30 = vector.shape_cast %29 : vector<1x64x64xbf16> to vector<64x64xbf16>
    %cst_25 = arith.constant dense<0.000000e+00> : vector<256x64xf32>
    %31 = tpu.matmul %28, %30, %cst_25 {dimension_numbers = #tpu.dot_dimension_numbers<[1], [0], [0], [1], [0, 0, 1, 1], [], []>} : vector<256x64xbf16>, vector<64x64xbf16>, vector<256x64xf32> -> vector<256x64xf32>
    %32 = arith.addf %24, %31 : vector<256x64xf32>
    %c0_26 = arith.constant 0 : index
    %c5_27 = arith.constant 5 : index
    %c5_28 = arith.constant 5 : index
    %c0_29 = arith.constant 0 : index
    %33 = vector.load %arg1[%c0_26, %c5_27, %c5_28, %c0_29] : memref<1x26x26x64xf32, #tpu.memory_space<vmem>>, vector<1x16x16x64xf32>
    %34 = vector.shape_cast %33 : vector<1x16x16x64xf32> to vector<16x16x64xf32>
    %35 = vector.shape_cast %34 : vector<16x16x64xf32> to vector<256x64xf32>
    %36 = arith.truncf %35 : vector<256x64xf32> to vector<256x64xbf16>
    %c4 = arith.constant 4 : index
    %c0_30 = arith.constant 0 : index
    %c0_31 = arith.constant 0 : index
    %37 = vector.load %arg2[%c4, %c0_30, %c0_31] : memref<9x64x64xbf16, #tpu.memory_space<vmem>>, vector<1x64x64xbf16>
    %38 = vector.shape_cast %37 : vector<1x64x64xbf16> to vector<64x64xbf16>
    %cst_32 = arith.constant dense<0.000000e+00> : vector<256x64xf32>
    %39 = tpu.matmul %36, %38, %cst_32 {dimension_numbers = #tpu.dot_dimension_numbers<[1], [0], [0], [1], [0, 0, 1, 1], [], []>} : vector<256x64xbf16>, vector<64x64xbf16>, vector<256x64xf32> -> vector<256x64xf32>
    %40 = arith.addf %32, %39 : vector<256x64xf32>
    %c0_33 = arith.constant 0 : index
    %c5_34 = arith.constant 5 : index
    %c10_35 = arith.constant 10 : index
    %c0_36 = arith.constant 0 : index
    %41 = vector.load %arg1[%c0_33, %c5_34, %c10_35, %c0_36] : memref<1x26x26x64xf32, #tpu.memory_space<vmem>>, vector<1x16x16x64xf32>
    %42 = vector.shape_cast %41 : vector<1x16x16x64xf32> to vector<16x16x64xf32>
    %43 = vector.shape_cast %42 : vector<16x16x64xf32> to vector<256x64xf32>
    %44 = arith.truncf %43 : vector<256x64xf32> to vector<256x64xbf16>
    %c5_37 = arith.constant 5 : index
    %c0_38 = arith.constant 0 : index
    %c0_39 = arith.constant 0 : index
    %45 = vector.load %arg2[%c5_37, %c0_38, %c0_39] : memref<9x64x64xbf16, #tpu.memory_space<vmem>>, vector<1x64x64xbf16>
    %46 = vector.shape_cast %45 : vector<1x64x64xbf16> to vector<64x64xbf16>
    %cst_40 = arith.constant dense<0.000000e+00> : vector<256x64xf32>
    %47 = tpu.matmul %44, %46, %cst_40 {dimension_numbers = #tpu.dot_dimension_numbers<[1], [0], [0], [1], [0, 0, 1, 1], [], []>} : vector<256x64xbf16>, vector<64x64xbf16>, vector<256x64xf32> -> vector<256x64xf32>
    %48 = arith.addf %40, %47 : vector<256x64xf32>
    %c0_41 = arith.constant 0 : index
    %c10_42 = arith.constant 10 : index
    %c0_43 = arith.constant 0 : index
    %c0_44 = arith.constant 0 : index
    %49 = vector.load %arg1[%c0_41, %c10_42, %c0_43, %c0_44] : memref<1x26x26x64xf32, #tpu.memory_space<vmem>>, vector<1x16x16x64xf32>
    %50 = vector.shape_cast %49 : vector<1x16x16x64xf32> to vector<16x16x64xf32>
    %51 = vector.shape_cast %50 : vector<16x16x64xf32> to vector<256x64xf32>
    %52 = arith.truncf %51 : vector<256x64xf32> to vector<256x64xbf16>
    %c6 = arith.constant 6 : index
    %c0_45 = arith.constant 0 : index
    %c0_46 = arith.constant 0 : index
    %53 = vector.load %arg2[%c6, %c0_45, %c0_46] : memref<9x64x64xbf16, #tpu.memory_space<vmem>>, vector<1x64x64xbf16>
    %54 = vector.shape_cast %53 : vector<1x64x64xbf16> to vector<64x64xbf16>
    %cst_47 = arith.constant dense<0.000000e+00> : vector<256x64xf32>
    %55 = tpu.matmul %52, %54, %cst_47 {dimension_numbers = #tpu.dot_dimension_numbers<[1], [0], [0], [1], [0, 0, 1, 1], [], []>} : vector<256x64xbf16>, vector<64x64xbf16>, vector<256x64xf32> -> vector<256x64xf32>
    %56 = arith.addf %48, %55 : vector<256x64xf32>
    %c0_48 = arith.constant 0 : index
    %c10_49 = arith.constant 10 : index
    %c5_50 = arith.constant 5 : index
    %c0_51 = arith.constant 0 : index
    %57 = vector.load %arg1[%c0_48, %c10_49, %c5_50, %c0_51] : memref<1x26x26x64xf32, #tpu.memory_space<vmem>>, vector<1x16x16x64xf32>
    %58 = vector.shape_cast %57 : vector<1x16x16x64xf32> to vector<16x16x64xf32>
    %59 = vector.shape_cast %58 : vector<16x16x64xf32> to vector<256x64xf32>
    %60 = arith.truncf %59 : vector<256x64xf32> to vector<256x64xbf16>
    %c7 = arith.constant 7 : index
    %c0_52 = arith.constant 0 : index
    %c0_53 = arith.constant 0 : index
    %61 = vector.load %arg2[%c7, %c0_52, %c0_53] : memref<9x64x64xbf16, #tpu.memory_space<vmem>>, vector<1x64x64xbf16>
    %62 = vector.shape_cast %61 : vector<1x64x64xbf16> to vector<64x64xbf16>
    %cst_54 = arith.constant dense<0.000000e+00> : vector<256x64xf32>
    %63 = tpu.matmul %60, %62, %cst_54 {dimension_numbers = #tpu.dot_dimension_numbers<[1], [0], [0], [1], [0, 0, 1, 1], [], []>} : vector<256x64xbf16>, vector<64x64xbf16>, vector<256x64xf32> -> vector<256x64xf32>
    %64 = arith.addf %56, %63 : vector<256x64xf32>
    %c0_55 = arith.constant 0 : index
    %c10_56 = arith.constant 10 : index
    %c10_57 = arith.constant 10 : index
    %c0_58 = arith.constant 0 : index
    %65 = vector.load %arg1[%c0_55, %c10_56, %c10_57, %c0_58] : memref<1x26x26x64xf32, #tpu.memory_space<vmem>>, vector<1x16x16x64xf32>
    %66 = vector.shape_cast %65 : vector<1x16x16x64xf32> to vector<16x16x64xf32>
    %67 = vector.shape_cast %66 : vector<16x16x64xf32> to vector<256x64xf32>
    %68 = arith.truncf %67 : vector<256x64xf32> to vector<256x64xbf16>
    %c8 = arith.constant 8 : index
    %c0_59 = arith.constant 0 : index
    %c0_60 = arith.constant 0 : index
    %69 = vector.load %arg2[%c8, %c0_59, %c0_60] : memref<9x64x64xbf16, #tpu.memory_space<vmem>>, vector<1x64x64xbf16>
    %70 = vector.shape_cast %69 : vector<1x64x64xbf16> to vector<64x64xbf16>
    %cst_61 = arith.constant dense<0.000000e+00> : vector<256x64xf32>
    %71 = tpu.matmul %68, %70, %cst_61 {dimension_numbers = #tpu.dot_dimension_numbers<[1], [0], [0], [1], [0, 0, 1, 1], [], []>} : vector<256x64xbf16>, vector<64x64xbf16>, vector<256x64xf32> -> vector<256x64xf32>
    %72 = arith.addf %64, %71 : vector<256x64xf32>
    %c0_62 = arith.constant 0 : index
    %c0_63 = arith.constant 0 : index
    %73 = vector.load %arg3[%c0_62, %c0_63] : memref<1x64xf32, #tpu.memory_space<vmem>>, vector<1x64xf32>
    %74 = vector.broadcast %73 : vector<1x64xf32> to vector<256x64xf32>
    %75 = arith.mulf %72, %74 : vector<256x64xf32>
    %c0_64 = arith.constant 0 : index
    %c0_65 = arith.constant 0 : index
    %76 = vector.load %arg4[%c0_64, %c0_65] : memref<1x64xf32, #tpu.memory_space<vmem>>, vector<1x64xf32>
    %77 = vector.broadcast %76 : vector<1x64xf32> to vector<256x64xf32>
    %78 = arith.addf %75, %77 : vector<256x64xf32>
    %cst_66 = arith.constant 0.000000e+00 : f32
    %79 = vector.broadcast %cst_66 : f32 to vector<256x64xf32>
    %80 = arith.maximumf %78, %79 : vector<256x64xf32>
    %cst_67 = arith.constant 0.000000e+00 : f32
    %81 = vector.broadcast %cst_67 : f32 to vector<18x18x64xf32>
    %c0_68 = arith.constant 0 : index
    %c0_69 = arith.constant 0 : index
    %c0_70 = arith.constant 0 : index
    %82 = vector.load %arg11[%c0_68, %c0_69, %c0_70] : memref<18x18x64xf32, #tpu.memory_space<vmem>>, vector<18x18x64xf32>
    tpu.vector_store %arg11[%c0_68, %c0_69, %c0_70], %81 {strides = array<i32>} : memref<18x18x64xf32, #tpu.memory_space<vmem>>, vector<18x18x64xf32>,
    %83 = vector.shape_cast %80 : vector<256x64xf32> to vector<16x16x64xf32>
    %c1_71 = arith.constant 1 : index
    %c1_72 = arith.constant 1 : index
    %c0_73 = arith.constant 0 : index
    %84 = vector.load %arg11[%c1_71, %c1_72, %c0_73] : memref<18x18x64xf32, #tpu.memory_space<vmem>>, vector<16x16x64xf32>
    tpu.vector_store %arg11[%c1_71, %c1_72, %c0_73], %83 {strides = array<i32>} : memref<18x18x64xf32, #tpu.memory_space<vmem>>, vector<16x16x64xf32>,
    %cst_74 = arith.constant 0.000000e+00 : f32
    %85 = vector.broadcast %cst_74 : f32 to vector<256x64xf32>
    %c0_75 = arith.constant 0 : index
    %c0_76 = arith.constant 0 : index
    %c0_77 = arith.constant 0 : index
    %86 = vector.load %arg11[%c0_75, %c0_76, %c0_77] : memref<18x18x64xf32, #tpu.memory_space<vmem>>, vector<16x16x64xf32>
    %87 = vector.shape_cast %86 : vector<16x16x64xf32> to vector<256x64xf32>
    %88 = arith.truncf %87 : vector<256x64xf32> to vector<256x64xbf16>
    %c0_78 = arith.constant 0 : index
    %c0_79 = arith.constant 0 : index
    %c0_80 = arith.constant 0 : index
    %89 = vector.load %arg5[%c0_78, %c0_79, %c0_80] : memref<9x64x64xbf16, #tpu.memory_space<vmem>>, vector<1x64x64xbf16>
    %90 = vector.shape_cast %89 : vector<1x64x64xbf16> to vector<64x64xbf16>
    %cst_81 = arith.constant dense<0.000000e+00> : vector<256x64xf32>
    %91 = tpu.matmul %88, %90, %cst_81 {dimension_numbers = #tpu.dot_dimension_numbers<[1], [0], [0], [1], [0, 0, 1, 1], [], []>} : vector<256x64xbf16>, vector<64x64xbf16>, vector<256x64xf32> -> vector<256x64xf32>
    %92 = arith.addf %85, %91 : vector<256x64xf32>
    %c0_82 = arith.constant 0 : index
    %c1_83 = arith.constant 1 : index
    %c0_84 = arith.constant 0 : index
    %93 = vector.load %arg11[%c0_82, %c1_83, %c0_84] : memref<18x18x64xf32, #tpu.memory_space<vmem>>, vector<16x16x64xf32>
    %94 = vector.shape_cast %93 : vector<16x16x64xf32> to vector<256x64xf32>
    %95 = arith.truncf %94 : vector<256x64xf32> to vector<256x64xbf16>
    %c1_85 = arith.constant 1 : index
    %c0_86 = arith.constant 0 : index
    %c0_87 = arith.constant 0 : index
    %96 = vector.load %arg5[%c1_85, %c0_86, %c0_87] : memref<9x64x64xbf16, #tpu.memory_space<vmem>>, vector<1x64x64xbf16>
    %97 = vector.shape_cast %96 : vector<1x64x64xbf16> to vector<64x64xbf16>
    %cst_88 = arith.constant dense<0.000000e+00> : vector<256x64xf32>
    %98 = tpu.matmul %95, %97, %cst_88 {dimension_numbers = #tpu.dot_dimension_numbers<[1], [0], [0], [1], [0, 0, 1, 1], [], []>} : vector<256x64xbf16>, vector<64x64xbf16>, vector<256x64xf32> -> vector<256x64xf32>
    %99 = arith.addf %92, %98 : vector<256x64xf32>
    %c0_89 = arith.constant 0 : index
    %c2_90 = arith.constant 2 : index
    %c0_91 = arith.constant 0 : index
    %100 = vector.load %arg11[%c0_89, %c2_90, %c0_91] : memref<18x18x64xf32, #tpu.memory_space<vmem>>, vector<16x16x64xf32>
    %101 = vector.shape_cast %100 : vector<16x16x64xf32> to vector<256x64xf32>
    %102 = arith.truncf %101 : vector<256x64xf32> to vector<256x64xbf16>
    %c2_92 = arith.constant 2 : index
    %c0_93 = arith.constant 0 : index
    %c0_94 = arith.constant 0 : index
    %103 = vector.load %arg5[%c2_92, %c0_93, %c0_94] : memref<9x64x64xbf16, #tpu.memory_space<vmem>>, vector<1x64x64xbf16>
    %104 = vector.shape_cast %103 : vector<1x64x64xbf16> to vector<64x64xbf16>
    %cst_95 = arith.constant dense<0.000000e+00> : vector<256x64xf32>
    %105 = tpu.matmul %102, %104, %cst_95 {dimension_numbers = #tpu.dot_dimension_numbers<[1], [0], [0], [1], [0, 0, 1, 1], [], []>} : vector<256x64xbf16>, vector<64x64xbf16>, vector<256x64xf32> -> vector<256x64xf32>
    %106 = arith.addf %99, %105 : vector<256x64xf32>
    %c1_96 = arith.constant 1 : index
    %c0_97 = arith.constant 0 : index
    %c0_98 = arith.constant 0 : index
    %107 = vector.load %arg11[%c1_96, %c0_97, %c0_98] : memref<18x18x64xf32, #tpu.memory_space<vmem>>, vector<16x16x64xf32>
    %108 = vector.shape_cast %107 : vector<16x16x64xf32> to vector<256x64xf32>
    %109 = arith.truncf %108 : vector<256x64xf32> to vector<256x64xbf16>
    %c3_99 = arith.constant 3 : index
    %c0_100 = arith.constant 0 : index
    %c0_101 = arith.constant 0 : index
    %110 = vector.load %arg5[%c3_99, %c0_100, %c0_101] : memref<9x64x64xbf16, #tpu.memory_space<vmem>>, vector<1x64x64xbf16>
    %111 = vector.shape_cast %110 : vector<1x64x64xbf16> to vector<64x64xbf16>
    %cst_102 = arith.constant dense<0.000000e+00> : vector<256x64xf32>
    %112 = tpu.matmul %109, %111, %cst_102 {dimension_numbers = #tpu.dot_dimension_numbers<[1], [0], [0], [1], [0, 0, 1, 1], [], []>} : vector<256x64xbf16>, vector<64x64xbf16>, vector<256x64xf32> -> vector<256x64xf32>
    %113 = arith.addf %106, %112 : vector<256x64xf32>
    %c1_103 = arith.constant 1 : index
    %c1_104 = arith.constant 1 : index
    %c0_105 = arith.constant 0 : index
    %114 = vector.load %arg11[%c1_103, %c1_104, %c0_105] : memref<18x18x64xf32, #tpu.memory_space<vmem>>, vector<16x16x64xf32>
    %115 = vector.shape_cast %114 : vector<16x16x64xf32> to vector<256x64xf32>
    %116 = arith.truncf %115 : vector<256x64xf32> to vector<256x64xbf16>
    %c4_106 = arith.constant 4 : index
    %c0_107 = arith.constant 0 : index
    %c0_108 = arith.constant 0 : index
    %117 = vector.load %arg5[%c4_106, %c0_107, %c0_108] : memref<9x64x64xbf16, #tpu.memory_space<vmem>>, vector<1x64x64xbf16>
    %118 = vector.shape_cast %117 : vector<1x64x64xbf16> to vector<64x64xbf16>
    %cst_109 = arith.constant dense<0.000000e+00> : vector<256x64xf32>
    %119 = tpu.matmul %116, %118, %cst_109 {dimension_numbers = #tpu.dot_dimension_numbers<[1], [0], [0], [1], [0, 0, 1, 1], [], []>} : vector<256x64xbf16>, vector<64x64xbf16>, vector<256x64xf32> -> vector<256x64xf32>
    %120 = arith.addf %113, %119 : vector<256x64xf32>
    %c1_110 = arith.constant 1 : index
    %c2_111 = arith.constant 2 : index
    %c0_112 = arith.constant 0 : index
    %121 = vector.load %arg11[%c1_110, %c2_111, %c0_112] : memref<18x18x64xf32, #tpu.memory_space<vmem>>, vector<16x16x64xf32>
    %122 = vector.shape_cast %121 : vector<16x16x64xf32> to vector<256x64xf32>
    %123 = arith.truncf %122 : vector<256x64xf32> to vector<256x64xbf16>
    %c5_113 = arith.constant 5 : index
    %c0_114 = arith.constant 0 : index
    %c0_115 = arith.constant 0 : index
    %124 = vector.load %arg5[%c5_113, %c0_114, %c0_115] : memref<9x64x64xbf16, #tpu.memory_space<vmem>>, vector<1x64x64xbf16>
    %125 = vector.shape_cast %124 : vector<1x64x64xbf16> to vector<64x64xbf16>
    %cst_116 = arith.constant dense<0.000000e+00> : vector<256x64xf32>
    %126 = tpu.matmul %123, %125, %cst_116 {dimension_numbers = #tpu.dot_dimension_numbers<[1], [0], [0], [1], [0, 0, 1, 1], [], []>} : vector<256x64xbf16>, vector<64x64xbf16>, vector<256x64xf32> -> vector<256x64xf32>
    %127 = arith.addf %120, %126 : vector<256x64xf32>
    %c2_117 = arith.constant 2 : index
    %c0_118 = arith.constant 0 : index
    %c0_119 = arith.constant 0 : index
    %128 = vector.load %arg11[%c2_117, %c0_118, %c0_119] : memref<18x18x64xf32, #tpu.memory_space<vmem>>, vector<16x16x64xf32>
    %129 = vector.shape_cast %128 : vector<16x16x64xf32> to vector<256x64xf32>
    %130 = arith.truncf %129 : vector<256x64xf32> to vector<256x64xbf16>
    %c6_120 = arith.constant 6 : index
    %c0_121 = arith.constant 0 : index
    %c0_122 = arith.constant 0 : index
    %131 = vector.load %arg5[%c6_120, %c0_121, %c0_122] : memref<9x64x64xbf16, #tpu.memory_space<vmem>>, vector<1x64x64xbf16>
    %132 = vector.shape_cast %131 : vector<1x64x64xbf16> to vector<64x64xbf16>
    %cst_123 = arith.constant dense<0.000000e+00> : vector<256x64xf32>
    %133 = tpu.matmul %130, %132, %cst_123 {dimension_numbers = #tpu.dot_dimension_numbers<[1], [0], [0], [1], [0, 0, 1, 1], [], []>} : vector<256x64xbf16>, vector<64x64xbf16>, vector<256x64xf32> -> vector<256x64xf32>
    %134 = arith.addf %127, %133 : vector<256x64xf32>
    %c2_124 = arith.constant 2 : index
    %c1_125 = arith.constant 1 : index
    %c0_126 = arith.constant 0 : index
    %135 = vector.load %arg11[%c2_124, %c1_125, %c0_126] : memref<18x18x64xf32, #tpu.memory_space<vmem>>, vector<16x16x64xf32>
    %136 = vector.shape_cast %135 : vector<16x16x64xf32> to vector<256x64xf32>
    %137 = arith.truncf %136 : vector<256x64xf32> to vector<256x64xbf16>
    %c7_127 = arith.constant 7 : index
    %c0_128 = arith.constant 0 : index
    %c0_129 = arith.constant 0 : index
    %138 = vector.load %arg5[%c7_127, %c0_128, %c0_129] : memref<9x64x64xbf16, #tpu.memory_space<vmem>>, vector<1x64x64xbf16>
    %139 = vector.shape_cast %138 : vector<1x64x64xbf16> to vector<64x64xbf16>
    %cst_130 = arith.constant dense<0.000000e+00> : vector<256x64xf32>
    %140 = tpu.matmul %137, %139, %cst_130 {dimension_numbers = #tpu.dot_dimension_numbers<[1], [0], [0], [1], [0, 0, 1, 1], [], []>} : vector<256x64xbf16>, vector<64x64xbf16>, vector<256x64xf32> -> vector<256x64xf32>
    %141 = arith.addf %134, %140 : vector<256x64xf32>
    %c2_131 = arith.constant 2 : index
    %c2_132 = arith.constant 2 : index
    %c0_133 = arith.constant 0 : index
    %142 = vector.load %arg11[%c2_131, %c2_132, %c0_133] : memref<18x18x64xf32, #tpu.memory_space<vmem>>, vector<16x16x64xf32>
    %143 = vector.shape_cast %142 : vector<16x16x64xf32> to vector<256x64xf32>
    %144 = arith.truncf %143 : vector<256x64xf32> to vector<256x64xbf16>
    %c8_134 = arith.constant 8 : index
    %c0_135 = arith.constant 0 : index
    %c0_136 = arith.constant 0 : index
    %145 = vector.load %arg5[%c8_134, %c0_135, %c0_136] : memref<9x64x64xbf16, #tpu.memory_space<vmem>>, vector<1x64x64xbf16>
    %146 = vector.shape_cast %145 : vector<1x64x64xbf16> to vector<64x64xbf16>
    %cst_137 = arith.constant dense<0.000000e+00> : vector<256x64xf32>
    %147 = tpu.matmul %144, %146, %cst_137 {dimension_numbers = #tpu.dot_dimension_numbers<[1], [0], [0], [1], [0, 0, 1, 1], [], []>} : vector<256x64xbf16>, vector<64x64xbf16>, vector<256x64xf32> -> vector<256x64xf32>
    %148 = arith.addf %141, %147 : vector<256x64xf32>
    %c0_138 = arith.constant 0 : index
    %c0_139 = arith.constant 0 : index
    %149 = vector.load %arg6[%c0_138, %c0_139] : memref<1x64xf32, #tpu.memory_space<vmem>>, vector<1x64xf32>
    %150 = vector.broadcast %149 : vector<1x64xf32> to vector<256x64xf32>
    %151 = arith.mulf %148, %150 : vector<256x64xf32>
    %c0_140 = arith.constant 0 : index
    %c0_141 = arith.constant 0 : index
    %152 = vector.load %arg7[%c0_140, %c0_141] : memref<1x64xf32, #tpu.memory_space<vmem>>, vector<1x64xf32>
    %153 = vector.broadcast %152 : vector<1x64xf32> to vector<256x64xf32>
    %154 = arith.addf %151, %153 : vector<256x64xf32>
    %cst_142 = arith.constant 0.000000e+00 : f32
    %155 = vector.broadcast %cst_142 : f32 to vector<256x64xf32>
    %156 = arith.maximumf %154, %155 : vector<256x64xf32>
    %157 = arith.truncf %156 : vector<256x64xf32> to vector<256x64xbf16>
    %c0_143 = arith.constant 0 : index
    %c0_144 = arith.constant 0 : index
    %158 = vector.load %arg8[%c0_143, %c0_144] : memref<64x16xbf16, #tpu.memory_space<vmem>>, vector<64x16xbf16>
    %cst_145 = arith.constant dense<0.000000e+00> : vector<256x16xf32>
    %159 = tpu.matmul %157, %158, %cst_145 {dimension_numbers = #tpu.dot_dimension_numbers<[1], [0], [0], [1], [0, 0, 1, 1], [], []>} : vector<256x64xbf16>, vector<64x16xbf16>, vector<256x16xf32> -> vector<256x16xf32>
    %c0_146 = arith.constant 0 : index
    %c0_147 = arith.constant 0 : index
    %160 = vector.load %arg9[%c0_146, %c0_147] : memref<1x16xf32, #tpu.memory_space<vmem>>, vector<1x16xf32>
    %161 = vector.broadcast %160 : vector<1x16xf32> to vector<256x16xf32>
    %162 = arith.addf %159, %161 : vector<256x16xf32>
    %163 = vector.shape_cast %162 : vector<256x16xf32> to vector<16x16x16xf32>
    %c0_148 = arith.constant 0 : index
    %c0_149 = arith.constant 0 : index
    %c0_150 = arith.constant 0 : index
    %c0_151 = arith.constant 0 : index
    %164 = vector.load %arg10[%c0_148, %c0_149, %c0_150, %c0_151] : memref<1x16x16x16xf32, #tpu.memory_space<vmem>>, vector<1x16x16x16xf32>
    %165 = vector.shape_cast %164 : vector<1x16x16x16xf32> to vector<16x16x16xf32>
    %166 = vector.shape_cast %163 : vector<16x16x16xf32> to vector<1x16x16x16xf32>
    tpu.vector_store %arg10[%c0_148, %c0_149, %c0_150, %c0_151], %166 {strides = array<i32>} : memref<1x16x16x16xf32, #tpu.memory_space<vmem>>, vector<1x16x16x16xf32>,
    return
  }
  func.func @transform_0(%arg0: i32) -> (i32, i32, i32, i32) {
    %c0_i32 = arith.constant 0 : i32
    %c0_i32_0 = arith.constant 0 : i32
    %c0_i32_1 = arith.constant 0 : i32
    %c0_i32_2 = arith.constant 0 : i32
    return %arg0, %c0_i32, %c0_i32_0, %c0_i32_1 : i32, i32, i32, i32
  }
  func.func @transform_1(%arg0: i32) -> (i32, i32, i32) {
    %c0_i32 = arith.constant 0 : i32
    %c0_i32_0 = arith.constant 0 : i32
    %c0_i32_1 = arith.constant 0 : i32
    %c0_i32_2 = arith.constant 0 : i32
    return %c0_i32, %c0_i32_0, %c0_i32_1 : i32, i32, i32
  }
  func.func @transform_2(%arg0: i32) -> (i32, i32) {
    %c0_i32 = arith.constant 0 : i32
    %c0_i32_0 = arith.constant 0 : i32
    %c0_i32_1 = arith.constant 0 : i32
    return %c0_i32, %c0_i32_0 : i32, i32
  }
  func.func @transform_3(%arg0: i32) -> (i32, i32) {
    %c0_i32 = arith.constant 0 : i32
    %c0_i32_0 = arith.constant 0 : i32
    %c0_i32_1 = arith.constant 0 : i32
    return %c0_i32, %c0_i32_0 : i32, i32
  }
  func.func @transform_4(%arg0: i32) -> (i32, i32, i32) {
    %c0_i32 = arith.constant 0 : i32
    %c0_i32_0 = arith.constant 0 : i32
    %c0_i32_1 = arith.constant 0 : i32
    %c0_i32_2 = arith.constant 0 : i32
    return %c0_i32, %c0_i32_0, %c0_i32_1 : i32, i32, i32
  }
  func.func @transform_5(%arg0: i32) -> (i32, i32) {
    %c0_i32 = arith.constant 0 : i32
    %c0_i32_0 = arith.constant 0 : i32
    %c0_i32_1 = arith.constant 0 : i32
    return %c0_i32, %c0_i32_0 : i32, i32
  }
  func.func @transform_6(%arg0: i32) -> (i32, i32) {
    %c0_i32 = arith.constant 0 : i32
    %c0_i32_0 = arith.constant 0 : i32
    %c0_i32_1 = arith.constant 0 : i32
    return %c0_i32, %c0_i32_0 : i32, i32
  }
  func.func @transform_7(%arg0: i32) -> (i32, i32) {
    %c0_i32 = arith.constant 0 : i32
    %c0_i32_0 = arith.constant 0 : i32
    %c0_i32_1 = arith.constant 0 : i32
    return %c0_i32, %c0_i32_0 : i32, i32
  }
  func.func @transform_8(%arg0: i32) -> (i32, i32) {
    %c0_i32 = arith.constant 0 : i32
    %c0_i32_0 = arith.constant 0 : i32
    %c0_i32_1 = arith.constant 0 : i32
    return %c0_i32, %c0_i32_0 : i32, i32
  }
  func.func @transform_9(%arg0: i32) -> (i32, i32, i32, i32) {
    %c0_i32 = arith.constant 0 : i32
    %c0_i32_0 = arith.constant 0 : i32
    %c0_i32_1 = arith.constant 0 : i32
    %c0_i32_2 = arith.constant 0 : i32
    return %arg0, %c0_i32, %c0_i32_0, %c0_i32_1 : i32, i32, i32, i32
  }
}

</mosaic_0001>

<llo_original>
// kernel: block_type_c_forward.1
$region0: #{block_type_c_forward.1}
  #allocation0 [shape = 'u32[]', space=smem, size = 0x4, offset = 0x4, fixed_abs, tag = 'smem constant byte address 0x4 - core index']
  #allocation1 [shape = 'u32[144,128]{1,0:T(1,128)}', space=vmem, size = 0x12000, scoped, tag = 'internal scratch']
  #allocation2 [shape = 'f32[18,18,64]{2,1,0:T(8,128)}', space=vmem, size = 0x36000, scoped, tag = 'scratch operand']
  %s0 = inlined_call_operand.vmem [shape: f32[2,26,26,64], index: 0, kind: input, shape index: {}]
  %s1 = inlined_call_operand.vmem [shape: bf16[9,64,64], index: 1, kind: input, shape index: {}]
  %s2 = inlined_call_operand.vmem [shape: f32[1,64], index: 2, kind: input, shape index: {}]
  %s3 = inlined_call_operand.vmem [shape: f32[1,64], index: 3, kind: input, shape index: {}]
  %s4 = inlined_call_operand.vmem [shape: bf16[9,64,64], index: 4, kind: input, shape index: {}]
  %s5 = inlined_call_operand.vmem [shape: f32[1,64], index: 5, kind: input, shape index: {}]
  %s6 = inlined_call_operand.vmem [shape: f32[1,64], index: 6, kind: input, shape index: {}]
  %s7 = inlined_call_operand.vmem [shape: bf16[64,16], index: 7, kind: input, shape index: {}]
  %s8 = inlined_call_operand.vmem [shape: f32[1,16], index: 8, kind: input, shape index: {}]
  %s9 = inlined_call_operand.vmem [shape: f32[2,16,16,16], index: 9, kind: output, shape index: {}]
  %s10 = sld [smem:[#allocation0]]
  $region69: #{block_type_c_forward.1} parent=0
    _
  %s12 = ssub.s32 1, %s10
  %s13 = scalar_select 0, %s12, %s10
  loop: start=0, step=1, limit=4
  $region2: #{block_type_c_forward.1} parent=0 // loop_pre_header
    _
  $region3: #{block_type_c_forward.1} parent=0 // loop_header
    %s15 = sphi 0, %s19
    %p16 = scmp.ge.s32.totalorder %s15, 4
    %s25 = sphi 0, %s27
    %s28 = sphi 0, %s25
    %s29 = sphi 0, %s28
    %s45 = sphi 0, %s29
    %s49 = sphi 0, %s49
    %s51 = sphi 0, %s49
    %s52 = sphi 0, %s51
    %s66 = sphi 0, %s52
    %s70 = sphi 0, %s70
    %s72 = sphi 0, %s70
    %s73 = sphi 0, %s72
    %s87 = sphi 0, %s73
    %s91 = sphi 0, %s91
    %s93 = sphi 0, %s91
    %s94 = sphi 0, %s93
    %s108 = sphi 0, %s94
    %s112 = sphi 0, %s112
    %s114 = sphi 0, %s112
    %s115 = sphi 0, %s114
    %s129 = sphi 0, %s115
    %s133 = sphi 0, %s133
    %s135 = sphi 0, %s133
    %s136 = sphi 0, %s135
    %s150 = sphi 0, %s136
    %s154 = sphi 0, %s154
    %s156 = sphi 0, %s154
    %s157 = sphi 0, %s156
    %s171 = sphi 0, %s157
    %s175 = sphi 0, %s175
    %s177 = sphi 0, %s175
    %s178 = sphi 0, %s177
    %s192 = sphi 0, %s178
    %s196 = sphi 0, %s196
    %s198 = sphi 0, %s196
    %s199 = sphi 0, %s198
    %s213 = sphi 0, %s199
    %s219 = sphi 0, %s221
    %s222 = sphi 0, %s219
    %s223 = sphi 0, %s222
    %s239 = sphi 0, %s223
  $region4: #{block_type_c_forward.1} parent=0 // loop_header_branch
    %18 = sbr.rel (%p16) target = $region8
  $region5: #{block_type_c_forward.1} parent=0 // loop_body
    %s20 = ssub.s32 %s15, 1
    %s21 = ssub.s32 %s15, 2
    %s22 = sadd.s32 %s15, 1
    %s23 = ssub.s32 %s15, %s22
    %p24 = scmp.eq.s32.totalorder %s23, 0
    %s26 = sadd.s32 %s25, 1
    %s27 = scalar_select %p24, %s25, %s26
    %p30 = pneg %p24
    %p31 = scmp.eq.s32.totalorder %s15, 1
    %p32 = por %p30, %p31
    %p33 = scmp.ne.s32.totalorder %s25, %s28
    %p34 = scmp.eq.s32.totalorder %s15, 0
    %p35 = por %p33, %p34
    %p36 = scmp.ne.s32.totalorder %s25, %s28
    %p37 = scmp.eq.s32.totalorder %s20, 1
    %p38 = por %p36, %p37
    %p39 = scmp.ne.s32.totalorder %s28, %s29
    %p40 = scmp.eq.s32.totalorder %s20, 0
    %p41 = por %p39, %p40
    %p42 = scmp.ne.s32.totalorder %s28, %s29
    %p43 = scmp.eq.s32.totalorder %s21, 1
    %p44 = por %p42, %p43
    %p46 = scmp.ne.s32.totalorder %s29, %s45
    %p47 = scmp.eq.s32.totalorder %s21, 0
    %p48 = por %p46, %p47
    %s50 = sadd.s32 %s49, 1
    %p53 = scmp.eq.s32.totalorder %s15, 1
    %p54 = scmp.ne.s32.totalorder %s49, %s51
    %p55 = scmp.eq.s32.totalorder %s15, 0
    %p56 = por %p54, %p55
    %p57 = scmp.ne.s32.totalorder %s49, %s51
    %p58 = scmp.eq.s32.totalorder %s20, 1
    %p59 = por %p57, %p58
    %p60 = scmp.ne.s32.totalorder %s51, %s52
    %p61 = scmp.eq.s32.totalorder %s20, 0
    %p62 = por %p60, %p61
    %p63 = scmp.ne.s32.totalorder %s51, %s52
    %p64 = scmp.eq.s32.totalorder %s21, 1
    %p65 = por %p63, %p64
    %p67 = scmp.ne.s32.totalorder %s52, %s66
    %p68 = scmp.eq.s32.totalorder %s21, 0
    %p69 = por %p67, %p68
    %s71 = sadd.s32 %s70, 1
    %p74 = scmp.eq.s32.totalorder %s15, 1
    %p75 = scmp.ne.s32.totalorder %s70, %s72
    %p76 = scmp.eq.s32.totalorder %s15, 0
    %p77 = por %p75, %p76
    %p78 = scmp.ne.s32.totalorder %s70, %s72
    %p79 = scmp.eq.s32.totalorder %s20, 1
    %p80 = por %p78, %p79
    %p81 = scmp.ne.s32.totalorder %s72, %s73
    %p82 = scmp.eq.s32.totalorder %s20, 0
    %p83 = por %p81, %p82
    %p84 = scmp.ne.s32.totalorder %s72, %s73
    %p85 = scmp.eq.s32.totalorder %s21, 1
    %p86 = por %p84, %p85
    %p88 = scmp.ne.s32.totalorder %s73, %s87
    %p89 = scmp.eq.s32.totalorder %s21, 0
    %p90 = por %p88, %p89
    %s92 = sadd.s32 %s91, 1
    %p95 = scmp.eq.s32.totalorder %s15, 1
    %p96 = scmp.ne.s32.totalorder %s91, %s93
    %p97 = scmp.eq.s32.totalorder %s15, 0
    %p98 = por %p96, %p97
    %p99 = scmp.ne.s32.totalorder %s91, %s93
    %p100 = scmp.eq.s32.totalorder %s20, 1
    %p101 = por %p99, %p100
    %p102 = scmp.ne.s32.totalorder %s93, %s94
    %p103 = scmp.eq.s32.totalorder %s20, 0
    %p104 = por %p102, %p103
    %p105 = scmp.ne.s32.totalorder %s93, %s94
    %p106 = scmp.eq.s32.totalorder %s21, 1
    %p107 = por %p105, %p106
    %p109 = scmp.ne.s32.totalorder %s94, %s108
    %p110 = scmp.eq.s32.totalorder %s21, 0
    %p111 = por %p109, %p110
    %s113 = sadd.s32 %s112, 1
    %p116 = scmp.eq.s32.totalorder %s15, 1
    %p117 = scmp.ne.s32.totalorder %s112, %s114
    %p118 = scmp.eq.s32.totalorder %s15, 0
    %p119 = por %p117, %p118
    %p120 = scmp.ne.s32.totalorder %s112, %s114
    %p121 = scmp.eq.s32.totalorder %s20, 1
    %p122 = por %p120, %p121
    %p123 = scmp.ne.s32.totalorder %s114, %s115
    %p124 = scmp.eq.s32.totalorder %s20, 0
    %p125 = por %p123, %p124
    %p126 = scmp.ne.s32.totalorder %s114, %s115
    %p127 = scmp.eq.s32.totalorder %s21, 1
    %p128 = por %p126, %p127
    %p130 = scmp.ne.s32.totalorder %s115, %s129
    %p131 = scmp.eq.s32.totalorder %s21, 0
    %p132 = por %p130, %p131
    %s134 = sadd.s32 %s133, 1
    %p137 = scmp.eq.s32.totalorder %s15, 1
    %p138 = scmp.ne.s32.totalorder %s133, %s135
    %p139 = scmp.eq.s32.totalorder %s15, 0
    %p140 = por %p138, %p139
    %p141 = scmp.ne.s32.totalorder %s133, %s135
    %p142 = scmp.eq.s32.totalorder %s20, 1
    %p143 = por %p141, %p142
    %p144 = scmp.ne.s32.totalorder %s135, %s136
    %p145 = scmp.eq.s32.totalorder %s20, 0
    %p146 = por %p144, %p145
    %p147 = scmp.ne.s32.totalorder %s135, %s136
    %p148 = scmp.eq.s32.totalorder %s21, 1
    %p149 = por %p147, %p148
    %p151 = scmp.ne.s32.totalorder %s136, %s150
    %p152 = scmp.eq.s32.totalorder %s21, 0
    %p153 = por %p151, %p152
    %s155 = sadd.s32 %s154, 1
    %p158 = scmp.eq.s32.totalorder %s15, 1
    %p159 = scmp.ne.s32.totalorder %s154, %s156
    %p160 = scmp.eq.s32.totalorder %s15, 0
    %p161 = por %p159, %p160
    %p162 = scmp.ne.s32.totalorder %s154, %s156
    %p163 = scmp.eq.s32.totalorder %s20, 1
    %p164 = por %p162, %p163
    %p165 = scmp.ne.s32.totalorder %s156, %s157
    %p166 = scmp.eq.s32.totalorder %s20, 0
    %p167 = por %p165, %p166
    %p168 = scmp.ne.s32.totalorder %s156, %s157
    %p169 = scmp.eq.s32.totalorder %s21, 1
    %p170 = por %p168, %p169
    %p172 = scmp.ne.s32.totalorder %s157, %s171
    %p173 = scmp.eq.s32.totalorder %s21, 0
    %p174 = por %p172, %p173
    %s176 = sadd.s32 %s175, 1
    %p179 = scmp.eq.s32.totalorder %s15, 1
    %p180 = scmp.ne.s32.totalorder %s175, %s177
    %p181 = scmp.eq.s32.totalorder %s15, 0
    %p182 = por %p180, %p181
    %p183 = scmp.ne.s32.totalorder %s175, %s177
    %p184 = scmp.eq.s32.totalorder %s20, 1
    %p185 = por %p183, %p184
    %p186 = scmp.ne.s32.totalorder %s177, %s178
    %p187 = scmp.eq.s32.totalorder %s20, 0
    %p188 = por %p186, %p187
    %p189 = scmp.ne.s32.totalorder %s177, %s178
    %p190 = scmp.eq.s32.totalorder %s21, 1
    %p191 = por %p189, %p190
    %p193 = scmp.ne.s32.totalorder %s178, %s192
    %p194 = scmp.eq.s32.totalorder %s21, 0
    %p195 = por %p193, %p194
    %s197 = sadd.s32 %s196, 1
    %p200 = scmp.eq.s32.totalorder %s15, 1
    %p201 = scmp.ne.s32.totalorder %s196, %s198
    %p202 = scmp.eq.s32.totalorder %s15, 0
    %p203 = por %p201, %p202
    %p204 = scmp.ne.s32.totalorder %s196, %s198
    %p205 = scmp.eq.s32.totalorder %s20, 1
    %p206 = por %p204, %p205
    %p207 = scmp.ne.s32.totalorder %s198, %s199
    %p208 = scmp.eq.s32.totalorder %s20, 0
    %p209 = por %p207, %p208
    %p210 = scmp.ne.s32.totalorder %s198, %s199
    %p211 = scmp.eq.s32.totalorder %s21, 1
    %p212 = por %p210, %p211
    %p214 = scmp.ne.s32.totalorder %s199, %s213
    %p215 = scmp.eq.s32.totalorder %s21, 0
    %p216 = por %p214, %p215
    %s217 = ssub.s32 %s15, %s22
    %p218 = scmp.eq.s32.totalorder %s217, 0
    %s220 = sadd.s32 %s219, 1
    %s221 = scalar_select %p218, %s219, %s220
    %p224 = pneg %p218
    %p225 = scmp.eq.s32.totalorder %s15, 1
    %p226 = por %p224, %p225
    %p227 = scmp.ne.s32.totalorder %s219, %s222
    %p228 = scmp.eq.s32.totalorder %s15, 0
    %p229 = por %p227, %p228
    %p230 = scmp.ne.s32.totalorder %s219, %s222
    %p231 = scmp.eq.s32.totalorder %s20, 1
    %p232 = por %p230, %p231
    %p233 = scmp.ne.s32.totalorder %s222, %s223
    %p234 = scmp.eq.s32.totalorder %s20, 0
    %p235 = por %p233, %p234
    %p236 = scmp.ne.s32.totalorder %s222, %s223
    %p237 = scmp.eq.s32.totalorder %s21, 1
    %p238 = por %p236, %p237
    %p240 = scmp.ne.s32.totalorder %s223, %s239
    %p241 = scmp.eq.s32.totalorder %s21, 0
    %p242 = por %p240, %p241
    %p243 = scmp.le.s32.totalorder 1, %s15
    %p244 = scmp.lt.s32.totalorder %s15, 3
    %p245 = pnand %p243, %p244
    %p246 = pneg %p245
    // Predicated region
    $region9: #{block_type_c_forward.1} parent=5 // pred_check
      _
    $region10: #{block_type_c_forward.1} parent=5 // pred_check_branch
      %248 = sbr.rel (%p245) target = $region12
    $region11: #{block_type_c_forward.1} parent=5 // pred_region
      %s249 = ssub.s32 %s15, 1
      // Predicated region
      $region13: #{block_type_c_forward.1} parent=11 // pred_check
        %p250 = pneg %p62
      $region14: #{block_type_c_forward.1} parent=11 // pred_check_branch
        %252 = sbr.rel (%p250) target = $region16
      $region15: #{block_type_c_forward.1} parent=11 // pred_region
        _
      $region16: #{block_type_c_forward.1} parent=11 // pred_fallthru
        _
      // Predicated region
      $region17: #{block_type_c_forward.1} parent=11 // pred_check
        %p253 = pneg %p83
      $region18: #{block_type_c_forward.1} parent=11 // pred_check_branch
        %255 = sbr.rel (%p253) target = $region20
      $region19: #{block_type_c_forward.1} parent=11 // pred_region
        _
      $region20: #{block_type_c_forward.1} parent=11 // pred_fallthru
        _
      // Predicated region
      $region21: #{block_type_c_forward.1} parent=11 // pred_check
        %p256 = pneg %p104
      $region22: #{block_type_c_forward.1} parent=11 // pred_check_branch
        %258 = sbr.rel (%p256) target = $region24
      $region23: #{block_type_c_forward.1} parent=11 // pred_region
        _
      $region24: #{block_type_c_forward.1} parent=11 // pred_fallthru
        _
      // Predicated region
      $region25: #{block_type_c_forward.1} parent=11 // pred_check
        %p259 = pneg %p125
      $region26: #{block_type_c_forward.1} parent=11 // pred_check_branch
        %261 = sbr.rel (%p259) target = $region28
      $region27: #{block_type_c_forward.1} parent=11 // pred_region
        _
      $region28: #{block_type_c_forward.1} parent=11 // pred_fallthru
        _
      // Predicated region
      $region29: #{block_type_c_forward.1} parent=11 // pred_check
        %p262 = pneg %p146
      $region30: #{block_type_c_forward.1} parent=11 // pred_check_branch
        %264 = sbr.rel (%p262) target = $region32
      $region31: #{block_type_c_forward.1} parent=11 // pred_region
        _
      $region32: #{block_type_c_forward.1} parent=11 // pred_fallthru
        _
      // Predicated region
      $region33: #{block_type_c_forward.1} parent=11 // pred_check
        %p265 = pneg %p167
      $region34: #{block_type_c_forward.1} parent=11 // pred_check_branch
        %267 = sbr.rel (%p265) target = $region36
      $region35: #{block_type_c_forward.1} parent=11 // pred_region
        _
      $region36: #{block_type_c_forward.1} parent=11 // pred_fallthru
        _
      // Predicated region
      $region37: #{block_type_c_forward.1} parent=11 // pred_check
        %p268 = pneg %p188
      $region38: #{block_type_c_forward.1} parent=11 // pred_check_branch
        %270 = sbr.rel (%p268) target = $region40
      $region39: #{block_type_c_forward.1} parent=11 // pred_region
        _
      $region40: #{block_type_c_forward.1} parent=11 // pred_fallthru
        _
      // Predicated region
      $region41: #{block_type_c_forward.1} parent=11 // pred_check
        %p271 = pneg %p209
      $region42: #{block_type_c_forward.1} parent=11 // pred_check_branch
        %273 = sbr.rel (%p271) target = $region44
      $region43: #{block_type_c_forward.1} parent=11 // pred_region
        _
      $region44: #{block_type_c_forward.1} parent=11 // pred_fallthru
        _
    $region12: #{block_type_c_forward.1} parent=5 // pred_fallthru
      _
    %p274 = scmp.lt.s32.totalorder %s15, 2
    // Predicated region
    $region45: #{block_type_c_forward.1} parent=5 // pred_check
      %p275 = pneg %p274
    $region46: #{block_type_c_forward.1} parent=5 // pred_check_branch
      %277 = sbr.rel (%p275) target = $region48
    $region47: #{block_type_c_forward.1} parent=5 // pred_region
      // Predicated region
      $region49: #{block_type_c_forward.1} parent=47 // pred_check
        %p278 = pneg %p35
      $region50: #{block_type_c_forward.1} parent=47 // pred_check_branch
        %280 = sbr.rel (%p278) target = $region52
      $region51: #{block_type_c_forward.1} parent=47 // pred_region
        %p281 = scmp.lt.s32.totalorder %s15, 1
        %s282 = scalar_select %p281, %s15, 1
        %s283 = smul.addr %s282, 104
        %s284 = smul.addr %s283, 8
        %s285 = scalar_lea.vmem %s0, %s284
      $region52: #{block_type_c_forward.1} parent=47 // pred_fallthru
        _
    $region48: #{block_type_c_forward.1} parent=5 // pred_fallthru
      _
    %p286 = scmp.le.s32.totalorder 1, %s15
    %p287 = scmp.lt.s32.totalorder %s15, 3
    %p288 = pnand %p286, %p287
    %p289 = pneg %p288
    // Predicated region
    $region53: #{block_type_c_forward.1} parent=5 // pred_check
      _
    $region54: #{block_type_c_forward.1} parent=5 // pred_check_branch
      %291 = sbr.rel (%p288) target = $region56
    $region55: #{block_type_c_forward.1} parent=5 // pred_region
      %s292 = ssub.s32 %s15, 1
      %p293 = scmp.lt.s32.totalorder %s20, 1
      %s294 = scalar_select %p293, %s20, 1
      %s295 = smul.addr %s294, 104
      %s296 = smul.addr %s295, 8
      %s297 = scalar_lea.vmem %s0, %s296
      %p298 = pneg %p41
      %p299 = pneg %p38
      %p300 = pneg %p62
      %p301 = pneg %p59
      %p302 = pneg %p83
      %p303 = pneg %p80
      %p304 = pneg %p104
      %p305 = pneg %p101
      %p306 = pneg %p125
      %p307 = pneg %p122
      %p308 = pneg %p146
      %p309 = pneg %p143
      %p310 = pneg %p167
      %p311 = pneg %p164
      %p312 = pneg %p188
      %p313 = pneg %p185
      %p314 = pneg %p209
      %p315 = pneg %p206
      %p316 = pneg %p235
      %p317 = pneg %p232
      %p318 = scmp.lt.s32.totalorder %s20, 1
      %s319 = scalar_select %p318, %s20, 1
      %s320 = smul.addr %s319, 32
      %s321 = smul.addr %s320, 8
      %s322 = scalar_lea.vmem %s9, %s321
      %p323 = scmp.lt.s32.totalorder %s20, 1
      %s324 = scalar_select %p323, %s20, 1
      %s325 = smul.addr %s324, 104
      %s326 = smul.addr %s325, 8
      %s327 = scalar_lea.vmem %s0, %s326
      %p328 = scmp.lt.s32.totalorder %s20, 1
      %s329 = scalar_select %p328, %s20, 1
      %s330 = smul.addr %s329, 32
      %s331 = smul.addr %s330, 8
      %s332 = scalar_lea.vmem %s9, %s331
      %v334 = vld [vmem:[%s327] sm:$0xff]
      %v335 = vld [vmem:[%s327 + $0x8] sm:$0xff]
      %v336 = vld [vmem:[%s327 + $0x20] sm:$0xff]
      %v337 = vld [vmem:[%s327 + $0x28] sm:$0xff]
      %v338 = vld [vmem:[%s327 + $0x40] sm:$0xff]
      %v339 = vld [vmem:[%s327 + $0x48] sm:$0xff]
      %v340 = vld [vmem:[%s327 + $0x60] sm:$0xff]
      %v341 = vld [vmem:[%s327 + $0x68] sm:$0xff]
      %v342 = vld [vmem:[%s327 + $0x80] sm:$0xff]
      %v343 = vld [vmem:[%s327 + $0x88] sm:$0xff]
      %v344 = vld [vmem:[%s327 + $0xa0] sm:$0xff]
      %v345 = vld [vmem:[%s327 + $0xa8] sm:$0xff]
      %v346 = vld [vmem:[%s327 + $0xc0] sm:$0xff]
      %v347 = vld [vmem:[%s327 + $0xc8] sm:$0xff]
      %v348 = vld [vmem:[%s327 + $0xe0] sm:$0xff]
      %v349 = vld [vmem:[%s327 + $0xe8] sm:$0xff]
      %v350 = vld [vmem:[%s327 + $0x100] sm:$0xff]
      %v351 = vld [vmem:[%s327 + $0x108] sm:$0xff]
      %v352 = vld [vmem:[%s327 + $0x120] sm:$0xff]
      %v353 = vld [vmem:[%s327 + $0x128] sm:$0xff]
      %v354 = vld [vmem:[%s327 + $0x140] sm:$0xff]
      %v355 = vld [vmem:[%s327 + $0x148] sm:$0xff]
      %v356 = vld [vmem:[%s327 + $0x160] sm:$0xff]
      %v357 = vld [vmem:[%s327 + $0x168] sm:$0xff]
      %v358 = vld [vmem:[%s327 + $0x180] sm:$0xff]
      %v359 = vld [vmem:[%s327 + $0x188] sm:$0xff]
      %v360 = vld [vmem:[%s327 + $0x1a0] sm:$0xff]
      %v361 = vld [vmem:[%s327 + $0x1a8] sm:$0xff]
      %v362 = vld [vmem:[%s327 + $0x1c0] sm:$0xff]
      %v363 = vld [vmem:[%s327 + $0x1c8] sm:$0xff]
      %v364 = vld [vmem:[%s327 + $0x1e0] sm:$0xff]
      %v365 = vld [vmem:[%s327 + $0x1e8] sm:$0xff]
      %v366 = vpack.c.bf16 %v335, %v334
      %v367 = vpack.c.bf16 %v337, %v336
      %v368 = vpack.c.bf16 %v339, %v338
      %v369 = vpack.c.bf16 %v341, %v340
      %v370 = vpack.c.bf16 %v343, %v342
      %v371 = vpack.c.bf16 %v345, %v344
      %v372 = vpack.c.bf16 %v347, %v346
      %v373 = vpack.c.bf16 %v349, %v348
      %v374 = vpack.c.bf16 %v351, %v350
      %v375 = vpack.c.bf16 %v353, %v352
      %v376 = vpack.c.bf16 %v355, %v354
      %v377 = vpack.c.bf16 %v357, %v356
      %v378 = vpack.c.bf16 %v359, %v358
      %v379 = vpack.c.bf16 %v361, %v360
      %v380 = vpack.c.bf16 %v363, %v362
      %v381 = vpack.c.bf16 %v365, %v364
      %v382 = vld [vmem:[%s1] sm:$0xf]
      %v383 = vld [vmem:[%s1 + $0x4] sm:$0xf]
      %v384 = vld [vmem:[%s1 + $0x8] sm:$0xf]
      %v385 = vld [vmem:[%s1 + $0xc] sm:$0xf]
      %v386 = vld [vmem:[%s1 + $0x10] sm:$0xf]
      %v387 = vld [vmem:[%s1 + $0x14] sm:$0xf]
      %v388 = vld [vmem:[%s1 + $0x18] sm:$0xf]
      %v389 = vld [vmem:[%s1 + $0x1c] sm:$0xf]
      %v390 = vld [vmem:[%s327 + $0x5] sm:$0xff]
      %v391 = vld [vmem:[%s327 + $0xd] sm:$0xff]
      %v392 = vld [vmem:[%s327 + $0x25] sm:$0xff]
      %v393 = vld [vmem:[%s327 + $0x2d] sm:$0xff]
      %v394 = vld [vmem:[%s327 + $0x45] sm:$0xff]
      %v395 = vld [vmem:[%s327 + $0x4d] sm:$0xff]
      %v396 = vld [vmem:[%s327 + $0x65] sm:$0xff]
      %v397 = vld [vmem:[%s327 + $0x6d] sm:$0xff]
      %v398 = vld [vmem:[%s327 + $0x85] sm:$0xff]
      %v399 = vld [vmem:[%s327 + $0x8d] sm:$0xff]
      %v400 = vld [vmem:[%s327 + $0xa5] sm:$0xff]
      %v401 = vld [vmem:[%s327 + $0xad] sm:$0xff]
      %v402 = vld [vmem:[%s327 + $0xc5] sm:$0xff]
      %v403 = vld [vmem:[%s327 + $0xcd] sm:$0xff]
      %v404 = vld [vmem:[%s327 + $0xe5] sm:$0xff]
      %v405 = vld [vmem:[%s327 + $0xed] sm:$0xff]
      %v406 = vld [vmem:[%s327 + $0x105] sm:$0xff]
      %v407 = vld [vmem:[%s327 + $0x10d] sm:$0xff]
      %v408 = vld [vmem:[%s327 + $0x125] sm:$0xff]
      %v409 = vld [vmem:[%s327 + $0x12d] sm:$0xff]
      %v410 = vld [vmem:[%s327 + $0x145] sm:$0xff]
      %v411 = vld [vmem:[%s327 + $0x14d] sm:$0xff]
      %v412 = vld [vmem:[%s327 + $0x165] sm:$0xff]
      %v413 = vld [vmem:[%s327 + $0x16d] sm:$0xff]
      %v414 = vld [vmem:[%s327 + $0x185] sm:$0xff]
      %v415 = vld [vmem:[%s327 + $0x18d] sm:$0xff]
      %v416 = vld [vmem:[%s327 + $0x1a5] sm:$0xff]
      %v417 = vld [vmem:[%s327 + $0x1ad] sm:$0xff]
      %v418 = vld [vmem:[%s327 + $0x1c5] sm:$0xff]
      %v419 = vld [vmem:[%s327 + $0x1cd] sm:$0xff]
      %v420 = vld [vmem:[%s327 + $0x1e5] sm:$0xff]
      %v421 = vld [vmem:[%s327 + $0x1ed] sm:$0xff]
      %v422 = vpack.c.bf16 %v391, %v390
      %v423 = vpack.c.bf16 %v393, %v392
      %v424 = vpack.c.bf16 %v395, %v394
      %v425 = vpack.c.bf16 %v397, %v396
      %v426 = vpack.c.bf16 %v399, %v398
      %v427 = vpack.c.bf16 %v401, %v400
      %v428 = vpack.c.bf16 %v403, %v402
      %v429 = vpack.c.bf16 %v405, %v404
      %v430 = vpack.c.bf16 %v407, %v406
      %v431 = vpack.c.bf16 %v409, %v408
      %v432 = vpack.c.bf16 %v411, %v410
      %v433 = vpack.c.bf16 %v413, %v412
      %v434 = vpack.c.bf16 %v415, %v414
      %v435 = vpack.c.bf16 %v417, %v416
      %v436 = vpack.c.bf16 %v419, %v418
      %v437 = vpack.c.bf16 %v421, %v420
      %s438 = scalar_lea.vmem %s1, 32
      %v439 = vld [vmem:[%s438] sm:$0xf]
      %v440 = vld [vmem:[%s438 + $0x4] sm:$0xf]
      %v441 = vld [vmem:[%s438 + $0x8] sm:$0xf]
      %v442 = vld [vmem:[%s438 + $0xc] sm:$0xf]
      %v443 = vld [vmem:[%s438 + $0x10] sm:$0xf]
      %v444 = vld [vmem:[%s438 + $0x14] sm:$0xf]
      %v445 = vld [vmem:[%s438 + $0x18] sm:$0xf]
      %v446 = vld [vmem:[%s438 + $0x1c] sm:$0xf]
      %v455 = vunpack.c.l.b16 %v439
      %v456 = vunpack.c.l.b16 %v440
      %v457 = vunpack.c.l.b16 %v441
      %v458 = vunpack.c.l.b16 %v442
      %v459 = vunpack.c.l.b16 %v443
      %v460 = vunpack.c.l.b16 %v444
      %v461 = vunpack.c.l.b16 %v445
      %v462 = vunpack.c.l.b16 %v446
      %v463 = vpack.c.b16 %v456, %v455
      %v464 = vpack.c.b16 %v458, %v457
      %v465 = vpack.c.b16 %v460, %v459
      %v466 = vpack.c.b16 %v462, %v461
      %vm471 = vcmask 523264
      %v473 = vsel %vm471, %v422, 0
      %v476 = vsel %vm471, %v423, 0
      %v479 = vsel %vm471, %v424, 0
      %v482 = vsel %vm471, %v425, 0
      %v485 = vsel %vm471, %v426, 0
      %v488 = vsel %vm471, %v427, 0
      %v491 = vsel %vm471, %v428, 0
      %v494 = vsel %vm471, %v429, 0
      %v497 = vsel %vm471, %v430, 0
      %v500 = vsel %vm471, %v431, 0
      %v503 = vsel %vm471, %v432, 0
      %v506 = vsel %vm471, %v433, 0
      %v509 = vsel %vm471, %v434, 0
      %v512 = vsel %vm471, %v435, 0
      %v515 = vsel %vm471, %v436, 0
      %v518 = vsel %vm471, %v437, 0
      %520 = vmatprep.subr.bf16.mxu0 0
      %521 = vmatpush1.bf16.msra.mxu0 %v463
      %522 = vmatprep.subr.bf16.mxu0 0
      %523 = vmatpush1.bf16.msra.mxu0 %v464
      %524 = vmatprep.subr.bf16.mxu0 0
      %525 = vmatpush1.bf16.msra.mxu0 %v465
      %526 = vmatprep.subr.bf16.mxu0 0
      %527 = vmatpush1.bf16.msra.mxu0 %v466
      %528 = vmatprep.subr.bf16.mxu0 0
      %529 = vmatpush1.bf16.msra.mxu0 0
      %530 = vmatprep.subr.bf16.mxu0 0
      %531 = vmatpush1.bf16.msra.mxu0 0
      %532 = vmatprep.subr.bf16.mxu0 0
      %533 = vmatpush1.bf16.msra.mxu0 0
      %534 = vmatprep.subr.bf16.mxu0 0
      %535 = vmatpush1.bf16.msra.mxu0 0
      %536 = vmatprep.subr.bf16.mxu0 0
      %537 = vmatpush1.bf16.msra.mxu0 0
      %538 = vmatprep.subr.bf16.mxu0 0
      %539 = vmatpush1.bf16.msra.mxu0 0
      %540 = vmatprep.subr.bf16.mxu0 0
      %541 = vmatpush1.bf16.msra.mxu0 0
      %542 = vmatprep.subr.bf16.mxu0 0
      %543 = vmatpush1.bf16.msra.mxu0 0
      %544 = vmatprep.subr.bf16.mxu0 0
      %545 = vmatpush1.bf16.msra.mxu0 0
      %546 = vmatprep.subr.bf16.mxu0 0
      %547 = vmatpush1.bf16.msra.mxu0 0
      %548 = vmatprep.subr.bf16.mxu0 0
      %549 = vmatpush1.bf16.msra.mxu0 0
      %550 = vmatprep.subr.bf16.mxu0 0
      %551 = vmatpush1.bf16.msra.mxu0 0
      %552 = vmatprep.mubr.bf16.mxu0 0
      %553 = vmatmul.mubr.bf16.gmra.mrb[0].mxu0 %v473
      %v554 = vpop.f32.mrb[0].mxu0
      %v555 = vadd.f32 0.0, %v554
      %v556 = vpop.f32.mrb[0].mxu0
      %v557 = vpop.f32.mrb[0].mxu0
      %v558 = vadd.f32 0.0, %v557
      %v559 = vpop.f32.mrb[0].mxu0
      %560 = vmatprep.mubr.bf16.mxu0 0
      %561 = vmatmul.mubr.bf16.gmra.mrb[0].mxu0 %v476
      %v562 = vpop.f32.mrb[0].mxu0
      %v563 = vadd.f32 0.0, %v562
      %v564 = vpop.f32.mrb[0].mxu0
      %v565 = vpop.f32.mrb[0].mxu0
      %v566 = vadd.f32 0.0, %v565
      %v567 = vpop.f32.mrb[0].mxu0
      %568 = vmatprep.mubr.bf16.mxu0 0
      %569 = vmatmul.mubr.bf16.gmra.mrb[0].mxu0 %v479
      %v570 = vpop.f32.mrb[0].mxu0
      %v571 = vadd.f32 0.0, %v570
      %v572 = vpop.f32.mrb[0].mxu0
      %v573 = vpop.f32.mrb[0].mxu0
      %v574 = vadd.f32 0.0, %v573
      %v575 = vpop.f32.mrb[0].mxu0
      %576 = vmatprep.mubr.bf16.mxu0 0
      %577 = vmatmul.mubr.bf16.gmra.mrb[0].mxu0 %v482
      %v578 = vpop.f32.mrb[0].mxu0
      %v579 = vadd.f32 0.0, %v578
      %v580 = vpop.f32.mrb[0].mxu0
      %v581 = vpop.f32.mrb[0].mxu0
      %v582 = vadd.f32 0.0, %v581
      %v583 = vpop.f32.mrb[0].mxu0
      %584 = vmatprep.mubr.bf16.mxu0 0
      %585 = vmatmul.mubr.bf16.gmra.mrb[0].mxu0 %v485
      %v586 = vpop.f32.mrb[0].mxu0
      %v587 = vadd.f32 0.0, %v586
      %v588 = vpop.f32.mrb[0].mxu0
      %v589 = vpop.f32.mrb[0].mxu0
      %v590 = vadd.f32 0.0, %v589
      %v591 = vpop.f32.mrb[0].mxu0
      %592 = vmatprep.mubr.bf16.mxu0 0
      %593 = vmatmul.mubr.bf16.gmra.mrb[0].mxu0 %v488
      %v594 = vpop.f32.mrb[0].mxu0
      %v595 = vadd.f32 0.0, %v594
      %v596 = vpop.f32.mrb[0].mxu0
      %v597 = vpop.f32.mrb[0].mxu0
      %v598 = vadd.f32 0.0, %v597
      %v599 = vpop.f32.mrb[0].mxu0
      %600 = vmatprep.mubr.bf16.mxu0 0
      %601 = vmatmul.mubr.bf16.gmra.mrb[0].mxu0 %v491
      %v602 = vpop.f32.mrb[0].mxu0
      %v603 = vadd.f32 0.0, %v602
      %v604 = vpop.f32.mrb[0].mxu0
      %v605 = vpop.f32.mrb[0].mxu0
      %v606 = vadd.f32 0.0, %v605
      %v607 = vpop.f32.mrb[0].mxu0
      %608 = vmatprep.mubr.bf16.mxu0 0
      %609 = vmatmul.mubr.bf16.gmra.mrb[0].mxu0 %v494
      %v610 = vpop.f32.mrb[0].mxu0
      %v611 = vadd.f32 0.0, %v610
      %v612 = vpop.f32.mrb[0].mxu0
      %v613 = vpop.f32.mrb[0].mxu0
      %v614 = vadd.f32 0.0, %v613
      %v615 = vpop.f32.mrb[0].mxu0
      %616 = vmatprep.mubr.bf16.mxu0 0
      %617 = vmatmul.mubr.bf16.gmra.mrb[0].mxu0 %v497
      %v618 = vpop.f32.mrb[0].mxu0
      %v619 = vadd.f32 0.0, %v618
      %v620 = vpop.f32.mrb[0].mxu0
      %v621 = vpop.f32.mrb[0].mxu0
      %v622 = vadd.f32 0.0, %v621
      %v623 = vpop.f32.mrb[0].mxu0
      %624 = vmatprep.mubr.bf16.mxu0 0
      %625 = vmatmul.mubr.bf16.gmra.mrb[0].mxu0 %v500
      %v626 = vpop.f32.mrb[0].mxu0
      %v627 = vadd.f32 0.0, %v626
      %v628 = vpop.f32.mrb[0].mxu0
      %v629 = vpop.f32.mrb[0].mxu0
      %v630 = vadd.f32 0.0, %v629
      %v631 = vpop.f32.mrb[0].mxu0
      %632 = vmatprep.mubr.bf16.mxu0 0
      %633 = vmatmul.mubr.bf16.gmra.mrb[0].mxu0 %v503
      %v634 = vpop.f32.mrb[0].mxu0
      %v635 = vadd.f32 0.0, %v634
      %v636 = vpop.f32.mrb[0].mxu0
      %v637 = vpop.f32.mrb[0].mxu0
      %v638 = vadd.f32 0.0, %v637
      %v639 = vpop.f32.mrb[0].mxu0
      %640 = vmatprep.mubr.bf16.mxu0 0
      %641 = vmatmul.mubr.bf16.gmra.mrb[0].mxu0 %v506
      %v642 = vpop.f32.mrb[0].mxu0
      %v643 = vadd.f32 0.0, %v642
      %v644 = vpop.f32.mrb[0].mxu0
      %v645 = vpop.f32.mrb[0].mxu0
      %v646 = vadd.f32 0.0, %v645
      %v647 = vpop.f32.mrb[0].mxu0
      %648 = vmatprep.mubr.bf16.mxu0 0
      %649 = vmatmul.mubr.bf16.gmra.mrb[0].mxu0 %v509
      %v650 = vpop.f32.mrb[0].mxu0
      %v651 = vadd.f32 0.0, %v650
      %v652 = vpop.f32.mrb[0].mxu0
      %v653 = vpop.f32.mrb[0].mxu0
      %v654 = vadd.f32 0.0, %v653
      %v655 = vpop.f32.mrb[0].mxu0
      %656 = vmatprep.mubr.bf16.mxu0 0
      %657 = vmatmul.mubr.bf16.gmra.mrb[0].mxu0 %v512
      %v658 = vpop.f32.mrb[0].mxu0
      %v659 = vadd.f32 0.0, %v658
      %v660 = vpop.f32.mrb[0].mxu0
      %v661 = vpop.f32.mrb[0].mxu0
      %v662 = vadd.f32 0.0, %v661
      %v663 = vpop.f32.mrb[0].mxu0
      %664 = vmatprep.mubr.bf16.mxu0 0
      %665 = vmatmul.mubr.bf16.gmra.mrb[0].mxu0 %v515
      %v666 = vpop.f32.mrb[0].mxu0
      %v667 = vadd.f32 0.0, %v666
      %v668 = vpop.f32.mrb[0].mxu0
      %v669 = vpop.f32.mrb[0].mxu0
      %v670 = vadd.f32 0.0, %v669
      %v671 = vpop.f32.mrb[0].mxu0
      %672 = vmatprep.mubr.bf16.mxu0 0
      %673 = vmatmul.mubr.bf16.gmra.mrb[0].mxu0 %v518
      %v674 = vpop.f32.mrb[0].mxu0
      %v675 = vadd.f32 0.0, %v674
      %v676 = vpop.f32.mrb[0].mxu0
      %v677 = vpop.f32.mrb[0].mxu0
      %v678 = vadd.f32 0.0, %v677
      %v679 = vpop.f32.mrb[0].mxu0
      %680 = vdwg.mxu0
      %v689 = vunpack.c.l.b16 %v382
      %v690 = vunpack.c.l.b16 %v383
      %v691 = vunpack.c.l.b16 %v384
      %v692 = vunpack.c.l.b16 %v385
      %v693 = vunpack.c.l.b16 %v386
      %v694 = vunpack.c.l.b16 %v387
      %v695 = vunpack.c.l.b16 %v388
      %v696 = vunpack.c.l.b16 %v389
      %v697 = vpack.c.b16 %v690, %v689
      %v698 = vpack.c.b16 %v692, %v691
      %v699 = vpack.c.b16 %v694, %v693
      %v700 = vpack.c.b16 %v696, %v695
      %v706 = vsel %vm471, %v366, 0
      %v709 = vsel %vm471, %v367, 0
      %v712 = vsel %vm471, %v368, 0
      %v715 = vsel %vm471, %v369, 0
      %v718 = vsel %vm471, %v370, 0
      %v721 = vsel %vm471, %v371, 0
      %v724 = vsel %vm471, %v372, 0
      %v727 = vsel %vm471, %v373, 0
      %v730 = vsel %vm471, %v374, 0
      %v733 = vsel %vm471, %v375, 0
      %v736 = vsel %vm471, %v376, 0
      %v739 = vsel %vm471, %v377, 0
      %v742 = vsel %vm471, %v378, 0
      %v745 = vsel %vm471, %v379, 0
      %v748 = vsel %vm471, %v380, 0
      %v751 = vsel %vm471, %v381, 0
      %753 = vmatprep.subr.bf16.mxu0 0
      %754 = vmatpush1.bf16.msra.mxu0 %v697
      %755 = vmatprep.subr.bf16.mxu0 0
      %756 = vmatpush1.bf16.msra.mxu0 %v698
      %757 = vmatprep.subr.bf16.mxu0 0
      %758 = vmatpush1.bf16.msra.mxu0 %v699
      %759 = vmatprep.subr.bf16.mxu0 0
      %760 = vmatpush1.bf16.msra.mxu0 %v700
      %761 = vmatprep.subr.bf16.mxu0 0
      %762 = vmatpush1.bf16.msra.mxu0 0
      %763 = vmatprep.subr.bf16.mxu0 0
      %764 = vmatpush1.bf16.msra.mxu0 0
      %765 = vmatprep.subr.bf16.mxu0 0
      %766 = vmatpush1.bf16.msra.mxu0 0
      %767 = vmatprep.subr.bf16.mxu0 0
      %768 = vmatpush1.bf16.msra.mxu0 0
      %769 = vmatprep.subr.bf16.mxu0 0
      %770 = vmatpush1.bf16.msra.mxu0 0
      %771 = vmatprep.subr.bf16.mxu0 0
      %772 = vmatpush1.bf16.msra.mxu0 0
      %773 = vmatprep.subr.bf16.mxu0 0
      %774 = vmatpush1.bf16.msra.mxu0 0
      %775 = vmatprep.subr.bf16.mxu0 0
      %776 = vmatpush1.bf16.msra.mxu0 0
      %777 = vmatprep.subr.bf16.mxu0 0
      %778 = vmatpush1.bf16.msra.mxu0 0
      %779 = vmatprep.subr.bf16.mxu0 0
      %780 = vmatpush1.bf16.msra.mxu0 0
      %781 = vmatprep.subr.bf16.mxu0 0
      %782 = vmatpush1.bf16.msra.mxu0 0
      %783 = vmatprep.subr.bf16.mxu0 0
      %784 = vmatpush1.bf16.msra.mxu0 0
      %785 = vmatprep.mubr.bf16.mxu0 0
      %786 = vmatmul.mubr.bf16.gmra.mrb[0].mxu0 %v706
      %v787 = vpop.f32.mrb[0].mxu0
      %v788 = vadd.f32 %v555, %v787
      %v789 = vpop.f32.mrb[0].mxu0
      %v790 = vpop.f32.mrb[0].mxu0
      %v791 = vadd.f32 %v558, %v790
      %v792 = vpop.f32.mrb[0].mxu0
      %793 = vmatprep.mubr.bf16.mxu0 0
      %794 = vmatmul.mubr.bf16.gmra.mrb[0].mxu0 %v709
      %v795 = vpop.f32.mrb[0].mxu0
      %v796 = vadd.f32 %v563, %v795
      %v797 = vpop.f32.mrb[0].mxu0
      %v798 = vpop.f32.mrb[0].mxu0
      %v799 = vadd.f32 %v566, %v798
      %v800 = vpop.f32.mrb[0].mxu0
      %801 = vmatprep.mubr.bf16.mxu0 0
      %802 = vmatmul.mubr.bf16.gmra.mrb[0].mxu0 %v712
      %v803 = vpop.f32.mrb[0].mxu0
      %v804 = vadd.f32 %v571, %v803
      %v805 = vpop.f32.mrb[0].mxu0
      %v806 = vpop.f32.mrb[0].mxu0
      %v807 = vadd.f32 %v574, %v806
      %v808 = vpop.f32.mrb[0].mxu0
      %809 = vmatprep.mubr.bf16.mxu0 0
      %810 = vmatmul.mubr.bf16.gmra.mrb[0].mxu0 %v715
      %v811 = vpop.f32.mrb[0].mxu0
      %v812 = vadd.f32 %v579, %v811
      %v813 = vpop.f32.mrb[0].mxu0
      %v814 = vpop.f32.mrb[0].mxu0
      %v815 = vadd.f32 %v582, %v814
      %v816 = vpop.f32.mrb[0].mxu0
      %817 = vmatprep.mubr.bf16.mxu0 0
      %818 = vmatmul.mubr.bf16.gmra.mrb[0].mxu0 %v718
      %v819 = vpop.f32.mrb[0].mxu0
      %v820 = vadd.f32 %v587, %v819
      %v821 = vpop.f32.mrb[0].mxu0
      %v822 = vpop.f32.mrb[0].mxu0
      %v823 = vadd.f32 %v590, %v822
      %v824 = vpop.f32.mrb[0].mxu0
      %825 = vmatprep.mubr.bf16.mxu0 0
      %826 = vmatmul.mubr.bf16.gmra.mrb[0].mxu0 %v721
      %v827 = vpop.f32.mrb[0].mxu0
      %v828 = vadd.f32 %v595, %v827
      %v829 = vpop.f32.mrb[0].mxu0
      %v830 = vpop.f32.mrb[0].mxu0
      %v831 = vadd.f32 %v598, %v830
      %v832 = vpop.f32.mrb[0].mxu0
      %833 = vmatprep.mubr.bf16.mxu0 0
      %834 = vmatmul.mubr.bf16.gmra.mrb[0].mxu0 %v724
      %v835 = vpop.f32.mrb[0].mxu0
      %v836 = vadd.f32 %v603, %v835
      %v837 = vpop.f32.mrb[0].mxu0
      %v838 = vpop.f32.mrb[0].mxu0
      %v839 = vadd.f32 %v606, %v838
      %v840 = vpop.f32.mrb[0].mxu0
      %841 = vmatprep.mubr.bf16.mxu0 0
      %842 = vmatmul.mubr.bf16.gmra.mrb[0].mxu0 %v727
      %v843 = vpop.f32.mrb[0].mxu0
      %v844 = vadd.f32 %v611, %v843
      %v845 = vpop.f32.mrb[0].mxu0
      %v846 = vpop.f32.mrb[0].mxu0
      %v847 = vadd.f32 %v614, %v846
      %v848 = vpop.f32.mrb[0].mxu0
      %849 = vmatprep.mubr.bf16.mxu0 0
      %850 = vmatmul.mubr.bf16.gmra.mrb[0].mxu0 %v730
      %v851 = vpop.f32.mrb[0].mxu0
      %v852 = vadd.f32 %v619, %v851
      %v853 = vpop.f32.mrb[0].mxu0
      %v854 = vpop.f32.mrb[0].mxu0
      %v855 = vadd.f32 %v622, %v854
      %v856 = vpop.f32.mrb[0].mxu0
      %857 = vmatprep.mubr.bf16.mxu0 0
      %858 = vmatmul.mubr.bf16.gmra.mrb[0].mxu0 %v733
      %v859 = vpop.f32.mrb[0].mxu0
      %v860 = vadd.f32 %v627, %v859
      %v861 = vpop.f32.mrb[0].mxu0
      %v862 = vpop.f32.mrb[0].mxu0
      %v863 = vadd.f32 %v630, %v862
      %v864 = vpop.f32.mrb[0].mxu0
      %865 = vmatprep.mubr.bf16.mxu0 0
      %866 = vmatmul.mubr.bf16.gmra.mrb[0].mxu0 %v736
      %v867 = vpop.f32.mrb[0].mxu0
      %v868 = vadd.f32 %v635, %v867
      %v869 = vpop.f32.mrb[0].mxu0
      %v870 = vpop.f32.mrb[0].mxu0
      %v871 = vadd.f32 %v638, %v870
      %v872 = vpop.f32.mrb[0].mxu0
      %873 = vmatprep.mubr.bf16.mxu0 0
      %874 = vmatmul.mubr.bf16.gmra.mrb[0].mxu0 %v739
      %v875 = vpop.f32.mrb[0].mxu0
      %v876 = vadd.f32 %v643, %v875
      %v877 = vpop.f32.mrb[0].mxu0
      %v878 = vpop.f32.mrb[0].mxu0
      %v879 = vadd.f32 %v646, %v878
      %v880 = vpop.f32.mrb[0].mxu0
      %881 = vmatprep.mubr.bf16.mxu0 0
      %882 = vmatmul.mubr.bf16.gmra.mrb[0].mxu0 %v742
      %v883 = vpop.f32.mrb[0].mxu0
      %v884 = vadd.f32 %v651, %v883
      %v885 = vpop.f32.mrb[0].mxu0
      %v886 = vpop.f32.mrb[0].mxu0
      %v887 = vadd.f32 %v654, %v886
      %v888 = vpop.f32.mrb[0].mxu0
      %889 = vmatprep.mubr.bf16.mxu0 0
      %890 = vmatmul.mubr.bf16.gmra.mrb[0].mxu0 %v745
      %v891 = vpop.f32.mrb[0].mxu0
      %v892 = vadd.f32 %v659, %v891
      %v893 = vpop.f32.mrb[0].mxu0
      %v894 = vpop.f32.mrb[0].mxu0
      %v895 = vadd.f32 %v662, %v894
      %v896 = vpop.f32.mrb[0].mxu0
      %897 = vmatprep.mubr.bf16.mxu0 0
      %898 = vmatmul.mubr.bf16.gmra.mrb[0].mxu0 %v748
      %v899 = vpop.f32.mrb[0].mxu0
      %v900 = vadd.f32 %v667, %v899
      %v901 = vpop.f32.mrb[0].mxu0
      %v902 = vpop.f32.mrb[0].mxu0
      %v903 = vadd.f32 %v670, %v902
      %v904 = vpop.f32.mrb[0].mxu0
      %905 = vmatprep.mubr.bf16.mxu0 0
      %906 = vmatmul.mubr.bf16.gmra.mrb[0].mxu0 %v751
      %v907 = vpop.f32.mrb[0].mxu0
      %v908 = vadd.f32 %v675, %v907
      %v909 = vpop.f32.mrb[0].mxu0
      %v910 = vpop.f32.mrb[0].mxu0
      %v911 = vadd.f32 %v678, %v910
      %v912 = vpop.f32.mrb[0].mxu0
      %913 = vdwg.mxu0
      %v914 = vld [vmem:[%s327 + $0xa] sm:$0xff]
      %v915 = vld [vmem:[%s327 + $0x12] sm:$0xff]
      %v916 = vld [vmem:[%s327 + $0x2a] sm:$0xff]
      %v917 = vld [vmem:[%s327 + $0x32] sm:$0xff]
      %v918 = vld [vmem:[%s327 + $0x4a] sm:$0xff]
      %v919 = vld [vmem:[%s327 + $0x52] sm:$0xff]
      %v920 = vld [vmem:[%s327 + $0x6a] sm:$0xff]
      %v921 = vld [vmem:[%s327 + $0x72] sm:$0xff]
      %v922 = vld [vmem:[%s327 + $0x8a] sm:$0xff]
      %v923 = vld [vmem:[%s327 + $0x92] sm:$0xff]
      %v924 = vld [vmem:[%s327 + $0xaa] sm:$0xff]
      %v925 = vld [vmem:[%s327 + $0xb2] sm:$0xff]
      %v926 = vld [vmem:[%s327 + $0xca] sm:$0xff]
      %v927 = vld [vmem:[%s327 + $0xd2] sm:$0xff]
      %v928 = vld [vmem:[%s327 + $0xea] sm:$0xff]
      %v929 = vld [vmem:[%s327 + $0xf2] sm:$0xff]
      %v930 = vld [vmem:[%s327 + $0x10a] sm:$0xff]
      %v931 = vld [vmem:[%s327 + $0x112] sm:$0xff]
      %v932 = vld [vmem:[%s327 + $0x12a] sm:$0xff]
      %v933 = vld [vmem:[%s327 + $0x132] sm:$0xff]
      %v934 = vld [vmem:[%s327 + $0x14a] sm:$0xff]
      %v935 = vld [vmem:[%s327 + $0x152] sm:$0xff]
      %v936 = vld [vmem:[%s327 + $0x16a] sm:$0xff]
      %v937 = vld [vmem:[%s327 + $0x172] sm:$0xff]
      %v938 = vld [vmem:[%s327 + $0x18a] sm:$0xff]
      %v939 = vld [vmem:[%s327 + $0x192] sm:$0xff]
      %v940 = vld [vmem:[%s327 + $0x1aa] sm:$0xff]
      %v941 = vld [vmem:[%s327 + $0x1b2] sm:$0xff]
      %v942 = vld [vmem:[%s327 + $0x1ca] sm:$0xff]
      %v943 = vld [vmem:[%s327 + $0x1d2] sm:$0xff]
      %v944 = vld [vmem:[%s327 + $0x1ea] sm:$0xff]
      %v945 = vld [vmem:[%s327 + $0x1f2] sm:$0xff]
      %v946 = vpack.c.bf16 %v915, %v914
      %v947 = vpack.c.bf16 %v917, %v916
      %v948 = vpack.c.bf16 %v919, %v918
      %v949 = vpack.c.bf16 %v921, %v920
      %v950 = vpack.c.bf16 %v923, %v922
      %v951 = vpack.c.bf16 %v925, %v924
      %v952 = vpack.c.bf16 %v927, %v926
      %v953 = vpack.c.bf16 %v929, %v928
      %v954 = vpack.c.bf16 %v931, %v930
      %v955 = vpack.c.bf16 %v933, %v932
      %v956 = vpack.c.bf16 %v935, %v934
      %v957 = vpack.c.bf16 %v937, %v936
      %v958 = vpack.c.bf16 %v939, %v938
      %v959 = vpack.c.bf16 %v941, %v940
      %v960 = vpack.c.bf16 %v943, %v942
      %v961 = vpack.c.bf16 %v945, %v944
      %s962 = scalar_lea.vmem %s1, 64
      %v963 = vld [vmem:[%s962] sm:$0xf]
      %v964 = vld [vmem:[%s962 + $0x4] sm:$0xf]
      %v965 = vld [vmem:[%s962 + $0x8] sm:$0xf]
      %v966 = vld [vmem:[%s962 + $0xc] sm:$0xf]
      %v967 = vld [vmem:[%s962 + $0x10] sm:$0xf]
      %v968 = vld [vmem:[%s962 + $0x14] sm:$0xf]
      %v969 = vld [vmem:[%s962 + $0x18] sm:$0xf]
      %v970 = vld [vmem:[%s962 + $0x1c] sm:$0xf]
      %v979 = vunpack.c.l.b16 %v963
      %v980 = vunpack.c.l.b16 %v964
      %v981 = vunpack.c.l.b16 %v965
      %v982 = vunpack.c.l.b16 %v966
      %v983 = vunpack.c.l.b16 %v967
      %v984 = vunpack.c.l.b16 %v968
      %v985 = vunpack.c.l.b16 %v969
      %v986 = vunpack.c.l.b16 %v970
      %v987 = vpack.c.b16 %v980, %v979
      %v988 = vpack.c.b16 %v982, %v981
      %v989 = vpack.c.b16 %v984, %v983
      %v990 = vpack.c.b16 %v986, %v985
      %v996 = vsel %vm471, %v946, 0
      %v999 = vsel %vm471, %v947, 0
      %v1002 = vsel %vm471, %v948, 0
      %v1005 = vsel %vm471, %v949, 0
      %v1008 = vsel %vm471, %v950, 0
      %v1011 = vsel %vm471, %v951, 0
      %v1014 = vsel %vm471, %v952, 0
      %v1017 = vsel %vm471, %v953, 0
      %v1020 = vsel %vm471, %v954, 0
      %v1023 = vsel %vm471, %v955, 0
      %v1026 = vsel %vm471, %v956, 0
      %v1029 = vsel %vm471, %v957, 0
      %v1032 = vsel %vm471, %v958, 0
      %v1035 = vsel %vm471, %v959, 0
      %v1038 = vsel %vm471, %v960, 0
      %v1041 = vsel %vm471, %v961, 0
      %1043 = vmatprep.subr.bf16.mxu0 0
      %1044 = vmatpush1.bf16.msra.mxu0 %v987
      %1045 = vmatprep.subr.bf16.mxu0 0
      %1046 = vmatpush1.bf16.msra.mxu0 %v988
      %1047 = vmatprep.subr.bf16.mxu0 0
      %1048 = vmatpush1.bf16.msra.mxu0 %v989
      %1049 = vmatprep.subr.bf16.mxu0 0
      %1050 = vmatpush1.bf16.msra.mxu0 %v990
      %1051 = vmatprep.subr.bf16.mxu0 0
      %1052 = vmatpush1.bf16.msra.mxu0 0
      %1053 = vmatprep.subr.bf16.mxu0 0
      %1054 = vmatpush1.bf16.msra.mxu0 0
      %1055 = vmatprep.subr.bf16.mxu0 0
      %1056 = vmatpush1.bf16.msra.mxu0 0
      %1057 = vmatprep.subr.bf16.mxu0 0
      %1058 = vmatpush1.bf16.msra.mxu0 0
      %1059 = vmatprep.subr.bf16.mxu0 0
      %1060 = vmatpush1.bf16.msra.mxu0 0
      %1061 = vmatprep.subr.bf16.mxu0 0
      %1062 = vmatpush1.bf16.msra.mxu0 0
      %1063 = vmatprep.subr.bf16.mxu0 0
      %1064 = vmatpush1.bf16.msra.mxu0 0
      %1065 = vmatprep.subr.bf16.mxu0 0
      %1066 = vmatpush1.bf16.msra.mxu0 0
      %1067 = vmatprep.subr.bf16.mxu0 0
      %1068 = vmatpush1.bf16.msra.mxu0 0
      %1069 = vmatprep.subr.bf16.mxu0 0
      %1070 = vmatpush1.bf16.msra.mxu0 0
      %1071 = vmatprep.subr.bf16.mxu0 0
      %1072 = vmatpush1.bf16.msra.mxu0 0
      %1073 = vmatprep.subr.bf16.mxu0 0
      %1074 = vmatpush1.bf16.msra.mxu0 0
      %1075 = vmatprep.mubr.bf16.mxu0 0
      %1076 = vmatmul.mubr.bf16.gmra.mrb[0].mxu0 %v996
      %v1077 = vpop.f32.mrb[0].mxu0
      %v1078 = vadd.f32 0.0, %v1077
      %v1079 = vpop.f32.mrb[0].mxu0
      %v1080 = vpop.f32.mrb[0].mxu0
      %v1081 = vadd.f32 0.0, %v1080
      %v1082 = vpop.f32.mrb[0].mxu0
      %1083 = vmatprep.mubr.bf16.mxu0 0
      %1084 = vmatmul.mubr.bf16.gmra.mrb[0].mxu0 %v999
      %v1085 = vpop.f32.mrb[0].mxu0
      %v1086 = vadd.f32 0.0, %v1085
      %v1087 = vpop.f32.mrb[0].mxu0
      %v1088 = vpop.f32.mrb[0].mxu0
      %v1089 = vadd.f32 0.0, %v1088
      %v1090 = vpop.f32.mrb[0].mxu0
      %1091 = vmatprep.mubr.bf16.mxu0 0
      %1092 = vmatmul.mubr.bf16.gmra.mrb[0].mxu0 %v1002
      %v1093 = vpop.f32.mrb[0].mxu0
      %v1094 = vadd.f32 0.0, %v1093
      %v1095 = vpop.f32.mrb[0].mxu0
      %v1096 = vpop.f32.mrb[0].mxu0
      %v1097 = vadd.f32 0.0, %v1096
      %v1098 = vpop.f32.mrb[0].mxu0
      %1099 = vmatprep.mubr.bf16.mxu0 0
      %1100 = vmatmul.mubr.bf16.gmra.mrb[0].mxu0 %v1005
      %v1101 = vpop.f32.mrb[0].mxu0
      %v1102 = vadd.f32 0.0, %v1101
      %v1103 = vpop.f32.mrb[0].mxu0
      %v1104 = vpop.f32.mrb[0].mxu0
      %v1105 = vadd.f32 0.0, %v1104
      %v1106 = vpop.f32.mrb[0].mxu0
      %1107 = vmatprep.mubr.bf16.mxu0 0
      %1108 = vmatmul.mubr.bf16.gmra.mrb[0].mxu0 %v1008
      %v1109 = vpop.f32.mrb[0].mxu0
      %v1110 = vadd.f32 0.0, %v1109
      %v1111 = vpop.f32.mrb[0].mxu0
      %v1112 = vpop.f32.mrb[0].mxu0
      %v1113 = vadd.f32 0.0, %v1112
      %v1114 = vpop.f32.mrb[0].mxu0
      %1115 = vmatprep.mubr.bf16.mxu0 0
      %1116 = vmatmul.mubr.bf16.gmra.mrb[0].mxu0 %v1011
      %v1117 = vpop.f32.mrb[0].mxu0
      %v1118 = vadd.f32 0.0, %v1117
      %v1119 = vpop.f32.mrb[0].mxu0
      %v1120 = vpop.f32.mrb[0].mxu0
      %v1121 = vadd.f32 0.0, %v1120
      %v1122 = vpop.f32.mrb[0].mxu0
      %1123 = vmatprep.mubr.bf16.mxu0 0
      %1124 = vmatmul.mubr.bf16.gmra.mrb[0].mxu0 %v1014
      %v1125 = vpop.f32.mrb[0].mxu0
      %v1126 = vadd.f32 0.0, %v1125
      %v1127 = vpop.f32.mrb[0].mxu0
      %v1128 = vpop.f32.mrb[0].mxu0
      %v1129 = vadd.f32 0.0, %v1128
      %v1130 = vpop.f32.mrb[0].mxu0
      %1131 = vmatprep.mubr.bf16.mxu0 0
      %1132 = vmatmul.mubr.bf16.gmra.mrb[0].mxu0 %v1017
      %v1133 = vpop.f32.mrb[0].mxu0
      %v1134 = vadd.f32 0.0, %v1133
      %v1135 = vpop.f32.mrb[0].mxu0
      %v1136 = vpop.f32.mrb[0].mxu0
      %v1137 = vadd.f32 0.0, %v1136
      %v1138 = vpop.f32.mrb[0].mxu0
      %1139 = vmatprep.mubr.bf16.mxu0 0
      %1140 = vmatmul.mubr.bf16.gmra.mrb[0].mxu0 %v1020
      %v1141 = vpop.f32.mrb[0].mxu0
      %v1142 = vadd.f32 0.0, %v1141
      %v1143 = vpop.f32.mrb[0].mxu0
      %v1144 = vpop.f32.mrb[0].mxu0
      %v1145 = vadd.f32 0.0, %v1144
      %v1146 = vpop.f32.mrb[0].mxu0
      %1147 = vmatprep.mubr.bf16.mxu0 0
      %1148 = vmatmul.mubr.bf16.gmra.mrb[0].mxu0 %v1023
      %v1149 = vpop.f32.mrb[0].mxu0
      %v1150 = vadd.f32 0.0, %v1149
      %v1151 = vpop.f32.mrb[0].mxu0
      %v1152 = vpop.f32.mrb[0].mxu0
      %v1153 = vadd.f32 0.0, %v1152
      %v1154 = vpop.f32.mrb[0].mxu0
      %1155 = vmatprep.mubr.bf16.mxu0 0
      %1156 = vmatmul.mubr.bf16.gmra.mrb[0].mxu0 %v1026
      %v1157 = vpop.f32.mrb[0].mxu0
      %v1158 = vadd.f32 0.0, %v1157
      %v1159 = vpop.f32.mrb[0].mxu0
      %v1160 = vpop.f32.mrb[0].mxu0
      %v1161 = vadd.f32 0.0, %v1160
      %v1162 = vpop.f32.mrb[0].mxu0
      %1163 = vmatprep.mubr.bf16.mxu0 0
      %1164 = vmatmul.mubr.bf16.gmra.mrb[0].mxu0 %v1029
      %v1165 = vpop.f32.mrb[0].mxu0
      %v1166 = vadd.f32 0.0, %v1165
      %v1167 = vpop.f32.mrb[0].mxu0
      %v1168 = vpop.f32.mrb[0].mxu0
      %v1169 = vadd.f32 0.0, %v1168
      %v1170 = vpop.f32.mrb[0].mxu0
      %1171 = vmatprep.mubr.bf16.mxu0 0
      %1172 = vmatmul.mubr.bf16.gmra.mrb[0].mxu0 %v1032
      %v1173 = vpop.f32.mrb[0].mxu0
      %v1174 = vadd.f32 0.0, %v1173
      %v1175 = vpop.f32.mrb[0].mxu0
      %v1176 = vpop.f32.mrb[0].mxu0
      %v1177 = vadd.f32 0.0, %v1176
      %v1178 = vpop.f32.mrb[0].mxu0
      %1179 = vmatprep.mubr.bf16.mxu0 0
      %1180 = vmatmul.mubr.bf16.gmra.mrb[0].mxu0 %v1035
      %v1181 = vpop.f32.mrb[0].mxu0
      %v1182 = vadd.f32 0.0, %v1181
      %v1183 = vpop.f32.mrb[0].mxu0
      %v1184 = vpop.f32.mrb[0].mxu0
      %v1185 = vadd.f32 0.0, %v1184
      %v1186 = vpop.f32.mrb[0].mxu0
      %1187 = vmatprep.mubr.bf16.mxu0 0
      %1188 = vmatmul.mubr.bf16.gmra.mrb[0].mxu0 %v1038
      %v1189 = vpop.f32.mrb[0].mxu0
      %v1190 = vadd.f32 0.0, %v1189
      %v1191 = vpop.f32.mrb[0].mxu0
      %v1192 = vpop.f32.mrb[0].mxu0
      %v1193 = vadd.f32 0.0, %v1192
      %v1194 = vpop.f32.mrb[0].mxu0
      %1195 = vmatprep.mubr.bf16.mxu0 0
      %1196 = vmatmul.mubr.bf16.gmra.mrb[0].mxu0 %v1041
      %v1197 = vpop.f32.mrb[0].mxu0
      %v1198 = vadd.f32 0.0, %v1197
      %v1199 = vpop.f32.mrb[0].mxu0
      %v1200 = vpop.f32.mrb[0].mxu0
      %v1201 = vadd.f32 0.0, %v1200
      %v1202 = vpop.f32.mrb[0].mxu0
      %1203 = vdwg.mxu0
      %v1204 = vadd.f32 %v788, %v1078
      %v1205 = vadd.f32 %v791, %v1081
      %v1206 = vadd.f32 %v796, %v1086
      %v1207 = vadd.f32 %v799, %v1089
      %v1208 = vadd.f32 %v804, %v1094
      %v1209 = vadd.f32 %v807, %v1097
      %v1210 = vadd.f32 %v812, %v1102
      %v1211 = vadd.f32 %v815, %v1105
      %v1212 = vadd.f32 %v820, %v1110
      %v1213 = vadd.f32 %v823, %v1113
      %v1214 = vadd.f32 %v828, %v1118
      %v1215 = vadd.f32 %v831, %v1121
      %v1216 = vadd.f32 %v836, %v1126
      %v1217 = vadd.f32 %v839, %v1129
      %v1218 = vadd.f32 %v844, %v1134
      %v1219 = vadd.f32 %v847, %v1137
      %v1220 = vadd.f32 %v852, %v1142
      %v1221 = vadd.f32 %v855, %v1145
      %v1222 = vadd.f32 %v860, %v1150
      %v1223 = vadd.f32 %v863, %v1153
      %v1224 = vadd.f32 %v868, %v1158
      %v1225 = vadd.f32 %v871, %v1161
      %v1226 = vadd.f32 %v876, %v1166
      %v1227 = vadd.f32 %v879, %v1169
      %v1228 = vadd.f32 %v884, %v1174
      %v1229 = vadd.f32 %v887, %v1177
      %v1230 = vadd.f32 %v892, %v1182
      %v1231 = vadd.f32 %v895, %v1185
      %v1232 = vadd.f32 %v900, %v1190
      %v1233 = vadd.f32 %v903, %v1193
      %v1234 = vadd.f32 %v908, %v1198
      %v1235 = vadd.f32 %v911, %v1201
      %s1236 = scalar_lea.vmem %s327, 160
      %v1237 = vld [vmem:[%s1236] sm:$0xff]
      %v1238 = vld [vmem:[%s1236 + $0x8] sm:$0xff]
      %v1239 = vld [vmem:[%s1236 + $0x20] sm:$0xff]
      %v1240 = vld [vmem:[%s1236 + $0x28] sm:$0xff]
      %v1241 = vld [vmem:[%s1236 + $0x40] sm:$0xff]
      %v1242 = vld [vmem:[%s1236 + $0x48] sm:$0xff]
      %v1243 = vld [vmem:[%s1236 + $0x60] sm:$0xff]
      %v1244 = vld [vmem:[%s1236 + $0x68] sm:$0xff]
      %v1245 = vld [vmem:[%s1236 + $0x80] sm:$0xff]
      %v1246 = vld [vmem:[%s1236 + $0x88] sm:$0xff]
      %v1247 = vld [vmem:[%s1236 + $0xa0] sm:$0xff]
      %v1248 = vld [vmem:[%s1236 + $0xa8] sm:$0xff]
      %v1249 = vld [vmem:[%s1236 + $0xc0] sm:$0xff]
      %v1250 = vld [vmem:[%s1236 + $0xc8] sm:$0xff]
      %v1251 = vld [vmem:[%s1236 + $0xe0] sm:$0xff]
      %v1252 = vld [vmem:[%s1236 + $0xe8] sm:$0xff]
      %v1253 = vld [vmem:[%s1236 + $0x100] sm:$0xff]
      %v1254 = vld [vmem:[%s1236 + $0x108] sm:$0xff]
      %v1255 = vld [vmem:[%s1236 + $0x120] sm:$0xff]
      %v1256 = vld [vmem:[%s1236 + $0x128] sm:$0xff]
      %v1257 = vld [vmem:[%s1236 + $0x140] sm:$0xff]
      %v1258 = vld [vmem:[%s1236 + $0x148] sm:$0xff]
      %v1259 = vld [vmem:[%s1236 + $0x160] sm:$0xff]
      %v1260 = vld [vmem:[%s1236 + $0x168] sm:$0xff]
      %v1261 = vld [vmem:[%s1236 + $0x180] sm:$0xff]
      %v1262 = vld [vmem:[%s1236 + $0x188] sm:$0xff]
      %v1263 = vld [vmem:[%s1236 + $0x1a0] sm:$0xff]
      %v1264 = vld [vmem:[%s1236 + $0x1a8] sm:$0xff]
      %v1265 = vld [vmem:[%s1236 + $0x1c0] sm:$0xff]
      %v1266 = vld [vmem:[%s1236 + $0x1c8] sm:$0xff]
      %v1267 = vld [vmem:[%s1236 + $0x1e0] sm:$0xff]
      %v1268 = vld [vmem:[%s1236 + $0x1e8] sm:$0xff]
      %v1269 = vpack.c.bf16 %v1238, %v1237
      %v1270 = vpack.c.bf16 %v1240, %v1239
      %v1271 = vpack.c.bf16 %v1242, %v1241
      %v1272 = vpack.c.bf16 %v1244, %v1243
      %v1273 = vpack.c.bf16 %v1246, %v1245
      %v1274 = vpack.c.bf16 %v1248, %v1247
      %v1275 = vpack.c.bf16 %v1250, %v1249
      %v1276 = vpack.c.bf16 %v1252, %v1251
      %v1277 = vpack.c.bf16 %v1254, %v1253
      %v1278 = vpack.c.bf16 %v1256, %v1255
      %v1279 = vpack.c.bf16 %v1258, %v1257
      %v1280 = vpack.c.bf16 %v1260, %v1259
      %v1281 = vpack.c.bf16 %v1262, %v1261
      %v1282 = vpack.c.bf16 %v1264, %v1263
      %v1283 = vpack.c.bf16 %v1266, %v1265
      %v1284 = vpack.c.bf16 %v1268, %v1267
      %s1285 = scalar_lea.vmem %s1, 96
      %v1286 = vld [vmem:[%s1285] sm:$0xf]
      %v1287 = vld [vmem:[%s1285 + $0x4] sm:$0xf]
      %v1288 = vld [vmem:[%s1285 + $0x8] sm:$0xf]
      %v1289 = vld [vmem:[%s1285 + $0xc] sm:$0xf]
      %v1290 = vld [vmem:[%s1285 + $0x10] sm:$0xf]
      %v1291 = vld [vmem:[%s1285 + $0x14] sm:$0xf]
      %v1292 = vld [vmem:[%s1285 + $0x18] sm:$0xf]
      %v1293 = vld [vmem:[%s1285 + $0x1c] sm:$0xf]
      %v1302 = vunpack.c.l.b16 %v1286
      %v1303 = vunpack.c.l.b16 %v1287
      %v1304 = vunpack.c.l.b16 %v1288
      %v1305 = vunpack.c.l.b16 %v1289
      %v1306 = vunpack.c.l.b16 %v1290
      %v1307 = vunpack.c.l.b16 %v1291
      %v1308 = vunpack.c.l.b16 %v1292
      %v1309 = vunpack.c.l.b16 %v1293
      %v1310 = vpack.c.b16 %v1303, %v1302
      %v1311 = vpack.c.b16 %v1305, %v1304
      %v1312 = vpack.c.b16 %v1307, %v1306
      %v1313 = vpack.c.b16 %v1309, %v1308
      %v1319 = vsel %vm471, %v1269, 0
      %v1322 = vsel %vm471, %v1270, 0
      %v1325 = vsel %vm471, %v1271, 0
      %v1328 = vsel %vm471, %v1272, 0
      %v1331 = vsel %vm471, %v1273, 0
      %v1334 = vsel %vm471, %v1274, 0
      %v1337 = vsel %vm471, %v1275, 0
      %v1340 = vsel %vm471, %v1276, 0
      %v1343 = vsel %vm471, %v1277, 0
      %v1346 = vsel %vm471, %v1278, 0
      %v1349 = vsel %vm471, %v1279, 0
      %v1352 = vsel %vm471, %v1280, 0
      %v1355 = vsel %vm471, %v1281, 0
      %v1358 = vsel %vm471, %v1282, 0
      %v1361 = vsel %vm471, %v1283, 0
      %v1364 = vsel %vm471, %v1284, 0
      %1366 = vmatprep.subr.bf16.mxu0 0
      %1367 = vmatpush1.bf16.msra.mxu0 %v1310
      %1368 = vmatprep.subr.bf16.mxu0 0
      %1369 = vmatpush1.bf16.msra.mxu0 %v1311
      %1370 = vmatprep.subr.bf16.mxu0 0
      %1371 = vmatpush1.bf16.msra.mxu0 %v1312
      %1372 = vmatprep.subr.bf16.mxu0 0
      %1373 = vmatpush1.bf16.msra.mxu0 %v1313
      %1374 = vmatprep.subr.bf16.mxu0 0
      %1375 = vmatpush1.bf16.msra.mxu0 0
      %1376 = vmatprep.subr.bf16.mxu0 0
      %1377 = vmatpush1.bf16.msra.mxu0 0
      %1378 = vmatprep.subr.bf16.mxu0 0
      %1379 = vmatpush1.bf16.msra.mxu0 0
      %1380 = vmatprep.subr.bf16.mxu0 0
      %1381 = vmatpush1.bf16.msra.mxu0 0
      %1382 = vmatprep.subr.bf16.mxu0 0
      %1383 = vmatpush1.bf16.msra.mxu0 0
      %1384 = vmatprep.subr.bf16.mxu0 0
      %1385 = vmatpush1.bf16.msra.mxu0 0
      %1386 = vmatprep.subr.bf16.mxu0 0
      %1387 = vmatpush1.bf16.msra.mxu0 0
      %1388 = vmatprep.subr.bf16.mxu0 0
      %1389 = vmatpush1.bf16.msra.mxu0 0
      %1390 = vmatprep.subr.bf16.mxu0 0
      %1391 = vmatpush1.bf16.msra.mxu0 0
      %1392 = vmatprep.subr.bf16.mxu0 0
      %1393 = vmatpush1.bf16.msra.mxu0 0
      %1394 = vmatprep.subr.bf16.mxu0 0
      %1395 = vmatpush1.bf16.msra.mxu0 0
      %1396 = vmatprep.subr.bf16.mxu0 0
      %1397 = vmatpush1.bf16.msra.mxu0 0
      %1398 = vmatprep.mubr.bf16.mxu0 0
      %1399 = vmatmul.mubr.bf16.gmra.mrb[0].mxu0 %v1319
      %v1400 = vpop.f32.mrb[0].mxu0
      %v1401 = vadd.f32 0.0, %v1400
      %v1402 = vpop.f32.mrb[0].mxu0
      %v1403 = vpop.f32.mrb[0].mxu0
      %v1404 = vadd.f32 0.0, %v1403
      %v1405 = vpop.f32.mrb[0].mxu0
      %1406 = vmatprep.mubr.bf16.mxu0 0
      %1407 = vmatmul.mubr.bf16.gmra.mrb[0].mxu0 %v1322
      %v1408 = vpop.f32.mrb[0].mxu0
      %v1409 = vadd.f32 0.0, %v1408
      %v1410 = vpop.f32.mrb[0].mxu0
      %v1411 = vpop.f32.mrb[0].mxu0
      %v1412 = vadd.f32 0.0, %v1411
      %v1413 = vpop.f32.mrb[0].mxu0
      %1414 = vmatprep.mubr.bf16.mxu0 0
      %1415 = vmatmul.mubr.bf16.gmra.mrb[0].mxu0 %v1325
      %v1416 = vpop.f32.mrb[0].mxu0
      %v1417 = vadd.f32 0.0, %v1416
      %v1418 = vpop.f32.mrb[0].mxu0
      %v1419 = vpop.f32.mrb[0].mxu0
      %v1420 = vadd.f32 0.0, %v1419
      %v1421 = vpop.f32.mrb[0].mxu0
      %1422 = vmatprep.mubr.bf16.mxu0 0
      %1423 = vmatmul.mubr.bf16.gmra.mrb[0].mxu0 %v1328
      %v1424 = vpop.f32.mrb[0].mxu0
      %v1425 = vadd.f32 0.0, %v1424
      %v1426 = vpop.f32.mrb[0].mxu0
      %v1427 = vpop.f32.mrb[0].mxu0
      %v1428 = vadd.f32 0.0, %v1427
      %v1429 = vpop.f32.mrb[0].mxu0
      %1430 = vmatprep.mubr.bf16.mxu0 0
      %1431 = vmatmul.mubr.bf16.gmra.mrb[0].mxu0 %v1331
      %v1432 = vpop.f32.mrb[0].mxu0
      %v1433 = vadd.f32 0.0, %v1432
      %v1434 = vpop.f32.mrb[0].mxu0
      %v1435 = vpop.f32.mrb[0].mxu0
      %v1436 = vadd.f32 0.0, %v1435
      %v1437 = vpop.f32.mrb[0].mxu0
      %1438 = vmatprep.mubr.bf16.mxu0 0
      %1439 = vmatmul.mubr.bf16.gmra.mrb[0].mxu0 %v1334
      %v1440 = vpop.f32.mrb[0].mxu0
      %v1441 = vadd.f32 0.0, %v1440
      %v1442 = vpop.f32.mrb[0].mxu0
      %v1443 = vpop.f32.mrb[0].mxu0
      %v1444 = vadd.f32 0.0, %v1443
      %v1445 = vpop.f32.mrb[0].mxu0
      %1446 = vmatprep.mubr.bf16.mxu0 0
      %1447 = vmatmul.mubr.bf16.gmra.mrb[0].mxu0 %v1337
      %v1448 = vpop.f32.mrb[0].mxu0
      %v1449 = vadd.f32 0.0, %v1448
      %v1450 = vpop.f32.mrb[0].mxu0
      %v1451 = vpop.f32.mrb[0].mxu0
      %v1452 = vadd.f32 0.0, %v1451
      %v1453 = vpop.f32.mrb[0].mxu0
      %1454 = vmatprep.mubr.bf16.mxu0 0
      %1455 = vmatmul.mubr.bf16.gmra.mrb[0].mxu0 %v1340
      %v1456 = vpop.f32.mrb[0].mxu0
      %v1457 = vadd.f32 0.0, %v1456
      %v1458 = vpop.f32.mrb[0].mxu0
      %v1459 = vpop.f32.mrb[0].mxu0
      %v1460 = vadd.f32 0.0, %v1459
      %v1461 = vpop.f32.mrb[0].mxu0
      %1462 = vmatprep.mubr.bf16.mxu0 0
      %1463 = vmatmul.mubr.bf16.gmra.mrb[0].mxu0 %v1343
      %v1464 = vpop.f32.mrb[0].mxu0
      %v1465 = vadd.f32 0.0, %v1464
      %v1466 = vpop.f32.mrb[0].mxu0
      %v1467 = vpop.f32.mrb[0].mxu0
      %v1468 = vadd.f32 0.0, %v1467
      %v1469 = vpop.f32.mrb[0].mxu0
      %1470 = vmatprep.mubr.bf16.mxu0 0
      %1471 = vmatmul.mubr.bf16.gmra.mrb[0].mxu0 %v1346
      %v1472 = vpop.f32.mrb[0].mxu0
      %v1473 = vadd.f32 0.0, %v1472
      %v1474 = vpop.f32.mrb[0].mxu0
      %v1475 = vpop.f32.mrb[0].mxu0
      %v1476 = vadd.f32 0.0, %v1475
      %v1477 = vpop.f32.mrb[0].mxu0
      %1478 = vmatprep.mubr.bf16.mxu0 0
      %1479 = vmatmul.mubr.bf16.gmra.mrb[0].mxu0 %v1349
      %v1480 = vpop.f32.mrb[0].mxu0
      %v1481 = vadd.f32 0.0, %v1480
      %v1482 = vpop.f32.mrb[0].mxu0
      %v1483 = vpop.f32.mrb[0].mxu0
      %v1484 = vadd.f32 0.0, %v1483
      %v1485 = vpop.f32.mrb[0].mxu0
      %1486 = vmatprep.mubr.bf16.mxu0 0
      %1487 = vmatmul.mubr.bf16.gmra.mrb[0].mxu0 %v1352
      %v1488 = vpop.f32.mrb[0].mxu0
      %v1489 = vadd.f32 0.0, %v1488
      %v1490 = vpop.f32.mrb[0].mxu0
      %v1491 = vpop.f32.mrb[0].mxu0
      %v1492 = vadd.f32 0.0, %v1491
      %v1493 = vpop.f32.mrb[0].mxu0
      %1494 = vmatprep.mubr.bf16.mxu0 0
      %1495 = vmatmul.mubr.bf16.gmra.mrb[0].mxu0 %v1355
      %v1496 = vpop.f32.mrb[0].mxu0
      %v1497 = vadd.f32 0.0, %v1496
      %v1498 = vpop.f32.mrb[0].mxu0
      %v1499 = vpop.f32.mrb[0].mxu0
      %v1500 = vadd.f32 0.0, %v1499
      %v1501 = vpop.f32.mrb[0].mxu0
      %1502 = vmatprep.mubr.bf16.mxu0 0
      %1503 = vmatmul.mubr.bf16.gmra.mrb[0].mxu0 %v1358
      %v1504 = vpop.f32.mrb[0].mxu0
      %v1505 = vadd.f32 0.0, %v1504
      %v1506 = vpop.f32.mrb[0].mxu0
      %v1507 = vpop.f32.mrb[0].mxu0
      %v1508 = vadd.f32 0.0, %v1507
      %v1509 = vpop.f32.mrb[0].mxu0
      %1510 = vmatprep.mubr.bf16.mxu0 0
      %1511 = vmatmul.mubr.bf16.gmra.mrb[0].mxu0 %v1361
      %v1512 = vpop.f32.mrb[0].mxu0
      %v1513 = vadd.f32 0.0, %v1512
      %v1514 = vpop.f32.mrb[0].mxu0
      %v1515 = vpop.f32.mrb[0].mxu0
      %v1516 = vadd.f32 0.0, %v1515
      %v1517 = vpop.f32.mrb[0].mxu0
      %1518 = vmatprep.mubr.bf16.mxu0 0
      %1519 = vmatmul.mubr.bf16.gmra.mrb[0].mxu0 %v1364
      %v1520 = vpop.f32.mrb[0].mxu0
      %v1521 = vadd.f32 0.0, %v1520
      %v1522 = vpop.f32.mrb[0].mxu0
      %v1523 = vpop.f32.mrb[0].mxu0
      %v1524 = vadd.f32 0.0, %v1523
      %v1525 = vpop.f32.mrb[0].mxu0
      %1526 = vdwg.mxu0
      %v1527 = vadd.f32 %v1204, %v1401
      %v1528 = vadd.f32 %v1205, %v1404
      %v1529 = vadd.f32 %v1206, %v1409
      %v1530 = vadd.f32 %v1207, %v1412
      %v1531 = vadd.f32 %v1208, %v1417
      %v1532 = vadd.f32 %v1209, %v1420
      %v1533 = vadd.f32 %v1210, %v1425
      %v1534 = vadd.f32 %v1211, %v1428
      %v1535 = vadd.f32 %v1212, %v1433
      %v1536 = vadd.f32 %v1213, %v1436
      %v1537 = vadd.f32 %v1214, %v1441
      %v1538 = vadd.f32 %v1215, %v1444
      %v1539 = vadd.f32 %v1216, %v1449
      %v1540 = vadd.f32 %v1217, %v1452
      %v1541 = vadd.f32 %v1218, %v1457
      %v1542 = vadd.f32 %v1219, %v1460
      %v1543 = vadd.f32 %v1220, %v1465
      %v1544 = vadd.f32 %v1221, %v1468
      %v1545 = vadd.f32 %v1222, %v1473
      %v1546 = vadd.f32 %v1223, %v1476
      %v1547 = vadd.f32 %v1224, %v1481
      %v1548 = vadd.f32 %v1225, %v1484
      %v1549 = vadd.f32 %v1226, %v1489
      %v1550 = vadd.f32 %v1227, %v1492
      %v1551 = vadd.f32 %v1228, %v1497
      %v1552 = vadd.f32 %v1229, %v1500
      %v1553 = vadd.f32 %v1230, %v1505
      %v1554 = vadd.f32 %v1231, %v1508
      %v1555 = vadd.f32 %v1232, %v1513
      %v1556 = vadd.f32 %v1233, %v1516
      %v1557 = vadd.f32 %v1234, %v1521
      %v1558 = vadd.f32 %v1235, %v1524
      %v1559 = vld [vmem:[%s1236 + $0x5] sm:$0xff]
      %v1560 = vld [vmem:[%s1236 + $0xd] sm:$0xff]
      %v1561 = vld [vmem:[%s1236 + $0x25] sm:$0xff]
      %v1562 = vld [vmem:[%s1236 + $0x2d] sm:$0xff]
      %v1563 = vld [vmem:[%s1236 + $0x45] sm:$0xff]
      %v1564 = vld [vmem:[%s1236 + $0x4d] sm:$0xff]
      %v1565 = vld [vmem:[%s1236 + $0x65] sm:$0xff]
      %v1566 = vld [vmem:[%s1236 + $0x6d] sm:$0xff]
      %v1567 = vld [vmem:[%s1236 + $0x85] sm:$0xff]
      %v1568 = vld [vmem:[%s1236 + $0x8d] sm:$0xff]
      %v1569 = vld [vmem:[%s1236 + $0xa5] sm:$0xff]
      %v1570 = vld [vmem:[%s1236 + $0xad] sm:$0xff]
      %v1571 = vld [vmem:[%s1236 + $0xc5] sm:$0xff]
      %v1572 = vld [vmem:[%s1236 + $0xcd] sm:$0xff]
      %v1573 = vld [vmem:[%s1236 + $0xe5] sm:$0xff]
      %v1574 = vld [vmem:[%s1236 + $0xed] sm:$0xff]
      %v1575 = vld [vmem:[%s1236 + $0x105] sm:$0xff]
      %v1576 = vld [vmem:[%s1236 + $0x10d] sm:$0xff]
      %v1577 = vld [vmem:[%s1236 + $0x125] sm:$0xff]
      %v1578 = vld [vmem:[%s1236 + $0x12d] sm:$0xff]
      %v1579 = vld [vmem:[%s1236 + $0x145] sm:$0xff]
      %v1580 = vld [vmem:[%s1236 + $0x14d] sm:$0xff]
      %v1581 = vld [vmem:[%s1236 + $0x165] sm:$0xff]
      %v1582 = vld [vmem:[%s1236 + $0x16d] sm:$0xff]
      %v1583 = vld [vmem:[%s1236 + $0x185] sm:$0xff]
      %v1584 = vld [vmem:[%s1236 + $0x18d] sm:$0xff]
      %v1585 = vld [vmem:[%s1236 + $0x1a5] sm:$0xff]
      %v1586 = vld [vmem:[%s1236 + $0x1ad] sm:$0xff]
      %v1587 = vld [vmem:[%s1236 + $0x1c5] sm:$0xff]
      %v1588 = vld [vmem:[%s1236 + $0x1cd] sm:$0xff]
      %v1589 = vld [vmem:[%s1236 + $0x1e5] sm:$0xff]
      %v1590 = vld [vmem:[%s1236 + $0x1ed] sm:$0xff]
      %v1591 = vpack.c.bf16 %v1560, %v1559
      %v1592 = vpack.c.bf16 %v1562, %v1561
      %v1593 = vpack.c.bf16 %v1564, %v1563
      %v1594 = vpack.c.bf16 %v1566, %v1565
      %v1595 = vpack.c.bf16 %v1568, %v1567
      %v1596 = vpack.c.bf16 %v1570, %v1569
      %v1597 = vpack.c.bf16 %v1572, %v1571
      %v1598 = vpack.c.bf16 %v1574, %v1573
      %v1599 = vpack.c.bf16 %v1576, %v1575
      %v1600 = vpack.c.bf16 %v1578, %v1577
      %v1601 = vpack.c.bf16 %v1580, %v1579
      %v1602 = vpack.c.bf16 %v1582, %v1581
      %v1603 = vpack.c.bf16 %v1584, %v1583
      %v1604 = vpack.c.bf16 %v1586, %v1585
      %v1605 = vpack.c.bf16 %v1588, %v1587
      %v1606 = vpack.c.bf16 %v1590, %v1589
      %s1607 = scalar_lea.vmem %s1, 128
      %v1608 = vld [vmem:[%s1607] sm:$0xf]
      %v1609 = vld [vmem:[%s1607 + $0x4] sm:$0xf]
      %v1610 = vld [vmem:[%s1607 + $0x8] sm:$0xf]
      %v1611 = vld [vmem:[%s1607 + $0xc] sm:$0xf]
      %v1612 = vld [vmem:[%s1607 + $0x10] sm:$0xf]
      %v1613 = vld [vmem:[%s1607 + $0x14] sm:$0xf]
      %v1614 = vld [vmem:[%s1607 + $0x18] sm:$0xf]
      %v1615 = vld [vmem:[%s1607 + $0x1c] sm:$0xf]
      %v1624 = vunpack.c.l.b16 %v1608
      %v1625 = vunpack.c.l.b16 %v1609
      %v1626 = vunpack.c.l.b16 %v1610
      %v1627 = vunpack.c.l.b16 %v1611
      %v1628 = vunpack.c.l.b16 %v1612
      %v1629 = vunpack.c.l.b16 %v1613
      %v1630 = vunpack.c.l.b16 %v1614
      %v1631 = vunpack.c.l.b16 %v1615
      %v1632 = vpack.c.b16 %v1625, %v1624
      %v1633 = vpack.c.b16 %v1627, %v1626
      %v1634 = vpack.c.b16 %v1629, %v1628
      %v1635 = vpack.c.b16 %v1631, %v1630
      %v1641 = vsel %vm471, %v1591, 0
      %v1644 = vsel %vm471, %v1592, 0
      %v1647 = vsel %vm471, %v1593, 0
      %v1650 = vsel %vm471, %v1594, 0
      %v1653 = vsel %vm471, %v1595, 0
      %v1656 = vsel %vm471, %v1596, 0
      %v1659 = vsel %vm471, %v1597, 0
      %v1662 = vsel %vm471, %v1598, 0
      %v1665 = vsel %vm471, %v1599, 0
      %v1668 = vsel %vm471, %v1600, 0
      %v1671 = vsel %vm471, %v1601, 0
      %v1674 = vsel %vm471, %v1602, 0
      %v1677 = vsel %vm471, %v1603, 0
      %v1680 = vsel %vm471, %v1604, 0
      %v1683 = vsel %vm471, %v1605, 0
      %v1686 = vsel %vm471, %v1606, 0
      %1688 = vmatprep.subr.bf16.mxu0 0
      %1689 = vmatpush1.bf16.msra.mxu0 %v1632
      %1690 = vmatprep.subr.bf16.mxu0 0
      %1691 = vmatpush1.bf16.msra.mxu0 %v1633
      %1692 = vmatprep.subr.bf16.mxu0 0
      %1693 = vmatpush1.bf16.msra.mxu0 %v1634
      %1694 = vmatprep.subr.bf16.mxu0 0
      %1695 = vmatpush1.bf16.msra.mxu0 %v1635
      %1696 = vmatprep.subr.bf16.mxu0 0
      %1697 = vmatpush1.bf16.msra.mxu0 0
      %1698 = vmatprep.subr.bf16.mxu0 0
      %1699 = vmatpush1.bf16.msra.mxu0 0
      %1700 = vmatprep.subr.bf16.mxu0 0
      %1701 = vmatpush1.bf16.msra.mxu0 0
      %1702 = vmatprep.subr.bf16.mxu0 0
      %1703 = vmatpush1.bf16.msra.mxu0 0
      %1704 = vmatprep.subr.bf16.mxu0 0
      %1705 = vmatpush1.bf16.msra.mxu0 0
      %1706 = vmatprep.subr.bf16.mxu0 0
      %1707 = vmatpush1.bf16.msra.mxu0 0
      %1708 = vmatprep.subr.bf16.mxu0 0
      %1709 = vmatpush1.bf16.msra.mxu0 0
      %1710 = vmatprep.subr.bf16.mxu0 0
      %1711 = vmatpush1.bf16.msra.mxu0 0
      %1712 = vmatprep.subr.bf16.mxu0 0
      %1713 = vmatpush1.bf16.msra.mxu0 0
      %1714 = vmatprep.subr.bf16.mxu0 0
      %1715 = vmatpush1.bf16.msra.mxu0 0
      %1716 = vmatprep.subr.bf16.mxu0 0
      %1717 = vmatpush1.bf16.msra.mxu0 0
      %1718 = vmatprep.subr.bf16.mxu0 0
      %1719 = vmatpush1.bf16.msra.mxu0 0
      %1720 = vmatprep.mubr.bf16.mxu0 0
      %1721 = vmatmul.mubr.bf16.gmra.mrb[0].mxu0 %v1641
      %v1722 = vpop.f32.mrb[0].mxu0
      %v1723 = vadd.f32 0.0, %v1722
      %v1724 = vpop.f32.mrb[0].mxu0
      %v1725 = vpop.f32.mrb[0].mxu0
      %v1726 = vadd.f32 0.0, %v1725
      %v1727 = vpop.f32.mrb[0].mxu0
      %1728 = vmatprep.mubr.bf16.mxu0 0
      %1729 = vmatmul.mubr.bf16.gmra.mrb[0].mxu0 %v1644
      %v1730 = vpop.f32.mrb[0].mxu0
      %v1731 = vadd.f32 0.0, %v1730
      %v1732 = vpop.f32.mrb[0].mxu0
      %v1733 = vpop.f32.mrb[0].mxu0
      %v1734 = vadd.f32 0.0, %v1733
      %v1735 = vpop.f32.mrb[0].mxu0
      %1736 = vmatprep.mubr.bf16.mxu0 0
      %1737 = vmatmul.mubr.bf16.gmra.mrb[0].mxu0 %v1647
      %v1738 = vpop.f32.mrb[0].mxu0
      %v1739 = vadd.f32 0.0, %v1738
      %v1740 = vpop.f32.mrb[0].mxu0
      %v1741 = vpop.f32.mrb[0].mxu0
      %v1742 = vadd.f32 0.0, %v1741
      %v1743 = vpop.f32.mrb[0].mxu0
      %1744 = vmatprep.mubr.bf16.mxu0 0
      %1745 = vmatmul.mubr.bf16.gmra.mrb[0].mxu0 %v1650
      %v1746 = vpop.f32.mrb[0].mxu0
      %v1747 = vadd.f32 0.0, %v1746
      %v1748 = vpop.f32.mrb[0].mxu0
      %v1749 = vpop.f32.mrb[0].mxu0
      %v1750 = vadd.f32 0.0, %v1749
      %v1751 = vpop.f32.mrb[0].mxu0
      %1752 = vmatprep.mubr.bf16.mxu0 0
      %1753 = vmatmul.mubr.bf16.gmra.mrb[0].mxu0 %v1653
      %v1754 = vpop.f32.mrb[0].mxu0
      %v1755 = vadd.f32 0.0, %v1754
      %v1756 = vpop.f32.mrb[0].mxu0
      %v1757 = vpop.f32.mrb[0].mxu0
      %v1758 = vadd.f32 0.0, %v1757
      %v1759 = vpop.f32.mrb[0].mxu0
      %1760 = vmatprep.mubr.bf16.mxu0 0
      %1761 = vmatmul.mubr.bf16.gmra.mrb[0].mxu0 %v1656
      %v1762 = vpop.f32.mrb[0].mxu0
      %v1763 = vadd.f32 0.0, %v1762
      %v1764 = vpop.f32.mrb[0].mxu0
      %v1765 = vpop.f32.mrb[0].mxu0
      %v1766 = vadd.f32 0.0, %v1765
      %v1767 = vpop.f32.mrb[0].mxu0
      %1768 = vmatprep.mubr.bf16.mxu0 0
      %1769 = vmatmul.mubr.bf16.gmra.mrb[0].mxu0 %v1659
      %v1770 = vpop.f32.mrb[0].mxu0
      %v1771 = vadd.f32 0.0, %v1770
      %v1772 = vpop.f32.mrb[0].mxu0
      %v1773 = vpop.f32.mrb[0].mxu0
      %v1774 = vadd.f32 0.0, %v1773
      %v1775 = vpop.f32.mrb[0].mxu0
      %1776 = vmatprep.mubr.bf16.mxu0 0
      %1777 = vmatmul.mubr.bf16.gmra.mrb[0].mxu0 %v1662
      %v1778 = vpop.f32.mrb[0].mxu0
      %v1779 = vadd.f32 0.0, %v1778
      %v1780 = vpop.f32.mrb[0].mxu0
      %v1781 = vpop.f32.mrb[0].mxu0
      %v1782 = vadd.f32 0.0, %v1781
      %v1783 = vpop.f32.mrb[0].mxu0
      %1784 = vmatprep.mubr.bf16.mxu0 0
      %1785 = vmatmul.mubr.bf16.gmra.mrb[0].mxu0 %v1665
      %v1786 = vpop.f32.mrb[0].mxu0
      %v1787 = vadd.f32 0.0, %v1786
      %v1788 = vpop.f32.mrb[0].mxu0
      %v1789 = vpop.f32.mrb[0].mxu0
      %v1790 = vadd.f32 0.0, %v1789
      %v1791 = vpop.f32.mrb[0].mxu0
      %1792 = vmatprep.mubr.bf16.mxu0 0
      %1793 = vmatmul.mubr.bf16.gmra.mrb[0].mxu0 %v1668
      %v1794 = vpop.f32.mrb[0].mxu0
      %v1795 = vadd.f32 0.0, %v1794
      %v1796 = vpop.f32.mrb[0].mxu0
      %v1797 = vpop.f32.mrb[0].mxu0
      %v1798 = vadd.f32 0.0, %v1797
      %v1799 = vpop.f32.mrb[0].mxu0
      %1800 = vmatprep.mubr.bf16.mxu0 0
      %1801 = vmatmul.mubr.bf16.gmra.mrb[0].mxu0 %v1671
      %v1802 = vpop.f32.mrb[0].mxu0
      %v1803 = vadd.f32 0.0, %v1802
      %v1804 = vpop.f32.mrb[0].mxu0
      %v1805 = vpop.f32.mrb[0].mxu0
      %v1806 = vadd.f32 0.0, %v1805
      %v1807 = vpop.f32.mrb[0].mxu0
      %1808 = vmatprep.mubr.bf16.mxu0 0
      %1809 = vmatmul.mubr.bf16.gmra.mrb[0].mxu0 %v1674
      %v1810 = vpop.f32.mrb[0].mxu0
      %v1811 = vadd.f32 0.0, %v1810
      %v1812 = vpop.f32.mrb[0].mxu0
      %v1813 = vpop.f32.mrb[0].mxu0
      %v1814 = vadd.f32 0.0, %v1813
      %v1815 = vpop.f32.mrb[0].mxu0
      %1816 = vmatprep.mubr.bf16.mxu0 0
      %1817 = vmatmul.mubr.bf16.gmra.mrb[0].mxu0 %v1677
      %v1818 = vpop.f32.mrb[0].mxu0
      %v1819 = vadd.f32 0.0, %v1818
      %v1820 = vpop.f32.mrb[0].mxu0
      %v1821 = vpop.f32.mrb[0].mxu0
      %v1822 = vadd.f32 0.0, %v1821
      %v1823 = vpop.f32.mrb[0].mxu0
      %1824 = vmatprep.mubr.bf16.mxu0 0
      %1825 = vmatmul.mubr.bf16.gmra.mrb[0].mxu0 %v1680
      %v1826 = vpop.f32.mrb[0].mxu0
      %v1827 = vadd.f32 0.0, %v1826
      %v1828 = vpop.f32.mrb[0].mxu0
      %v1829 = vpop.f32.mrb[0].mxu0
      %v1830 = vadd.f32 0.0, %v1829
      %v1831 = vpop.f32.mrb[0].mxu0
      %1832 = vmatprep.mubr.bf16.mxu0 0
      %1833 = vmatmul.mubr.bf16.gmra.mrb[0].mxu0 %v1683
      %v1834 = vpop.f32.mrb[0].mxu0
      %v1835 = vadd.f32 0.0, %v1834
      %v1836 = vpop.f32.mrb[0].mxu0
      %v1837 = vpop.f32.mrb[0].mxu0
      %v1838 = vadd.f32 0.0, %v1837
      %v1839 = vpop.f32.mrb[0].mxu0
      %1840 = vmatprep.mubr.bf16.mxu0 0
      %1841 = vmatmul.mubr.bf16.gmra.mrb[0].mxu0 %v1686
      %v1842 = vpop.f32.mrb[0].mxu0
      %v1843 = vadd.f32 0.0, %v1842
      %v1844 = vpop.f32.mrb[0].mxu0
      %v1845 = vpop.f32.mrb[0].mxu0
      %v1846 = vadd.f32 0.0, %v1845
      %v1847 = vpop.f32.mrb[0].mxu0
      %1848 = vdwg.mxu0
      %v1849 = vadd.f32 %v1527, %v1723
      %v1850 = vadd.f32 %v1528, %v1726
      %v1851 = vadd.f32 %v1529, %v1731
      %v1852 = vadd.f32 %v1530, %v1734
      %v1853 = vadd.f32 %v1531, %v1739
      %v1854 = vadd.f32 %v1532, %v1742
      %v1855 = vadd.f32 %v1533, %v1747
      %v1856 = vadd.f32 %v1534, %v1750
      %v1857 = vadd.f32 %v1535, %v1755
      %v1858 = vadd.f32 %v1536, %v1758
      %v1859 = vadd.f32 %v1537, %v1763
      %v1860 = vadd.f32 %v1538, %v1766
      %v1861 = vadd.f32 %v1539, %v1771
      %v1862 = vadd.f32 %v1540, %v1774
      %v1863 = vadd.f32 %v1541, %v1779
      %v1864 = vadd.f32 %v1542, %v1782
      %v1865 = vadd.f32 %v1543, %v1787
      %v1866 = vadd.f32 %v1544, %v1790
      %v1867 = vadd.f32 %v1545, %v1795
      %v1868 = vadd.f32 %v1546, %v1798
      %v1869 = vadd.f32 %v1547, %v1803
      %v1870 = vadd.f32 %v1548, %v1806
      %v1871 = vadd.f32 %v1549, %v1811
      %v1872 = vadd.f32 %v1550, %v1814
      %v1873 = vadd.f32 %v1551, %v1819
      %v1874 = vadd.f32 %v1552, %v1822
      %v1875 = vadd.f32 %v1553, %v1827
      %v1876 = vadd.f32 %v1554, %v1830
      %v1877 = vadd.f32 %v1555, %v1835
      %v1878 = vadd.f32 %v1556, %v1838
      %v1879 = vadd.f32 %v1557, %v1843
      %v1880 = vadd.f32 %v1558, %v1846
      %v1881 = vld [vmem:[%s1236 + $0xa] sm:$0xff]
      %v1882 = vld [vmem:[%s1236 + $0x12] sm:$0xff]
      %v1883 = vld [vmem:[%s1236 + $0x2a] sm:$0xff]
      %v1884 = vld [vmem:[%s1236 + $0x32] sm:$0xff]
      %v1885 = vld [vmem:[%s1236 + $0x4a] sm:$0xff]
      %v1886 = vld [vmem:[%s1236 + $0x52] sm:$0xff]
      %v1887 = vld [vmem:[%s1236 + $0x6a] sm:$0xff]
      %v1888 = vld [vmem:[%s1236 + $0x72] sm:$0xff]
      %v1889 = vld [vmem:[%s1236 + $0x8a] sm:$0xff]
      %v1890 = vld [vmem:[%s1236 + $0x92] sm:$0xff]
      %v1891 = vld [vmem:[%s1236 + $0xaa] sm:$0xff]
      %v1892 = vld [vmem:[%s1236 + $0xb2] sm:$0xff]
      %v1893 = vld [vmem:[%s1236 + $0xca] sm:$0xff]
      %v1894 = vld [vmem:[%s1236 + $0xd2] sm:$0xff]
      %v1895 = vld [vmem:[%s1236 + $0xea] sm:$0xff]
      %v1896 = vld [vmem:[%s1236 + $0xf2] sm:$0xff]
      %v1897 = vld [vmem:[%s1236 + $0x10a] sm:$0xff]
      %v1898 = vld [vmem:[%s1236 + $0x112] sm:$0xff]
      %v1899 = vld [vmem:[%s1236 + $0x12a] sm:$0xff]
      %v1900 = vld [vmem:[%s1236 + $0x132] sm:$0xff]
      %v1901 = vld [vmem:[%s1236 + $0x14a] sm:$0xff]
      %v1902 = vld [vmem:[%s1236 + $0x152] sm:$0xff]
      %v1903 = vld [vmem:[%s1236 + $0x16a] sm:$0xff]
      %v1904 = vld [vmem:[%s1236 + $0x172] sm:$0xff]
      %v1905 = vld [vmem:[%s1236 + $0x18a] sm:$0xff]
      %v1906 = vld [vmem:[%s1236 + $0x192] sm:$0xff]
      %v1907 = vld [vmem:[%s1236 + $0x1aa] sm:$0xff]
      %v1908 = vld [vmem:[%s1236 + $0x1b2] sm:$0xff]
      %v1909 = vld [vmem:[%s1236 + $0x1ca] sm:$0xff]
      %v1910 = vld [vmem:[%s1236 + $0x1d2] sm:$0xff]
      %v1911 = vld [vmem:[%s1236 + $0x1ea] sm:$0xff]
      %v1912 = vld [vmem:[%s1236 + $0x1f2] sm:$0xff]
      %v1913 = vpack.c.bf16 %v1882, %v1881
      %v1914 = vpack.c.bf16 %v1884, %v1883
      %v1915 = vpack.c.bf16 %v1886, %v1885
      %v1916 = vpack.c.bf16 %v1888, %v1887
      %v1917 = vpack.c.bf16 %v1890, %v1889
      %v1918 = vpack.c.bf16 %v1892, %v1891
      %v1919 = vpack.c.bf16 %v1894, %v1893
      %v1920 = vpack.c.bf16 %v1896, %v1895
      %v1921 = vpack.c.bf16 %v1898, %v1897
      %v1922 = vpack.c.bf16 %v1900, %v1899
      %v1923 = vpack.c.bf16 %v1902, %v1901
      %v1924 = vpack.c.bf16 %v1904, %v1903
      %v1925 = vpack.c.bf16 %v1906, %v1905
      %v1926 = vpack.c.bf16 %v1908, %v1907
      %v1927 = vpack.c.bf16 %v1910, %v1909
      %v1928 = vpack.c.bf16 %v1912, %v1911
      %s1929 = scalar_lea.vmem %s1, 160
      %v1930 = vld [vmem:[%s1929] sm:$0xf]
      %v1931 = vld [vmem:[%s1929 + $0x4] sm:$0xf]
      %v1932 = vld [vmem:[%s1929 + $0x8] sm:$0xf]
      %v1933 = vld [vmem:[%s1929 + $0xc] sm:$0xf]
      %v1934 = vld [vmem:[%s1929 + $0x10] sm:$0xf]
      %v1935 = vld [vmem:[%s1929 + $0x14] sm:$0xf]
      %v1936 = vld [vmem:[%s1929 + $0x18] sm:$0xf]
      %v1937 = vld [vmem:[%s1929 + $0x1c] sm:$0xf]
      %v1946 = vunpack.c.l.b16 %v1930
      %v1947 = vunpack.c.l.b16 %v1931
      %v1948 = vunpack.c.l.b16 %v1932
      %v1949 = vunpack.c.l.b16 %v1933
      %v1950 = vunpack.c.l.b16 %v1934
      %v1951 = vunpack.c.l.b16 %v1935
      %v1952 = vunpack.c.l.b16 %v1936
      %v1953 = vunpack.c.l.b16 %v1937
      %v1954 = vpack.c.b16 %v1947, %v1946
      %v1955 = vpack.c.b16 %v1949, %v1948
      %v1956 = vpack.c.b16 %v1951, %v1950
      %v1957 = vpack.c.b16 %v1953, %v1952
      %v1963 = vsel %vm471, %v1913, 0
      %v1966 = vsel %vm471, %v1914, 0
      %v1969 = vsel %vm471, %v1915, 0
      %v1972 = vsel %vm471, %v1916, 0
      %v1975 = vsel %vm471, %v1917, 0
      %v1978 = vsel %vm471, %v1918, 0
      %v1981 = vsel %vm471, %v1919, 0
      %v1984 = vsel %vm471, %v1920, 0
      %v1987 = vsel %vm471, %v1921, 0
      %v1990 = vsel %vm471, %v1922, 0
      %v1993 = vsel %vm471, %v1923, 0
      %v1996 = vsel %vm471, %v1924, 0
      %v1999 = vsel %vm471, %v1925, 0
      %v2002 = vsel %vm471, %v1926, 0
      %v2005 = vsel %vm471, %v1927, 0
      %v2008 = vsel %vm471, %v1928, 0
      %2010 = vmatprep.subr.bf16.mxu0 0
      %2011 = vmatpush1.bf16.msra.mxu0 %v1954
      %2012 = vmatprep.subr.bf16.mxu0 0
      %2013 = vmatpush1.bf16.msra.mxu0 %v1955
      %2014 = vmatprep.subr.bf16.mxu0 0
      %2015 = vmatpush1.bf16.msra.mxu0 %v1956
      %2016 = vmatprep.subr.bf16.mxu0 0
      %2017 = vmatpush1.bf16.msra.mxu0 %v1957
      %2018 = vmatprep.subr.bf16.mxu0 0
      %2019 = vmatpush1.bf16.msra.mxu0 0
      %2020 = vmatprep.subr.bf16.mxu0 0
      %2021 = vmatpush1.bf16.msra.mxu0 0
      %2022 = vmatprep.subr.bf16.mxu0 0
      %2023 = vmatpush1.bf16.msra.mxu0 0
      %2024 = vmatprep.subr.bf16.mxu0 0
      %2025 = vmatpush1.bf16.msra.mxu0 0
      %2026 = vmatprep.subr.bf16.mxu0 0
      %2027 = vmatpush1.bf16.msra.mxu0 0
      %2028 = vmatprep.subr.bf16.mxu0 0
      %2029 = vmatpush1.bf16.msra.mxu0 0
      %2030 = vmatprep.subr.bf16.mxu0 0
      %2031 = vmatpush1.bf16.msra.mxu0 0
      %2032 = vmatprep.subr.bf16.mxu0 0
      %2033 = vmatpush1.bf16.msra.mxu0 0
      %2034 = vmatprep.subr.bf16.mxu0 0
      %2035 = vmatpush1.bf16.msra.mxu0 0
      %2036 = vmatprep.subr.bf16.mxu0 0
      %2037 = vmatpush1.bf16.msra.mxu0 0
      %2038 = vmatprep.subr.bf16.mxu0 0
      %2039 = vmatpush1.bf16.msra.mxu0 0
      %2040 = vmatprep.subr.bf16.mxu0 0
      %2041 = vmatpush1.bf16.msra.mxu0 0
      %2042 = vmatprep.mubr.bf16.mxu0 0
      %2043 = vmatmul.mubr.bf16.gmra.mrb[0].mxu0 %v1963
      %v2044 = vpop.f32.mrb[0].mxu0
      %v2045 = vadd.f32 0.0, %v2044
      %v2046 = vpop.f32.mrb[0].mxu0
      %v2047 = vpop.f32.mrb[0].mxu0
      %v2048 = vadd.f32 0.0, %v2047
      %v2049 = vpop.f32.mrb[0].mxu0
      %2050 = vmatprep.mubr.bf16.mxu0 0
      %2051 = vmatmul.mubr.bf16.gmra.mrb[0].mxu0 %v1966
      %v2052 = vpop.f32.mrb[0].mxu0
      %v2053 = vadd.f32 0.0, %v2052
      %v2054 = vpop.f32.mrb[0].mxu0
      %v2055 = vpop.f32.mrb[0].mxu0
      %v2056 = vadd.f32 0.0, %v2055
      %v2057 = vpop.f32.mrb[0].mxu0
      %2058 = vmatprep.mubr.bf16.mxu0 0
      %2059 = vmatmul.mubr.bf16.gmra.mrb[0].mxu0 %v1969
      %v2060 = vpop.f32.mrb[0].mxu0
      %v2061 = vadd.f32 0.0, %v2060
      %v2062 = vpop.f32.mrb[0].mxu0
      %v2063 = vpop.f32.mrb[0].mxu0
      %v2064 = vadd.f32 0.0, %v2063
      %v2065 = vpop.f32.mrb[0].mxu0
      %2066 = vmatprep.mubr.bf16.mxu0 0
      %2067 = vmatmul.mubr.bf16.gmra.mrb[0].mxu0 %v1972
      %v2068 = vpop.f32.mrb[0].mxu0
      %v2069 = vadd.f32 0.0, %v2068
      %v2070 = vpop.f32.mrb[0].mxu0
      %v2071 = vpop.f32.mrb[0].mxu0
      %v2072 = vadd.f32 0.0, %v2071
      %v2073 = vpop.f32.mrb[0].mxu0
      %2074 = vmatprep.mubr.bf16.mxu0 0
      %2075 = vmatmul.mubr.bf16.gmra.mrb[0].mxu0 %v1975
      %v2076 = vpop.f32.mrb[0].mxu0
      %v2077 = vadd.f32 0.0, %v2076
      %v2078 = vpop.f32.mrb[0].mxu0
      %v2079 = vpop.f32.mrb[0].mxu0
      %v2080 = vadd.f32 0.0, %v2079
      %v2081 = vpop.f32.mrb[0].mxu0
      %2082 = vmatprep.mubr.bf16.mxu0 0
      %2083 = vmatmul.mubr.bf16.gmra.mrb[0].mxu0 %v1978
      %v2084 = vpop.f32.mrb[0].mxu0
      %v2085 = vadd.f32 0.0, %v2084
      %v2086 = vpop.f32.mrb[0].mxu0
      %v2087 = vpop.f32.mrb[0].mxu0
      %v2088 = vadd.f32 0.0, %v2087
      %v2089 = vpop.f32.mrb[0].mxu0
      %2090 = vmatprep.mubr.bf16.mxu0 0
      %2091 = vmatmul.mubr.bf16.gmra.mrb[0].mxu0 %v1981
      %v2092 = vpop.f32.mrb[0].mxu0
      %v2093 = vadd.f32 0.0, %v2092
      %v2094 = vpop.f32.mrb[0].mxu0
      %v2095 = vpop.f32.mrb[0].mxu0
      %v2096 = vadd.f32 0.0, %v2095
      %v2097 = vpop.f32.mrb[0].mxu0
      %2098 = vmatprep.mubr.bf16.mxu0 0
      %2099 = vmatmul.mubr.bf16.gmra.mrb[0].mxu0 %v1984
      %v2100 = vpop.f32.mrb[0].mxu0
      %v2101 = vadd.f32 0.0, %v2100
      %v2102 = vpop.f32.mrb[0].mxu0
      %v2103 = vpop.f32.mrb[0].mxu0
      %v2104 = vadd.f32 0.0, %v2103
      %v2105 = vpop.f32.mrb[0].mxu0
      %2106 = vmatprep.mubr.bf16.mxu0 0
      %2107 = vmatmul.mubr.bf16.gmra.mrb[0].mxu0 %v1987
      %v2108 = vpop.f32.mrb[0].mxu0
      %v2109 = vadd.f32 0.0, %v2108
      %v2110 = vpop.f32.mrb[0].mxu0
      %v2111 = vpop.f32.mrb[0].mxu0
      %v2112 = vadd.f32 0.0, %v2111
      %v2113 = vpop.f32.mrb[0].mxu0
      %2114 = vmatprep.mubr.bf16.mxu0 0
      %2115 = vmatmul.mubr.bf16.gmra.mrb[0].mxu0 %v1990
      %v2116 = vpop.f32.mrb[0].mxu0
      %v2117 = vadd.f32 0.0, %v2116
      %v2118 = vpop.f32.mrb[0].mxu0
      %v2119 = vpop.f32.mrb[0].mxu0
      %v2120 = vadd.f32 0.0, %v2119
      %v2121 = vpop.f32.mrb[0].mxu0
      %2122 = vmatprep.mubr.bf16.mxu0 0
      %2123 = vmatmul.mubr.bf16.gmra.mrb[0].mxu0 %v1993
      %v2124 = vpop.f32.mrb[0].mxu0
      %v2125 = vadd.f32 0.0, %v2124
      %v2126 = vpop.f32.mrb[0].mxu0
      %v2127 = vpop.f32.mrb[0].mxu0
      %v2128 = vadd.f32 0.0, %v2127
      %v2129 = vpop.f32.mrb[0].mxu0
      %2130 = vmatprep.mubr.bf16.mxu0 0
      %2131 = vmatmul.mubr.bf16.gmra.mrb[0].mxu0 %v1996
      %v2132 = vpop.f32.mrb[0].mxu0
      %v2133 = vadd.f32 0.0, %v2132
      %v2134 = vpop.f32.mrb[0].mxu0
      %v2135 = vpop.f32.mrb[0].mxu0
      %v2136 = vadd.f32 0.0, %v2135
      %v2137 = vpop.f32.mrb[0].mxu0
      %2138 = vmatprep.mubr.bf16.mxu0 0
      %2139 = vmatmul.mubr.bf16.gmra.mrb[0].mxu0 %v1999
      %v2140 = vpop.f32.mrb[0].mxu0
      %v2141 = vadd.f32 0.0, %v2140
      %v2142 = vpop.f32.mrb[0].mxu0
      %v2143 = vpop.f32.mrb[0].mxu0
      %v2144 = vadd.f32 0.0, %v2143
      %v2145 = vpop.f32.mrb[0].mxu0
      %2146 = vmatprep.mubr.bf16.mxu0 0
      %2147 = vmatmul.mubr.bf16.gmra.mrb[0].mxu0 %v2002
      %v2148 = vpop.f32.mrb[0].mxu0
      %v2149 = vadd.f32 0.0, %v2148
      %v2150 = vpop.f32.mrb[0].mxu0
      %v2151 = vpop.f32.mrb[0].mxu0
      %v2152 = vadd.f32 0.0, %v2151
      %v2153 = vpop.f32.mrb[0].mxu0
      %2154 = vmatprep.mubr.bf16.mxu0 0
      %2155 = vmatmul.mubr.bf16.gmra.mrb[0].mxu0 %v2005
      %v2156 = vpop.f32.mrb[0].mxu0
      %v2157 = vadd.f32 0.0, %v2156
      %v2158 = vpop.f32.mrb[0].mxu0
      %v2159 = vpop.f32.mrb[0].mxu0
      %v2160 = vadd.f32 0.0, %v2159
      %v2161 = vpop.f32.mrb[0].mxu0
      %2162 = vmatprep.mubr.bf16.mxu0 0
      %2163 = vmatmul.mubr.bf16.gmra.mrb[0].mxu0 %v2008
      %v2164 = vpop.f32.mrb[0].mxu0
      %v2165 = vadd.f32 0.0, %v2164
      %v2166 = vpop.f32.mrb[0].mxu0
      %v2167 = vpop.f32.mrb[0].mxu0
      %v2168 = vadd.f32 0.0, %v2167
      %v2169 = vpop.f32.mrb[0].mxu0
      %2170 = vdwg.mxu0
      %v2171 = vadd.f32 %v1849, %v2045
      %v2172 = vadd.f32 %v1850, %v2048
      %v2173 = vadd.f32 %v1851, %v2053
      %v2174 = vadd.f32 %v1852, %v2056
      %v2175 = vadd.f32 %v1853, %v2061
      %v2176 = vadd.f32 %v1854, %v2064
      %v2177 = vadd.f32 %v1855, %v2069
      %v2178 = vadd.f32 %v1856, %v2072
      %v2179 = vadd.f32 %v1857, %v2077
      %v2180 = vadd.f32 %v1858, %v2080
      %v2181 = vadd.f32 %v1859, %v2085
      %v2182 = vadd.f32 %v1860, %v2088
      %v2183 = vadd.f32 %v1861, %v2093
      %v2184 = vadd.f32 %v1862, %v2096
      %v2185 = vadd.f32 %v1863, %v2101
      %v2186 = vadd.f32 %v1864, %v2104
      %v2187 = vadd.f32 %v1865, %v2109
      %v2188 = vadd.f32 %v1866, %v2112
      %v2189 = vadd.f32 %v1867, %v2117
      %v2190 = vadd.f32 %v1868, %v2120
      %v2191 = vadd.f32 %v1869, %v2125
      %v2192 = vadd.f32 %v1870, %v2128
      %v2193 = vadd.f32 %v1871, %v2133
      %v2194 = vadd.f32 %v1872, %v2136
      %v2195 = vadd.f32 %v1873, %v2141
      %v2196 = vadd.f32 %v1874, %v2144
      %v2197 = vadd.f32 %v1875, %v2149
      %v2198 = vadd.f32 %v1876, %v2152
      %v2199 = vadd.f32 %v1877, %v2157
      %v2200 = vadd.f32 %v1878, %v2160
      %v2201 = vadd.f32 %v1879, %v2165
      %v2202 = vadd.f32 %v1880, %v2168
      %s2203 = scalar_lea.vmem %s327, 320
      %v2204 = vld [vmem:[%s2203] sm:$0xff]
      %v2205 = vld [vmem:[%s2203 + $0x8] sm:$0xff]
      %v2206 = vld [vmem:[%s2203 + $0x20] sm:$0xff]
      %v2207 = vld [vmem:[%s2203 + $0x28] sm:$0xff]
      %v2208 = vld [vmem:[%s2203 + $0x40] sm:$0xff]
      %v2209 = vld [vmem:[%s2203 + $0x48] sm:$0xff]
      %v2210 = vld [vmem:[%s2203 + $0x60] sm:$0xff]
      %v2211 = vld [vmem:[%s2203 + $0x68] sm:$0xff]
      %v2212 = vld [vmem:[%s2203 + $0x80] sm:$0xff]
      %v2213 = vld [vmem:[%s2203 + $0x88] sm:$0xff]
      %v2214 = vld [vmem:[%s2203 + $0xa0] sm:$0xff]
      %v2215 = vld [vmem:[%s2203 + $0xa8] sm:$0xff]
      %v2216 = vld [vmem:[%s2203 + $0xc0] sm:$0xff]
      %v2217 = vld [vmem:[%s2203 + $0xc8] sm:$0xff]
      %v2218 = vld [vmem:[%s2203 + $0xe0] sm:$0xff]
      %v2219 = vld [vmem:[%s2203 + $0xe8] sm:$0xff]
      %v2220 = vld [vmem:[%s2203 + $0x100] sm:$0xff]
      %v2221 = vld [vmem:[%s2203 + $0x108] sm:$0xff]
      %v2222 = vld [vmem:[%s2203 + $0x120] sm:$0xff]
      %v2223 = vld [vmem:[%s2203 + $0x128] sm:$0xff]
      %v2224 = vld [vmem:[%s2203 + $0x140] sm:$0xff]
      %v2225 = vld [vmem:[%s2203 + $0x148] sm:$0xff]
      %v2226 = vld [vmem:[%s2203 + $0x160] sm:$0xff]
      %v2227 = vld [vmem:[%s2203 + $0x168] sm:$0xff]
      %v2228 = vld [vmem:[%s2203 + $0x180] sm:$0xff]
      %v2229 = vld [vmem:[%s2203 + $0x188] sm:$0xff]
      %v2230 = vld [vmem:[%s2203 + $0x1a0] sm:$0xff]
      %v2231 = vld [vmem:[%s2203 + $0x1a8] sm:$0xff]
      %v2232 = vld [vmem:[%s2203 + $0x1c0] sm:$0xff]
      %v2233 = vld [vmem:[%s2203 + $0x1c8] sm:$0xff]
      %v2234 = vld [vmem:[%s2203 + $0x1e0] sm:$0xff]
      %v2235 = vld [vmem:[%s2203 + $0x1e8] sm:$0xff]
      %v2236 = vpack.c.bf16 %v2205, %v2204
      %v2237 = vpack.c.bf16 %v2207, %v2206
      %v2238 = vpack.c.bf16 %v2209, %v2208
      %v2239 = vpack.c.bf16 %v2211, %v2210
      %v2240 = vpack.c.bf16 %v2213, %v2212
      %v2241 = vpack.c.bf16 %v2215, %v2214
      %v2242 = vpack.c.bf16 %v2217, %v2216
      %v2243 = vpack.c.bf16 %v2219, %v2218
      %v2244 = vpack.c.bf16 %v2221, %v2220
      %v2245 = vpack.c.bf16 %v2223, %v2222
      %v2246 = vpack.c.bf16 %v2225, %v2224
      %v2247 = vpack.c.bf16 %v2227, %v2226
      %v2248 = vpack.c.bf16 %v2229, %v2228
      %v2249 = vpack.c.bf16 %v2231, %v2230
      %v2250 = vpack.c.bf16 %v2233, %v2232
      %v2251 = vpack.c.bf16 %v2235, %v2234
      %s2252 = scalar_lea.vmem %s1, 192
      %v2253 = vld [vmem:[%s2252] sm:$0xf]
      %v2254 = vld [vmem:[%s2252 + $0x4] sm:$0xf]
      %v2255 = vld [vmem:[%s2252 + $0x8] sm:$0xf]
      %v2256 = vld [vmem:[%s2252 + $0xc] sm:$0xf]
      %v2257 = vld [vmem:[%s2252 + $0x10] sm:$0xf]
      %v2258 = vld [vmem:[%s2252 + $0x14] sm:$0xf]
      %v2259 = vld [vmem:[%s2252 + $0x18] sm:$0xf]
      %v2260 = vld [vmem:[%s2252 + $0x1c] sm:$0xf]
      %v2269 = vunpack.c.l.b16 %v2253
      %v2270 = vunpack.c.l.b16 %v2254
      %v2271 = vunpack.c.l.b16 %v2255
      %v2272 = vunpack.c.l.b16 %v2256
      %v2273 = vunpack.c.l.b16 %v2257
      %v2274 = vunpack.c.l.b16 %v2258
      %v2275 = vunpack.c.l.b16 %v2259
      %v2276 = vunpack.c.l.b16 %v2260
      %v2277 = vpack.c.b16 %v2270, %v2269
      %v2278 = vpack.c.b16 %v2272, %v2271
      %v2279 = vpack.c.b16 %v2274, %v2273
      %v2280 = vpack.c.b16 %v2276, %v2275
      %v2286 = vsel %vm471, %v2236, 0
      %v2289 = vsel %vm471, %v2237, 0
      %v2292 = vsel %vm471, %v2238, 0
      %v2295 = vsel %vm471, %v2239, 0
      %v2298 = vsel %vm471, %v2240, 0
      %v2301 = vsel %vm471, %v2241, 0
      %v2304 = vsel %vm471, %v2242, 0
      %v2307 = vsel %vm471, %v2243, 0
      %v2310 = vsel %vm471, %v2244, 0
      %v2313 = vsel %vm471, %v2245, 0
      %v2316 = vsel %vm471, %v2246, 0
      %v2319 = vsel %vm471, %v2247, 0
      %v2322 = vsel %vm471, %v2248, 0
      %v2325 = vsel %vm471, %v2249, 0
      %v2328 = vsel %vm471, %v2250, 0
      %v2331 = vsel %vm471, %v2251, 0
      %2333 = vmatprep.subr.bf16.mxu0 0
      %2334 = vmatpush1.bf16.msra.mxu0 %v2277
      %2335 = vmatprep.subr.bf16.mxu0 0
      %2336 = vmatpush1.bf16.msra.mxu0 %v2278
      %2337 = vmatprep.subr.bf16.mxu0 0
      %2338 = vmatpush1.bf16.msra.mxu0 %v2279
      %2339 = vmatprep.subr.bf16.mxu0 0
      %2340 = vmatpush1.bf16.msra.mxu0 %v2280
      %2341 = vmatprep.subr.bf16.mxu0 0
      %2342 = vmatpush1.bf16.msra.mxu0 0
      %2343 = vmatprep.subr.bf16.mxu0 0
      %2344 = vmatpush1.bf16.msra.mxu0 0
      %2345 = vmatprep.subr.bf16.mxu0 0
      %2346 = vmatpush1.bf16.msra.mxu0 0
      %2347 = vmatprep.subr.bf16.mxu0 0
      %2348 = vmatpush1.bf16.msra.mxu0 0
      %2349 = vmatprep.subr.bf16.mxu0 0
      %2350 = vmatpush1.bf16.msra.mxu0 0
      %2351 = vmatprep.subr.bf16.mxu0 0
      %2352 = vmatpush1.bf16.msra.mxu0 0
      %2353 = vmatprep.subr.bf16.mxu0 0
      %2354 = vmatpush1.bf16.msra.mxu0 0
      %2355 = vmatprep.subr.bf16.mxu0 0
      %2356 = vmatpush1.bf16.msra.mxu0 0
      %2357 = vmatprep.subr.bf16.mxu0 0
      %2358 = vmatpush1.bf16.msra.mxu0 0
      %2359 = vmatprep.subr.bf16.mxu0 0
      %2360 = vmatpush1.bf16.msra.mxu0 0
      %2361 = vmatprep.subr.bf16.mxu0 0
      %2362 = vmatpush1.bf16.msra.mxu0 0
      %2363 = vmatprep.subr.bf16.mxu0 0
      %2364 = vmatpush1.bf16.msra.mxu0 0
      %2365 = vmatprep.mubr.bf16.mxu0 0
      %2366 = vmatmul.mubr.bf16.gmra.mrb[0].mxu0 %v2286
      %v2367 = vpop.f32.mrb[0].mxu0
      %v2368 = vadd.f32 0.0, %v2367
      %v2369 = vpop.f32.mrb[0].mxu0
      %v2370 = vpop.f32.mrb[0].mxu0
      %v2371 = vadd.f32 0.0, %v2370
      %v2372 = vpop.f32.mrb[0].mxu0
      %2373 = vmatprep.mubr.bf16.mxu0 0
      %2374 = vmatmul.mubr.bf16.gmra.mrb[0].mxu0 %v2289
      %v2375 = vpop.f32.mrb[0].mxu0
      %v2376 = vadd.f32 0.0, %v2375
      %v2377 = vpop.f32.mrb[0].mxu0
      %v2378 = vpop.f32.mrb[0].mxu0
      %v2379 = vadd.f32 0.0, %v2378
      %v2380 = vpop.f32.mrb[0].mxu0
      %2381 = vmatprep.mubr.bf16.mxu0 0
      %2382 = vmatmul.mubr.bf16.gmra.mrb[0].mxu0 %v2292
      %v2383 = vpop.f32.mrb[0].mxu0
      %v2384 = vadd.f32 0.0, %v2383
      %v2385 = vpop.f32.mrb[0].mxu0
      %v2386 = vpop.f32.mrb[0].mxu0
      %v2387 = vadd.f32 0.0, %v2386
      %v2388 = vpop.f32.mrb[0].mxu0
      %2389 = vmatprep.mubr.bf16.mxu0 0
      %2390 = vmatmul.mubr.bf16.gmra.mrb[0].mxu0 %v2295
      %v2391 = vpop.f32.mrb[0].mxu0
      %v2392 = vadd.f32 0.0, %v2391
      %v2393 = vpop.f32.mrb[0].mxu0
      %v2394 = vpop.f32.mrb[0].mxu0
      %v2395 = vadd.f32 0.0, %v2394
      %v2396 = vpop.f32.mrb[0].mxu0
      %2397 = vmatprep.mubr.bf16.mxu0 0
      %2398 = vmatmul.mubr.bf16.gmra.mrb[0].mxu0 %v2298
      %v2399 = vpop.f32.mrb[0].mxu0
      %v2400 = vadd.f32 0.0, %v2399
      %v2401 = vpop.f32.mrb[0].mxu0
      %v2402 = vpop.f32.mrb[0].mxu0
      %v2403 = vadd.f32 0.0, %v2402
      %v2404 = vpop.f32.mrb[0].mxu0
      %2405 = vmatprep.mubr.bf16.mxu0 0
      %2406 = vmatmul.mubr.bf16.gmra.mrb[0].mxu0 %v2301
      %v2407 = vpop.f32.mrb[0].mxu0
      %v2408 = vadd.f32 0.0, %v2407
      %v2409 = vpop.f32.mrb[0].mxu0
      %v2410 = vpop.f32.mrb[0].mxu0
      %v2411 = vadd.f32 0.0, %v2410
      %v2412 = vpop.f32.mrb[0].mxu0
      %2413 = vmatprep.mubr.bf16.mxu0 0
      %2414 = vmatmul.mubr.bf16.gmra.mrb[0].mxu0 %v2304
      %v2415 = vpop.f32.mrb[0].mxu0
      %v2416 = vadd.f32 0.0, %v2415
      %v2417 = vpop.f32.mrb[0].mxu0
      %v2418 = vpop.f32.mrb[0].mxu0
      %v2419 = vadd.f32 0.0, %v2418
      %v2420 = vpop.f32.mrb[0].mxu0
      %2421 = vmatprep.mubr.bf16.mxu0 0
      %2422 = vmatmul.mubr.bf16.gmra.mrb[0].mxu0 %v2307
      %v2423 = vpop.f32.mrb[0].mxu0
      %v2424 = vadd.f32 0.0, %v2423
      %v2425 = vpop.f32.mrb[0].mxu0
      %v2426 = vpop.f32.mrb[0].mxu0
      %v2427 = vadd.f32 0.0, %v2426
      %v2428 = vpop.f32.mrb[0].mxu0
      %2429 = vmatprep.mubr.bf16.mxu0 0
      %2430 = vmatmul.mubr.bf16.gmra.mrb[0].mxu0 %v2310
      %v2431 = vpop.f32.mrb[0].mxu0
      %v2432 = vadd.f32 0.0, %v2431
      %v2433 = vpop.f32.mrb[0].mxu0
      %v2434 = vpop.f32.mrb[0].mxu0
      %v2435 = vadd.f32 0.0, %v2434
      %v2436 = vpop.f32.mrb[0].mxu0
      %2437 = vmatprep.mubr.bf16.mxu0 0
      %2438 = vmatmul.mubr.bf16.gmra.mrb[0].mxu0 %v2313
      %v2439 = vpop.f32.mrb[0].mxu0
      %v2440 = vadd.f32 0.0, %v2439
      %v2441 = vpop.f32.mrb[0].mxu0
      %v2442 = vpop.f32.mrb[0].mxu0
      %v2443 = vadd.f32 0.0, %v2442
      %v2444 = vpop.f32.mrb[0].mxu0
      %2445 = vmatprep.mubr.bf16.mxu0 0
      %2446 = vmatmul.mubr.bf16.gmra.mrb[0].mxu0 %v2316
      %v2447 = vpop.f32.mrb[0].mxu0
      %v2448 = vadd.f32 0.0, %v2447
      %v2449 = vpop.f32.mrb[0].mxu0
      %v2450 = vpop.f32.mrb[0].mxu0
      %v2451 = vadd.f32 0.0, %v2450
      %v2452 = vpop.f32.mrb[0].mxu0
      %2453 = vmatprep.mubr.bf16.mxu0 0
      %2454 = vmatmul.mubr.bf16.gmra.mrb[0].mxu0 %v2319
      %v2455 = vpop.f32.mrb[0].mxu0
      %v2456 = vadd.f32 0.0, %v2455
      %v2457 = vpop.f32.mrb[0].mxu0
      %v2458 = vpop.f32.mrb[0].mxu0
      %v2459 = vadd.f32 0.0, %v2458
      %v2460 = vpop.f32.mrb[0].mxu0
      %2461 = vmatprep.mubr.bf16.mxu0 0
      %2462 = vmatmul.mubr.bf16.gmra.mrb[0].mxu0 %v2322
      %v2463 = vpop.f32.mrb[0].mxu0
      %v2464 = vadd.f32 0.0, %v2463
      %v2465 = vpop.f32.mrb[0].mxu0
      %v2466 = vpop.f32.mrb[0].mxu0
      %v2467 = vadd.f32 0.0, %v2466
      %v2468 = vpop.f32.mrb[0].mxu0
      %2469 = vmatprep.mubr.bf16.mxu0 0
      %2470 = vmatmul.mubr.bf16.gmra.mrb[0].mxu0 %v2325
      %v2471 = vpop.f32.mrb[0].mxu0
      %v2472 = vadd.f32 0.0, %v2471
      %v2473 = vpop.f32.mrb[0].mxu0
      %v2474 = vpop.f32.mrb[0].mxu0
      %v2475 = vadd.f32 0.0, %v2474
      %v2476 = vpop.f32.mrb[0].mxu0
      %2477 = vmatprep.mubr.bf16.mxu0 0
      %2478 = vmatmul.mubr.bf16.gmra.mrb[0].mxu0 %v2328
      %v2479 = vpop.f32.mrb[0].mxu0
      %v2480 = vadd.f32 0.0, %v2479
      %v2481 = vpop.f32.mrb[0].mxu0
      %v2482 = vpop.f32.mrb[0].mxu0
      %v2483 = vadd.f32 0.0, %v2482
      %v2484 = vpop.f32.mrb[0].mxu0
      %2485 = vmatprep.mubr.bf16.mxu0 0
      %2486 = vmatmul.mubr.bf16.gmra.mrb[0].mxu0 %v2331
      %v2487 = vpop.f32.mrb[0].mxu0
      %v2488 = vadd.f32 0.0, %v2487
      %v2489 = vpop.f32.mrb[0].mxu0
      %v2490 = vpop.f32.mrb[0].mxu0
      %v2491 = vadd.f32 0.0, %v2490
      %v2492 = vpop.f32.mrb[0].mxu0
      %2493 = vdwg.mxu0
      %v2494 = vadd.f32 %v2171, %v2368
      %v2495 = vadd.f32 %v2172, %v2371
      %v2496 = vadd.f32 %v2173, %v2376
      %v2497 = vadd.f32 %v2174, %v2379
      %v2498 = vadd.f32 %v2175, %v2384
      %v2499 = vadd.f32 %v2176, %v2387
      %v2500 = vadd.f32 %v2177, %v2392
      %v2501 = vadd.f32 %v2178, %v2395
      %v2502 = vadd.f32 %v2179, %v2400
      %v2503 = vadd.f32 %v2180, %v2403
      %v2504 = vadd.f32 %v2181, %v2408
      %v2505 = vadd.f32 %v2182, %v2411
      %v2506 = vadd.f32 %v2183, %v2416
      %v2507 = vadd.f32 %v2184, %v2419
      %v2508 = vadd.f32 %v2185, %v2424
      %v2509 = vadd.f32 %v2186, %v2427
      %v2510 = vadd.f32 %v2187, %v2432
      %v2511 = vadd.f32 %v2188, %v2435
      %v2512 = vadd.f32 %v2189, %v2440
      %v2513 = vadd.f32 %v2190, %v2443
      %v2514 = vadd.f32 %v2191, %v2448
      %v2515 = vadd.f32 %v2192, %v2451
      %v2516 = vadd.f32 %v2193, %v2456
      %v2517 = vadd.f32 %v2194, %v2459
      %v2518 = vadd.f32 %v2195, %v2464
      %v2519 = vadd.f32 %v2196, %v2467
      %v2520 = vadd.f32 %v2197, %v2472
      %v2521 = vadd.f32 %v2198, %v2475
      %v2522 = vadd.f32 %v2199, %v2480
      %v2523 = vadd.f32 %v2200, %v2483
      %v2524 = vadd.f32 %v2201, %v2488
      %v2525 = vadd.f32 %v2202, %v2491
      %v2526 = vld [vmem:[%s2203 + $0x5] sm:$0xff]
      %v2527 = vld [vmem:[%s2203 + $0xd] sm:$0xff]
      %v2528 = vld [vmem:[%s2203 + $0x25] sm:$0xff]
      %v2529 = vld [vmem:[%s2203 + $0x2d] sm:$0xff]
      %v2530 = vld [vmem:[%s2203 + $0x45] sm:$0xff]
      %v2531 = vld [vmem:[%s2203 + $0x4d] sm:$0xff]
      %v2532 = vld [vmem:[%s2203 + $0x65] sm:$0xff]
      %v2533 = vld [vmem:[%s2203 + $0x6d] sm:$0xff]
      %v2534 = vld [vmem:[%s2203 + $0x85] sm:$0xff]
      %v2535 = vld [vmem:[%s2203 + $0x8d] sm:$0xff]
      %v2536 = vld [vmem:[%s2203 + $0xa5] sm:$0xff]
      %v2537 = vld [vmem:[%s2203 + $0xad] sm:$0xff]
      %v2538 = vld [vmem:[%s2203 + $0xc5] sm:$0xff]
      %v2539 = vld [vmem:[%s2203 + $0xcd] sm:$0xff]
      %v2540 = vld [vmem:[%s2203 + $0xe5] sm:$0xff]
      %v2541 = vld [vmem:[%s2203 + $0xed] sm:$0xff]
      %v2542 = vld [vmem:[%s2203 + $0x105] sm:$0xff]
      %v2543 = vld [vmem:[%s2203 + $0x10d] sm:$0xff]
      %v2544 = vld [vmem:[%s2203 + $0x125] sm:$0xff]
      %v2545 = vld [vmem:[%s2203 + $0x12d] sm:$0xff]
      %v2546 = vld [vmem:[%s2203 + $0x145] sm:$0xff]
      %v2547 = vld [vmem:[%s2203 + $0x14d] sm:$0xff]
      %v2548 = vld [vmem:[%s2203 + $0x165] sm:$0xff]
      %v2549 = vld [vmem:[%s2203 + $0x16d] sm:$0xff]
      %v2550 = vld [vmem:[%s2203 + $0x185] sm:$0xff]
      %v2551 = vld [vmem:[%s2203 + $0x18d] sm:$0xff]
      %v2552 = vld [vmem:[%s2203 + $0x1a5] sm:$0xff]
      %v2553 = vld [vmem:[%s2203 + $0x1ad] sm:$0xff]
      %v2554 = vld [vmem:[%s2203 + $0x1c5] sm:$0xff]
      %v2555 = vld [vmem:[%s2203 + $0x1cd] sm:$0xff]
      %v2556 = vld [vmem:[%s2203 + $0x1e5] sm:$0xff]
      %v2557 = vld [vmem:[%s2203 + $0x1ed] sm:$0xff]
      %v2558 = vpack.c.bf16 %v2527, %v2526
      %v2559 = vpack.c.bf16 %v2529, %v2528
      %v2560 = vpack.c.bf16 %v2531, %v2530
      %v2561 = vpack.c.bf16 %v2533, %v2532
      %v2562 = vpack.c.bf16 %v2535, %v2534
      %v2563 = vpack.c.bf16 %v2537, %v2536
      %v2564 = vpack.c.bf16 %v2539, %v2538
      %v2565 = vpack.c.bf16 %v2541, %v2540
      %v2566 = vpack.c.bf16 %v2543, %v2542
      %v2567 = vpack.c.bf16 %v2545, %v2544
      %v2568 = vpack.c.bf16 %v2547, %v2546
      %v2569 = vpack.c.bf16 %v2549, %v2548
      %v2570 = vpack.c.bf16 %v2551, %v2550
      %v2571 = vpack.c.bf16 %v2553, %v2552
      %v2572 = vpack.c.bf16 %v2555, %v2554
      %v2573 = vpack.c.bf16 %v2557, %v2556
      %s2574 = scalar_lea.vmem %s1, 224
      %v2575 = vld [vmem:[%s2574] sm:$0xf]
      %v2576 = vld [vmem:[%s2574 + $0x4] sm:$0xf]
      %v2577 = vld [vmem:[%s2574 + $0x8] sm:$0xf]
      %v2578 = vld [vmem:[%s2574 + $0xc] sm:$0xf]
      %v2579 = vld [vmem:[%s2574 + $0x10] sm:$0xf]
      %v2580 = vld [vmem:[%s2574 + $0x14] sm:$0xf]
      %v2581 = vld [vmem:[%s2574 + $0x18] sm:$0xf]
      %v2582 = vld [vmem:[%s2574 + $0x1c] sm:$0xf]
      %v2591 = vunpack.c.l.b16 %v2575
      %v2592 = vunpack.c.l.b16 %v2576
      %v2593 = vunpack.c.l.b16 %v2577
      %v2594 = vunpack.c.l.b16 %v2578
      %v2595 = vunpack.c.l.b16 %v2579
      %v2596 = vunpack.c.l.b16 %v2580
      %v2597 = vunpack.c.l.b16 %v2581
      %v2598 = vunpack.c.l.b16 %v2582
      %v2599 = vpack.c.b16 %v2592, %v2591
      %v2600 = vpack.c.b16 %v2594, %v2593
      %v2601 = vpack.c.b16 %v2596, %v2595
      %v2602 = vpack.c.b16 %v2598, %v2597
      %v2608 = vsel %vm471, %v2558, 0
      %v2611 = vsel %vm471, %v2559, 0
      %v2614 = vsel %vm471, %v2560, 0
      %v2617 = vsel %vm471, %v2561, 0
      %v2620 = vsel %vm471, %v2562, 0
      %v2623 = vsel %vm471, %v2563, 0
      %v2626 = vsel %vm471, %v2564, 0
      %v2629 = vsel %vm471, %v2565, 0
      %v2632 = vsel %vm471, %v2566, 0
      %v2635 = vsel %vm471, %v2567, 0
      %v2638 = vsel %vm471, %v2568, 0
      %v2641 = vsel %vm471, %v2569, 0
      %v2644 = vsel %vm471, %v2570, 0
      %v2647 = vsel %vm471, %v2571, 0
      %v2650 = vsel %vm471, %v2572, 0
      %v2653 = vsel %vm471, %v2573, 0
      %2655 = vmatprep.subr.bf16.mxu0 0
      %2656 = vmatpush1.bf16.msra.mxu0 %v2599
      %2657 = vmatprep.subr.bf16.mxu0 0
      %2658 = vmatpush1.bf16.msra.mxu0 %v2600
      %2659 = vmatprep.subr.bf16.mxu0 0
      %2660 = vmatpush1.bf16.msra.mxu0 %v2601
      %2661 = vmatprep.subr.bf16.mxu0 0
      %2662 = vmatpush1.bf16.msra.mxu0 %v2602
      %2663 = vmatprep.subr.bf16.mxu0 0
      %2664 = vmatpush1.bf16.msra.mxu0 0
      %2665 = vmatprep.subr.bf16.mxu0 0
      %2666 = vmatpush1.bf16.msra.mxu0 0
      %2667 = vmatprep.subr.bf16.mxu0 0
      %2668 = vmatpush1.bf16.msra.mxu0 0
      %2669 = vmatprep.subr.bf16.mxu0 0
      %2670 = vmatpush1.bf16.msra.mxu0 0
      %2671 = vmatprep.subr.bf16.mxu0 0
      %2672 = vmatpush1.bf16.msra.mxu0 0
      %2673 = vmatprep.subr.bf16.mxu0 0
      %2674 = vmatpush1.bf16.msra.mxu0 0
      %2675 = vmatprep.subr.bf16.mxu0 0
      %2676 = vmatpush1.bf16.msra.mxu0 0
      %2677 = vmatprep.subr.bf16.mxu0 0
      %2678 = vmatpush1.bf16.msra.mxu0 0
      %2679 = vmatprep.subr.bf16.mxu0 0
      %2680 = vmatpush1.bf16.msra.mxu0 0
      %2681 = vmatprep.subr.bf16.mxu0 0
      %2682 = vmatpush1.bf16.msra.mxu0 0
      %2683 = vmatprep.subr.bf16.mxu0 0
      %2684 = vmatpush1.bf16.msra.mxu0 0
      %2685 = vmatprep.subr.bf16.mxu0 0
      %2686 = vmatpush1.bf16.msra.mxu0 0
      %2687 = vmatprep.mubr.bf16.mxu0 0
      %2688 = vmatmul.mubr.bf16.gmra.mrb[0].mxu0 %v2608
      %v2689 = vpop.f32.mrb[0].mxu0
      %v2690 = vadd.f32 0.0, %v2689
      %v2691 = vpop.f32.mrb[0].mxu0
      %v2692 = vpop.f32.mrb[0].mxu0
      %v2693 = vadd.f32 0.0, %v2692
      %v2694 = vpop.f32.mrb[0].mxu0
      %2695 = vmatprep.mubr.bf16.mxu0 0
      %2696 = vmatmul.mubr.bf16.gmra.mrb[0].mxu0 %v2611
      %v2697 = vpop.f32.mrb[0].mxu0
      %v2698 = vadd.f32 0.0, %v2697
      %v2699 = vpop.f32.mrb[0].mxu0
      %v2700 = vpop.f32.mrb[0].mxu0
      %v2701 = vadd.f32 0.0, %v2700
      %v2702 = vpop.f32.mrb[0].mxu0
      %2703 = vmatprep.mubr.bf16.mxu0 0
      %2704 = vmatmul.mubr.bf16.gmra.mrb[0].mxu0 %v2614
      %v2705 = vpop.f32.mrb[0].mxu0
      %v2706 = vadd.f32 0.0, %v2705
      %v2707 = vpop.f32.mrb[0].mxu0
      %v2708 = vpop.f32.mrb[0].mxu0
      %v2709 = vadd.f32 0.0, %v2708
      %v2710 = vpop.f32.mrb[0].mxu0
      %2711 = vmatprep.mubr.bf16.mxu0 0
      %2712 = vmatmul.mubr.bf16.gmra.mrb[0].mxu0 %v2617
      %v2713 = vpop.f32.mrb[0].mxu0
      %v2714 = vadd.f32 0.0, %v2713
      %v2715 = vpop.f32.mrb[0].mxu0
      %v2716 = vpop.f32.mrb[0].mxu0
      %v2717 = vadd.f32 0.0, %v2716
      %v2718 = vpop.f32.mrb[0].mxu0
      %2719 = vmatprep.mubr.bf16.mxu0 0
      %2720 = vmatmul.mubr.bf16.gmra.mrb[0].mxu0 %v2620
      %v2721 = vpop.f32.mrb[0].mxu0
      %v2722 = vadd.f32 0.0, %v2721
      %v2723 = vpop.f32.mrb[0].mxu0
      %v2724 = vpop.f32.mrb[0].mxu0
      %v2725 = vadd.f32 0.0, %v2724
      %v2726 = vpop.f32.mrb[0].mxu0
      %2727 = vmatprep.mubr.bf16.mxu0 0
      %2728 = vmatmul.mubr.bf16.gmra.mrb[0].mxu0 %v2623
      %v2729 = vpop.f32.mrb[0].mxu0
      %v2730 = vadd.f32 0.0, %v2729
      %v2731 = vpop.f32.mrb[0].mxu0
      %v2732 = vpop.f32.mrb[0].mxu0
      %v2733 = vadd.f32 0.0, %v2732
      %v2734 = vpop.f32.mrb[0].mxu0
      %2735 = vmatprep.mubr.bf16.mxu0 0
      %2736 = vmatmul.mubr.bf16.gmra.mrb[0].mxu0 %v2626
      %v2737 = vpop.f32.mrb[0].mxu0
      %v2738 = vadd.f32 0.0, %v2737
      %v2739 = vpop.f32.mrb[0].mxu0
      %v2740 = vpop.f32.mrb[0].mxu0
      %v2741 = vadd.f32 0.0, %v2740
      %v2742 = vpop.f32.mrb[0].mxu0
      %2743 = vmatprep.mubr.bf16.mxu0 0
      %2744 = vmatmul.mubr.bf16.gmra.mrb[0].mxu0 %v2629
      %v2745 = vpop.f32.mrb[0].mxu0
      %v2746 = vadd.f32 0.0, %v2745
      %v2747 = vpop.f32.mrb[0].mxu0
      %v2748 = vpop.f32.mrb[0].mxu0
      %v2749 = vadd.f32 0.0, %v2748
      %v2750 = vpop.f32.mrb[0].mxu0
      %2751 = vmatprep.mubr.bf16.mxu0 0
      %2752 = vmatmul.mubr.bf16.gmra.mrb[0].mxu0 %v2632
      %v2753 = vpop.f32.mrb[0].mxu0
      %v2754 = vadd.f32 0.0, %v2753
      %v2755 = vpop.f32.mrb[0].mxu0
      %v2756 = vpop.f32.mrb[0].mxu0
      %v2757 = vadd.f32 0.0, %v2756
      %v2758 = vpop.f32.mrb[0].mxu0
      %2759 = vmatprep.mubr.bf16.mxu0 0
      %2760 = vmatmul.mubr.bf16.gmra.mrb[0].mxu0 %v2635
      %v2761 = vpop.f32.mrb[0].mxu0
      %v2762 = vadd.f32 0.0, %v2761
      %v2763 = vpop.f32.mrb[0].mxu0
      %v2764 = vpop.f32.mrb[0].mxu0
      %v2765 = vadd.f32 0.0, %v2764
      %v2766 = vpop.f32.mrb[0].mxu0
      %2767 = vmatprep.mubr.bf16.mxu0 0
      %2768 = vmatmul.mubr.bf16.gmra.mrb[0].mxu0 %v2638
      %v2769 = vpop.f32.mrb[0].mxu0
      %v2770 = vadd.f32 0.0, %v2769
      %v2771 = vpop.f32.mrb[0].mxu0
      %v2772 = vpop.f32.mrb[0].mxu0
      %v2773 = vadd.f32 0.0, %v2772
      %v2774 = vpop.f32.mrb[0].mxu0
      %2775 = vmatprep.mubr.bf16.mxu0 0
      %2776 = vmatmul.mubr.bf16.gmra.mrb[0].mxu0 %v2641
      %v2777 = vpop.f32.mrb[0].mxu0
      %v2778 = vadd.f32 0.0, %v2777
      %v2779 = vpop.f32.mrb[0].mxu0
      %v2780 = vpop.f32.mrb[0].mxu0
      %v2781 = vadd.f32 0.0, %v2780
      %v2782 = vpop.f32.mrb[0].mxu0
      %2783 = vmatprep.mubr.bf16.mxu0 0
      %2784 = vmatmul.mubr.bf16.gmra.mrb[0].mxu0 %v2644
      %v2785 = vpop.f32.mrb[0].mxu0
      %v2786 = vadd.f32 0.0, %v2785
      %v2787 = vpop.f32.mrb[0].mxu0
      %v2788 = vpop.f32.mrb[0].mxu0
      %v2789 = vadd.f32 0.0, %v2788
      %v2790 = vpop.f32.mrb[0].mxu0
      %2791 = vmatprep.mubr.bf16.mxu0 0
      %2792 = vmatmul.mubr.bf16.gmra.mrb[0].mxu0 %v2647
      %v2793 = vpop.f32.mrb[0].mxu0
      %v2794 = vadd.f32 0.0, %v2793
      %v2795 = vpop.f32.mrb[0].mxu0
      %v2796 = vpop.f32.mrb[0].mxu0
      %v2797 = vadd.f32 0.0, %v2796
      %v2798 = vpop.f32.mrb[0].mxu0
      %2799 = vmatprep.mubr.bf16.mxu0 0
      %2800 = vmatmul.mubr.bf16.gmra.mrb[0].mxu0 %v2650
      %v2801 = vpop.f32.mrb[0].mxu0
      %v2802 = vadd.f32 0.0, %v2801
      %v2803 = vpop.f32.mrb[0].mxu0
      %v2804 = vpop.f32.mrb[0].mxu0
      %v2805 = vadd.f32 0.0, %v2804
      %v2806 = vpop.f32.mrb[0].mxu0
      %2807 = vmatprep.mubr.bf16.mxu0 0
      %2808 = vmatmul.mubr.bf16.gmra.mrb[0].mxu0 %v2653
      %v2809 = vpop.f32.mrb[0].mxu0
      %v2810 = vadd.f32 0.0, %v2809
      %v2811 = vpop.f32.mrb[0].mxu0
      %v2812 = vpop.f32.mrb[0].mxu0
      %v2813 = vadd.f32 0.0, %v2812
      %v2814 = vpop.f32.mrb[0].mxu0
      %2815 = vdwg.mxu0
      %v2816 = vadd.f32 %v2494, %v2690
      %v2817 = vadd.f32 %v2495, %v2693
      %v2818 = vadd.f32 %v2496, %v2698
      %v2819 = vadd.f32 %v2497, %v2701
      %v2820 = vadd.f32 %v2498, %v2706
      %v2821 = vadd.f32 %v2499, %v2709
      %v2822 = vadd.f32 %v2500, %v2714
      %v2823 = vadd.f32 %v2501, %v2717
      %v2824 = vadd.f32 %v2502, %v2722
      %v2825 = vadd.f32 %v2503, %v2725
      %v2826 = vadd.f32 %v2504, %v2730
      %v2827 = vadd.f32 %v2505, %v2733
      %v2828 = vadd.f32 %v2506, %v2738
      %v2829 = vadd.f32 %v2507, %v2741
      %v2830 = vadd.f32 %v2508, %v2746
      %v2831 = vadd.f32 %v2509, %v2749
      %v2832 = vadd.f32 %v2510, %v2754
      %v2833 = vadd.f32 %v2511, %v2757
      %v2834 = vadd.f32 %v2512, %v2762
      %v2835 = vadd.f32 %v2513, %v2765
      %v2836 = vadd.f32 %v2514, %v2770
      %v2837 = vadd.f32 %v2515, %v2773
      %v2838 = vadd.f32 %v2516, %v2778
      %v2839 = vadd.f32 %v2517, %v2781
      %v2840 = vadd.f32 %v2518, %v2786
      %v2841 = vadd.f32 %v2519, %v2789
      %v2842 = vadd.f32 %v2520, %v2794
      %v2843 = vadd.f32 %v2521, %v2797
      %v2844 = vadd.f32 %v2522, %v2802
      %v2845 = vadd.f32 %v2523, %v2805
      %v2846 = vadd.f32 %v2524, %v2810
      %v2847 = vadd.f32 %v2525, %v2813
      %v2848 = vld [vmem:[%s2203 + $0xa] sm:$0xff]
      %v2849 = vld [vmem:[%s2203 + $0x12] sm:$0xff]
      %v2850 = vld [vmem:[%s2203 + $0x2a] sm:$0xff]
      %v2851 = vld [vmem:[%s2203 + $0x32] sm:$0xff]
      %v2852 = vld [vmem:[%s2203 + $0x4a] sm:$0xff]
      %v2853 = vld [vmem:[%s2203 + $0x52] sm:$0xff]
      %v2854 = vld [vmem:[%s2203 + $0x6a] sm:$0xff]
      %v2855 = vld [vmem:[%s2203 + $0x72] sm:$0xff]
      %v2856 = vld [vmem:[%s2203 + $0x8a] sm:$0xff]
      %v2857 = vld [vmem:[%s2203 + $0x92] sm:$0xff]
      %v2858 = vld [vmem:[%s2203 + $0xaa] sm:$0xff]
      %v2859 = vld [vmem:[%s2203 + $0xb2] sm:$0xff]
      %v2860 = vld [vmem:[%s2203 + $0xca] sm:$0xff]
      %v2861 = vld [vmem:[%s2203 + $0xd2] sm:$0xff]
      %v2862 = vld [vmem:[%s2203 + $0xea] sm:$0xff]
      %v2863 = vld [vmem:[%s2203 + $0xf2] sm:$0xff]
      %v2864 = vld [vmem:[%s2203 + $0x10a] sm:$0xff]
      %v2865 = vld [vmem:[%s2203 + $0x112] sm:$0xff]
      %v2866 = vld [vmem:[%s2203 + $0x12a] sm:$0xff]
      %v2867 = vld [vmem:[%s2203 + $0x132] sm:$0xff]
      %v2868 = vld [vmem:[%s2203 + $0x14a] sm:$0xff]
      %v2869 = vld [vmem:[%s2203 + $0x152] sm:$0xff]
      %v2870 = vld [vmem:[%s2203 + $0x16a] sm:$0xff]
      %v2871 = vld [vmem:[%s2203 + $0x172] sm:$0xff]
      %v2872 = vld [vmem:[%s2203 + $0x18a] sm:$0xff]
      %v2873 = vld [vmem:[%s2203 + $0x192] sm:$0xff]
      %v2874 = vld [vmem:[%s2203 + $0x1aa] sm:$0xff]
      %v2875 = vld [vmem:[%s2203 + $0x1b2] sm:$0xff]
      %v2876 = vld [vmem:[%s2203 + $0x1ca] sm:$0xff]
      %v2877 = vld [vmem:[%s2203 + $0x1d2] sm:$0xff]
      %v2878 = vld [vmem:[%s2203 + $0x1ea] sm:$0xff]
      %v2879 = vld [vmem:[%s2203 + $0x1f2] sm:$0xff]
      %v2880 = vpack.c.bf16 %v2849, %v2848
      %v2881 = vpack.c.bf16 %v2851, %v2850
      %v2882 = vpack.c.bf16 %v2853, %v2852
      %v2883 = vpack.c.bf16 %v2855, %v2854
      %v2884 = vpack.c.bf16 %v2857, %v2856
      %v2885 = vpack.c.bf16 %v2859, %v2858
      %v2886 = vpack.c.bf16 %v2861, %v2860
      %v2887 = vpack.c.bf16 %v2863, %v2862
      %v2888 = vpack.c.bf16 %v2865, %v2864
      %v2889 = vpack.c.bf16 %v2867, %v2866
      %v2890 = vpack.c.bf16 %v2869, %v2868
      %v2891 = vpack.c.bf16 %v2871, %v2870
      %v2892 = vpack.c.bf16 %v2873, %v2872
      %v2893 = vpack.c.bf16 %v2875, %v2874
      %v2894 = vpack.c.bf16 %v2877, %v2876
      %v2895 = vpack.c.bf16 %v2879, %v2878
      %s2896 = scalar_lea.vmem %s1, 256
      %v2897 = vld [vmem:[%s2896] sm:$0xf]
      %v2898 = vld [vmem:[%s2896 + $0x4] sm:$0xf]
      %v2899 = vld [vmem:[%s2896 + $0x8] sm:$0xf]
      %v2900 = vld [vmem:[%s2896 + $0xc] sm:$0xf]
      %v2901 = vld [vmem:[%s2896 + $0x10] sm:$0xf]
      %v2902 = vld [vmem:[%s2896 + $0x14] sm:$0xf]
      %v2903 = vld [vmem:[%s2896 + $0x18] sm:$0xf]
      %v2904 = vld [vmem:[%s2896 + $0x1c] sm:$0xf]
      %v2913 = vunpack.c.l.b16 %v2897
      %v2914 = vunpack.c.l.b16 %v2898
      %v2915 = vunpack.c.l.b16 %v2899
      %v2916 = vunpack.c.l.b16 %v2900
      %v2917 = vunpack.c.l.b16 %v2901
      %v2918 = vunpack.c.l.b16 %v2902
      %v2919 = vunpack.c.l.b16 %v2903
      %v2920 = vunpack.c.l.b16 %v2904
      %v2921 = vpack.c.b16 %v2914, %v2913
      %v2922 = vpack.c.b16 %v2916, %v2915
      %v2923 = vpack.c.b16 %v2918, %v2917
      %v2924 = vpack.c.b16 %v2920, %v2919
      %v2930 = vsel %vm471, %v2880, 0
      %v2933 = vsel %vm471, %v2881, 0
      %v2936 = vsel %vm471, %v2882, 0
      %v2939 = vsel %vm471, %v2883, 0
      %v2942 = vsel %vm471, %v2884, 0
      %v2945 = vsel %vm471, %v2885, 0
      %v2948 = vsel %vm471, %v2886, 0
      %v2951 = vsel %vm471, %v2887, 0
      %v2954 = vsel %vm471, %v2888, 0
      %v2957 = vsel %vm471, %v2889, 0
      %v2960 = vsel %vm471, %v2890, 0
      %v2963 = vsel %vm471, %v2891, 0
      %v2966 = vsel %vm471, %v2892, 0
      %v2969 = vsel %vm471, %v2893, 0
      %v2972 = vsel %vm471, %v2894, 0
      %v2975 = vsel %vm471, %v2895, 0
      %2977 = vmatprep.subr.bf16.mxu0 0
      %2978 = vmatpush1.bf16.msra.mxu0 %v2921
      %2979 = vmatprep.subr.bf16.mxu0 0
      %2980 = vmatpush1.bf16.msra.mxu0 %v2922
      %2981 = vmatprep.subr.bf16.mxu0 0
      %2982 = vmatpush1.bf16.msra.mxu0 %v2923
      %2983 = vmatprep.subr.bf16.mxu0 0
      %2984 = vmatpush1.bf16.msra.mxu0 %v2924
      %2985 = vmatprep.subr.bf16.mxu0 0
      %2986 = vmatpush1.bf16.msra.mxu0 0
      %2987 = vmatprep.subr.bf16.mxu0 0
      %2988 = vmatpush1.bf16.msra.mxu0 0
      %2989 = vmatprep.subr.bf16.mxu0 0
      %2990 = vmatpush1.bf16.msra.mxu0 0
      %2991 = vmatprep.subr.bf16.mxu0 0
      %2992 = vmatpush1.bf16.msra.mxu0 0
      %2993 = vmatprep.subr.bf16.mxu0 0
      %2994 = vmatpush1.bf16.msra.mxu0 0
      %2995 = vmatprep.subr.bf16.mxu0 0
      %2996 = vmatpush1.bf16.msra.mxu0 0
      %2997 = vmatprep.subr.bf16.mxu0 0
      %2998 = vmatpush1.bf16.msra.mxu0 0
      %2999 = vmatprep.subr.bf16.mxu0 0
      %3000 = vmatpush1.bf16.msra.mxu0 0
      %3001 = vmatprep.subr.bf16.mxu0 0
      %3002 = vmatpush1.bf16.msra.mxu0 0
      %3003 = vmatprep.subr.bf16.mxu0 0
      %3004 = vmatpush1.bf16.msra.mxu0 0
      %3005 = vmatprep.subr.bf16.mxu0 0
      %3006 = vmatpush1.bf16.msra.mxu0 0
      %3007 = vmatprep.subr.bf16.mxu0 0
      %3008 = vmatpush1.bf16.msra.mxu0 0
      %3009 = vmatprep.mubr.bf16.mxu0 0
      %3010 = vmatmul.mubr.bf16.gmra.mrb[0].mxu0 %v2930
      %v3011 = vpop.f32.mrb[0].mxu0
      %v3012 = vadd.f32 0.0, %v3011
      %v3013 = vpop.f32.mrb[0].mxu0
      %v3014 = vpop.f32.mrb[0].mxu0
      %v3015 = vadd.f32 0.0, %v3014
      %v3016 = vpop.f32.mrb[0].mxu0
      %3017 = vmatprep.mubr.bf16.mxu0 0
      %3018 = vmatmul.mubr.bf16.gmra.mrb[0].mxu0 %v2933
      %v3019 = vpop.f32.mrb[0].mxu0
      %v3020 = vadd.f32 0.0, %v3019
      %v3021 = vpop.f32.mrb[0].mxu0
      %v3022 = vpop.f32.mrb[0].mxu0
      %v3023 = vadd.f32 0.0, %v3022
      %v3024 = vpop.f32.mrb[0].mxu0
      %3025 = vmatprep.mubr.bf16.mxu0 0
      %3026 = vmatmul.mubr.bf16.gmra.mrb[0].mxu0 %v2936
      %v3027 = vpop.f32.mrb[0].mxu0
      %v3028 = vadd.f32 0.0, %v3027
      %v3029 = vpop.f32.mrb[0].mxu0
      %v3030 = vpop.f32.mrb[0].mxu0
      %v3031 = vadd.f32 0.0, %v3030
      %v3032 = vpop.f32.mrb[0].mxu0
      %3033 = vmatprep.mubr.bf16.mxu0 0
      %3034 = vmatmul.mubr.bf16.gmra.mrb[0].mxu0 %v2939
      %v3035 = vpop.f32.mrb[0].mxu0
      %v3036 = vadd.f32 0.0, %v3035
      %v3037 = vpop.f32.mrb[0].mxu0
      %v3038 = vpop.f32.mrb[0].mxu0
      %v3039 = vadd.f32 0.0, %v3038
      %v3040 = vpop.f32.mrb[0].mxu0
      %3041 = vmatprep.mubr.bf16.mxu0 0
      %3042 = vmatmul.mubr.bf16.gmra.mrb[0].mxu0 %v2942
      %v3043 = vpop.f32.mrb[0].mxu0
      %v3044 = vadd.f32 0.0, %v3043
      %v3045 = vpop.f32.mrb[0].mxu0
      %v3046 = vpop.f32.mrb[0].mxu0
      %v3047 = vadd.f32 0.0, %v3046
      %v3048 = vpop.f32.mrb[0].mxu0
      %3049 = vmatprep.mubr.bf16.mxu0 0
      %3050 = vmatmul.mubr.bf16.gmra.mrb[0].mxu0 %v2945
      %v3051 = vpop.f32.mrb[0].mxu0
      %v3052 = vadd.f32 0.0, %v3051
      %v3053 = vpop.f32.mrb[0].mxu0
      %v3054 = vpop.f32.mrb[0].mxu0
      %v3055 = vadd.f32 0.0, %v3054
      %v3056 = vpop.f32.mrb[0].mxu0
      %3057 = vmatprep.mubr.bf16.mxu0 0
      %3058 = vmatmul.mubr.bf16.gmra.mrb[0].mxu0 %v2948
      %v3059 = vpop.f32.mrb[0].mxu0
      %v3060 = vadd.f32 0.0, %v3059
      %v3061 = vpop.f32.mrb[0].mxu0
      %v3062 = vpop.f32.mrb[0].mxu0
      %v3063 = vadd.f32 0.0, %v3062
      %v3064 = vpop.f32.mrb[0].mxu0
      %3065 = vmatprep.mubr.bf16.mxu0 0
      %3066 = vmatmul.mubr.bf16.gmra.mrb[0].mxu0 %v2951
      %v3067 = vpop.f32.mrb[0].mxu0
      %v3068 = vadd.f32 0.0, %v3067
      %v3069 = vpop.f32.mrb[0].mxu0
      %v3070 = vpop.f32.mrb[0].mxu0
      %v3071 = vadd.f32 0.0, %v3070
      %v3072 = vpop.f32.mrb[0].mxu0
      %3073 = vmatprep.mubr.bf16.mxu0 0
      %3074 = vmatmul.mubr.bf16.gmra.mrb[0].mxu0 %v2954
      %v3075 = vpop.f32.mrb[0].mxu0
      %v3076 = vadd.f32 0.0, %v3075
      %v3077 = vpop.f32.mrb[0].mxu0
      %v3078 = vpop.f32.mrb[0].mxu0
      %v3079 = vadd.f32 0.0, %v3078
      %v3080 = vpop.f32.mrb[0].mxu0
      %3081 = vmatprep.mubr.bf16.mxu0 0
      %3082 = vmatmul.mubr.bf16.gmra.mrb[0].mxu0 %v2957
      %v3083 = vpop.f32.mrb[0].mxu0
      %v3084 = vadd.f32 0.0, %v3083
      %v3085 = vpop.f32.mrb[0].mxu0
      %v3086 = vpop.f32.mrb[0].mxu0
      %v3087 = vadd.f32 0.0, %v3086
      %v3088 = vpop.f32.mrb[0].mxu0
      %3089 = vmatprep.mubr.bf16.mxu0 0
      %3090 = vmatmul.mubr.bf16.gmra.mrb[0].mxu0 %v2960
      %v3091 = vpop.f32.mrb[0].mxu0
      %v3092 = vadd.f32 0.0, %v3091
      %v3093 = vpop.f32.mrb[0].mxu0
      %v3094 = vpop.f32.mrb[0].mxu0
      %v3095 = vadd.f32 0.0, %v3094
      %v3096 = vpop.f32.mrb[0].mxu0
      %3097 = vmatprep.mubr.bf16.mxu0 0
      %3098 = vmatmul.mubr.bf16.gmra.mrb[0].mxu0 %v2963
      %v3099 = vpop.f32.mrb[0].mxu0
      %v3100 = vadd.f32 0.0, %v3099
      %v3101 = vpop.f32.mrb[0].mxu0
      %v3102 = vpop.f32.mrb[0].mxu0
      %v3103 = vadd.f32 0.0, %v3102
      %v3104 = vpop.f32.mrb[0].mxu0
      %3105 = vmatprep.mubr.bf16.mxu0 0
      %3106 = vmatmul.mubr.bf16.gmra.mrb[0].mxu0 %v2966
      %v3107 = vpop.f32.mrb[0].mxu0
      %v3108 = vadd.f32 0.0, %v3107
      %v3109 = vpop.f32.mrb[0].mxu0
      %v3110 = vpop.f32.mrb[0].mxu0
      %v3111 = vadd.f32 0.0, %v3110
      %v3112 = vpop.f32.mrb[0].mxu0
      %3113 = vmatprep.mubr.bf16.mxu0 0
      %3114 = vmatmul.mubr.bf16.gmra.mrb[0].mxu0 %v2969
      %v3115 = vpop.f32.mrb[0].mxu0
      %v3116 = vadd.f32 0.0, %v3115
      %v3117 = vpop.f32.mrb[0].mxu0
      %v3118 = vpop.f32.mrb[0].mxu0
      %v3119 = vadd.f32 0.0, %v3118
      %v3120 = vpop.f32.mrb[0].mxu0
      %3121 = vmatprep.mubr.bf16.mxu0 0
      %3122 = vmatmul.mubr.bf16.gmra.mrb[0].mxu0 %v2972
      %v3123 = vpop.f32.mrb[0].mxu0
      %v3124 = vadd.f32 0.0, %v3123
      %v3125 = vpop.f32.mrb[0].mxu0
      %v3126 = vpop.f32.mrb[0].mxu0
      %v3127 = vadd.f32 0.0, %v3126
      %v3128 = vpop.f32.mrb[0].mxu0
      %3129 = vmatprep.mubr.bf16.mxu0 0
      %3130 = vmatmul.mubr.bf16.gmra.mrb[0].mxu0 %v2975
      %v3131 = vpop.f32.mrb[0].mxu0
      %v3132 = vadd.f32 0.0, %v3131
      %v3133 = vpop.f32.mrb[0].mxu0
      %v3134 = vpop.f32.mrb[0].mxu0
      %v3135 = vadd.f32 0.0, %v3134
      %v3136 = vpop.f32.mrb[0].mxu0
      %3137 = vdwg.mxu0
      %v3138 = vadd.f32 %v2816, %v3012
      %v3139 = vadd.f32 %v2817, %v3015
      %v3140 = vadd.f32 %v2818, %v3020
      %v3141 = vadd.f32 %v2819, %v3023
      %v3142 = vadd.f32 %v2820, %v3028
      %v3143 = vadd.f32 %v2821, %v3031
      %v3144 = vadd.f32 %v2822, %v3036
      %v3145 = vadd.f32 %v2823, %v3039
      %v3146 = vadd.f32 %v2824, %v3044
      %v3147 = vadd.f32 %v2825, %v3047
      %v3148 = vadd.f32 %v2826, %v3052
      %v3149 = vadd.f32 %v2827, %v3055
      %v3150 = vadd.f32 %v2828, %v3060
      %v3151 = vadd.f32 %v2829, %v3063
      %v3152 = vadd.f32 %v2830, %v3068
      %v3153 = vadd.f32 %v2831, %v3071
      %v3154 = vadd.f32 %v2832, %v3076
      %v3155 = vadd.f32 %v2833, %v3079
      %v3156 = vadd.f32 %v2834, %v3084
      %v3157 = vadd.f32 %v2835, %v3087
      %v3158 = vadd.f32 %v2836, %v3092
      %v3159 = vadd.f32 %v2837, %v3095
      %v3160 = vadd.f32 %v2838, %v3100
      %v3161 = vadd.f32 %v2839, %v3103
      %v3162 = vadd.f32 %v2840, %v3108
      %v3163 = vadd.f32 %v2841, %v3111
      %v3164 = vadd.f32 %v2842, %v3116
      %v3165 = vadd.f32 %v2843, %v3119
      %v3166 = vadd.f32 %v2844, %v3124
      %v3167 = vadd.f32 %v2845, %v3127
      %v3168 = vadd.f32 %v2846, %v3132
      %v3169 = vadd.f32 %v2847, %v3135
      %v3170 = vld [vmem:[%s2] sm:$0x1]
      %v3172 = vlaneseq
      %v3173 = vshrl.u32 %v3172, 7
      %v3174 = vsub.s32 0, %v3173
      %v3175 = vrot.slane %v3170, %v3174
      %v3177 = vmul.f32 %v3138, %v3175
      %v3178 = vmul.f32 %v3139, %v3175
      %v3179 = vmul.f32 %v3140, %v3175
      %v3180 = vmul.f32 %v3141, %v3175
      %v3181 = vmul.f32 %v3142, %v3175
      %v3182 = vmul.f32 %v3143, %v3175
      %v3183 = vmul.f32 %v3144, %v3175
      %v3184 = vmul.f32 %v3145, %v3175
      %v3185 = vmul.f32 %v3146, %v3175
      %v3186 = vmul.f32 %v3147, %v3175
      %v3187 = vmul.f32 %v3148, %v3175
      %v3188 = vmul.f32 %v3149, %v3175
      %v3189 = vmul.f32 %v3150, %v3175
      %v3190 = vmul.f32 %v3151, %v3175
      %v3191 = vmul.f32 %v3152, %v3175
      %v3192 = vmul.f32 %v3153, %v3175
      %v3193 = vmul.f32 %v3154, %v3175
      %v3194 = vmul.f32 %v3155, %v3175
      %v3195 = vmul.f32 %v3156, %v3175
      %v3196 = vmul.f32 %v3157, %v3175
      %v3197 = vmul.f32 %v3158, %v3175
      %v3198 = vmul.f32 %v3159, %v3175
      %v3199 = vmul.f32 %v3160, %v3175
      %v3200 = vmul.f32 %v3161, %v3175
      %v3201 = vmul.f32 %v3162, %v3175
      %v3202 = vmul.f32 %v3163, %v3175
      %v3203 = vmul.f32 %v3164, %v3175
      %v3204 = vmul.f32 %v3165, %v3175
      %v3205 = vmul.f32 %v3166, %v3175
      %v3206 = vmul.f32 %v3167, %v3175
      %v3207 = vmul.f32 %v3168, %v3175
      %v3208 = vmul.f32 %v3169, %v3175
      %v3209 = vld [vmem:[%s3] sm:$0x1]
      %v3211 = vlaneseq
      %v3212 = vshrl.u32 %v3211, 7
      %v3213 = vsub.s32 0, %v3212
      %v3214 = vrot.slane %v3209, %v3213
      %v3216 = vadd.f32 %v3177, %v3214
      %v3217 = vadd.f32 %v3178, %v3214
      %v3218 = vadd.f32 %v3179, %v3214
      %v3219 = vadd.f32 %v3180, %v3214
      %v3220 = vadd.f32 %v3181, %v3214
      %v3221 = vadd.f32 %v3182, %v3214
      %v3222 = vadd.f32 %v3183, %v3214
      %v3223 = vadd.f32 %v3184, %v3214
      %v3224 = vadd.f32 %v3185, %v3214
      %v3225 = vadd.f32 %v3186, %v3214
      %v3226 = vadd.f32 %v3187, %v3214
      %v3227 = vadd.f32 %v3188, %v3214
      %v3228 = vadd.f32 %v3189, %v3214
      %v3229 = vadd.f32 %v3190, %v3214
      %v3230 = vadd.f32 %v3191, %v3214
      %v3231 = vadd.f32 %v3192, %v3214
      %v3232 = vadd.f32 %v3193, %v3214
      %v3233 = vadd.f32 %v3194, %v3214
      %v3234 = vadd.f32 %v3195, %v3214
      %v3235 = vadd.f32 %v3196, %v3214
      %v3236 = vadd.f32 %v3197, %v3214
      %v3237 = vadd.f32 %v3198, %v3214
      %v3238 = vadd.f32 %v3199, %v3214
      %v3239 = vadd.f32 %v3200, %v3214
      %v3240 = vadd.f32 %v3201, %v3214
      %v3241 = vadd.f32 %v3202, %v3214
      %v3242 = vadd.f32 %v3203, %v3214
      %v3243 = vadd.f32 %v3204, %v3214
      %v3244 = vadd.f32 %v3205, %v3214
      %v3245 = vadd.f32 %v3206, %v3214
      %v3246 = vadd.f32 %v3207, %v3214
      %v3247 = vadd.f32 %v3208, %v3214
      %v3248 = vmax.f32 %v3216, 0.0
      %v3249 = vmax.f32 %v3217, 0.0
      %v3250 = vmax.f32 %v3218, 0.0
      %v3251 = vmax.f32 %v3219, 0.0
      %v3252 = vmax.f32 %v3220, 0.0
      %v3253 = vmax.f32 %v3221, 0.0
      %v3254 = vmax.f32 %v3222, 0.0
      %v3255 = vmax.f32 %v3223, 0.0
      %v3256 = vmax.f32 %v3224, 0.0
      %v3257 = vmax.f32 %v3225, 0.0
      %v3258 = vmax.f32 %v3226, 0.0
      %v3259 = vmax.f32 %v3227, 0.0
      %v3260 = vmax.f32 %v3228, 0.0
      %v3261 = vmax.f32 %v3229, 0.0
      %v3262 = vmax.f32 %v3230, 0.0
      %v3263 = vmax.f32 %v3231, 0.0
      %v3264 = vmax.f32 %v3232, 0.0
      %v3265 = vmax.f32 %v3233, 0.0
      %v3266 = vmax.f32 %v3234, 0.0
      %v3267 = vmax.f32 %v3235, 0.0
      %v3268 = vmax.f32 %v3236, 0.0
      %v3269 = vmax.f32 %v3237, 0.0
      %v3270 = vmax.f32 %v3238, 0.0
      %v3271 = vmax.f32 %v3239, 0.0
      %v3272 = vmax.f32 %v3240, 0.0
      %v3273 = vmax.f32 %v3241, 0.0
      %v3274 = vmax.f32 %v3242, 0.0
      %v3275 = vmax.f32 %v3243, 0.0
      %v3276 = vmax.f32 %v3244, 0.0
      %v3277 = vmax.f32 %v3245, 0.0
      %v3278 = vmax.f32 %v3246, 0.0
      %v3279 = vmax.f32 %v3247, 0.0
      %3280 = vst.msk [vmem:[#allocation2] sm:$0xff] %vm471, 0.0
      %3281 = vst.msk [vmem:[#allocation2 + $0x8] sm:$0xff] %vm471, 0.0
      %vm3282 = vcmask 517120
      %3283 = vst.msk [vmem:[#allocation2 + $0x10] sm:$0x3] %vm3282, 0.0
      %3284 = vst.msk [vmem:[#allocation2 + $0x18] sm:$0xff] %vm471, 0.0
      %3285 = vst.msk [vmem:[#allocation2 + $0x20] sm:$0xff] %vm471, 0.0
      %3286 = vst.msk [vmem:[#allocation2 + $0x28] sm:$0x3] %vm3282, 0.0
      %3287 = vst.msk [vmem:[#allocation2 + $0x30] sm:$0xff] %vm471, 0.0
      %3288 = vst.msk [vmem:[#allocation2 + $0x38] sm:$0xff] %vm471, 0.0
      %3289 = vst.msk [vmem:[#allocation2 + $0x40] sm:$0x3] %vm3282, 0.0
      %3290 = vst.msk [vmem:[#allocation2 + $0x48] sm:$0xff] %vm471, 0.0
      %3291 = vst.msk [vmem:[#allocation2 + $0x50] sm:$0xff] %vm471, 0.0
      %3292 = vst.msk [vmem:[#allocation2 + $0x58] sm:$0x3] %vm3282, 0.0
      %3293 = vst.msk [vmem:[#allocation2 + $0x60] sm:$0xff] %vm471, 0.0
      %3294 = vst.msk [vmem:[#allocation2 + $0x68] sm:$0xff] %vm471, 0.0
      %3295 = vst.msk [vmem:[#allocation2 + $0x70] sm:$0x3] %vm3282, 0.0
      %3296 = vst.msk [vmem:[#allocation2 + $0x78] sm:$0xff] %vm471, 0.0
      %3297 = vst.msk [vmem:[#allocation2 + $0x80] sm:$0xff] %vm471, 0.0
      %3298 = vst.msk [vmem:[#allocation2 + $0x88] sm:$0x3] %vm3282, 0.0
      %3299 = vst.msk [vmem:[#allocation2 + $0x90] sm:$0xff] %vm471, 0.0
      %3300 = vst.msk [vmem:[#allocation2 + $0x98] sm:$0xff] %vm471, 0.0
      %3301 = vst.msk [vmem:[#allocation2 + $0xa0] sm:$0x3] %vm3282, 0.0
      %3302 = vst.msk [vmem:[#allocation2 + $0xa8] sm:$0xff] %vm471, 0.0
      %3303 = vst.msk [vmem:[#allocation2 + $0xb0] sm:$0xff] %vm471, 0.0
      %3304 = vst.msk [vmem:[#allocation2 + $0xb8] sm:$0x3] %vm3282, 0.0
      %3305 = vst.msk [vmem:[#allocation2 + $0xc0] sm:$0xff] %vm471, 0.0
      %3306 = vst.msk [vmem:[#allocation2 + $0xc8] sm:$0xff] %vm471, 0.0
      %3307 = vst.msk [vmem:[#allocation2 + $0xd0] sm:$0x3] %vm3282, 0.0
      %3308 = vst.msk [vmem:[#allocation2 + $0xd8] sm:$0xff] %vm471, 0.0
      %3309 = vst.msk [vmem:[#allocation2 + $0xe0] sm:$0xff] %vm471, 0.0
      %3310 = vst.msk [vmem:[#allocation2 + $0xe8] sm:$0x3] %vm3282, 0.0
      %3311 = vst.msk [vmem:[#allocation2 + $0xf0] sm:$0xff] %vm471, 0.0
      %3312 = vst.msk [vmem:[#allocation2 + $0xf8] sm:$0xff] %vm471, 0.0
      %3313 = vst.msk [vmem:[#allocation2 + $0x100] sm:$0x3] %vm3282, 0.0
      %3314 = vst.msk [vmem:[#allocation2 + $0x108] sm:$0xff] %vm471, 0.0
      %3315 = vst.msk [vmem:[#allocation2 + $0x110] sm:$0xff] %vm471, 0.0
      %3316 = vst.msk [vmem:[#allocation2 + $0x118] sm:$0x3] %vm3282, 0.0
      %3317 = vst.msk [vmem:[#allocation2 + $0x120] sm:$0xff] %vm471, 0.0
      %3318 = vst.msk [vmem:[#allocation2 + $0x128] sm:$0xff] %vm471, 0.0
      %3319 = vst.msk [vmem:[#allocation2 + $0x130] sm:$0x3] %vm3282, 0.0
      %3320 = vst.msk [vmem:[#allocation2 + $0x138] sm:$0xff] %vm471, 0.0
      %3321 = vst.msk [vmem:[#allocation2 + $0x140] sm:$0xff] %vm471, 0.0
      %3322 = vst.msk [vmem:[#allocation2 + $0x148] sm:$0x3] %vm3282, 0.0
      %3323 = vst.msk [vmem:[#allocation2 + $0x150] sm:$0xff] %vm471, 0.0
      %3324 = vst.msk [vmem:[#allocation2 + $0x158] sm:$0xff] %vm471, 0.0
      %3325 = vst.msk [vmem:[#allocation2 + $0x160] sm:$0x3] %vm3282, 0.0
      %3326 = vst.msk [vmem:[#allocation2 + $0x168] sm:$0xff] %vm471, 0.0
      %3327 = vst.msk [vmem:[#allocation2 + $0x170] sm:$0xff] %vm471, 0.0
      %3328 = vst.msk [vmem:[#allocation2 + $0x178] sm:$0x3] %vm3282, 0.0
      %3329 = vst.msk [vmem:[#allocation2 + $0x180] sm:$0xff] %vm471, 0.0
      %3330 = vst.msk [vmem:[#allocation2 + $0x188] sm:$0xff] %vm471, 0.0
      %3331 = vst.msk [vmem:[#allocation2 + $0x190] sm:$0x3] %vm3282, 0.0
      %3332 = vst.msk [vmem:[#allocation2 + $0x198] sm:$0xff] %vm471, 0.0
      %3333 = vst.msk [vmem:[#allocation2 + $0x1a0] sm:$0xff] %vm471, 0.0
      %3334 = vst.msk [vmem:[#allocation2 + $0x1a8] sm:$0x3] %vm3282, 0.0
      %s3335 = scalar_lea.vmem [#allocation2], 24
      %3336 = vst.msk [vmem:[%s3335 + $0x1] sm:$0xff] %vm471, %v3248
      %3337 = vst.msk [vmem:[%s3335 + $0x9] sm:$0xff] %vm471, %v3249
      %3338 = vst.msk [vmem:[%s3335 + $0x19] sm:$0xff] %vm471, %v3250
      %3339 = vst.msk [vmem:[%s3335 + $0x21] sm:$0xff] %vm471, %v3251
      %3340 = vst.msk [vmem:[%s3335 + $0x31] sm:$0xff] %vm471, %v3252
      %3341 = vst.msk [vmem:[%s3335 + $0x39] sm:$0xff] %vm471, %v3253
      %3342 = vst.msk [vmem:[%s3335 + $0x49] sm:$0xff] %vm471, %v3254
      %3343 = vst.msk [vmem:[%s3335 + $0x51] sm:$0xff] %vm471, %v3255
      %3344 = vst.msk [vmem:[%s3335 + $0x61] sm:$0xff] %vm471, %v3256
      %3345 = vst.msk [vmem:[%s3335 + $0x69] sm:$0xff] %vm471, %v3257
      %3346 = vst.msk [vmem:[%s3335 + $0x79] sm:$0xff] %vm471, %v3258
      %3347 = vst.msk [vmem:[%s3335 + $0x81] sm:$0xff] %vm471, %v3259
      %3348 = vst.msk [vmem:[%s3335 + $0x91] sm:$0xff] %vm471, %v3260
      %3349 = vst.msk [vmem:[%s3335 + $0x99] sm:$0xff] %vm471, %v3261
      %3350 = vst.msk [vmem:[%s3335 + $0xa9] sm:$0xff] %vm471, %v3262
      %3351 = vst.msk [vmem:[%s3335 + $0xb1] sm:$0xff] %vm471, %v3263
      %3352 = vst.msk [vmem:[%s3335 + $0xc1] sm:$0xff] %vm471, %v3264
      %3353 = vst.msk [vmem:[%s3335 + $0xc9] sm:$0xff] %vm471, %v3265
      %3354 = vst.msk [vmem:[%s3335 + $0xd9] sm:$0xff] %vm471, %v3266
      %3355 = vst.msk [vmem:[%s3335 + $0xe1] sm:$0xff] %vm471, %v3267
      %3356 = vst.msk [vmem:[%s3335 + $0xf1] sm:$0xff] %vm471, %v3268
      %3357 = vst.msk [vmem:[%s3335 + $0xf9] sm:$0xff] %vm471, %v3269
      %3358 = vst.msk [vmem:[%s3335 + $0x109] sm:$0xff] %vm471, %v3270
      %3359 = vst.msk [vmem:[%s3335 + $0x111] sm:$0xff] %vm471, %v3271
      %3360 = vst.msk [vmem:[%s3335 + $0x121] sm:$0xff] %vm471, %v3272
      %3361 = vst.msk [vmem:[%s3335 + $0x129] sm:$0xff] %vm471, %v3273
      %3362 = vst.msk [vmem:[%s3335 + $0x139] sm:$0xff] %vm471, %v3274
      %3363 = vst.msk [vmem:[%s3335 + $0x141] sm:$0xff] %vm471, %v3275
      %3364 = vst.msk [vmem:[%s3335 + $0x151] sm:$0xff] %vm471, %v3276
      %3365 = vst.msk [vmem:[%s3335 + $0x159] sm:$0xff] %vm471, %v3277
      %3366 = vst.msk [vmem:[%s3335 + $0x169] sm:$0xff] %vm471, %v3278
      %3367 = vst.msk [vmem:[%s3335 + $0x171] sm:$0xff] %vm471, %v3279
      %v3368 = vld [vmem:[#allocation2] sm:$0xff]
      %v3369 = vld [vmem:[#allocation2 + $0x8] sm:$0xff]
      %v3370 = vld [vmem:[#allocation2 + $0x18] sm:$0xff]
      %v3371 = vld [vmem:[#allocation2 + $0x20] sm:$0xff]
      %v3372 = vld [vmem:[#allocation2 + $0x30] sm:$0xff]
      %v3373 = vld [vmem:[#allocation2 + $0x38] sm:$0xff]
      %v3374 = vld [vmem:[#allocation2 + $0x48] sm:$0xff]
      %v3375 = vld [vmem:[#allocation2 + $0x50] sm:$0xff]
      %v3376 = vld [vmem:[#allocation2 + $0x60] sm:$0xff]
      %v3377 = vld [vmem:[#allocation2 + $0x68] sm:$0xff]
      %v3378 = vld [vmem:[#allocation2 + $0x78] sm:$0xff]
      %v3379 = vld [vmem:[#allocation2 + $0x80] sm:$0xff]
      %v3380 = vld [vmem:[#allocation2 + $0x90] sm:$0xff]
      %v3381 = vld [vmem:[#allocation2 + $0x98] sm:$0xff]
      %v3382 = vld [vmem:[#allocation2 + $0xa8] sm:$0xff]
      %v3383 = vld [vmem:[#allocation2 + $0xb0] sm:$0xff]
      %v3384 = vld [vmem:[#allocation2 + $0xc0] sm:$0xff]
      %v3385 = vld [vmem:[#allocation2 + $0xc8] sm:$0xff]
      %v3386 = vld [vmem:[#allocation2 + $0xd8] sm:$0xff]
      %v3387 = vld [vmem:[#allocation2 + $0xe0] sm:$0xff]
      %v3388 = vld [vmem:[#allocation2 + $0xf0] sm:$0xff]
      %v3389 = vld [vmem:[#allocation2 + $0xf8] sm:$0xff]
      %v3390 = vld [vmem:[#allocation2 + $0x108] sm:$0xff]
      %v3391 = vld [vmem:[#allocation2 + $0x110] sm:$0xff]
      %v3392 = vld [vmem:[#allocation2 + $0x120] sm:$0xff]
      %v3393 = vld [vmem:[#allocation2 + $0x128] sm:$0xff]
      %v3394 = vld [vmem:[#allocation2 + $0x138] sm:$0xff]
      %v3395 = vld [vmem:[#allocation2 + $0x140] sm:$0xff]
      %v3396 = vld [vmem:[#allocation2 + $0x150] sm:$0xff]
      %v3397 = vld [vmem:[#allocation2 + $0x158] sm:$0xff]
      %v3398 = vld [vmem:[#allocation2 + $0x168] sm:$0xff]
      %v3399 = vld [vmem:[#allocation2 + $0x170] sm:$0xff]
      %v3400 = vpack.c.bf16 %v3369, %v3368
      %v3401 = vpack.c.bf16 %v3371, %v3370
      %v3402 = vpack.c.bf16 %v3373, %v3372
      %v3403 = vpack.c.bf16 %v3375, %v3374
      %v3404 = vpack.c.bf16 %v3377, %v3376
      %v3405 = vpack.c.bf16 %v3379, %v3378
      %v3406 = vpack.c.bf16 %v3381, %v3380
      %v3407 = vpack.c.bf16 %v3383, %v3382
      %v3408 = vpack.c.bf16 %v3385, %v3384
      %v3409 = vpack.c.bf16 %v3387, %v3386
      %v3410 = vpack.c.bf16 %v3389, %v3388
      %v3411 = vpack.c.bf16 %v3391, %v3390
      %v3412 = vpack.c.bf16 %v3393, %v3392
      %v3413 = vpack.c.bf16 %v3395, %v3394
      %v3414 = vpack.c.bf16 %v3397, %v3396
      %v3415 = vpack.c.bf16 %v3399, %v3398
      %v3416 = vld [vmem:[%s4] sm:$0xf]
      %v3417 = vld [vmem:[%s4 + $0x4] sm:$0xf]
      %v3418 = vld [vmem:[%s4 + $0x8] sm:$0xf]
      %v3419 = vld [vmem:[%s4 + $0xc] sm:$0xf]
      %v3420 = vld [vmem:[%s4 + $0x10] sm:$0xf]
      %v3421 = vld [vmem:[%s4 + $0x14] sm:$0xf]
      %v3422 = vld [vmem:[%s4 + $0x18] sm:$0xf]
      %v3423 = vld [vmem:[%s4 + $0x1c] sm:$0xf]
      %v3424 = vld [vmem:[#allocation2 + $0x1] sm:$0xff]
      %v3425 = vld [vmem:[#allocation2 + $0x9] sm:$0xff]
      %v3426 = vld [vmem:[#allocation2 + $0x19] sm:$0xff]
      %v3427 = vld [vmem:[#allocation2 + $0x21] sm:$0xff]
      %v3428 = vld [vmem:[#allocation2 + $0x31] sm:$0xff]
      %v3429 = vld [vmem:[#allocation2 + $0x39] sm:$0xff]
      %v3430 = vld [vmem:[#allocation2 + $0x49] sm:$0xff]
      %v3431 = vld [vmem:[#allocation2 + $0x51] sm:$0xff]
      %v3432 = vld [vmem:[#allocation2 + $0x61] sm:$0xff]
      %v3433 = vld [vmem:[#allocation2 + $0x69] sm:$0xff]
      %v3434 = vld [vmem:[#allocation2 + $0x79] sm:$0xff]
      %v3435 = vld [vmem:[#allocation2 + $0x81] sm:$0xff]
      %v3436 = vld [vmem:[#allocation2 + $0x91] sm:$0xff]
      %v3437 = vld [vmem:[#allocation2 + $0x99] sm:$0xff]
      %v3438 = vld [vmem:[#allocation2 + $0xa9] sm:$0xff]
      %v3439 = vld [vmem:[#allocation2 + $0xb1] sm:$0xff]
      %v3440 = vld [vmem:[#allocation2 + $0xc1] sm:$0xff]
      %v3441 = vld [vmem:[#allocation2 + $0xc9] sm:$0xff]
      %v3442 = vld [vmem:[#allocation2 + $0xd9] sm:$0xff]
      %v3443 = vld [vmem:[#allocation2 + $0xe1] sm:$0xff]
      %v3444 = vld [vmem:[#allocation2 + $0xf1] sm:$0xff]
      %v3445 = vld [vmem:[#allocation2 + $0xf9] sm:$0xff]
      %v3446 = vld [vmem:[#allocation2 + $0x109] sm:$0xff]
      %v3447 = vld [vmem:[#allocation2 + $0x111] sm:$0xff]
      %v3448 = vld [vmem:[#allocation2 + $0x121] sm:$0xff]
      %v3449 = vld [vmem:[#allocation2 + $0x129] sm:$0xff]
      %v3450 = vld [vmem:[#allocation2 + $0x139] sm:$0xff]
      %v3451 = vld [vmem:[#allocation2 + $0x141] sm:$0xff]
      %v3452 = vld [vmem:[#allocation2 + $0x151] sm:$0xff]
      %v3453 = vld [vmem:[#allocation2 + $0x159] sm:$0xff]
      %v3454 = vld [vmem:[#allocation2 + $0x169] sm:$0xff]
      %v3455 = vld [vmem:[#allocation2 + $0x171] sm:$0xff]
      %v3456 = vpack.c.bf16 %v3425, %v3424
      %v3457 = vpack.c.bf16 %v3427, %v3426
      %v3458 = vpack.c.bf16 %v3429, %v3428
      %v3459 = vpack.c.bf16 %v3431, %v3430
      %v3460 = vpack.c.bf16 %v3433, %v3432
      %v3461 = vpack.c.bf16 %v3435, %v3434
      %v3462 = vpack.c.bf16 %v3437, %v3436
      %v3463 = vpack.c.bf16 %v3439, %v3438
      %v3464 = vpack.c.bf16 %v3441, %v3440
      %v3465 = vpack.c.bf16 %v3443, %v3442
      %v3466 = vpack.c.bf16 %v3445, %v3444
      %v3467 = vpack.c.bf16 %v3447, %v3446
      %v3468 = vpack.c.bf16 %v3449, %v3448
      %v3469 = vpack.c.bf16 %v3451, %v3450
      %v3470 = vpack.c.bf16 %v3453, %v3452
      %v3471 = vpack.c.bf16 %v3455, %v3454
      %s3472 = scalar_lea.vmem %s4, 32
      %v3473 = vld [vmem:[%s3472] sm:$0xf]
      %v3474 = vld [vmem:[%s3472 + $0x4] sm:$0xf]
      %v3475 = vld [vmem:[%s3472 + $0x8] sm:$0xf]
      %v3476 = vld [vmem:[%s3472 + $0xc] sm:$0xf]
      %v3477 = vld [vmem:[%s3472 + $0x10] sm:$0xf]
      %v3478 = vld [vmem:[%s3472 + $0x14] sm:$0xf]
      %v3479 = vld [vmem:[%s3472 + $0x18] sm:$0xf]
      %v3480 = vld [vmem:[%s3472 + $0x1c] sm:$0xf]
      %v3489 = vunpack.c.l.b16 %v3473
      %v3490 = vunpack.c.l.b16 %v3474
      %v3491 = vunpack.c.l.b16 %v3475
      %v3492 = vunpack.c.l.b16 %v3476
      %v3493 = vunpack.c.l.b16 %v3477
      %v3494 = vunpack.c.l.b16 %v3478
      %v3495 = vunpack.c.l.b16 %v3479
      %v3496 = vunpack.c.l.b16 %v3480
      %v3497 = vpack.c.b16 %v3490, %v3489
      %v3498 = vpack.c.b16 %v3492, %v3491
      %v3499 = vpack.c.b16 %v3494, %v3493
      %v3500 = vpack.c.b16 %v3496, %v3495
      %v3506 = vsel %vm471, %v3456, 0
      %v3509 = vsel %vm471, %v3457, 0
      %v3512 = vsel %vm471, %v3458, 0
      %v3515 = vsel %vm471, %v3459, 0
      %v3518 = vsel %vm471, %v3460, 0
      %v3521 = vsel %vm471, %v3461, 0
      %v3524 = vsel %vm471, %v3462, 0
      %v3527 = vsel %vm471, %v3463, 0
      %v3530 = vsel %vm471, %v3464, 0
      %v3533 = vsel %vm471, %v3465, 0
      %v3536 = vsel %vm471, %v3466, 0
      %v3539 = vsel %vm471, %v3467, 0
      %v3542 = vsel %vm471, %v3468, 0
      %v3545 = vsel %vm471, %v3469, 0
      %v3548 = vsel %vm471, %v3470, 0
      %v3551 = vsel %vm471, %v3471, 0
      %3553 = vmatprep.subr.bf16.mxu0 0
      %3554 = vmatpush1.bf16.msra.mxu0 %v3497
      %3555 = vmatprep.subr.bf16.mxu0 0
      %3556 = vmatpush1.bf16.msra.mxu0 %v3498
      %3557 = vmatprep.subr.bf16.mxu0 0
      %3558 = vmatpush1.bf16.msra.mxu0 %v3499
      %3559 = vmatprep.subr.bf16.mxu0 0
      %3560 = vmatpush1.bf16.msra.mxu0 %v3500
      %3561 = vmatprep.subr.bf16.mxu0 0
      %3562 = vmatpush1.bf16.msra.mxu0 0
      %3563 = vmatprep.subr.bf16.mxu0 0
      %3564 = vmatpush1.bf16.msra.mxu0 0
      %3565 = vmatprep.subr.bf16.mxu0 0
      %3566 = vmatpush1.bf16.msra.mxu0 0
      %3567 = vmatprep.subr.bf16.mxu0 0
      %3568 = vmatpush1.bf16.msra.mxu0 0
      %3569 = vmatprep.subr.bf16.mxu0 0
      %3570 = vmatpush1.bf16.msra.mxu0 0
      %3571 = vmatprep.subr.bf16.mxu0 0
      %3572 = vmatpush1.bf16.msra.mxu0 0
      %3573 = vmatprep.subr.bf16.mxu0 0
      %3574 = vmatpush1.bf16.msra.mxu0 0
      %3575 = vmatprep.subr.bf16.mxu0 0
      %3576 = vmatpush1.bf16.msra.mxu0 0
      %3577 = vmatprep.subr.bf16.mxu0 0
      %3578 = vmatpush1.bf16.msra.mxu0 0
      %3579 = vmatprep.subr.bf16.mxu0 0
      %3580 = vmatpush1.bf16.msra.mxu0 0
      %3581 = vmatprep.subr.bf16.mxu0 0
      %3582 = vmatpush1.bf16.msra.mxu0 0
      %3583 = vmatprep.subr.bf16.mxu0 0
      %3584 = vmatpush1.bf16.msra.mxu0 0
      %3585 = vmatprep.mubr.bf16.mxu0 0
      %3586 = vmatmul.mubr.bf16.gmra.mrb[0].mxu0 %v3506
      %v3587 = vpop.f32.mrb[0].mxu0
      %v3588 = vadd.f32 0.0, %v3587
      %v3589 = vpop.f32.mrb[0].mxu0
      %v3590 = vpop.f32.mrb[0].mxu0
      %v3591 = vadd.f32 0.0, %v3590
      %v3592 = vpop.f32.mrb[0].mxu0
      %3593 = vmatprep.mubr.bf16.mxu0 0
      %3594 = vmatmul.mubr.bf16.gmra.mrb[0].mxu0 %v3509
      %v3595 = vpop.f32.mrb[0].mxu0
      %v3596 = vadd.f32 0.0, %v3595
      %v3597 = vpop.f32.mrb[0].mxu0
      %v3598 = vpop.f32.mrb[0].mxu0
      %v3599 = vadd.f32 0.0, %v3598
      %v3600 = vpop.f32.mrb[0].mxu0
      %3601 = vmatprep.mubr.bf16.mxu0 0
      %3602 = vmatmul.mubr.bf16.gmra.mrb[0].mxu0 %v3512
      %v3603 = vpop.f32.mrb[0].mxu0
      %v3604 = vadd.f32 0.0, %v3603
      %v3605 = vpop.f32.mrb[0].mxu0
      %v3606 = vpop.f32.mrb[0].mxu0
      %v3607 = vadd.f32 0.0, %v3606
      %v3608 = vpop.f32.mrb[0].mxu0
      %3609 = vmatprep.mubr.bf16.mxu0 0
      %3610 = vmatmul.mubr.bf16.gmra.mrb[0].mxu0 %v3515
      %v3611 = vpop.f32.mrb[0].mxu0
      %v3612 = vadd.f32 0.0, %v3611
      %v3613 = vpop.f32.mrb[0].mxu0
      %v3614 = vpop.f32.mrb[0].mxu0
      %v3615 = vadd.f32 0.0, %v3614
      %v3616 = vpop.f32.mrb[0].mxu0
      %3617 = vmatprep.mubr.bf16.mxu0 0
      %3618 = vmatmul.mubr.bf16.gmra.mrb[0].mxu0 %v3518
      %v3619 = vpop.f32.mrb[0].mxu0
      %v3620 = vadd.f32 0.0, %v3619
      %v3621 = vpop.f32.mrb[0].mxu0
      %v3622 = vpop.f32.mrb[0].mxu0
      %v3623 = vadd.f32 0.0, %v3622
      %v3624 = vpop.f32.mrb[0].mxu0
      %3625 = vmatprep.mubr.bf16.mxu0 0
      %3626 = vmatmul.mubr.bf16.gmra.mrb[0].mxu0 %v3521
      %v3627 = vpop.f32.mrb[0].mxu0
      %v3628 = vadd.f32 0.0, %v3627
      %v3629 = vpop.f32.mrb[0].mxu0
      %v3630 = vpop.f32.mrb[0].mxu0
      %v3631 = vadd.f32 0.0, %v3630
      %v3632 = vpop.f32.mrb[0].mxu0
      %3633 = vmatprep.mubr.bf16.mxu0 0
      %3634 = vmatmul.mubr.bf16.gmra.mrb[0].mxu0 %v3524
      %v3635 = vpop.f32.mrb[0].mxu0
      %v3636 = vadd.f32 0.0, %v3635
      %v3637 = vpop.f32.mrb[0].mxu0
      %v3638 = vpop.f32.mrb[0].mxu0
      %v3639 = vadd.f32 0.0, %v3638
      %v3640 = vpop.f32.mrb[0].mxu0
      %3641 = vmatprep.mubr.bf16.mxu0 0
      %3642 = vmatmul.mubr.bf16.gmra.mrb[0].mxu0 %v3527
      %v3643 = vpop.f32.mrb[0].mxu0
      %v3644 = vadd.f32 0.0, %v3643
      %v3645 = vpop.f32.mrb[0].mxu0
      %v3646 = vpop.f32.mrb[0].mxu0
      %v3647 = vadd.f32 0.0, %v3646
      %v3648 = vpop.f32.mrb[0].mxu0
      %3649 = vmatprep.mubr.bf16.mxu0 0
      %3650 = vmatmul.mubr.bf16.gmra.mrb[0].mxu0 %v3530
      %v3651 = vpop.f32.mrb[0].mxu0
      %v3652 = vadd.f32 0.0, %v3651
      %v3653 = vpop.f32.mrb[0].mxu0
      %v3654 = vpop.f32.mrb[0].mxu0
      %v3655 = vadd.f32 0.0, %v3654
      %v3656 = vpop.f32.mrb[0].mxu0
      %3657 = vmatprep.mubr.bf16.mxu0 0
      %3658 = vmatmul.mubr.bf16.gmra.mrb[0].mxu0 %v3533
      %v3659 = vpop.f32.mrb[0].mxu0
      %v3660 = vadd.f32 0.0, %v3659
      %v3661 = vpop.f32.mrb[0].mxu0
      %v3662 = vpop.f32.mrb[0].mxu0
      %v3663 = vadd.f32 0.0, %v3662
      %v3664 = vpop.f32.mrb[0].mxu0
      %3665 = vmatprep.mubr.bf16.mxu0 0
      %3666 = vmatmul.mubr.bf16.gmra.mrb[0].mxu0 %v3536
      %v3667 = vpop.f32.mrb[0].mxu0
      %v3668 = vadd.f32 0.0, %v3667
      %v3669 = vpop.f32.mrb[0].mxu0
      %v3670 = vpop.f32.mrb[0].mxu0
      %v3671 = vadd.f32 0.0, %v3670
      %v3672 = vpop.f32.mrb[0].mxu0
      %3673 = vmatprep.mubr.bf16.mxu0 0
      %3674 = vmatmul.mubr.bf16.gmra.mrb[0].mxu0 %v3539
      %v3675 = vpop.f32.mrb[0].mxu0
      %v3676 = vadd.f32 0.0, %v3675
      %v3677 = vpop.f32.mrb[0].mxu0
      %v3678 = vpop.f32.mrb[0].mxu0
      %v3679 = vadd.f32 0.0, %v3678
      %v3680 = vpop.f32.mrb[0].mxu0
      %3681 = vmatprep.mubr.bf16.mxu0 0
      %3682 = vmatmul.mubr.bf16.gmra.mrb[0].mxu0 %v3542
      %v3683 = vpop.f32.mrb[0].mxu0
      %v3684 = vadd.f32 0.0, %v3683
      %v3685 = vpop.f32.mrb[0].mxu0
      %v3686 = vpop.f32.mrb[0].mxu0
      %v3687 = vadd.f32 0.0, %v3686
      %v3688 = vpop.f32.mrb[0].mxu0
      %3689 = vmatprep.mubr.bf16.mxu0 0
      %3690 = vmatmul.mubr.bf16.gmra.mrb[0].mxu0 %v3545
      %v3691 = vpop.f32.mrb[0].mxu0
      %v3692 = vadd.f32 0.0, %v3691
      %v3693 = vpop.f32.mrb[0].mxu0
      %v3694 = vpop.f32.mrb[0].mxu0
      %v3695 = vadd.f32 0.0, %v3694
      %v3696 = vpop.f32.mrb[0].mxu0
      %3697 = vmatprep.mubr.bf16.mxu0 0
      %3698 = vmatmul.mubr.bf16.gmra.mrb[0].mxu0 %v3548
      %v3699 = vpop.f32.mrb[0].mxu0
      %v3700 = vadd.f32 0.0, %v3699
      %v3701 = vpop.f32.mrb[0].mxu0
      %v3702 = vpop.f32.mrb[0].mxu0
      %v3703 = vadd.f32 0.0, %v3702
      %v3704 = vpop.f32.mrb[0].mxu0
      %3705 = vmatprep.mubr.bf16.mxu0 0
      %3706 = vmatmul.mubr.bf16.gmra.mrb[0].mxu0 %v3551
      %v3707 = vpop.f32.mrb[0].mxu0
      %v3708 = vadd.f32 0.0, %v3707
      %v3709 = vpop.f32.mrb[0].mxu0
      %v3710 = vpop.f32.mrb[0].mxu0
      %v3711 = vadd.f32 0.0, %v3710
      %v3712 = vpop.f32.mrb[0].mxu0
      %3713 = vdwg.mxu0
      %v3722 = vunpack.c.l.b16 %v3416
      %v3723 = vunpack.c.l.b16 %v3417
      %v3724 = vunpack.c.l.b16 %v3418
      %v3725 = vunpack.c.l.b16 %v3419
      %v3726 = vunpack.c.l.b16 %v3420
      %v3727 = vunpack.c.l.b16 %v3421
      %v3728 = vunpack.c.l.b16 %v3422
      %v3729 = vunpack.c.l.b16 %v3423
      %v3730 = vpack.c.b16 %v3723, %v3722
      %v3731 = vpack.c.b16 %v3725, %v3724
      %v3732 = vpack.c.b16 %v3727, %v3726
      %v3733 = vpack.c.b16 %v3729, %v3728
      %v3739 = vsel %vm471, %v3400, 0
      %v3742 = vsel %vm471, %v3401, 0
      %v3745 = vsel %vm471, %v3402, 0
      %v3748 = vsel %vm471, %v3403, 0
      %v3751 = vsel %vm471, %v3404, 0
      %v3754 = vsel %vm471, %v3405, 0
      %v3757 = vsel %vm471, %v3406, 0
      %v3760 = vsel %vm471, %v3407, 0
      %v3763 = vsel %vm471, %v3408, 0
      %v3766 = vsel %vm471, %v3409, 0
      %v3769 = vsel %vm471, %v3410, 0
      %v3772 = vsel %vm471, %v3411, 0
      %v3775 = vsel %vm471, %v3412, 0
      %v3778 = vsel %vm471, %v3413, 0
      %v3781 = vsel %vm471, %v3414, 0
      %v3784 = vsel %vm471, %v3415, 0
      %3786 = vmatprep.subr.bf16.mxu0 0
      %3787 = vmatpush1.bf16.msra.mxu0 %v3730
      %3788 = vmatprep.subr.bf16.mxu0 0
      %3789 = vmatpush1.bf16.msra.mxu0 %v3731
      %3790 = vmatprep.subr.bf16.mxu0 0
      %3791 = vmatpush1.bf16.msra.mxu0 %v3732
      %3792 = vmatprep.subr.bf16.mxu0 0
      %3793 = vmatpush1.bf16.msra.mxu0 %v3733
      %3794 = vmatprep.subr.bf16.mxu0 0
      %3795 = vmatpush1.bf16.msra.mxu0 0
      %3796 = vmatprep.subr.bf16.mxu0 0
      %3797 = vmatpush1.bf16.msra.mxu0 0
      %3798 = vmatprep.subr.bf16.mxu0 0
      %3799 = vmatpush1.bf16.msra.mxu0 0
      %3800 = vmatprep.subr.bf16.mxu0 0
      %3801 = vmatpush1.bf16.msra.mxu0 0
      %3802 = vmatprep.subr.bf16.mxu0 0
      %3803 = vmatpush1.bf16.msra.mxu0 0
      %3804 = vmatprep.subr.bf16.mxu0 0
      %3805 = vmatpush1.bf16.msra.mxu0 0
      %3806 = vmatprep.subr.bf16.mxu0 0
      %3807 = vmatpush1.bf16.msra.mxu0 0
      %3808 = vmatprep.subr.bf16.mxu0 0
      %3809 = vmatpush1.bf16.msra.mxu0 0
      %3810 = vmatprep.subr.bf16.mxu0 0
      %3811 = vmatpush1.bf16.msra.mxu0 0
      %3812 = vmatprep.subr.bf16.mxu0 0
      %3813 = vmatpush1.bf16.msra.mxu0 0
      %3814 = vmatprep.subr.bf16.mxu0 0
      %3815 = vmatpush1.bf16.msra.mxu0 0
      %3816 = vmatprep.subr.bf16.mxu0 0
      %3817 = vmatpush1.bf16.msra.mxu0 0
      %3818 = vmatprep.mubr.bf16.mxu0 0
      %3819 = vmatmul.mubr.bf16.gmra.mrb[0].mxu0 %v3739
      %v3820 = vpop.f32.mrb[0].mxu0
      %v3821 = vadd.f32 %v3588, %v3820
      %v3822 = vpop.f32.mrb[0].mxu0
      %v3823 = vpop.f32.mrb[0].mxu0
      %v3824 = vadd.f32 %v3591, %v3823
      %v3825 = vpop.f32.mrb[0].mxu0
      %3826 = vmatprep.mubr.bf16.mxu0 0
      %3827 = vmatmul.mubr.bf16.gmra.mrb[0].mxu0 %v3742
      %v3828 = vpop.f32.mrb[0].mxu0
      %v3829 = vadd.f32 %v3596, %v3828
      %v3830 = vpop.f32.mrb[0].mxu0
      %v3831 = vpop.f32.mrb[0].mxu0
      %v3832 = vadd.f32 %v3599, %v3831
      %v3833 = vpop.f32.mrb[0].mxu0
      %3834 = vmatprep.mubr.bf16.mxu0 0
      %3835 = vmatmul.mubr.bf16.gmra.mrb[0].mxu0 %v3745
      %v3836 = vpop.f32.mrb[0].mxu0
      %v3837 = vadd.f32 %v3604, %v3836
      %v3838 = vpop.f32.mrb[0].mxu0
      %v3839 = vpop.f32.mrb[0].mxu0
      %v3840 = vadd.f32 %v3607, %v3839
      %v3841 = vpop.f32.mrb[0].mxu0
      %3842 = vmatprep.mubr.bf16.mxu0 0
      %3843 = vmatmul.mubr.bf16.gmra.mrb[0].mxu0 %v3748
      %v3844 = vpop.f32.mrb[0].mxu0
      %v3845 = vadd.f32 %v3612, %v3844
      %v3846 = vpop.f32.mrb[0].mxu0
      %v3847 = vpop.f32.mrb[0].mxu0
      %v3848 = vadd.f32 %v3615, %v3847
      %v3849 = vpop.f32.mrb[0].mxu0
      %3850 = vmatprep.mubr.bf16.mxu0 0
      %3851 = vmatmul.mubr.bf16.gmra.mrb[0].mxu0 %v3751
      %v3852 = vpop.f32.mrb[0].mxu0
      %v3853 = vadd.f32 %v3620, %v3852
      %v3854 = vpop.f32.mrb[0].mxu0
      %v3855 = vpop.f32.mrb[0].mxu0
      %v3856 = vadd.f32 %v3623, %v3855
      %v3857 = vpop.f32.mrb[0].mxu0
      %3858 = vmatprep.mubr.bf16.mxu0 0
      %3859 = vmatmul.mubr.bf16.gmra.mrb[0].mxu0 %v3754
      %v3860 = vpop.f32.mrb[0].mxu0
      %v3861 = vadd.f32 %v3628, %v3860
      %v3862 = vpop.f32.mrb[0].mxu0
      %v3863 = vpop.f32.mrb[0].mxu0
      %v3864 = vadd.f32 %v3631, %v3863
      %v3865 = vpop.f32.mrb[0].mxu0
      %3866 = vmatprep.mubr.bf16.mxu0 0
      %3867 = vmatmul.mubr.bf16.gmra.mrb[0].mxu0 %v3757
      %v3868 = vpop.f32.mrb[0].mxu0
      %v3869 = vadd.f32 %v3636, %v3868
      %v3870 = vpop.f32.mrb[0].mxu0
      %v3871 = vpop.f32.mrb[0].mxu0
      %v3872 = vadd.f32 %v3639, %v3871
      %v3873 = vpop.f32.mrb[0].mxu0
      %3874 = vmatprep.mubr.bf16.mxu0 0
      %3875 = vmatmul.mubr.bf16.gmra.mrb[0].mxu0 %v3760
      %v3876 = vpop.f32.mrb[0].mxu0
      %v3877 = vadd.f32 %v3644, %v3876
      %v3878 = vpop.f32.mrb[0].mxu0
      %v3879 = vpop.f32.mrb[0].mxu0
      %v3880 = vadd.f32 %v3647, %v3879
      %v3881 = vpop.f32.mrb[0].mxu0
      %3882 = vmatprep.mubr.bf16.mxu0 0
      %3883 = vmatmul.mubr.bf16.gmra.mrb[0].mxu0 %v3763
      %v3884 = vpop.f32.mrb[0].mxu0
      %v3885 = vadd.f32 %v3652, %v3884
      %v3886 = vpop.f32.mrb[0].mxu0
      %v3887 = vpop.f32.mrb[0].mxu0
      %v3888 = vadd.f32 %v3655, %v3887
      %v3889 = vpop.f32.mrb[0].mxu0
      %3890 = vmatprep.mubr.bf16.mxu0 0
      %3891 = vmatmul.mubr.bf16.gmra.mrb[0].mxu0 %v3766
      %v3892 = vpop.f32.mrb[0].mxu0
      %v3893 = vadd.f32 %v3660, %v3892
      %v3894 = vpop.f32.mrb[0].mxu0
      %v3895 = vpop.f32.mrb[0].mxu0
      %v3896 = vadd.f32 %v3663, %v3895
      %v3897 = vpop.f32.mrb[0].mxu0
      %3898 = vmatprep.mubr.bf16.mxu0 0
      %3899 = vmatmul.mubr.bf16.gmra.mrb[0].mxu0 %v3769
      %v3900 = vpop.f32.mrb[0].mxu0
      %v3901 = vadd.f32 %v3668, %v3900
      %v3902 = vpop.f32.mrb[0].mxu0
      %v3903 = vpop.f32.mrb[0].mxu0
      %v3904 = vadd.f32 %v3671, %v3903
      %v3905 = vpop.f32.mrb[0].mxu0
      %3906 = vmatprep.mubr.bf16.mxu0 0
      %3907 = vmatmul.mubr.bf16.gmra.mrb[0].mxu0 %v3772
      %v3908 = vpop.f32.mrb[0].mxu0
      %v3909 = vadd.f32 %v3676, %v3908
      %v3910 = vpop.f32.mrb[0].mxu0
      %v3911 = vpop.f32.mrb[0].mxu0
      %v3912 = vadd.f32 %v3679, %v3911
      %v3913 = vpop.f32.mrb[0].mxu0
      %3914 = vmatprep.mubr.bf16.mxu0 0
      %3915 = vmatmul.mubr.bf16.gmra.mrb[0].mxu0 %v3775
      %v3916 = vpop.f32.mrb[0].mxu0
      %v3917 = vadd.f32 %v3684, %v3916
      %v3918 = vpop.f32.mrb[0].mxu0
      %v3919 = vpop.f32.mrb[0].mxu0
      %v3920 = vadd.f32 %v3687, %v3919
      %v3921 = vpop.f32.mrb[0].mxu0
      %3922 = vmatprep.mubr.bf16.mxu0 0
      %3923 = vmatmul.mubr.bf16.gmra.mrb[0].mxu0 %v3778
      %v3924 = vpop.f32.mrb[0].mxu0
      %v3925 = vadd.f32 %v3692, %v3924
      %v3926 = vpop.f32.mrb[0].mxu0
      %v3927 = vpop.f32.mrb[0].mxu0
      %v3928 = vadd.f32 %v3695, %v3927
      %v3929 = vpop.f32.mrb[0].mxu0
      %3930 = vmatprep.mubr.bf16.mxu0 0
      %3931 = vmatmul.mubr.bf16.gmra.mrb[0].mxu0 %v3781
      %v3932 = vpop.f32.mrb[0].mxu0
      %v3933 = vadd.f32 %v3700, %v3932
      %v3934 = vpop.f32.mrb[0].mxu0
      %v3935 = vpop.f32.mrb[0].mxu0
      %v3936 = vadd.f32 %v3703, %v3935
      %v3937 = vpop.f32.mrb[0].mxu0
      %3938 = vmatprep.mubr.bf16.mxu0 0
      %3939 = vmatmul.mubr.bf16.gmra.mrb[0].mxu0 %v3784
      %v3940 = vpop.f32.mrb[0].mxu0
      %v3941 = vadd.f32 %v3708, %v3940
      %v3942 = vpop.f32.mrb[0].mxu0
      %v3943 = vpop.f32.mrb[0].mxu0
      %v3944 = vadd.f32 %v3711, %v3943
      %v3945 = vpop.f32.mrb[0].mxu0
      %3946 = vdwg.mxu0
      %v3947 = vld [vmem:[#allocation2 + $0x2] sm:$0xff]
      %v3948 = vld [vmem:[#allocation2 + $0xa] sm:$0xff]
      %v3949 = vld [vmem:[#allocation2 + $0x1a] sm:$0xff]
      %v3950 = vld [vmem:[#allocation2 + $0x22] sm:$0xff]
      %v3951 = vld [vmem:[#allocation2 + $0x32] sm:$0xff]
      %v3952 = vld [vmem:[#allocation2 + $0x3a] sm:$0xff]
      %v3953 = vld [vmem:[#allocation2 + $0x4a] sm:$0xff]
      %v3954 = vld [vmem:[#allocation2 + $0x52] sm:$0xff]
      %v3955 = vld [vmem:[#allocation2 + $0x62] sm:$0xff]
      %v3956 = vld [vmem:[#allocation2 + $0x6a] sm:$0xff]
      %v3957 = vld [vmem:[#allocation2 + $0x7a] sm:$0xff]
      %v3958 = vld [vmem:[#allocation2 + $0x82] sm:$0xff]
      %v3959 = vld [vmem:[#allocation2 + $0x92] sm:$0xff]
      %v3960 = vld [vmem:[#allocation2 + $0x9a] sm:$0xff]
      %v3961 = vld [vmem:[#allocation2 + $0xaa] sm:$0xff]
      %v3962 = vld [vmem:[#allocation2 + $0xb2] sm:$0xff]
      %v3963 = vld [vmem:[#allocation2 + $0xc2] sm:$0xff]
      %v3964 = vld [vmem:[#allocation2 + $0xca] sm:$0xff]
      %v3965 = vld [vmem:[#allocation2 + $0xda] sm:$0xff]
      %v3966 = vld [vmem:[#allocation2 + $0xe2] sm:$0xff]
      %v3967 = vld [vmem:[#allocation2 + $0xf2] sm:$0xff]
      %v3968 = vld [vmem:[#allocation2 + $0xfa] sm:$0xff]
      %v3969 = vld [vmem:[#allocation2 + $0x10a] sm:$0xff]
      %v3970 = vld [vmem:[#allocation2 + $0x112] sm:$0xff]
      %v3971 = vld [vmem:[#allocation2 + $0x122] sm:$0xff]
      %v3972 = vld [vmem:[#allocation2 + $0x12a] sm:$0xff]
      %v3973 = vld [vmem:[#allocation2 + $0x13a] sm:$0xff]
      %v3974 = vld [vmem:[#allocation2 + $0x142] sm:$0xff]
      %v3975 = vld [vmem:[#allocation2 + $0x152] sm:$0xff]
      %v3976 = vld [vmem:[#allocation2 + $0x15a] sm:$0xff]
      %v3977 = vld [vmem:[#allocation2 + $0x16a] sm:$0xff]
      %v3978 = vld [vmem:[#allocation2 + $0x172] sm:$0xff]
      %v3979 = vpack.c.bf16 %v3948, %v3947
      %v3980 = vpack.c.bf16 %v3950, %v3949
      %v3981 = vpack.c.bf16 %v3952, %v3951
      %v3982 = vpack.c.bf16 %v3954, %v3953
      %v3983 = vpack.c.bf16 %v3956, %v3955
      %v3984 = vpack.c.bf16 %v3958, %v3957
      %v3985 = vpack.c.bf16 %v3960, %v3959
      %v3986 = vpack.c.bf16 %v3962, %v3961
      %v3987 = vpack.c.bf16 %v3964, %v3963
      %v3988 = vpack.c.bf16 %v3966, %v3965
      %v3989 = vpack.c.bf16 %v3968, %v3967
      %v3990 = vpack.c.bf16 %v3970, %v3969
      %v3991 = vpack.c.bf16 %v3972, %v3971
      %v3992 = vpack.c.bf16 %v3974, %v3973
      %v3993 = vpack.c.bf16 %v3976, %v3975
      %v3994 = vpack.c.bf16 %v3978, %v3977
      %s3995 = scalar_lea.vmem %s4, 64
      %v3996 = vld [vmem:[%s3995] sm:$0xf]
      %v3997 = vld [vmem:[%s3995 + $0x4] sm:$0xf]
      %v3998 = vld [vmem:[%s3995 + $0x8] sm:$0xf]
      %v3999 = vld [vmem:[%s3995 + $0xc] sm:$0xf]
      %v4000 = vld [vmem:[%s3995 + $0x10] sm:$0xf]
      %v4001 = vld [vmem:[%s3995 + $0x14] sm:$0xf]
      %v4002 = vld [vmem:[%s3995 + $0x18] sm:$0xf]
      %v4003 = vld [vmem:[%s3995 + $0x1c] sm:$0xf]
      %v4012 = vunpack.c.l.b16 %v3996
      %v4013 = vunpack.c.l.b16 %v3997
      %v4014 = vunpack.c.l.b16 %v3998
      %v4015 = vunpack.c.l.b16 %v3999
      %v4016 = vunpack.c.l.b16 %v4000
      %v4017 = vunpack.c.l.b16 %v4001
      %v4018 = vunpack.c.l.b16 %v4002
      %v4019 = vunpack.c.l.b16 %v4003
      %v4020 = vpack.c.b16 %v4013, %v4012
      %v4021 = vpack.c.b16 %v4015, %v4014
      %v4022 = vpack.c.b16 %v4017, %v4016
      %v4023 = vpack.c.b16 %v4019, %v4018
      %v4029 = vsel %vm471, %v3979, 0
      %v4032 = vsel %vm471, %v3980, 0
      %v4035 = vsel %vm471, %v3981, 0
      %v4038 = vsel %vm471, %v3982, 0
      %v4041 = vsel %vm471, %v3983, 0
      %v4044 = vsel %vm471, %v3984, 0
      %v4047 = vsel %vm471, %v3985, 0
      %v4050 = vsel %vm471, %v3986, 0
      %v4053 = vsel %vm471, %v3987, 0
      %v4056 = vsel %vm471, %v3988, 0
      %v4059 = vsel %vm471, %v3989, 0
      %v4062 = vsel %vm471, %v3990, 0
      %v4065 = vsel %vm471, %v3991, 0
      %v4068 = vsel %vm471, %v3992, 0
      %v4071 = vsel %vm471, %v3993, 0
      %v4074 = vsel %vm471, %v3994, 0
      %4076 = vmatprep.subr.bf16.mxu0 0
      %4077 = vmatpush1.bf16.msra.mxu0 %v4020
      %4078 = vmatprep.subr.bf16.mxu0 0
      %4079 = vmatpush1.bf16.msra.mxu0 %v4021
      %4080 = vmatprep.subr.bf16.mxu0 0
      %4081 = vmatpush1.bf16.msra.mxu0 %v4022
      %4082 = vmatprep.subr.bf16.mxu0 0
      %4083 = vmatpush1.bf16.msra.mxu0 %v4023
      %4084 = vmatprep.subr.bf16.mxu0 0
      %4085 = vmatpush1.bf16.msra.mxu0 0
      %4086 = vmatprep.subr.bf16.mxu0 0
      %4087 = vmatpush1.bf16.msra.mxu0 0
      %4088 = vmatprep.subr.bf16.mxu0 0
      %4089 = vmatpush1.bf16.msra.mxu0 0
      %4090 = vmatprep.subr.bf16.mxu0 0
      %4091 = vmatpush1.bf16.msra.mxu0 0
      %4092 = vmatprep.subr.bf16.mxu0 0
      %4093 = vmatpush1.bf16.msra.mxu0 0
      %4094 = vmatprep.subr.bf16.mxu0 0
      %4095 = vmatpush1.bf16.msra.mxu0 0
      %4096 = vmatprep.subr.bf16.mxu0 0
      %4097 = vmatpush1.bf16.msra.mxu0 0
      %4098 = vmatprep.subr.bf16.mxu0 0
      %4099 = vmatpush1.bf16.msra.mxu0 0
      %4100 = vmatprep.subr.bf16.mxu0 0
      %4101 = vmatpush1.bf16.msra.mxu0 0
      %4102 = vmatprep.subr.bf16.mxu0 0
      %4103 = vmatpush1.bf16.msra.mxu0 0
      %4104 = vmatprep.subr.bf16.mxu0 0
      %4105 = vmatpush1.bf16.msra.mxu0 0
      %4106 = vmatprep.subr.bf16.mxu0 0
      %4107 = vmatpush1.bf16.msra.mxu0 0
      %4108 = vmatprep.mubr.bf16.mxu0 0
      %4109 = vmatmul.mubr.bf16.gmra.mrb[0].mxu0 %v4029
      %v4110 = vpop.f32.mrb[0].mxu0
      %v4111 = vadd.f32 0.0, %v4110
      %v4112 = vpop.f32.mrb[0].mxu0
      %v4113 = vpop.f32.mrb[0].mxu0
      %v4114 = vadd.f32 0.0, %v4113
      %v4115 = vpop.f32.mrb[0].mxu0
      %4116 = vmatprep.mubr.bf16.mxu0 0
      %4117 = vmatmul.mubr.bf16.gmra.mrb[0].mxu0 %v4032
      %v4118 = vpop.f32.mrb[0].mxu0
      %v4119 = vadd.f32 0.0, %v4118
      %v4120 = vpop.f32.mrb[0].mxu0
      %v4121 = vpop.f32.mrb[0].mxu0
      %v4122 = vadd.f32 0.0, %v4121
      %v4123 = vpop.f32.mrb[0].mxu0
      %4124 = vmatprep.mubr.bf16.mxu0 0
      %4125 = vmatmul.mubr.bf16.gmra.mrb[0].mxu0 %v4035
      %v4126 = vpop.f32.mrb[0].mxu0
      %v4127 = vadd.f32 0.0, %v4126
      %v4128 = vpop.f32.mrb[0].mxu0
      %v4129 = vpop.f32.mrb[0].mxu0
      %v4130 = vadd.f32 0.0, %v4129
      %v4131 = vpop.f32.mrb[0].mxu0
      %4132 = vmatprep.mubr.bf16.mxu0 0
      %4133 = vmatmul.mubr.bf16.gmra.mrb[0].mxu0 %v4038
      %v4134 = vpop.f32.mrb[0].mxu0
      %v4135 = vadd.f32 0.0, %v4134
      %v4136 = vpop.f32.mrb[0].mxu0
      %v4137 = vpop.f32.mrb[0].mxu0
      %v4138 = vadd.f32 0.0, %v4137
      %v4139 = vpop.f32.mrb[0].mxu0
      %4140 = vmatprep.mubr.bf16.mxu0 0
      %4141 = vmatmul.mubr.bf16.gmra.mrb[0].mxu0 %v4041
      %v4142 = vpop.f32.mrb[0].mxu0
      %v4143 = vadd.f32 0.0, %v4142
      %v4144 = vpop.f32.mrb[0].mxu0
      %v4145 = vpop.f32.mrb[0].mxu0
      %v4146 = vadd.f32 0.0, %v4145
      %v4147 = vpop.f32.mrb[0].mxu0
      %4148 = vmatprep.mubr.bf16.mxu0 0
      %4149 = vmatmul.mubr.bf16.gmra.mrb[0].mxu0 %v4044
      %v4150 = vpop.f32.mrb[0].mxu0
      %v4151 = vadd.f32 0.0, %v4150
      %v4152 = vpop.f32.mrb[0].mxu0
      %v4153 = vpop.f32.mrb[0].mxu0
      %v4154 = vadd.f32 0.0, %v4153
      %v4155 = vpop.f32.mrb[0].mxu0
      %4156 = vmatprep.mubr.bf16.mxu0 0
      %4157 = vmatmul.mubr.bf16.gmra.mrb[0].mxu0 %v4047
      %v4158 = vpop.f32.mrb[0].mxu0
      %v4159 = vadd.f32 0.0, %v4158
      %v4160 = vpop.f32.mrb[0].mxu0
      %v4161 = vpop.f32.mrb[0].mxu0
      %v4162 = vadd.f32 0.0, %v4161
      %v4163 = vpop.f32.mrb[0].mxu0
      %4164 = vmatprep.mubr.bf16.mxu0 0
      %4165 = vmatmul.mubr.bf16.gmra.mrb[0].mxu0 %v4050
      %v4166 = vpop.f32.mrb[0].mxu0
      %v4167 = vadd.f32 0.0, %v4166
      %v4168 = vpop.f32.mrb[0].mxu0
      %v4169 = vpop.f32.mrb[0].mxu0
      %v4170 = vadd.f32 0.0, %v4169
      %v4171 = vpop.f32.mrb[0].mxu0
      %4172 = vmatprep.mubr.bf16.mxu0 0
      %4173 = vmatmul.mubr.bf16.gmra.mrb[0].mxu0 %v4053
      %v4174 = vpop.f32.mrb[0].mxu0
      %v4175 = vadd.f32 0.0, %v4174
      %v4176 = vpop.f32.mrb[0].mxu0
      %v4177 = vpop.f32.mrb[0].mxu0
      %v4178 = vadd.f32 0.0, %v4177
      %v4179 = vpop.f32.mrb[0].mxu0
      %4180 = vmatprep.mubr.bf16.mxu0 0
      %4181 = vmatmul.mubr.bf16.gmra.mrb[0].mxu0 %v4056
      %v4182 = vpop.f32.mrb[0].mxu0
      %v4183 = vadd.f32 0.0, %v4182
      %v4184 = vpop.f32.mrb[0].mxu0
      %v4185 = vpop.f32.mrb[0].mxu0
      %v4186 = vadd.f32 0.0, %v4185
      %v4187 = vpop.f32.mrb[0].mxu0
      %4188 = vmatprep.mubr.bf16.mxu0 0
      %4189 = vmatmul.mubr.bf16.gmra.mrb[0].mxu0 %v4059
      %v4190 = vpop.f32.mrb[0].mxu0
      %v4191 = vadd.f32 0.0, %v4190
      %v4192 = vpop.f32.mrb[0].mxu0
      %v4193 = vpop.f32.mrb[0].mxu0
      %v4194 = vadd.f32 0.0, %v4193
      %v4195 = vpop.f32.mrb[0].mxu0
      %4196 = vmatprep.mubr.bf16.mxu0 0
      %4197 = vmatmul.mubr.bf16.gmra.mrb[0].mxu0 %v4062
      %v4198 = vpop.f32.mrb[0].mxu0
      %v4199 = vadd.f32 0.0, %v4198
      %v4200 = vpop.f32.mrb[0].mxu0
      %v4201 = vpop.f32.mrb[0].mxu0
      %v4202 = vadd.f32 0.0, %v4201
      %v4203 = vpop.f32.mrb[0].mxu0
      %4204 = vmatprep.mubr.bf16.mxu0 0
      %4205 = vmatmul.mubr.bf16.gmra.mrb[0].mxu0 %v4065
      %v4206 = vpop.f32.mrb[0].mxu0
      %v4207 = vadd.f32 0.0, %v4206
      %v4208 = vpop.f32.mrb[0].mxu0
      %v4209 = vpop.f32.mrb[0].mxu0
      %v4210 = vadd.f32 0.0, %v4209
      %v4211 = vpop.f32.mrb[0].mxu0
      %4212 = vmatprep.mubr.bf16.mxu0 0
      %4213 = vmatmul.mubr.bf16.gmra.mrb[0].mxu0 %v4068
      %v4214 = vpop.f32.mrb[0].mxu0
      %v4215 = vadd.f32 0.0, %v4214
      %v4216 = vpop.f32.mrb[0].mxu0
      %v4217 = vpop.f32.mrb[0].mxu0
      %v4218 = vadd.f32 0.0, %v4217
      %v4219 = vpop.f32.mrb[0].mxu0
      %4220 = vmatprep.mubr.bf16.mxu0 0
      %4221 = vmatmul.mubr.bf16.gmra.mrb[0].mxu0 %v4071
      %v4222 = vpop.f32.mrb[0].mxu0
      %v4223 = vadd.f32 0.0, %v4222
      %v4224 = vpop.f32.mrb[0].mxu0
      %v4225 = vpop.f32.mrb[0].mxu0
      %v4226 = vadd.f32 0.0, %v4225
      %v4227 = vpop.f32.mrb[0].mxu0
      %4228 = vmatprep.mubr.bf16.mxu0 0
      %4229 = vmatmul.mubr.bf16.gmra.mrb[0].mxu0 %v4074
      %v4230 = vpop.f32.mrb[0].mxu0
      %v4231 = vadd.f32 0.0, %v4230
      %v4232 = vpop.f32.mrb[0].mxu0
      %v4233 = vpop.f32.mrb[0].mxu0
      %v4234 = vadd.f32 0.0, %v4233
      %v4235 = vpop.f32.mrb[0].mxu0
      %4236 = vdwg.mxu0
      %v4237 = vadd.f32 %v3821, %v4111
      %v4238 = vadd.f32 %v3824, %v4114
      %v4239 = vadd.f32 %v3829, %v4119
      %v4240 = vadd.f32 %v3832, %v4122
      %v4241 = vadd.f32 %v3837, %v4127
      %v4242 = vadd.f32 %v3840, %v4130
      %v4243 = vadd.f32 %v3845, %v4135
      %v4244 = vadd.f32 %v3848, %v4138
      %v4245 = vadd.f32 %v3853, %v4143
      %v4246 = vadd.f32 %v3856, %v4146
      %v4247 = vadd.f32 %v3861, %v4151
      %v4248 = vadd.f32 %v3864, %v4154
      %v4249 = vadd.f32 %v3869, %v4159
      %v4250 = vadd.f32 %v3872, %v4162
      %v4251 = vadd.f32 %v3877, %v4167
      %v4252 = vadd.f32 %v3880, %v4170
      %v4253 = vadd.f32 %v3885, %v4175
      %v4254 = vadd.f32 %v3888, %v4178
      %v4255 = vadd.f32 %v3893, %v4183
      %v4256 = vadd.f32 %v3896, %v4186
      %v4257 = vadd.f32 %v3901, %v4191
      %v4258 = vadd.f32 %v3904, %v4194
      %v4259 = vadd.f32 %v3909, %v4199
      %v4260 = vadd.f32 %v3912, %v4202
      %v4261 = vadd.f32 %v3917, %v4207
      %v4262 = vadd.f32 %v3920, %v4210
      %v4263 = vadd.f32 %v3925, %v4215
      %v4264 = vadd.f32 %v3928, %v4218
      %v4265 = vadd.f32 %v3933, %v4223
      %v4266 = vadd.f32 %v3936, %v4226
      %v4267 = vadd.f32 %v3941, %v4231
      %v4268 = vadd.f32 %v3944, %v4234
      %v4269 = vld [vmem:[%s3335] sm:$0xff]
      %v4270 = vld [vmem:[%s3335 + $0x8] sm:$0xff]
      %v4271 = vld [vmem:[%s3335 + $0x18] sm:$0xff]
      %v4272 = vld [vmem:[%s3335 + $0x20] sm:$0xff]
      %v4273 = vld [vmem:[%s3335 + $0x30] sm:$0xff]
      %v4274 = vld [vmem:[%s3335 + $0x38] sm:$0xff]
      %v4275 = vld [vmem:[%s3335 + $0x48] sm:$0xff]
      %v4276 = vld [vmem:[%s3335 + $0x50] sm:$0xff]
      %v4277 = vld [vmem:[%s3335 + $0x60] sm:$0xff]
      %v4278 = vld [vmem:[%s3335 + $0x68] sm:$0xff]
      %v4279 = vld [vmem:[%s3335 + $0x78] sm:$0xff]
      %v4280 = vld [vmem:[%s3335 + $0x80] sm:$0xff]
      %v4281 = vld [vmem:[%s3335 + $0x90] sm:$0xff]
      %v4282 = vld [vmem:[%s3335 + $0x98] sm:$0xff]
      %v4283 = vld [vmem:[%s3335 + $0xa8] sm:$0xff]
      %v4284 = vld [vmem:[%s3335 + $0xb0] sm:$0xff]
      %v4285 = vld [vmem:[%s3335 + $0xc0] sm:$0xff]
      %v4286 = vld [vmem:[%s3335 + $0xc8] sm:$0xff]
      %v4287 = vld [vmem:[%s3335 + $0xd8] sm:$0xff]
      %v4288 = vld [vmem:[%s3335 + $0xe0] sm:$0xff]
      %v4289 = vld [vmem:[%s3335 + $0xf0] sm:$0xff]
      %v4290 = vld [vmem:[%s3335 + $0xf8] sm:$0xff]
      %v4291 = vld [vmem:[%s3335 + $0x108] sm:$0xff]
      %v4292 = vld [vmem:[%s3335 + $0x110] sm:$0xff]
      %v4293 = vld [vmem:[%s3335 + $0x120] sm:$0xff]
      %v4294 = vld [vmem:[%s3335 + $0x128] sm:$0xff]
      %v4295 = vld [vmem:[%s3335 + $0x138] sm:$0xff]
      %v4296 = vld [vmem:[%s3335 + $0x140] sm:$0xff]
      %v4297 = vld [vmem:[%s3335 + $0x150] sm:$0xff]
      %v4298 = vld [vmem:[%s3335 + $0x158] sm:$0xff]
      %v4299 = vld [vmem:[%s3335 + $0x168] sm:$0xff]
      %v4300 = vld [vmem:[%s3335 + $0x170] sm:$0xff]
      %v4301 = vpack.c.bf16 %v4270, %v4269
      %v4302 = vpack.c.bf16 %v4272, %v4271
      %v4303 = vpack.c.bf16 %v4274, %v4273
      %v4304 = vpack.c.bf16 %v4276, %v4275
      %v4305 = vpack.c.bf16 %v4278, %v4277
      %v4306 = vpack.c.bf16 %v4280, %v4279
      %v4307 = vpack.c.bf16 %v4282, %v4281
      %v4308 = vpack.c.bf16 %v4284, %v4283
      %v4309 = vpack.c.bf16 %v4286, %v4285
      %v4310 = vpack.c.bf16 %v4288, %v4287
      %v4311 = vpack.c.bf16 %v4290, %v4289
      %v4312 = vpack.c.bf16 %v4292, %v4291
      %v4313 = vpack.c.bf16 %v4294, %v4293
      %v4314 = vpack.c.bf16 %v4296, %v4295
      %v4315 = vpack.c.bf16 %v4298, %v4297
      %v4316 = vpack.c.bf16 %v4300, %v4299
      %s4317 = scalar_lea.vmem %s4, 96
      %v4318 = vld [vmem:[%s4317] sm:$0xf]
      %v4319 = vld [vmem:[%s4317 + $0x4] sm:$0xf]
      %v4320 = vld [vmem:[%s4317 + $0x8] sm:$0xf]
      %v4321 = vld [vmem:[%s4317 + $0xc] sm:$0xf]
      %v4322 = vld [vmem:[%s4317 + $0x10] sm:$0xf]
      %v4323 = vld [vmem:[%s4317 + $0x14] sm:$0xf]
      %v4324 = vld [vmem:[%s4317 + $0x18] sm:$0xf]
      %v4325 = vld [vmem:[%s4317 + $0x1c] sm:$0xf]
      %v4334 = vunpack.c.l.b16 %v4318
      %v4335 = vunpack.c.l.b16 %v4319
      %v4336 = vunpack.c.l.b16 %v4320
      %v4337 = vunpack.c.l.b16 %v4321
      %v4338 = vunpack.c.l.b16 %v4322
      %v4339 = vunpack.c.l.b16 %v4323
      %v4340 = vunpack.c.l.b16 %v4324
      %v4341 = vunpack.c.l.b16 %v4325
      %v4342 = vpack.c.b16 %v4335, %v4334
      %v4343 = vpack.c.b16 %v4337, %v4336
      %v4344 = vpack.c.b16 %v4339, %v4338
      %v4345 = vpack.c.b16 %v4341, %v4340
      %v4351 = vsel %vm471, %v4301, 0
      %v4354 = vsel %vm471, %v4302, 0
      %v4357 = vsel %vm471, %v4303, 0
      %v4360 = vsel %vm471, %v4304, 0
      %v4363 = vsel %vm471, %v4305, 0
      %v4366 = vsel %vm471, %v4306, 0
      %v4369 = vsel %vm471, %v4307, 0
      %v4372 = vsel %vm471, %v4308, 0
      %v4375 = vsel %vm471, %v4309, 0
      %v4378 = vsel %vm471, %v4310, 0
      %v4381 = vsel %vm471, %v4311, 0
      %v4384 = vsel %vm471, %v4312, 0
      %v4387 = vsel %vm471, %v4313, 0
      %v4390 = vsel %vm471, %v4314, 0
      %v4393 = vsel %vm471, %v4315, 0
      %v4396 = vsel %vm471, %v4316, 0
      %4398 = vmatprep.subr.bf16.mxu0 0
      %4399 = vmatpush1.bf16.msra.mxu0 %v4342
      %4400 = vmatprep.subr.bf16.mxu0 0
      %4401 = vmatpush1.bf16.msra.mxu0 %v4343
      %4402 = vmatprep.subr.bf16.mxu0 0
      %4403 = vmatpush1.bf16.msra.mxu0 %v4344
      %4404 = vmatprep.subr.bf16.mxu0 0
      %4405 = vmatpush1.bf16.msra.mxu0 %v4345
      %4406 = vmatprep.subr.bf16.mxu0 0
      %4407 = vmatpush1.bf16.msra.mxu0 0
      %4408 = vmatprep.subr.bf16.mxu0 0
      %4409 = vmatpush1.bf16.msra.mxu0 0
      %4410 = vmatprep.subr.bf16.mxu0 0
      %4411 = vmatpush1.bf16.msra.mxu0 0
      %4412 = vmatprep.subr.bf16.mxu0 0
      %4413 = vmatpush1.bf16.msra.mxu0 0
      %4414 = vmatprep.subr.bf16.mxu0 0
      %4415 = vmatpush1.bf16.msra.mxu0 0
      %4416 = vmatprep.subr.bf16.mxu0 0
      %4417 = vmatpush1.bf16.msra.mxu0 0
      %4418 = vmatprep.subr.bf16.mxu0 0
      %4419 = vmatpush1.bf16.msra.mxu0 0
      %4420 = vmatprep.subr.bf16.mxu0 0
      %4421 = vmatpush1.bf16.msra.mxu0 0
      %4422 = vmatprep.subr.bf16.mxu0 0
      %4423 = vmatpush1.bf16.msra.mxu0 0
      %4424 = vmatprep.subr.bf16.mxu0 0
      %4425 = vmatpush1.bf16.msra.mxu0 0
      %4426 = vmatprep.subr.bf16.mxu0 0
      %4427 = vmatpush1.bf16.msra.mxu0 0
      %4428 = vmatprep.subr.bf16.mxu0 0
      %4429 = vmatpush1.bf16.msra.mxu0 0
      %4430 = vmatprep.mubr.bf16.mxu0 0
      %4431 = vmatmul.mubr.bf16.gmra.mrb[0].mxu0 %v4351
      %v4432 = vpop.f32.mrb[0].mxu0
      %v4433 = vadd.f32 0.0, %v4432
      %v4434 = vpop.f32.mrb[0].mxu0
      %v4435 = vpop.f32.mrb[0].mxu0
      %v4436 = vadd.f32 0.0, %v4435
      %v4437 = vpop.f32.mrb[0].mxu0
      %4438 = vmatprep.mubr.bf16.mxu0 0
      %4439 = vmatmul.mubr.bf16.gmra.mrb[0].mxu0 %v4354
      %v4440 = vpop.f32.mrb[0].mxu0
      %v4441 = vadd.f32 0.0, %v4440
      %v4442 = vpop.f32.mrb[0].mxu0
      %v4443 = vpop.f32.mrb[0].mxu0
      %v4444 = vadd.f32 0.0, %v4443
      %v4445 = vpop.f32.mrb[0].mxu0
      %4446 = vmatprep.mubr.bf16.mxu0 0
      %4447 = vmatmul.mubr.bf16.gmra.mrb[0].mxu0 %v4357
      %v4448 = vpop.f32.mrb[0].mxu0
      %v4449 = vadd.f32 0.0, %v4448
      %v4450 = vpop.f32.mrb[0].mxu0
      %v4451 = vpop.f32.mrb[0].mxu0
      %v4452 = vadd.f32 0.0, %v4451
      %v4453 = vpop.f32.mrb[0].mxu0
      %4454 = vmatprep.mubr.bf16.mxu0 0
      %4455 = vmatmul.mubr.bf16.gmra.mrb[0].mxu0 %v4360
      %v4456 = vpop.f32.mrb[0].mxu0
      %v4457 = vadd.f32 0.0, %v4456
      %v4458 = vpop.f32.mrb[0].mxu0
      %v4459 = vpop.f32.mrb[0].mxu0
      %v4460 = vadd.f32 0.0, %v4459
      %v4461 = vpop.f32.mrb[0].mxu0
      %4462 = vmatprep.mubr.bf16.mxu0 0
      %4463 = vmatmul.mubr.bf16.gmra.mrb[0].mxu0 %v4363
      %v4464 = vpop.f32.mrb[0].mxu0
      %v4465 = vadd.f32 0.0, %v4464
      %v4466 = vpop.f32.mrb[0].mxu0
      %v4467 = vpop.f32.mrb[0].mxu0
      %v4468 = vadd.f32 0.0, %v4467
      %v4469 = vpop.f32.mrb[0].mxu0
      %4470 = vmatprep.mubr.bf16.mxu0 0
      %4471 = vmatmul.mubr.bf16.gmra.mrb[0].mxu0 %v4366
      %v4472 = vpop.f32.mrb[0].mxu0
      %v4473 = vadd.f32 0.0, %v4472
      %v4474 = vpop.f32.mrb[0].mxu0
      %v4475 = vpop.f32.mrb[0].mxu0
      %v4476 = vadd.f32 0.0, %v4475
      %v4477 = vpop.f32.mrb[0].mxu0
      %4478 = vmatprep.mubr.bf16.mxu0 0
      %4479 = vmatmul.mubr.bf16.gmra.mrb[0].mxu0 %v4369
      %v4480 = vpop.f32.mrb[0].mxu0
      %v4481 = vadd.f32 0.0, %v4480
      %v4482 = vpop.f32.mrb[0].mxu0
      %v4483 = vpop.f32.mrb[0].mxu0
      %v4484 = vadd.f32 0.0, %v4483
      %v4485 = vpop.f32.mrb[0].mxu0
      %4486 = vmatprep.mubr.bf16.mxu0 0
      %4487 = vmatmul.mubr.bf16.gmra.mrb[0].mxu0 %v4372
      %v4488 = vpop.f32.mrb[0].mxu0
      %v4489 = vadd.f32 0.0, %v4488
      %v4490 = vpop.f32.mrb[0].mxu0
      %v4491 = vpop.f32.mrb[0].mxu0
      %v4492 = vadd.f32 0.0, %v4491
      %v4493 = vpop.f32.mrb[0].mxu0
      %4494 = vmatprep.mubr.bf16.mxu0 0
      %4495 = vmatmul.mubr.bf16.gmra.mrb[0].mxu0 %v4375
      %v4496 = vpop.f32.mrb[0].mxu0
      %v4497 = vadd.f32 0.0, %v4496
      %v4498 = vpop.f32.mrb[0].mxu0
      %v4499 = vpop.f32.mrb[0].mxu0
      %v4500 = vadd.f32 0.0, %v4499
      %v4501 = vpop.f32.mrb[0].mxu0
      %4502 = vmatprep.mubr.bf16.mxu0 0
      %4503 = vmatmul.mubr.bf16.gmra.mrb[0].mxu0 %v4378
      %v4504 = vpop.f32.mrb[0].mxu0
      %v4505 = vadd.f32 0.0, %v4504
      %v4506 = vpop.f32.mrb[0].mxu0
      %v4507 = vpop.f32.mrb[0].mxu0
      %v4508 = vadd.f32 0.0, %v4507
      %v4509 = vpop.f32.mrb[0].mxu0
      %4510 = vmatprep.mubr.bf16.mxu0 0
      %4511 = vmatmul.mubr.bf16.gmra.mrb[0].mxu0 %v4381
      %v4512 = vpop.f32.mrb[0].mxu0
      %v4513 = vadd.f32 0.0, %v4512
      %v4514 = vpop.f32.mrb[0].mxu0
      %v4515 = vpop.f32.mrb[0].mxu0
      %v4516 = vadd.f32 0.0, %v4515
      %v4517 = vpop.f32.mrb[0].mxu0
      %4518 = vmatprep.mubr.bf16.mxu0 0
      %4519 = vmatmul.mubr.bf16.gmra.mrb[0].mxu0 %v4384
      %v4520 = vpop.f32.mrb[0].mxu0
      %v4521 = vadd.f32 0.0, %v4520
      %v4522 = vpop.f32.mrb[0].mxu0
      %v4523 = vpop.f32.mrb[0].mxu0
      %v4524 = vadd.f32 0.0, %v4523
      %v4525 = vpop.f32.mrb[0].mxu0
      %4526 = vmatprep.mubr.bf16.mxu0 0
      %4527 = vmatmul.mubr.bf16.gmra.mrb[0].mxu0 %v4387
      %v4528 = vpop.f32.mrb[0].mxu0
      %v4529 = vadd.f32 0.0, %v4528
      %v4530 = vpop.f32.mrb[0].mxu0
      %v4531 = vpop.f32.mrb[0].mxu0
      %v4532 = vadd.f32 0.0, %v4531
      %v4533 = vpop.f32.mrb[0].mxu0
      %4534 = vmatprep.mubr.bf16.mxu0 0
      %4535 = vmatmul.mubr.bf16.gmra.mrb[0].mxu0 %v4390
      %v4536 = vpop.f32.mrb[0].mxu0
      %v4537 = vadd.f32 0.0, %v4536
      %v4538 = vpop.f32.mrb[0].mxu0
      %v4539 = vpop.f32.mrb[0].mxu0
      %v4540 = vadd.f32 0.0, %v4539
      %v4541 = vpop.f32.mrb[0].mxu0
      %4542 = vmatprep.mubr.bf16.mxu0 0
      %4543 = vmatmul.mubr.bf16.gmra.mrb[0].mxu0 %v4393
      %v4544 = vpop.f32.mrb[0].mxu0
      %v4545 = vadd.f32 0.0, %v4544
      %v4546 = vpop.f32.mrb[0].mxu0
      %v4547 = vpop.f32.mrb[0].mxu0
      %v4548 = vadd.f32 0.0, %v4547
      %v4549 = vpop.f32.mrb[0].mxu0
      %4550 = vmatprep.mubr.bf16.mxu0 0
      %4551 = vmatmul.mubr.bf16.gmra.mrb[0].mxu0 %v4396
      %v4552 = vpop.f32.mrb[0].mxu0
      %v4553 = vadd.f32 0.0, %v4552
      %v4554 = vpop.f32.mrb[0].mxu0
      %v4555 = vpop.f32.mrb[0].mxu0
      %v4556 = vadd.f32 0.0, %v4555
      %v4557 = vpop.f32.mrb[0].mxu0
      %4558 = vdwg.mxu0
      %v4559 = vadd.f32 %v4237, %v4433
      %v4560 = vadd.f32 %v4238, %v4436
      %v4561 = vadd.f32 %v4239, %v4441
      %v4562 = vadd.f32 %v4240, %v4444
      %v4563 = vadd.f32 %v4241, %v4449
      %v4564 = vadd.f32 %v4242, %v4452
      %v4565 = vadd.f32 %v4243, %v4457
      %v4566 = vadd.f32 %v4244, %v4460
      %v4567 = vadd.f32 %v4245, %v4465
      %v4568 = vadd.f32 %v4246, %v4468
      %v4569 = vadd.f32 %v4247, %v4473
      %v4570 = vadd.f32 %v4248, %v4476
      %v4571 = vadd.f32 %v4249, %v4481
      %v4572 = vadd.f32 %v4250, %v4484
      %v4573 = vadd.f32 %v4251, %v4489
      %v4574 = vadd.f32 %v4252, %v4492
      %v4575 = vadd.f32 %v4253, %v4497
      %v4576 = vadd.f32 %v4254, %v4500
      %v4577 = vadd.f32 %v4255, %v4505
      %v4578 = vadd.f32 %v4256, %v4508
      %v4579 = vadd.f32 %v4257, %v4513
      %v4580 = vadd.f32 %v4258, %v4516
      %v4581 = vadd.f32 %v4259, %v4521
      %v4582 = vadd.f32 %v4260, %v4524
      %v4583 = vadd.f32 %v4261, %v4529
      %v4584 = vadd.f32 %v4262, %v4532
      %v4585 = vadd.f32 %v4263, %v4537
      %v4586 = vadd.f32 %v4264, %v4540
      %v4587 = vadd.f32 %v4265, %v4545
      %v4588 = vadd.f32 %v4266, %v4548
      %v4589 = vadd.f32 %v4267, %v4553
      %v4590 = vadd.f32 %v4268, %v4556
      %v4591 = vld [vmem:[%s3335 + $0x1] sm:$0xff]
      %v4592 = vld [vmem:[%s3335 + $0x9] sm:$0xff]
      %v4593 = vld [vmem:[%s3335 + $0x19] sm:$0xff]
      %v4594 = vld [vmem:[%s3335 + $0x21] sm:$0xff]
      %v4595 = vld [vmem:[%s3335 + $0x31] sm:$0xff]
      %v4596 = vld [vmem:[%s3335 + $0x39] sm:$0xff]
      %v4597 = vld [vmem:[%s3335 + $0x49] sm:$0xff]
      %v4598 = vld [vmem:[%s3335 + $0x51] sm:$0xff]
      %v4599 = vld [vmem:[%s3335 + $0x61] sm:$0xff]
      %v4600 = vld [vmem:[%s3335 + $0x69] sm:$0xff]
      %v4601 = vld [vmem:[%s3335 + $0x79] sm:$0xff]
      %v4602 = vld [vmem:[%s3335 + $0x81] sm:$0xff]
      %v4603 = vld [vmem:[%s3335 + $0x91] sm:$0xff]
      %v4604 = vld [vmem:[%s3335 + $0x99] sm:$0xff]
      %v4605 = vld [vmem:[%s3335 + $0xa9] sm:$0xff]
      %v4606 = vld [vmem:[%s3335 + $0xb1] sm:$0xff]
      %v4607 = vld [vmem:[%s3335 + $0xc1] sm:$0xff]
      %v4608 = vld [vmem:[%s3335 + $0xc9] sm:$0xff]
      %v4609 = vld [vmem:[%s3335 + $0xd9] sm:$0xff]
      %v4610 = vld [vmem:[%s3335 + $0xe1] sm:$0xff]
      %v4611 = vld [vmem:[%s3335 + $0xf1] sm:$0xff]
      %v4612 = vld [vmem:[%s3335 + $0xf9] sm:$0xff]
      %v4613 = vld [vmem:[%s3335 + $0x109] sm:$0xff]
      %v4614 = vld [vmem:[%s3335 + $0x111] sm:$0xff]
      %v4615 = vld [vmem:[%s3335 + $0x121] sm:$0xff]
      %v4616 = vld [vmem:[%s3335 + $0x129] sm:$0xff]
      %v4617 = vld [vmem:[%s3335 + $0x139] sm:$0xff]
      %v4618 = vld [vmem:[%s3335 + $0x141] sm:$0xff]
      %v4619 = vld [vmem:[%s3335 + $0x151] sm:$0xff]
      %v4620 = vld [vmem:[%s3335 + $0x159] sm:$0xff]
      %v4621 = vld [vmem:[%s3335 + $0x169] sm:$0xff]
      %v4622 = vld [vmem:[%s3335 + $0x171] sm:$0xff]
      %v4623 = vpack.c.bf16 %v4592, %v4591
      %v4624 = vpack.c.bf16 %v4594, %v4593
      %v4625 = vpack.c.bf16 %v4596, %v4595
      %v4626 = vpack.c.bf16 %v4598, %v4597
      %v4627 = vpack.c.bf16 %v4600, %v4599
      %v4628 = vpack.c.bf16 %v4602, %v4601
      %v4629 = vpack.c.bf16 %v4604, %v4603
      %v4630 = vpack.c.bf16 %v4606, %v4605
      %v4631 = vpack.c.bf16 %v4608, %v4607
      %v4632 = vpack.c.bf16 %v4610, %v4609
      %v4633 = vpack.c.bf16 %v4612, %v4611
      %v4634 = vpack.c.bf16 %v4614, %v4613
      %v4635 = vpack.c.bf16 %v4616, %v4615
      %v4636 = vpack.c.bf16 %v4618, %v4617
      %v4637 = vpack.c.bf16 %v4620, %v4619
      %v4638 = vpack.c.bf16 %v4622, %v4621
      %s4639 = scalar_lea.vmem %s4, 128
      %v4640 = vld [vmem:[%s4639] sm:$0xf]
      %v4641 = vld [vmem:[%s4639 + $0x4] sm:$0xf]
      %v4642 = vld [vmem:[%s4639 + $0x8] sm:$0xf]
      %v4643 = vld [vmem:[%s4639 + $0xc] sm:$0xf]
      %v4644 = vld [vmem:[%s4639 + $0x10] sm:$0xf]
      %v4645 = vld [vmem:[%s4639 + $0x14] sm:$0xf]
      %v4646 = vld [vmem:[%s4639 + $0x18] sm:$0xf]
      %v4647 = vld [vmem:[%s4639 + $0x1c] sm:$0xf]
      %v4656 = vunpack.c.l.b16 %v4640
      %v4657 = vunpack.c.l.b16 %v4641
      %v4658 = vunpack.c.l.b16 %v4642
      %v4659 = vunpack.c.l.b16 %v4643
      %v4660 = vunpack.c.l.b16 %v4644
      %v4661 = vunpack.c.l.b16 %v4645
      %v4662 = vunpack.c.l.b16 %v4646
      %v4663 = vunpack.c.l.b16 %v4647
      %v4664 = vpack.c.b16 %v4657, %v4656
      %v4665 = vpack.c.b16 %v4659, %v4658
      %v4666 = vpack.c.b16 %v4661, %v4660
      %v4667 = vpack.c.b16 %v4663, %v4662
      %v4673 = vsel %vm471, %v4623, 0
      %v4676 = vsel %vm471, %v4624, 0
      %v4679 = vsel %vm471, %v4625, 0
      %v4682 = vsel %vm471, %v4626, 0
      %v4685 = vsel %vm471, %v4627, 0
      %v4688 = vsel %vm471, %v4628, 0
      %v4691 = vsel %vm471, %v4629, 0
      %v4694 = vsel %vm471, %v4630, 0
      %v4697 = vsel %vm471, %v4631, 0
      %v4700 = vsel %vm471, %v4632, 0
      %v4703 = vsel %vm471, %v4633, 0
      %v4706 = vsel %vm471, %v4634, 0
      %v4709 = vsel %vm471, %v4635, 0
      %v4712 = vsel %vm471, %v4636, 0
      %v4715 = vsel %vm471, %v4637, 0
      %v4718 = vsel %vm471, %v4638, 0
      %4720 = vmatprep.subr.bf16.mxu0 0
      %4721 = vmatpush1.bf16.msra.mxu0 %v4664
      %4722 = vmatprep.subr.bf16.mxu0 0
      %4723 = vmatpush1.bf16.msra.mxu0 %v4665
      %4724 = vmatprep.subr.bf16.mxu0 0
      %4725 = vmatpush1.bf16.msra.mxu0 %v4666
      %4726 = vmatprep.subr.bf16.mxu0 0
      %4727 = vmatpush1.bf16.msra.mxu0 %v4667
      %4728 = vmatprep.subr.bf16.mxu0 0
      %4729 = vmatpush1.bf16.msra.mxu0 0
      %4730 = vmatprep.subr.bf16.mxu0 0
      %4731 = vmatpush1.bf16.msra.mxu0 0
      %4732 = vmatprep.subr.bf16.mxu0 0
      %4733 = vmatpush1.bf16.msra.mxu0 0
      %4734 = vmatprep.subr.bf16.mxu0 0
      %4735 = vmatpush1.bf16.msra.mxu0 0
      %4736 = vmatprep.subr.bf16.mxu0 0
      %4737 = vmatpush1.bf16.msra.mxu0 0
      %4738 = vmatprep.subr.bf16.mxu0 0
      %4739 = vmatpush1.bf16.msra.mxu0 0
      %4740 = vmatprep.subr.bf16.mxu0 0
      %4741 = vmatpush1.bf16.msra.mxu0 0
      %4742 = vmatprep.subr.bf16.mxu0 0
      %4743 = vmatpush1.bf16.msra.mxu0 0
      %4744 = vmatprep.subr.bf16.mxu0 0
      %4745 = vmatpush1.bf16.msra.mxu0 0
      %4746 = vmatprep.subr.bf16.mxu0 0
      %4747 = vmatpush1.bf16.msra.mxu0 0
      %4748 = vmatprep.subr.bf16.mxu0 0
      %4749 = vmatpush1.bf16.msra.mxu0 0
      %4750 = vmatprep.subr.bf16.mxu0 0
      %4751 = vmatpush1.bf16.msra.mxu0 0
      %4752 = vmatprep.mubr.bf16.mxu0 0
      %4753 = vmatmul.mubr.bf16.gmra.mrb[0].mxu0 %v4673
      %v4754 = vpop.f32.mrb[0].mxu0
      %v4755 = vadd.f32 0.0, %v4754
      %v4756 = vpop.f32.mrb[0].mxu0
      %v4757 = vpop.f32.mrb[0].mxu0
      %v4758 = vadd.f32 0.0, %v4757
      %v4759 = vpop.f32.mrb[0].mxu0
      %4760 = vmatprep.mubr.bf16.mxu0 0
      %4761 = vmatmul.mubr.bf16.gmra.mrb[0].mxu0 %v4676
      %v4762 = vpop.f32.mrb[0].mxu0
      %v4763 = vadd.f32 0.0, %v4762
      %v4764 = vpop.f32.mrb[0].mxu0
      %v4765 = vpop.f32.mrb[0].mxu0
      %v4766 = vadd.f32 0.0, %v4765
      %v4767 = vpop.f32.mrb[0].mxu0
      %4768 = vmatprep.mubr.bf16.mxu0 0
      %4769 = vmatmul.mubr.bf16.gmra.mrb[0].mxu0 %v4679
      %v4770 = vpop.f32.mrb[0].mxu0
      %v4771 = vadd.f32 0.0, %v4770
      %v4772 = vpop.f32.mrb[0].mxu0
      %v4773 = vpop.f32.mrb[0].mxu0
      %v4774 = vadd.f32 0.0, %v4773
      %v4775 = vpop.f32.mrb[0].mxu0
      %4776 = vmatprep.mubr.bf16.mxu0 0
      %4777 = vmatmul.mubr.bf16.gmra.mrb[0].mxu0 %v4682
      %v4778 = vpop.f32.mrb[0].mxu0
      %v4779 = vadd.f32 0.0, %v4778
      %v4780 = vpop.f32.mrb[0].mxu0
      %v4781 = vpop.f32.mrb[0].mxu0
      %v4782 = vadd.f32 0.0, %v4781
      %v4783 = vpop.f32.mrb[0].mxu0
      %4784 = vmatprep.mubr.bf16.mxu0 0
      %4785 = vmatmul.mubr.bf16.gmra.mrb[0].mxu0 %v4685
      %v4786 = vpop.f32.mrb[0].mxu0
      %v4787 = vadd.f32 0.0, %v4786
      %v4788 = vpop.f32.mrb[0].mxu0
      %v4789 = vpop.f32.mrb[0].mxu0
      %v4790 = vadd.f32 0.0, %v4789
      %v4791 = vpop.f32.mrb[0].mxu0
      %4792 = vmatprep.mubr.bf16.mxu0 0
      %4793 = vmatmul.mubr.bf16.gmra.mrb[0].mxu0 %v4688
      %v4794 = vpop.f32.mrb[0].mxu0
      %v4795 = vadd.f32 0.0, %v4794
      %v4796 = vpop.f32.mrb[0].mxu0
      %v4797 = vpop.f32.mrb[0].mxu0
      %v4798 = vadd.f32 0.0, %v4797
      %v4799 = vpop.f32.mrb[0].mxu0
      %4800 = vmatprep.mubr.bf16.mxu0 0
      %4801 = vmatmul.mubr.bf16.gmra.mrb[0].mxu0 %v4691
      %v4802 = vpop.f32.mrb[0].mxu0
      %v4803 = vadd.f32 0.0, %v4802
      %v4804 = vpop.f32.mrb[0].mxu0
      %v4805 = vpop.f32.mrb[0].mxu0
      %v4806 = vadd.f32 0.0, %v4805
      %v4807 = vpop.f32.mrb[0].mxu0
      %4808 = vmatprep.mubr.bf16.mxu0 0
      %4809 = vmatmul.mubr.bf16.gmra.mrb[0].mxu0 %v4694
      %v4810 = vpop.f32.mrb[0].mxu0
      %v4811 = vadd.f32 0.0, %v4810
      %v4812 = vpop.f32.mrb[0].mxu0
      %v4813 = vpop.f32.mrb[0].mxu0
      %v4814 = vadd.f32 0.0, %v4813
      %v4815 = vpop.f32.mrb[0].mxu0
      %4816 = vmatprep.mubr.bf16.mxu0 0
      %4817 = vmatmul.mubr.bf16.gmra.mrb[0].mxu0 %v4697
      %v4818 = vpop.f32.mrb[0].mxu0
      %v4819 = vadd.f32 0.0, %v4818
      %v4820 = vpop.f32.mrb[0].mxu0
      %v4821 = vpop.f32.mrb[0].mxu0
      %v4822 = vadd.f32 0.0, %v4821
      %v4823 = vpop.f32.mrb[0].mxu0
      %4824 = vmatprep.mubr.bf16.mxu0 0
      %4825 = vmatmul.mubr.bf16.gmra.mrb[0].mxu0 %v4700
      %v4826 = vpop.f32.mrb[0].mxu0
      %v4827 = vadd.f32 0.0, %v4826
      %v4828 = vpop.f32.mrb[0].mxu0
      %v4829 = vpop.f32.mrb[0].mxu0
      %v4830 = vadd.f32 0.0, %v4829
      %v4831 = vpop.f32.mrb[0].mxu0
      %4832 = vmatprep.mubr.bf16.mxu0 0
      %4833 = vmatmul.mubr.bf16.gmra.mrb[0].mxu0 %v4703
      %v4834 = vpop.f32.mrb[0].mxu0
      %v4835 = vadd.f32 0.0, %v4834
      %v4836 = vpop.f32.mrb[0].mxu0
      %v4837 = vpop.f32.mrb[0].mxu0
      %v4838 = vadd.f32 0.0, %v4837
      %v4839 = vpop.f32.mrb[0].mxu0
      %4840 = vmatprep.mubr.bf16.mxu0 0
      %4841 = vmatmul.mubr.bf16.gmra.mrb[0].mxu0 %v4706
      %v4842 = vpop.f32.mrb[0].mxu0
      %v4843 = vadd.f32 0.0, %v4842
      %v4844 = vpop.f32.mrb[0].mxu0
      %v4845 = vpop.f32.mrb[0].mxu0
      %v4846 = vadd.f32 0.0, %v4845
      %v4847 = vpop.f32.mrb[0].mxu0
      %4848 = vmatprep.mubr.bf16.mxu0 0
      %4849 = vmatmul.mubr.bf16.gmra.mrb[0].mxu0 %v4709
      %v4850 = vpop.f32.mrb[0].mxu0
      %v4851 = vadd.f32 0.0, %v4850
      %v4852 = vpop.f32.mrb[0].mxu0
      %v4853 = vpop.f32.mrb[0].mxu0
      %v4854 = vadd.f32 0.0, %v4853
      %v4855 = vpop.f32.mrb[0].mxu0
      %4856 = vmatprep.mubr.bf16.mxu0 0
      %4857 = vmatmul.mubr.bf16.gmra.mrb[0].mxu0 %v4712
      %v4858 = vpop.f32.mrb[0].mxu0
      %v4859 = vadd.f32 0.0, %v4858
      %v4860 = vpop.f32.mrb[0].mxu0
      %v4861 = vpop.f32.mrb[0].mxu0
      %v4862 = vadd.f32 0.0, %v4861
      %v4863 = vpop.f32.mrb[0].mxu0
      %4864 = vmatprep.mubr.bf16.mxu0 0
      %4865 = vmatmul.mubr.bf16.gmra.mrb[0].mxu0 %v4715
      %v4866 = vpop.f32.mrb[0].mxu0
      %v4867 = vadd.f32 0.0, %v4866
      %v4868 = vpop.f32.mrb[0].mxu0
      %v4869 = vpop.f32.mrb[0].mxu0
      %v4870 = vadd.f32 0.0, %v4869
      %v4871 = vpop.f32.mrb[0].mxu0
      %4872 = vmatprep.mubr.bf16.mxu0 0
      %4873 = vmatmul.mubr.bf16.gmra.mrb[0].mxu0 %v4718
      %v4874 = vpop.f32.mrb[0].mxu0
      %v4875 = vadd.f32 0.0, %v4874
      %v4876 = vpop.f32.mrb[0].mxu0
      %v4877 = vpop.f32.mrb[0].mxu0
      %v4878 = vadd.f32 0.0, %v4877
      %v4879 = vpop.f32.mrb[0].mxu0
      %4880 = vdwg.mxu0
      %v4881 = vadd.f32 %v4559, %v4755
      %v4882 = vadd.f32 %v4560, %v4758
      %v4883 = vadd.f32 %v4561, %v4763
      %v4884 = vadd.f32 %v4562, %v4766
      %v4885 = vadd.f32 %v4563, %v4771
      %v4886 = vadd.f32 %v4564, %v4774
      %v4887 = vadd.f32 %v4565, %v4779
      %v4888 = vadd.f32 %v4566, %v4782
      %v4889 = vadd.f32 %v4567, %v4787
      %v4890 = vadd.f32 %v4568, %v4790
      %v4891 = vadd.f32 %v4569, %v4795
      %v4892 = vadd.f32 %v4570, %v4798
      %v4893 = vadd.f32 %v4571, %v4803
      %v4894 = vadd.f32 %v4572, %v4806
      %v4895 = vadd.f32 %v4573, %v4811
      %v4896 = vadd.f32 %v4574, %v4814
      %v4897 = vadd.f32 %v4575, %v4819
      %v4898 = vadd.f32 %v4576, %v4822
      %v4899 = vadd.f32 %v4577, %v4827
      %v4900 = vadd.f32 %v4578, %v4830
      %v4901 = vadd.f32 %v4579, %v4835
      %v4902 = vadd.f32 %v4580, %v4838
      %v4903 = vadd.f32 %v4581, %v4843
      %v4904 = vadd.f32 %v4582, %v4846
      %v4905 = vadd.f32 %v4583, %v4851
      %v4906 = vadd.f32 %v4584, %v4854
      %v4907 = vadd.f32 %v4585, %v4859
      %v4908 = vadd.f32 %v4586, %v4862
      %v4909 = vadd.f32 %v4587, %v4867
      %v4910 = vadd.f32 %v4588, %v4870
      %v4911 = vadd.f32 %v4589, %v4875
      %v4912 = vadd.f32 %v4590, %v4878
      %v4913 = vld [vmem:[%s3335 + $0x2] sm:$0xff]
      %v4914 = vld [vmem:[%s3335 + $0xa] sm:$0xff]
      %v4915 = vld [vmem:[%s3335 + $0x1a] sm:$0xff]
      %v4916 = vld [vmem:[%s3335 + $0x22] sm:$0xff]
      %v4917 = vld [vmem:[%s3335 + $0x32] sm:$0xff]
      %v4918 = vld [vmem:[%s3335 + $0x3a] sm:$0xff]
      %v4919 = vld [vmem:[%s3335 + $0x4a] sm:$0xff]
      %v4920 = vld [vmem:[%s3335 + $0x52] sm:$0xff]
      %v4921 = vld [vmem:[%s3335 + $0x62] sm:$0xff]
      %v4922 = vld [vmem:[%s3335 + $0x6a] sm:$0xff]
      %v4923 = vld [vmem:[%s3335 + $0x7a] sm:$0xff]
      %v4924 = vld [vmem:[%s3335 + $0x82] sm:$0xff]
      %v4925 = vld [vmem:[%s3335 + $0x92] sm:$0xff]
      %v4926 = vld [vmem:[%s3335 + $0x9a] sm:$0xff]
      %v4927 = vld [vmem:[%s3335 + $0xaa] sm:$0xff]
      %v4928 = vld [vmem:[%s3335 + $0xb2] sm:$0xff]
      %v4929 = vld [vmem:[%s3335 + $0xc2] sm:$0xff]
      %v4930 = vld [vmem:[%s3335 + $0xca] sm:$0xff]
      %v4931 = vld [vmem:[%s3335 + $0xda] sm:$0xff]
      %v4932 = vld [vmem:[%s3335 + $0xe2] sm:$0xff]
      %v4933 = vld [vmem:[%s3335 + $0xf2] sm:$0xff]
      %v4934 = vld [vmem:[%s3335 + $0xfa] sm:$0xff]
      %v4935 = vld [vmem:[%s3335 + $0x10a] sm:$0xff]
      %v4936 = vld [vmem:[%s3335 + $0x112] sm:$0xff]
      %v4937 = vld [vmem:[%s3335 + $0x122] sm:$0xff]
      %v4938 = vld [vmem:[%s3335 + $0x12a] sm:$0xff]
      %v4939 = vld [vmem:[%s3335 + $0x13a] sm:$0xff]
      %v4940 = vld [vmem:[%s3335 + $0x142] sm:$0xff]
      %v4941 = vld [vmem:[%s3335 + $0x152] sm:$0xff]
      %v4942 = vld [vmem:[%s3335 + $0x15a] sm:$0xff]
      %v4943 = vld [vmem:[%s3335 + $0x16a] sm:$0xff]
      %v4944 = vld [vmem:[%s3335 + $0x172] sm:$0xff]
      %v4945 = vpack.c.bf16 %v4914, %v4913
      %v4946 = vpack.c.bf16 %v4916, %v4915
      %v4947 = vpack.c.bf16 %v4918, %v4917
      %v4948 = vpack.c.bf16 %v4920, %v4919
      %v4949 = vpack.c.bf16 %v4922, %v4921
      %v4950 = vpack.c.bf16 %v4924, %v4923
      %v4951 = vpack.c.bf16 %v4926, %v4925
      %v4952 = vpack.c.bf16 %v4928, %v4927
      %v4953 = vpack.c.bf16 %v4930, %v4929
      %v4954 = vpack.c.bf16 %v4932, %v4931
      %v4955 = vpack.c.bf16 %v4934, %v4933
      %v4956 = vpack.c.bf16 %v4936, %v4935
      %v4957 = vpack.c.bf16 %v4938, %v4937
      %v4958 = vpack.c.bf16 %v4940, %v4939
      %v4959 = vpack.c.bf16 %v4942, %v4941
      %v4960 = vpack.c.bf16 %v4944, %v4943
      %s4961 = scalar_lea.vmem %s4, 160
      %v4962 = vld [vmem:[%s4961] sm:$0xf]
      %v4963 = vld [vmem:[%s4961 + $0x4] sm:$0xf]
      %v4964 = vld [vmem:[%s4961 + $0x8] sm:$0xf]
      %v4965 = vld [vmem:[%s4961 + $0xc] sm:$0xf]
      %v4966 = vld [vmem:[%s4961 + $0x10] sm:$0xf]
      %v4967 = vld [vmem:[%s4961 + $0x14] sm:$0xf]
      %v4968 = vld [vmem:[%s4961 + $0x18] sm:$0xf]
      %v4969 = vld [vmem:[%s4961 + $0x1c] sm:$0xf]
      %v4978 = vunpack.c.l.b16 %v4962
      %v4979 = vunpack.c.l.b16 %v4963
      %v4980 = vunpack.c.l.b16 %v4964
      %v4981 = vunpack.c.l.b16 %v4965
      %v4982 = vunpack.c.l.b16 %v4966
      %v4983 = vunpack.c.l.b16 %v4967
      %v4984 = vunpack.c.l.b16 %v4968
      %v4985 = vunpack.c.l.b16 %v4969
      %v4986 = vpack.c.b16 %v4979, %v4978
      %v4987 = vpack.c.b16 %v4981, %v4980
      %v4988 = vpack.c.b16 %v4983, %v4982
      %v4989 = vpack.c.b16 %v4985, %v4984
      %v4995 = vsel %vm471, %v4945, 0
      %v4998 = vsel %vm471, %v4946, 0
      %v5001 = vsel %vm471, %v4947, 0
      %v5004 = vsel %vm471, %v4948, 0
      %v5007 = vsel %vm471, %v4949, 0
      %v5010 = vsel %vm471, %v4950, 0
      %v5013 = vsel %vm471, %v4951, 0
      %v5016 = vsel %vm471, %v4952, 0
      %v5019 = vsel %vm471, %v4953, 0
      %v5022 = vsel %vm471, %v4954, 0
      %v5025 = vsel %vm471, %v4955, 0
      %v5028 = vsel %vm471, %v4956, 0
      %v5031 = vsel %vm471, %v4957, 0
      %v5034 = vsel %vm471, %v4958, 0
      %v5037 = vsel %vm471, %v4959, 0
      %v5040 = vsel %vm471, %v4960, 0
      %5042 = vmatprep.subr.bf16.mxu0 0
      %5043 = vmatpush1.bf16.msra.mxu0 %v4986
      %5044 = vmatprep.subr.bf16.mxu0 0
      %5045 = vmatpush1.bf16.msra.mxu0 %v4987
      %5046 = vmatprep.subr.bf16.mxu0 0
      %5047 = vmatpush1.bf16.msra.mxu0 %v4988
      %5048 = vmatprep.subr.bf16.mxu0 0
      %5049 = vmatpush1.bf16.msra.mxu0 %v4989
      %5050 = vmatprep.subr.bf16.mxu0 0
      %5051 = vmatpush1.bf16.msra.mxu0 0
      %5052 = vmatprep.subr.bf16.mxu0 0
      %5053 = vmatpush1.bf16.msra.mxu0 0
      %5054 = vmatprep.subr.bf16.mxu0 0
      %5055 = vmatpush1.bf16.msra.mxu0 0
      %5056 = vmatprep.subr.bf16.mxu0 0
      %5057 = vmatpush1.bf16.msra.mxu0 0
      %5058 = vmatprep.subr.bf16.mxu0 0
      %5059 = vmatpush1.bf16.msra.mxu0 0
      %5060 = vmatprep.subr.bf16.mxu0 0
      %5061 = vmatpush1.bf16.msra.mxu0 0
      %5062 = vmatprep.subr.bf16.mxu0 0
      %5063 = vmatpush1.bf16.msra.mxu0 0
      %5064 = vmatprep.subr.bf16.mxu0 0
      %5065 = vmatpush1.bf16.msra.mxu0 0
      %5066 = vmatprep.subr.bf16.mxu0 0
      %5067 = vmatpush1.bf16.msra.mxu0 0
      %5068 = vmatprep.subr.bf16.mxu0 0
      %5069 = vmatpush1.bf16.msra.mxu0 0
      %5070 = vmatprep.subr.bf16.mxu0 0
      %5071 = vmatpush1.bf16.msra.mxu0 0
      %5072 = vmatprep.subr.bf16.mxu0 0
      %5073 = vmatpush1.bf16.msra.mxu0 0
      %5074 = vmatprep.mubr.bf16.mxu0 0
      %5075 = vmatmul.mubr.bf16.gmra.mrb[0].mxu0 %v4995
      %v5076 = vpop.f32.mrb[0].mxu0
      %v5077 = vadd.f32 0.0, %v5076
      %v5078 = vpop.f32.mrb[0].mxu0
      %v5079 = vpop.f32.mrb[0].mxu0
      %v5080 = vadd.f32 0.0, %v5079
      %v5081 = vpop.f32.mrb[0].mxu0
      %5082 = vmatprep.mubr.bf16.mxu0 0
      %5083 = vmatmul.mubr.bf16.gmra.mrb[0].mxu0 %v4998
      %v5084 = vpop.f32.mrb[0].mxu0
      %v5085 = vadd.f32 0.0, %v5084
      %v5086 = vpop.f32.mrb[0].mxu0
      %v5087 = vpop.f32.mrb[0].mxu0
      %v5088 = vadd.f32 0.0, %v5087
      %v5089 = vpop.f32.mrb[0].mxu0
      %5090 = vmatprep.mubr.bf16.mxu0 0
      %5091 = vmatmul.mubr.bf16.gmra.mrb[0].mxu0 %v5001
      %v5092 = vpop.f32.mrb[0].mxu0
      %v5093 = vadd.f32 0.0, %v5092
      %v5094 = vpop.f32.mrb[0].mxu0
      %v5095 = vpop.f32.mrb[0].mxu0
      %v5096 = vadd.f32 0.0, %v5095
      %v5097 = vpop.f32.mrb[0].mxu0
      %5098 = vmatprep.mubr.bf16.mxu0 0
      %5099 = vmatmul.mubr.bf16.gmra.mrb[0].mxu0 %v5004
      %v5100 = vpop.f32.mrb[0].mxu0
      %v5101 = vadd.f32 0.0, %v5100
      %v5102 = vpop.f32.mrb[0].mxu0
      %v5103 = vpop.f32.mrb[0].mxu0
      %v5104 = vadd.f32 0.0, %v5103
      %v5105 = vpop.f32.mrb[0].mxu0
      %5106 = vmatprep.mubr.bf16.mxu0 0
      %5107 = vmatmul.mubr.bf16.gmra.mrb[0].mxu0 %v5007
      %v5108 = vpop.f32.mrb[0].mxu0
      %v5109 = vadd.f32 0.0, %v5108
      %v5110 = vpop.f32.mrb[0].mxu0
      %v5111 = vpop.f32.mrb[0].mxu0
      %v5112 = vadd.f32 0.0, %v5111
      %v5113 = vpop.f32.mrb[0].mxu0
      %5114 = vmatprep.mubr.bf16.mxu0 0
      %5115 = vmatmul.mubr.bf16.gmra.mrb[0].mxu0 %v5010
      %v5116 = vpop.f32.mrb[0].mxu0
      %v5117 = vadd.f32 0.0, %v5116
      %v5118 = vpop.f32.mrb[0].mxu0
      %v5119 = vpop.f32.mrb[0].mxu0
      %v5120 = vadd.f32 0.0, %v5119
      %v5121 = vpop.f32.mrb[0].mxu0
      %5122 = vmatprep.mubr.bf16.mxu0 0
      %5123 = vmatmul.mubr.bf16.gmra.mrb[0].mxu0 %v5013
      %v5124 = vpop.f32.mrb[0].mxu0
      %v5125 = vadd.f32 0.0, %v5124
      %v5126 = vpop.f32.mrb[0].mxu0
      %v5127 = vpop.f32.mrb[0].mxu0
      %v5128 = vadd.f32 0.0, %v5127
      %v5129 = vpop.f32.mrb[0].mxu0
      %5130 = vmatprep.mubr.bf16.mxu0 0
      %5131 = vmatmul.mubr.bf16.gmra.mrb[0].mxu0 %v5016
      %v5132 = vpop.f32.mrb[0].mxu0
      %v5133 = vadd.f32 0.0, %v5132
      %v5134 = vpop.f32.mrb[0].mxu0
      %v5135 = vpop.f32.mrb[0].mxu0
      %v5136 = vadd.f32 0.0, %v5135
      %v5137 = vpop.f32.mrb[0].mxu0
      %5138 = vmatprep.mubr.bf16.mxu0 0
      %5139 = vmatmul.mubr.bf16.gmra.mrb[0].mxu0 %v5019
      %v5140 = vpop.f32.mrb[0].mxu0
      %v5141 = vadd.f32 0.0, %v5140
      %v5142 = vpop.f32.mrb[0].mxu0
      %v5143 = vpop.f32.mrb[0].mxu0
      %v5144 = vadd.f32 0.0, %v5143
      %v5145 = vpop.f32.mrb[0].mxu0
      %5146 = vmatprep.mubr.bf16.mxu0 0
      %5147 = vmatmul.mubr.bf16.gmra.mrb[0].mxu0 %v5022
      %v5148 = vpop.f32.mrb[0].mxu0
      %v5149 = vadd.f32 0.0, %v5148
      %v5150 = vpop.f32.mrb[0].mxu0
      %v5151 = vpop.f32.mrb[0].mxu0
      %v5152 = vadd.f32 0.0, %v5151
      %v5153 = vpop.f32.mrb[0].mxu0
      %5154 = vmatprep.mubr.bf16.mxu0 0
      %5155 = vmatmul.mubr.bf16.gmra.mrb[0].mxu0 %v5025
      %v5156 = vpop.f32.mrb[0].mxu0
      %v5157 = vadd.f32 0.0, %v5156
      %v5158 = vpop.f32.mrb[0].mxu0
      %v5159 = vpop.f32.mrb[0].mxu0
      %v5160 = vadd.f32 0.0, %v5159
      %v5161 = vpop.f32.mrb[0].mxu0
      %5162 = vmatprep.mubr.bf16.mxu0 0
      %5163 = vmatmul.mubr.bf16.gmra.mrb[0].mxu0 %v5028
      %v5164 = vpop.f32.mrb[0].mxu0
      %v5165 = vadd.f32 0.0, %v5164
      %v5166 = vpop.f32.mrb[0].mxu0
      %v5167 = vpop.f32.mrb[0].mxu0
      %v5168 = vadd.f32 0.0, %v5167
      %v5169 = vpop.f32.mrb[0].mxu0
      %5170 = vmatprep.mubr.bf16.mxu0 0
      %5171 = vmatmul.mubr.bf16.gmra.mrb[0].mxu0 %v5031
      %v5172 = vpop.f32.mrb[0].mxu0
      %v5173 = vadd.f32 0.0, %v5172
      %v5174 = vpop.f32.mrb[0].mxu0
      %v5175 = vpop.f32.mrb[0].mxu0
      %v5176 = vadd.f32 0.0, %v5175
      %v5177 = vpop.f32.mrb[0].mxu0
      %5178 = vmatprep.mubr.bf16.mxu0 0
      %5179 = vmatmul.mubr.bf16.gmra.mrb[0].mxu0 %v5034
      %v5180 = vpop.f32.mrb[0].mxu0
      %v5181 = vadd.f32 0.0, %v5180
      %v5182 = vpop.f32.mrb[0].mxu0
      %v5183 = vpop.f32.mrb[0].mxu0
      %v5184 = vadd.f32 0.0, %v5183
      %v5185 = vpop.f32.mrb[0].mxu0
      %5186 = vmatprep.mubr.bf16.mxu0 0
      %5187 = vmatmul.mubr.bf16.gmra.mrb[0].mxu0 %v5037
      %v5188 = vpop.f32.mrb[0].mxu0
      %v5189 = vadd.f32 0.0, %v5188
      %v5190 = vpop.f32.mrb[0].mxu0
      %v5191 = vpop.f32.mrb[0].mxu0
      %v5192 = vadd.f32 0.0, %v5191
      %v5193 = vpop.f32.mrb[0].mxu0
      %5194 = vmatprep.mubr.bf16.mxu0 0
      %5195 = vmatmul.mubr.bf16.gmra.mrb[0].mxu0 %v5040
      %v5196 = vpop.f32.mrb[0].mxu0
      %v5197 = vadd.f32 0.0, %v5196
      %v5198 = vpop.f32.mrb[0].mxu0
      %v5199 = vpop.f32.mrb[0].mxu0
      %v5200 = vadd.f32 0.0, %v5199
      %v5201 = vpop.f32.mrb[0].mxu0
      %5202 = vdwg.mxu0
      %v5203 = vadd.f32 %v4881, %v5077
      %v5204 = vadd.f32 %v4882, %v5080
      %v5205 = vadd.f32 %v4883, %v5085
      %v5206 = vadd.f32 %v4884, %v5088
      %v5207 = vadd.f32 %v4885, %v5093
      %v5208 = vadd.f32 %v4886, %v5096
      %v5209 = vadd.f32 %v4887, %v5101
      %v5210 = vadd.f32 %v4888, %v5104
      %v5211 = vadd.f32 %v4889, %v5109
      %v5212 = vadd.f32 %v4890, %v5112
      %v5213 = vadd.f32 %v4891, %v5117
      %v5214 = vadd.f32 %v4892, %v5120
      %v5215 = vadd.f32 %v4893, %v5125
      %v5216 = vadd.f32 %v4894, %v5128
      %v5217 = vadd.f32 %v4895, %v5133
      %v5218 = vadd.f32 %v4896, %v5136
      %v5219 = vadd.f32 %v4897, %v5141
      %v5220 = vadd.f32 %v4898, %v5144
      %v5221 = vadd.f32 %v4899, %v5149
      %v5222 = vadd.f32 %v4900, %v5152
      %v5223 = vadd.f32 %v4901, %v5157
      %v5224 = vadd.f32 %v4902, %v5160
      %v5225 = vadd.f32 %v4903, %v5165
      %v5226 = vadd.f32 %v4904, %v5168
      %v5227 = vadd.f32 %v4905, %v5173
      %v5228 = vadd.f32 %v4906, %v5176
      %v5229 = vadd.f32 %v4907, %v5181
      %v5230 = vadd.f32 %v4908, %v5184
      %v5231 = vadd.f32 %v4909, %v5189
      %v5232 = vadd.f32 %v4910, %v5192
      %v5233 = vadd.f32 %v4911, %v5197
      %v5234 = vadd.f32 %v4912, %v5200
      %s5235 = scalar_lea.vmem [#allocation2], 48
      %v5236 = vld [vmem:[%s5235] sm:$0xff]
      %v5237 = vld [vmem:[%s5235 + $0x8] sm:$0xff]
      %v5238 = vld [vmem:[%s5235 + $0x18] sm:$0xff]
      %v5239 = vld [vmem:[%s5235 + $0x20] sm:$0xff]
      %v5240 = vld [vmem:[%s5235 + $0x30] sm:$0xff]
      %v5241 = vld [vmem:[%s5235 + $0x38] sm:$0xff]
      %v5242 = vld [vmem:[%s5235 + $0x48] sm:$0xff]
      %v5243 = vld [vmem:[%s5235 + $0x50] sm:$0xff]
      %v5244 = vld [vmem:[%s5235 + $0x60] sm:$0xff]
      %v5245 = vld [vmem:[%s5235 + $0x68] sm:$0xff]
      %v5246 = vld [vmem:[%s5235 + $0x78] sm:$0xff]
      %v5247 = vld [vmem:[%s5235 + $0x80] sm:$0xff]
      %v5248 = vld [vmem:[%s5235 + $0x90] sm:$0xff]
      %v5249 = vld [vmem:[%s5235 + $0x98] sm:$0xff]
      %v5250 = vld [vmem:[%s5235 + $0xa8] sm:$0xff]
      %v5251 = vld [vmem:[%s5235 + $0xb0] sm:$0xff]
      %v5252 = vld [vmem:[%s5235 + $0xc0] sm:$0xff]
      %v5253 = vld [vmem:[%s5235 + $0xc8] sm:$0xff]
      %v5254 = vld [vmem:[%s5235 + $0xd8] sm:$0xff]
      %v5255 = vld [vmem:[%s5235 + $0xe0] sm:$0xff]
      %v5256 = vld [vmem:[%s5235 + $0xf0] sm:$0xff]
      %v5257 = vld [vmem:[%s5235 + $0xf8] sm:$0xff]
      %v5258 = vld [vmem:[%s5235 + $0x108] sm:$0xff]
      %v5259 = vld [vmem:[%s5235 + $0x110] sm:$0xff]
      %v5260 = vld [vmem:[%s5235 + $0x120] sm:$0xff]
      %v5261 = vld [vmem:[%s5235 + $0x128] sm:$0xff]
      %v5262 = vld [vmem:[%s5235 + $0x138] sm:$0xff]
      %v5263 = vld [vmem:[%s5235 + $0x140] sm:$0xff]
      %v5264 = vld [vmem:[%s5235 + $0x150] sm:$0xff]
      %v5265 = vld [vmem:[%s5235 + $0x158] sm:$0xff]
      %v5266 = vld [vmem:[%s5235 + $0x168] sm:$0xff]
      %v5267 = vld [vmem:[%s5235 + $0x170] sm:$0xff]
      %v5268 = vpack.c.bf16 %v5237, %v5236
      %v5269 = vpack.c.bf16 %v5239, %v5238
      %v5270 = vpack.c.bf16 %v5241, %v5240
      %v5271 = vpack.c.bf16 %v5243, %v5242
      %v5272 = vpack.c.bf16 %v5245, %v5244
      %v5273 = vpack.c.bf16 %v5247, %v5246
      %v5274 = vpack.c.bf16 %v5249, %v5248
      %v5275 = vpack.c.bf16 %v5251, %v5250
      %v5276 = vpack.c.bf16 %v5253, %v5252
      %v5277 = vpack.c.bf16 %v5255, %v5254
      %v5278 = vpack.c.bf16 %v5257, %v5256
      %v5279 = vpack.c.bf16 %v5259, %v5258
      %v5280 = vpack.c.bf16 %v5261, %v5260
      %v5281 = vpack.c.bf16 %v5263, %v5262
      %v5282 = vpack.c.bf16 %v5265, %v5264
      %v5283 = vpack.c.bf16 %v5267, %v5266
      %s5284 = scalar_lea.vmem %s4, 192
      %v5285 = vld [vmem:[%s5284] sm:$0xf]
      %v5286 = vld [vmem:[%s5284 + $0x4] sm:$0xf]
      %v5287 = vld [vmem:[%s5284 + $0x8] sm:$0xf]
      %v5288 = vld [vmem:[%s5284 + $0xc] sm:$0xf]
      %v5289 = vld [vmem:[%s5284 + $0x10] sm:$0xf]
      %v5290 = vld [vmem:[%s5284 + $0x14] sm:$0xf]
      %v5291 = vld [vmem:[%s5284 + $0x18] sm:$0xf]
      %v5292 = vld [vmem:[%s5284 + $0x1c] sm:$0xf]
      %v5301 = vunpack.c.l.b16 %v5285
      %v5302 = vunpack.c.l.b16 %v5286
      %v5303 = vunpack.c.l.b16 %v5287
      %v5304 = vunpack.c.l.b16 %v5288
      %v5305 = vunpack.c.l.b16 %v5289
      %v5306 = vunpack.c.l.b16 %v5290
      %v5307 = vunpack.c.l.b16 %v5291
      %v5308 = vunpack.c.l.b16 %v5292
      %v5309 = vpack.c.b16 %v5302, %v5301
      %v5310 = vpack.c.b16 %v5304, %v5303
      %v5311 = vpack.c.b16 %v5306, %v5305
      %v5312 = vpack.c.b16 %v5308, %v5307
      %v5318 = vsel %vm471, %v5268, 0
      %v5321 = vsel %vm471, %v5269, 0
      %v5324 = vsel %vm471, %v5270, 0
      %v5327 = vsel %vm471, %v5271, 0
      %v5330 = vsel %vm471, %v5272, 0
      %v5333 = vsel %vm471, %v5273, 0
      %v5336 = vsel %vm471, %v5274, 0
      %v5339 = vsel %vm471, %v5275, 0
      %v5342 = vsel %vm471, %v5276, 0
      %v5345 = vsel %vm471, %v5277, 0
      %v5348 = vsel %vm471, %v5278, 0
      %v5351 = vsel %vm471, %v5279, 0
      %v5354 = vsel %vm471, %v5280, 0
      %v5357 = vsel %vm471, %v5281, 0
      %v5360 = vsel %vm471, %v5282, 0
      %v5363 = vsel %vm471, %v5283, 0
      %5365 = vmatprep.subr.bf16.mxu0 0
      %5366 = vmatpush1.bf16.msra.mxu0 %v5309
      %5367 = vmatprep.subr.bf16.mxu0 0
      %5368 = vmatpush1.bf16.msra.mxu0 %v5310
      %5369 = vmatprep.subr.bf16.mxu0 0
      %5370 = vmatpush1.bf16.msra.mxu0 %v5311
      %5371 = vmatprep.subr.bf16.mxu0 0
      %5372 = vmatpush1.bf16.msra.mxu0 %v5312
      %5373 = vmatprep.subr.bf16.mxu0 0
      %5374 = vmatpush1.bf16.msra.mxu0 0
      %5375 = vmatprep.subr.bf16.mxu0 0
      %5376 = vmatpush1.bf16.msra.mxu0 0
      %5377 = vmatprep.subr.bf16.mxu0 0
      %5378 = vmatpush1.bf16.msra.mxu0 0
      %5379 = vmatprep.subr.bf16.mxu0 0
      %5380 = vmatpush1.bf16.msra.mxu0 0
      %5381 = vmatprep.subr.bf16.mxu0 0
      %5382 = vmatpush1.bf16.msra.mxu0 0
      %5383 = vmatprep.subr.bf16.mxu0 0
      %5384 = vmatpush1.bf16.msra.mxu0 0
      %5385 = vmatprep.subr.bf16.mxu0 0
      %5386 = vmatpush1.bf16.msra.mxu0 0
      %5387 = vmatprep.subr.bf16.mxu0 0
      %5388 = vmatpush1.bf16.msra.mxu0 0
      %5389 = vmatprep.subr.bf16.mxu0 0
      %5390 = vmatpush1.bf16.msra.mxu0 0
      %5391 = vmatprep.subr.bf16.mxu0 0
      %5392 = vmatpush1.bf16.msra.mxu0 0
      %5393 = vmatprep.subr.bf16.mxu0 0
      %5394 = vmatpush1.bf16.msra.mxu0 0
      %5395 = vmatprep.subr.bf16.mxu0 0
      %5396 = vmatpush1.bf16.msra.mxu0 0
      %5397 = vmatprep.mubr.bf16.mxu0 0
      %5398 = vmatmul.mubr.bf16.gmra.mrb[0].mxu0 %v5318
      %v5399 = vpop.f32.mrb[0].mxu0
      %v5400 = vadd.f32 0.0, %v5399
      %v5401 = vpop.f32.mrb[0].mxu0
      %v5402 = vpop.f32.mrb[0].mxu0
      %v5403 = vadd.f32 0.0, %v5402
      %v5404 = vpop.f32.mrb[0].mxu0
      %5405 = vmatprep.mubr.bf16.mxu0 0
      %5406 = vmatmul.mubr.bf16.gmra.mrb[0].mxu0 %v5321
      %v5407 = vpop.f32.mrb[0].mxu0
      %v5408 = vadd.f32 0.0, %v5407
      %v5409 = vpop.f32.mrb[0].mxu0
      %v5410 = vpop.f32.mrb[0].mxu0
      %v5411 = vadd.f32 0.0, %v5410
      %v5412 = vpop.f32.mrb[0].mxu0
      %5413 = vmatprep.mubr.bf16.mxu0 0
      %5414 = vmatmul.mubr.bf16.gmra.mrb[0].mxu0 %v5324
      %v5415 = vpop.f32.mrb[0].mxu0
      %v5416 = vadd.f32 0.0, %v5415
      %v5417 = vpop.f32.mrb[0].mxu0
      %v5418 = vpop.f32.mrb[0].mxu0
      %v5419 = vadd.f32 0.0, %v5418
      %v5420 = vpop.f32.mrb[0].mxu0
      %5421 = vmatprep.mubr.bf16.mxu0 0
      %5422 = vmatmul.mubr.bf16.gmra.mrb[0].mxu0 %v5327
      %v5423 = vpop.f32.mrb[0].mxu0
      %v5424 = vadd.f32 0.0, %v5423
      %v5425 = vpop.f32.mrb[0].mxu0
      %v5426 = vpop.f32.mrb[0].mxu0
      %v5427 = vadd.f32 0.0, %v5426
      %v5428 = vpop.f32.mrb[0].mxu0
      %5429 = vmatprep.mubr.bf16.mxu0 0
      %5430 = vmatmul.mubr.bf16.gmra.mrb[0].mxu0 %v5330
      %v5431 = vpop.f32.mrb[0].mxu0
      %v5432 = vadd.f32 0.0, %v5431
      %v5433 = vpop.f32.mrb[0].mxu0
      %v5434 = vpop.f32.mrb[0].mxu0
      %v5435 = vadd.f32 0.0, %v5434
      %v5436 = vpop.f32.mrb[0].mxu0
      %5437 = vmatprep.mubr.bf16.mxu0 0
      %5438 = vmatmul.mubr.bf16.gmra.mrb[0].mxu0 %v5333
      %v5439 = vpop.f32.mrb[0].mxu0
      %v5440 = vadd.f32 0.0, %v5439
      %v5441 = vpop.f32.mrb[0].mxu0
      %v5442 = vpop.f32.mrb[0].mxu0
      %v5443 = vadd.f32 0.0, %v5442
      %v5444 = vpop.f32.mrb[0].mxu0
      %5445 = vmatprep.mubr.bf16.mxu0 0
      %5446 = vmatmul.mubr.bf16.gmra.mrb[0].mxu0 %v5336
      %v5447 = vpop.f32.mrb[0].mxu0
      %v5448 = vadd.f32 0.0, %v5447
      %v5449 = vpop.f32.mrb[0].mxu0
      %v5450 = vpop.f32.mrb[0].mxu0
      %v5451 = vadd.f32 0.0, %v5450
      %v5452 = vpop.f32.mrb[0].mxu0
      %5453 = vmatprep.mubr.bf16.mxu0 0
      %5454 = vmatmul.mubr.bf16.gmra.mrb[0].mxu0 %v5339
      %v5455 = vpop.f32.mrb[0].mxu0
      %v5456 = vadd.f32 0.0, %v5455
      %v5457 = vpop.f32.mrb[0].mxu0
      %v5458 = vpop.f32.mrb[0].mxu0
      %v5459 = vadd.f32 0.0, %v5458
      %v5460 = vpop.f32.mrb[0].mxu0
      %5461 = vmatprep.mubr.bf16.mxu0 0
      %5462 = vmatmul.mubr.bf16.gmra.mrb[0].mxu0 %v5342
      %v5463 = vpop.f32.mrb[0].mxu0
      %v5464 = vadd.f32 0.0, %v5463
      %v5465 = vpop.f32.mrb[0].mxu0
      %v5466 = vpop.f32.mrb[0].mxu0
      %v5467 = vadd.f32 0.0, %v5466
      %v5468 = vpop.f32.mrb[0].mxu0
      %5469 = vmatprep.mubr.bf16.mxu0 0
      %5470 = vmatmul.mubr.bf16.gmra.mrb[0].mxu0 %v5345
      %v5471 = vpop.f32.mrb[0].mxu0
      %v5472 = vadd.f32 0.0, %v5471
      %v5473 = vpop.f32.mrb[0].mxu0
      %v5474 = vpop.f32.mrb[0].mxu0
      %v5475 = vadd.f32 0.0, %v5474
      %v5476 = vpop.f32.mrb[0].mxu0
      %5477 = vmatprep.mubr.bf16.mxu0 0
      %5478 = vmatmul.mubr.bf16.gmra.mrb[0].mxu0 %v5348
      %v5479 = vpop.f32.mrb[0].mxu0
      %v5480 = vadd.f32 0.0, %v5479
      %v5481 = vpop.f32.mrb[0].mxu0
      %v5482 = vpop.f32.mrb[0].mxu0
      %v5483 = vadd.f32 0.0, %v5482
      %v5484 = vpop.f32.mrb[0].mxu0
      %5485 = vmatprep.mubr.bf16.mxu0 0
      %5486 = vmatmul.mubr.bf16.gmra.mrb[0].mxu0 %v5351
      %v5487 = vpop.f32.mrb[0].mxu0
      %v5488 = vadd.f32 0.0, %v5487
      %v5489 = vpop.f32.mrb[0].mxu0
      %v5490 = vpop.f32.mrb[0].mxu0
      %v5491 = vadd.f32 0.0, %v5490
      %v5492 = vpop.f32.mrb[0].mxu0
      %5493 = vmatprep.mubr.bf16.mxu0 0
      %5494 = vmatmul.mubr.bf16.gmra.mrb[0].mxu0 %v5354
      %v5495 = vpop.f32.mrb[0].mxu0
      %v5496 = vadd.f32 0.0, %v5495
      %v5497 = vpop.f32.mrb[0].mxu0
      %v5498 = vpop.f32.mrb[0].mxu0
      %v5499 = vadd.f32 0.0, %v5498
      %v5500 = vpop.f32.mrb[0].mxu0
      %5501 = vmatprep.mubr.bf16.mxu0 0
      %5502 = vmatmul.mubr.bf16.gmra.mrb[0].mxu0 %v5357
      %v5503 = vpop.f32.mrb[0].mxu0
      %v5504 = vadd.f32 0.0, %v5503
      %v5505 = vpop.f32.mrb[0].mxu0
      %v5506 = vpop.f32.mrb[0].mxu0
      %v5507 = vadd.f32 0.0, %v5506
      %v5508 = vpop.f32.mrb[0].mxu0
      %5509 = vmatprep.mubr.bf16.mxu0 0
      %5510 = vmatmul.mubr.bf16.gmra.mrb[0].mxu0 %v5360
      %v5511 = vpop.f32.mrb[0].mxu0
      %v5512 = vadd.f32 0.0, %v5511
      %v5513 = vpop.f32.mrb[0].mxu0
      %v5514 = vpop.f32.mrb[0].mxu0
      %v5515 = vadd.f32 0.0, %v5514
      %v5516 = vpop.f32.mrb[0].mxu0
      %5517 = vmatprep.mubr.bf16.mxu0 0
      %5518 = vmatmul.mubr.bf16.gmra.mrb[0].mxu0 %v5363
      %v5519 = vpop.f32.mrb[0].mxu0
      %v5520 = vadd.f32 0.0, %v5519
      %v5521 = vpop.f32.mrb[0].mxu0
      %v5522 = vpop.f32.mrb[0].mxu0
      %v5523 = vadd.f32 0.0, %v5522
      %v5524 = vpop.f32.mrb[0].mxu0
      %5525 = vdwg.mxu0
      %v5526 = vadd.f32 %v5203, %v5400
      %v5527 = vadd.f32 %v5204, %v5403
      %v5528 = vadd.f32 %v5205, %v5408
      %v5529 = vadd.f32 %v5206, %v5411
      %v5530 = vadd.f32 %v5207, %v5416
      %v5531 = vadd.f32 %v5208, %v5419
      %v5532 = vadd.f32 %v5209, %v5424
      %v5533 = vadd.f32 %v5210, %v5427
      %v5534 = vadd.f32 %v5211, %v5432
      %v5535 = vadd.f32 %v5212, %v5435
      %v5536 = vadd.f32 %v5213, %v5440
      %v5537 = vadd.f32 %v5214, %v5443
      %v5538 = vadd.f32 %v5215, %v5448
      %v5539 = vadd.f32 %v5216, %v5451
      %v5540 = vadd.f32 %v5217, %v5456
      %v5541 = vadd.f32 %v5218, %v5459
      %v5542 = vadd.f32 %v5219, %v5464
      %v5543 = vadd.f32 %v5220, %v5467
      %v5544 = vadd.f32 %v5221, %v5472
      %v5545 = vadd.f32 %v5222, %v5475
      %v5546 = vadd.f32 %v5223, %v5480
      %v5547 = vadd.f32 %v5224, %v5483
      %v5548 = vadd.f32 %v5225, %v5488
      %v5549 = vadd.f32 %v5226, %v5491
      %v5550 = vadd.f32 %v5227, %v5496
      %v5551 = vadd.f32 %v5228, %v5499
      %v5552 = vadd.f32 %v5229, %v5504
      %v5553 = vadd.f32 %v5230, %v5507
      %v5554 = vadd.f32 %v5231, %v5512
      %v5555 = vadd.f32 %v5232, %v5515
      %v5556 = vadd.f32 %v5233, %v5520
      %v5557 = vadd.f32 %v5234, %v5523
      %v5558 = vld [vmem:[%s5235 + $0x1] sm:$0xff]
      %v5559 = vld [vmem:[%s5235 + $0x9] sm:$0xff]
      %v5560 = vld [vmem:[%s5235 + $0x19] sm:$0xff]
      %v5561 = vld [vmem:[%s5235 + $0x21] sm:$0xff]
      %v5562 = vld [vmem:[%s5235 + $0x31] sm:$0xff]
      %v5563 = vld [vmem:[%s5235 + $0x39] sm:$0xff]
      %v5564 = vld [vmem:[%s5235 + $0x49] sm:$0xff]
      %v5565 = vld [vmem:[%s5235 + $0x51] sm:$0xff]
      %v5566 = vld [vmem:[%s5235 + $0x61] sm:$0xff]
      %v5567 = vld [vmem:[%s5235 + $0x69] sm:$0xff]
      %v5568 = vld [vmem:[%s5235 + $0x79] sm:$0xff]
      %v5569 = vld [vmem:[%s5235 + $0x81] sm:$0xff]
      %v5570 = vld [vmem:[%s5235 + $0x91] sm:$0xff]
      %v5571 = vld [vmem:[%s5235 + $0x99] sm:$0xff]
      %v5572 = vld [vmem:[%s5235 + $0xa9] sm:$0xff]
      %v5573 = vld [vmem:[%s5235 + $0xb1] sm:$0xff]
      %v5574 = vld [vmem:[%s5235 + $0xc1] sm:$0xff]
      %v5575 = vld [vmem:[%s5235 + $0xc9] sm:$0xff]
      %v5576 = vld [vmem:[%s5235 + $0xd9] sm:$0xff]
      %v5577 = vld [vmem:[%s5235 + $0xe1] sm:$0xff]
      %v5578 = vld [vmem:[%s5235 + $0xf1] sm:$0xff]
      %v5579 = vld [vmem:[%s5235 + $0xf9] sm:$0xff]
      %v5580 = vld [vmem:[%s5235 + $0x109] sm:$0xff]
      %v5581 = vld [vmem:[%s5235 + $0x111] sm:$0xff]
      %v5582 = vld [vmem:[%s5235 + $0x121] sm:$0xff]
      %v5583 = vld [vmem:[%s5235 + $0x129] sm:$0xff]
      %v5584 = vld [vmem:[%s5235 + $0x139] sm:$0xff]
      %v5585 = vld [vmem:[%s5235 + $0x141] sm:$0xff]
      %v5586 = vld [vmem:[%s5235 + $0x151] sm:$0xff]
      %v5587 = vld [vmem:[%s5235 + $0x159] sm:$0xff]
      %v5588 = vld [vmem:[%s5235 + $0x169] sm:$0xff]
      %v5589 = vld [vmem:[%s5235 + $0x171] sm:$0xff]
      %v5590 = vpack.c.bf16 %v5559, %v5558
      %v5591 = vpack.c.bf16 %v5561, %v5560
      %v5592 = vpack.c.bf16 %v5563, %v5562
      %v5593 = vpack.c.bf16 %v5565, %v5564
      %v5594 = vpack.c.bf16 %v5567, %v5566
      %v5595 = vpack.c.bf16 %v5569, %v5568
      %v5596 = vpack.c.bf16 %v5571, %v5570
      %v5597 = vpack.c.bf16 %v5573, %v5572
      %v5598 = vpack.c.bf16 %v5575, %v5574
      %v5599 = vpack.c.bf16 %v5577, %v5576
      %v5600 = vpack.c.bf16 %v5579, %v5578
      %v5601 = vpack.c.bf16 %v5581, %v5580
      %v5602 = vpack.c.bf16 %v5583, %v5582
      %v5603 = vpack.c.bf16 %v5585, %v5584
      %v5604 = vpack.c.bf16 %v5587, %v5586
      %v5605 = vpack.c.bf16 %v5589, %v5588
      %s5606 = scalar_lea.vmem %s4, 224
      %v5607 = vld [vmem:[%s5606] sm:$0xf]
      %v5608 = vld [vmem:[%s5606 + $0x4] sm:$0xf]
      %v5609 = vld [vmem:[%s5606 + $0x8] sm:$0xf]
      %v5610 = vld [vmem:[%s5606 + $0xc] sm:$0xf]
      %v5611 = vld [vmem:[%s5606 + $0x10] sm:$0xf]
      %v5612 = vld [vmem:[%s5606 + $0x14] sm:$0xf]
      %v5613 = vld [vmem:[%s5606 + $0x18] sm:$0xf]
      %v5614 = vld [vmem:[%s5606 + $0x1c] sm:$0xf]
      %v5623 = vunpack.c.l.b16 %v5607
      %v5624 = vunpack.c.l.b16 %v5608
      %v5625 = vunpack.c.l.b16 %v5609
      %v5626 = vunpack.c.l.b16 %v5610
      %v5627 = vunpack.c.l.b16 %v5611
      %v5628 = vunpack.c.l.b16 %v5612
      %v5629 = vunpack.c.l.b16 %v5613
      %v5630 = vunpack.c.l.b16 %v5614
      %v5631 = vpack.c.b16 %v5624, %v5623
      %v5632 = vpack.c.b16 %v5626, %v5625
      %v5633 = vpack.c.b16 %v5628, %v5627
      %v5634 = vpack.c.b16 %v5630, %v5629
      %v5640 = vsel %vm471, %v5590, 0
      %v5643 = vsel %vm471, %v5591, 0
      %v5646 = vsel %vm471, %v5592, 0
      %v5649 = vsel %vm471, %v5593, 0
      %v5652 = vsel %vm471, %v5594, 0
      %v5655 = vsel %vm471, %v5595, 0
      %v5658 = vsel %vm471, %v5596, 0
      %v5661 = vsel %vm471, %v5597, 0
      %v5664 = vsel %vm471, %v5598, 0
      %v5667 = vsel %vm471, %v5599, 0
      %v5670 = vsel %vm471, %v5600, 0
      %v5673 = vsel %vm471, %v5601, 0
      %v5676 = vsel %vm471, %v5602, 0
      %v5679 = vsel %vm471, %v5603, 0
      %v5682 = vsel %vm471, %v5604, 0
      %v5685 = vsel %vm471, %v5605, 0
      %5687 = vmatprep.subr.bf16.mxu0 0
      %5688 = vmatpush1.bf16.msra.mxu0 %v5631
      %5689 = vmatprep.subr.bf16.mxu0 0
      %5690 = vmatpush1.bf16.msra.mxu0 %v5632
      %5691 = vmatprep.subr.bf16.mxu0 0
      %5692 = vmatpush1.bf16.msra.mxu0 %v5633
      %5693 = vmatprep.subr.bf16.mxu0 0
      %5694 = vmatpush1.bf16.msra.mxu0 %v5634
      %5695 = vmatprep.subr.bf16.mxu0 0
      %5696 = vmatpush1.bf16.msra.mxu0 0
      %5697 = vmatprep.subr.bf16.mxu0 0
      %5698 = vmatpush1.bf16.msra.mxu0 0
      %5699 = vmatprep.subr.bf16.mxu0 0
      %5700 = vmatpush1.bf16.msra.mxu0 0
      %5701 = vmatprep.subr.bf16.mxu0 0
      %5702 = vmatpush1.bf16.msra.mxu0 0
      %5703 = vmatprep.subr.bf16.mxu0 0
      %5704 = vmatpush1.bf16.msra.mxu0 0
      %5705 = vmatprep.subr.bf16.mxu0 0
      %5706 = vmatpush1.bf16.msra.mxu0 0
      %5707 = vmatprep.subr.bf16.mxu0 0
      %5708 = vmatpush1.bf16.msra.mxu0 0
      %5709 = vmatprep.subr.bf16.mxu0 0
      %5710 = vmatpush1.bf16.msra.mxu0 0
      %5711 = vmatprep.subr.bf16.mxu0 0
      %5712 = vmatpush1.bf16.msra.mxu0 0
      %5713 = vmatprep.subr.bf16.mxu0 0
      %5714 = vmatpush1.bf16.msra.mxu0 0
      %5715 = vmatprep.subr.bf16.mxu0 0
      %5716 = vmatpush1.bf16.msra.mxu0 0
      %5717 = vmatprep.subr.bf16.mxu0 0
      %5718 = vmatpush1.bf16.msra.mxu0 0
      %5719 = vmatprep.mubr.bf16.mxu0 0
      %5720 = vmatmul.mubr.bf16.gmra.mrb[0].mxu0 %v5640
      %v5721 = vpop.f32.mrb[0].mxu0
      %v5722 = vadd.f32 0.0, %v5721
      %v5723 = vpop.f32.mrb[0].mxu0
      %v5724 = vpop.f32.mrb[0].mxu0
      %v5725 = vadd.f32 0.0, %v5724
      %v5726 = vpop.f32.mrb[0].mxu0
      %5727 = vmatprep.mubr.bf16.mxu0 0
      %5728 = vmatmul.mubr.bf16.gmra.mrb[0].mxu0 %v5643
      %v5729 = vpop.f32.mrb[0].mxu0
      %v5730 = vadd.f32 0.0, %v5729
      %v5731 = vpop.f32.mrb[0].mxu0
      %v5732 = vpop.f32.mrb[0].mxu0
      %v5733 = vadd.f32 0.0, %v5732
      %v5734 = vpop.f32.mrb[0].mxu0
      %5735 = vmatprep.mubr.bf16.mxu0 0
      %5736 = vmatmul.mubr.bf16.gmra.mrb[0].mxu0 %v5646
      %v5737 = vpop.f32.mrb[0].mxu0
      %v5738 = vadd.f32 0.0, %v5737
      %v5739 = vpop.f32.mrb[0].mxu0
      %v5740 = vpop.f32.mrb[0].mxu0
      %v5741 = vadd.f32 0.0, %v5740
      %v5742 = vpop.f32.mrb[0].mxu0
      %5743 = vmatprep.mubr.bf16.mxu0 0
      %5744 = vmatmul.mubr.bf16.gmra.mrb[0].mxu0 %v5649
      %v5745 = vpop.f32.mrb[0].mxu0
      %v5746 = vadd.f32 0.0, %v5745
      %v5747 = vpop.f32.mrb[0].mxu0
      %v5748 = vpop.f32.mrb[0].mxu0
      %v5749 = vadd.f32 0.0, %v5748
      %v5750 = vpop.f32.mrb[0].mxu0
      %5751 = vmatprep.mubr.bf16.mxu0 0
      %5752 = vmatmul.mubr.bf16.gmra.mrb[0].mxu0 %v5652
      %v5753 = vpop.f32.mrb[0].mxu0
      %v5754 = vadd.f32 0.0, %v5753
      %v5755 = vpop.f32.mrb[0].mxu0
      %v5756 = vpop.f32.mrb[0].mxu0
      %v5757 = vadd.f32 0.0, %v5756
      %v5758 = vpop.f32.mrb[0].mxu0
      %5759 = vmatprep.mubr.bf16.mxu0 0
      %5760 = vmatmul.mubr.bf16.gmra.mrb[0].mxu0 %v5655
      %v5761 = vpop.f32.mrb[0].mxu0
      %v5762 = vadd.f32 0.0, %v5761
      %v5763 = vpop.f32.mrb[0].mxu0
      %v5764 = vpop.f32.mrb[0].mxu0
      %v5765 = vadd.f32 0.0, %v5764
      %v5766 = vpop.f32.mrb[0].mxu0
      %5767 = vmatprep.mubr.bf16.mxu0 0
      %5768 = vmatmul.mubr.bf16.gmra.mrb[0].mxu0 %v5658
      %v5769 = vpop.f32.mrb[0].mxu0
      %v5770 = vadd.f32 0.0, %v5769
      %v5771 = vpop.f32.mrb[0].mxu0
      %v5772 = vpop.f32.mrb[0].mxu0
      %v5773 = vadd.f32 0.0, %v5772
      %v5774 = vpop.f32.mrb[0].mxu0
      %5775 = vmatprep.mubr.bf16.mxu0 0
      %5776 = vmatmul.mubr.bf16.gmra.mrb[0].mxu0 %v5661
      %v5777 = vpop.f32.mrb[0].mxu0
      %v5778 = vadd.f32 0.0, %v5777
      %v5779 = vpop.f32.mrb[0].mxu0
      %v5780 = vpop.f32.mrb[0].mxu0
      %v5781 = vadd.f32 0.0, %v5780
      %v5782 = vpop.f32.mrb[0].mxu0
      %5783 = vmatprep.mubr.bf16.mxu0 0
      %5784 = vmatmul.mubr.bf16.gmra.mrb[0].mxu0 %v5664
      %v5785 = vpop.f32.mrb[0].mxu0
      %v5786 = vadd.f32 0.0, %v5785
      %v5787 = vpop.f32.mrb[0].mxu0
      %v5788 = vpop.f32.mrb[0].mxu0
      %v5789 = vadd.f32 0.0, %v5788
      %v5790 = vpop.f32.mrb[0].mxu0
      %5791 = vmatprep.mubr.bf16.mxu0 0
      %5792 = vmatmul.mubr.bf16.gmra.mrb[0].mxu0 %v5667
      %v5793 = vpop.f32.mrb[0].mxu0
      %v5794 = vadd.f32 0.0, %v5793
      %v5795 = vpop.f32.mrb[0].mxu0
      %v5796 = vpop.f32.mrb[0].mxu0
      %v5797 = vadd.f32 0.0, %v5796
      %v5798 = vpop.f32.mrb[0].mxu0
      %5799 = vmatprep.mubr.bf16.mxu0 0
      %5800 = vmatmul.mubr.bf16.gmra.mrb[0].mxu0 %v5670
      %v5801 = vpop.f32.mrb[0].mxu0
      %v5802 = vadd.f32 0.0, %v5801
      %v5803 = vpop.f32.mrb[0].mxu0
      %v5804 = vpop.f32.mrb[0].mxu0
      %v5805 = vadd.f32 0.0, %v5804
      %v5806 = vpop.f32.mrb[0].mxu0
      %5807 = vmatprep.mubr.bf16.mxu0 0
      %5808 = vmatmul.mubr.bf16.gmra.mrb[0].mxu0 %v5673
      %v5809 = vpop.f32.mrb[0].mxu0
      %v5810 = vadd.f32 0.0, %v5809
      %v5811 = vpop.f32.mrb[0].mxu0
      %v5812 = vpop.f32.mrb[0].mxu0
      %v5813 = vadd.f32 0.0, %v5812
      %v5814 = vpop.f32.mrb[0].mxu0
      %5815 = vmatprep.mubr.bf16.mxu0 0
      %5816 = vmatmul.mubr.bf16.gmra.mrb[0].mxu0 %v5676
      %v5817 = vpop.f32.mrb[0].mxu0
      %v5818 = vadd.f32 0.0, %v5817
      %v5819 = vpop.f32.mrb[0].mxu0
      %v5820 = vpop.f32.mrb[0].mxu0
      %v5821 = vadd.f32 0.0, %v5820
      %v5822 = vpop.f32.mrb[0].mxu0
      %5823 = vmatprep.mubr.bf16.mxu0 0
      %5824 = vmatmul.mubr.bf16.gmra.mrb[0].mxu0 %v5679
      %v5825 = vpop.f32.mrb[0].mxu0
      %v5826 = vadd.f32 0.0, %v5825
      %v5827 = vpop.f32.mrb[0].mxu0
      %v5828 = vpop.f32.mrb[0].mxu0
      %v5829 = vadd.f32 0.0, %v5828
      %v5830 = vpop.f32.mrb[0].mxu0
      %5831 = vmatprep.mubr.bf16.mxu0 0
      %5832 = vmatmul.mubr.bf16.gmra.mrb[0].mxu0 %v5682
      %v5833 = vpop.f32.mrb[0].mxu0
      %v5834 = vadd.f32 0.0, %v5833
      %v5835 = vpop.f32.mrb[0].mxu0
      %v5836 = vpop.f32.mrb[0].mxu0
      %v5837 = vadd.f32 0.0, %v5836
      %v5838 = vpop.f32.mrb[0].mxu0
      %5839 = vmatprep.mubr.bf16.mxu0 0
      %5840 = vmatmul.mubr.bf16.gmra.mrb[0].mxu0 %v5685
      %v5841 = vpop.f32.mrb[0].mxu0
      %v5842 = vadd.f32 0.0, %v5841
      %v5843 = vpop.f32.mrb[0].mxu0
      %v5844 = vpop.f32.mrb[0].mxu0
      %v5845 = vadd.f32 0.0, %v5844
      %v5846 = vpop.f32.mrb[0].mxu0
      %5847 = vdwg.mxu0
      %v5848 = vadd.f32 %v5526, %v5722
      %v5849 = vadd.f32 %v5527, %v5725
      %v5850 = vadd.f32 %v5528, %v5730
      %v5851 = vadd.f32 %v5529, %v5733
      %v5852 = vadd.f32 %v5530, %v5738
      %v5853 = vadd.f32 %v5531, %v5741
      %v5854 = vadd.f32 %v5532, %v5746
      %v5855 = vadd.f32 %v5533, %v5749
      %v5856 = vadd.f32 %v5534, %v5754
      %v5857 = vadd.f32 %v5535, %v5757
      %v5858 = vadd.f32 %v5536, %v5762
      %v5859 = vadd.f32 %v5537, %v5765
      %v5860 = vadd.f32 %v5538, %v5770
      %v5861 = vadd.f32 %v5539, %v5773
      %v5862 = vadd.f32 %v5540, %v5778
      %v5863 = vadd.f32 %v5541, %v5781
      %v5864 = vadd.f32 %v5542, %v5786
      %v5865 = vadd.f32 %v5543, %v5789
      %v5866 = vadd.f32 %v5544, %v5794
      %v5867 = vadd.f32 %v5545, %v5797
      %v5868 = vadd.f32 %v5546, %v5802
      %v5869 = vadd.f32 %v5547, %v5805
      %v5870 = vadd.f32 %v5548, %v5810
      %v5871 = vadd.f32 %v5549, %v5813
      %v5872 = vadd.f32 %v5550, %v5818
      %v5873 = vadd.f32 %v5551, %v5821
      %v5874 = vadd.f32 %v5552, %v5826
      %v5875 = vadd.f32 %v5553, %v5829
      %v5876 = vadd.f32 %v5554, %v5834
      %v5877 = vadd.f32 %v5555, %v5837
      %v5878 = vadd.f32 %v5556, %v5842
      %v5879 = vadd.f32 %v5557, %v5845
      %v5880 = vld [vmem:[%s5235 + $0x2] sm:$0xff]
      %v5881 = vld [vmem:[%s5235 + $0xa] sm:$0xff]
      %v5882 = vld [vmem:[%s5235 + $0x1a] sm:$0xff]
      %v5883 = vld [vmem:[%s5235 + $0x22] sm:$0xff]
      %v5884 = vld [vmem:[%s5235 + $0x32] sm:$0xff]
      %v5885 = vld [vmem:[%s5235 + $0x3a] sm:$0xff]
      %v5886 = vld [vmem:[%s5235 + $0x4a] sm:$0xff]
      %v5887 = vld [vmem:[%s5235 + $0x52] sm:$0xff]
      %v5888 = vld [vmem:[%s5235 + $0x62] sm:$0xff]
      %v5889 = vld [vmem:[%s5235 + $0x6a] sm:$0xff]
      %v5890 = vld [vmem:[%s5235 + $0x7a] sm:$0xff]
      %v5891 = vld [vmem:[%s5235 + $0x82] sm:$0xff]
      %v5892 = vld [vmem:[%s5235 + $0x92] sm:$0xff]
      %v5893 = vld [vmem:[%s5235 + $0x9a] sm:$0xff]
      %v5894 = vld [vmem:[%s5235 + $0xaa] sm:$0xff]
      %v5895 = vld [vmem:[%s5235 + $0xb2] sm:$0xff]
      %v5896 = vld [vmem:[%s5235 + $0xc2] sm:$0xff]
      %v5897 = vld [vmem:[%s5235 + $0xca] sm:$0xff]
      %v5898 = vld [vmem:[%s5235 + $0xda] sm:$0xff]
      %v5899 = vld [vmem:[%s5235 + $0xe2] sm:$0xff]
      %v5900 = vld [vmem:[%s5235 + $0xf2] sm:$0xff]
      %v5901 = vld [vmem:[%s5235 + $0xfa] sm:$0xff]
      %v5902 = vld [vmem:[%s5235 + $0x10a] sm:$0xff]
      %v5903 = vld [vmem:[%s5235 + $0x112] sm:$0xff]
      %v5904 = vld [vmem:[%s5235 + $0x122] sm:$0xff]
      %v5905 = vld [vmem:[%s5235 + $0x12a] sm:$0xff]
      %v5906 = vld [vmem:[%s5235 + $0x13a] sm:$0xff]
      %v5907 = vld [vmem:[%s5235 + $0x142] sm:$0xff]
      %v5908 = vld [vmem:[%s5235 + $0x152] sm:$0xff]
      %v5909 = vld [vmem:[%s5235 + $0x15a] sm:$0xff]
      %v5910 = vld [vmem:[%s5235 + $0x16a] sm:$0xff]
      %v5911 = vld [vmem:[%s5235 + $0x172] sm:$0xff]
      %v5912 = vpack.c.bf16 %v5881, %v5880
      %v5913 = vpack.c.bf16 %v5883, %v5882
      %v5914 = vpack.c.bf16 %v5885, %v5884
      %v5915 = vpack.c.bf16 %v5887, %v5886
      %v5916 = vpack.c.bf16 %v5889, %v5888
      %v5917 = vpack.c.bf16 %v5891, %v5890
      %v5918 = vpack.c.bf16 %v5893, %v5892
      %v5919 = vpack.c.bf16 %v5895, %v5894
      %v5920 = vpack.c.bf16 %v5897, %v5896
      %v5921 = vpack.c.bf16 %v5899, %v5898
      %v5922 = vpack.c.bf16 %v5901, %v5900
      %v5923 = vpack.c.bf16 %v5903, %v5902
      %v5924 = vpack.c.bf16 %v5905, %v5904
      %v5925 = vpack.c.bf16 %v5907, %v5906
      %v5926 = vpack.c.bf16 %v5909, %v5908
      %v5927 = vpack.c.bf16 %v5911, %v5910
      %s5928 = scalar_lea.vmem %s4, 256
      %v5929 = vld [vmem:[%s5928] sm:$0xf]
      %v5930 = vld [vmem:[%s5928 + $0x4] sm:$0xf]
      %v5931 = vld [vmem:[%s5928 + $0x8] sm:$0xf]
      %v5932 = vld [vmem:[%s5928 + $0xc] sm:$0xf]
      %v5933 = vld [vmem:[%s5928 + $0x10] sm:$0xf]
      %v5934 = vld [vmem:[%s5928 + $0x14] sm:$0xf]
      %v5935 = vld [vmem:[%s5928 + $0x18] sm:$0xf]
      %v5936 = vld [vmem:[%s5928 + $0x1c] sm:$0xf]
      %v5945 = vunpack.c.l.b16 %v5929
      %v5946 = vunpack.c.l.b16 %v5930
      %v5947 = vunpack.c.l.b16 %v5931
      %v5948 = vunpack.c.l.b16 %v5932
      %v5949 = vunpack.c.l.b16 %v5933
      %v5950 = vunpack.c.l.b16 %v5934
      %v5951 = vunpack.c.l.b16 %v5935
      %v5952 = vunpack.c.l.b16 %v5936
      %v5953 = vpack.c.b16 %v5946, %v5945
      %v5954 = vpack.c.b16 %v5948, %v5947
      %v5955 = vpack.c.b16 %v5950, %v5949
      %v5956 = vpack.c.b16 %v5952, %v5951
      %v5962 = vsel %vm471, %v5912, 0
      %v5965 = vsel %vm471, %v5913, 0
      %v5968 = vsel %vm471, %v5914, 0
      %v5971 = vsel %vm471, %v5915, 0
      %v5974 = vsel %vm471, %v5916, 0
      %v5977 = vsel %vm471, %v5917, 0
      %v5980 = vsel %vm471, %v5918, 0
      %v5983 = vsel %vm471, %v5919, 0
      %v5986 = vsel %vm471, %v5920, 0
      %v5989 = vsel %vm471, %v5921, 0
      %v5992 = vsel %vm471, %v5922, 0
      %v5995 = vsel %vm471, %v5923, 0
      %v5998 = vsel %vm471, %v5924, 0
      %v6001 = vsel %vm471, %v5925, 0
      %v6004 = vsel %vm471, %v5926, 0
      %v6007 = vsel %vm471, %v5927, 0
      %6009 = vmatprep.subr.bf16.mxu0 0
      %6010 = vmatpush1.bf16.msra.mxu0 %v5953
      %6011 = vmatprep.subr.bf16.mxu0 0
      %6012 = vmatpush1.bf16.msra.mxu0 %v5954
      %6013 = vmatprep.subr.bf16.mxu0 0
      %6014 = vmatpush1.bf16.msra.mxu0 %v5955
      %6015 = vmatprep.subr.bf16.mxu0 0
      %6016 = vmatpush1.bf16.msra.mxu0 %v5956
      %6017 = vmatprep.subr.bf16.mxu0 0
      %6018 = vmatpush1.bf16.msra.mxu0 0
      %6019 = vmatprep.subr.bf16.mxu0 0
      %6020 = vmatpush1.bf16.msra.mxu0 0
      %6021 = vmatprep.subr.bf16.mxu0 0
      %6022 = vmatpush1.bf16.msra.mxu0 0
      %6023 = vmatprep.subr.bf16.mxu0 0
      %6024 = vmatpush1.bf16.msra.mxu0 0
      %6025 = vmatprep.subr.bf16.mxu0 0
      %6026 = vmatpush1.bf16.msra.mxu0 0
      %6027 = vmatprep.subr.bf16.mxu0 0
      %6028 = vmatpush1.bf16.msra.mxu0 0
      %6029 = vmatprep.subr.bf16.mxu0 0
      %6030 = vmatpush1.bf16.msra.mxu0 0
      %6031 = vmatprep.subr.bf16.mxu0 0
      %6032 = vmatpush1.bf16.msra.mxu0 0
      %6033 = vmatprep.subr.bf16.mxu0 0
      %6034 = vmatpush1.bf16.msra.mxu0 0
      %6035 = vmatprep.subr.bf16.mxu0 0
      %6036 = vmatpush1.bf16.msra.mxu0 0
      %6037 = vmatprep.subr.bf16.mxu0 0
      %6038 = vmatpush1.bf16.msra.mxu0 0
      %6039 = vmatprep.subr.bf16.mxu0 0
      %6040 = vmatpush1.bf16.msra.mxu0 0
      %6041 = vmatprep.mubr.bf16.mxu0 0
      %6042 = vmatmul.mubr.bf16.gmra.mrb[0].mxu0 %v5962
      %v6043 = vpop.f32.mrb[0].mxu0
      %v6044 = vadd.f32 0.0, %v6043
      %v6045 = vpop.f32.mrb[0].mxu0
      %v6046 = vpop.f32.mrb[0].mxu0
      %v6047 = vadd.f32 0.0, %v6046
      %v6048 = vpop.f32.mrb[0].mxu0
      %6049 = vmatprep.mubr.bf16.mxu0 0
      %6050 = vmatmul.mubr.bf16.gmra.mrb[0].mxu0 %v5965
      %v6051 = vpop.f32.mrb[0].mxu0
      %v6052 = vadd.f32 0.0, %v6051
      %v6053 = vpop.f32.mrb[0].mxu0
      %v6054 = vpop.f32.mrb[0].mxu0
      %v6055 = vadd.f32 0.0, %v6054
      %v6056 = vpop.f32.mrb[0].mxu0
      %6057 = vmatprep.mubr.bf16.mxu0 0
      %6058 = vmatmul.mubr.bf16.gmra.mrb[0].mxu0 %v5968
      %v6059 = vpop.f32.mrb[0].mxu0
      %v6060 = vadd.f32 0.0, %v6059
      %v6061 = vpop.f32.mrb[0].mxu0
      %v6062 = vpop.f32.mrb[0].mxu0
      %v6063 = vadd.f32 0.0, %v6062
      %v6064 = vpop.f32.mrb[0].mxu0
      %6065 = vmatprep.mubr.bf16.mxu0 0
      %6066 = vmatmul.mubr.bf16.gmra.mrb[0].mxu0 %v5971
      %v6067 = vpop.f32.mrb[0].mxu0
      %v6068 = vadd.f32 0.0, %v6067
      %v6069 = vpop.f32.mrb[0].mxu0
      %v6070 = vpop.f32.mrb[0].mxu0
      %v6071 = vadd.f32 0.0, %v6070
      %v6072 = vpop.f32.mrb[0].mxu0
      %6073 = vmatprep.mubr.bf16.mxu0 0
      %6074 = vmatmul.mubr.bf16.gmra.mrb[0].mxu0 %v5974
      %v6075 = vpop.f32.mrb[0].mxu0
      %v6076 = vadd.f32 0.0, %v6075
      %v6077 = vpop.f32.mrb[0].mxu0
      %v6078 = vpop.f32.mrb[0].mxu0
      %v6079 = vadd.f32 0.0, %v6078
      %v6080 = vpop.f32.mrb[0].mxu0
      %6081 = vmatprep.mubr.bf16.mxu0 0
      %6082 = vmatmul.mubr.bf16.gmra.mrb[0].mxu0 %v5977
      %v6083 = vpop.f32.mrb[0].mxu0
      %v6084 = vadd.f32 0.0, %v6083
      %v6085 = vpop.f32.mrb[0].mxu0
      %v6086 = vpop.f32.mrb[0].mxu0
      %v6087 = vadd.f32 0.0, %v6086
      %v6088 = vpop.f32.mrb[0].mxu0
      %6089 = vmatprep.mubr.bf16.mxu0 0
      %6090 = vmatmul.mubr.bf16.gmra.mrb[0].mxu0 %v5980
      %v6091 = vpop.f32.mrb[0].mxu0
      %v6092 = vadd.f32 0.0, %v6091
      %v6093 = vpop.f32.mrb[0].mxu0
      %v6094 = vpop.f32.mrb[0].mxu0
      %v6095 = vadd.f32 0.0, %v6094
      %v6096 = vpop.f32.mrb[0].mxu0
      %6097 = vmatprep.mubr.bf16.mxu0 0
      %6098 = vmatmul.mubr.bf16.gmra.mrb[0].mxu0 %v5983
      %v6099 = vpop.f32.mrb[0].mxu0
      %v6100 = vadd.f32 0.0, %v6099
      %v6101 = vpop.f32.mrb[0].mxu0
      %v6102 = vpop.f32.mrb[0].mxu0
      %v6103 = vadd.f32 0.0, %v6102
      %v6104 = vpop.f32.mrb[0].mxu0
      %6105 = vmatprep.mubr.bf16.mxu0 0
      %6106 = vmatmul.mubr.bf16.gmra.mrb[0].mxu0 %v5986
      %v6107 = vpop.f32.mrb[0].mxu0
      %v6108 = vadd.f32 0.0, %v6107
      %v6109 = vpop.f32.mrb[0].mxu0
      %v6110 = vpop.f32.mrb[0].mxu0
      %v6111 = vadd.f32 0.0, %v6110
      %v6112 = vpop.f32.mrb[0].mxu0
      %6113 = vmatprep.mubr.bf16.mxu0 0
      %6114 = vmatmul.mubr.bf16.gmra.mrb[0].mxu0 %v5989
      %v6115 = vpop.f32.mrb[0].mxu0
      %v6116 = vadd.f32 0.0, %v6115
      %v6117 = vpop.f32.mrb[0].mxu0
      %v6118 = vpop.f32.mrb[0].mxu0
      %v6119 = vadd.f32 0.0, %v6118
      %v6120 = vpop.f32.mrb[0].mxu0
      %6121 = vmatprep.mubr.bf16.mxu0 0
      %6122 = vmatmul.mubr.bf16.gmra.mrb[0].mxu0 %v5992
      %v6123 = vpop.f32.mrb[0].mxu0
      %v6124 = vadd.f32 0.0, %v6123
      %v6125 = vpop.f32.mrb[0].mxu0
      %v6126 = vpop.f32.mrb[0].mxu0
      %v6127 = vadd.f32 0.0, %v6126
      %v6128 = vpop.f32.mrb[0].mxu0
      %6129 = vmatprep.mubr.bf16.mxu0 0
      %6130 = vmatmul.mubr.bf16.gmra.mrb[0].mxu0 %v5995
      %v6131 = vpop.f32.mrb[0].mxu0
      %v6132 = vadd.f32 0.0, %v6131
      %v6133 = vpop.f32.mrb[0].mxu0
      %v6134 = vpop.f32.mrb[0].mxu0
      %v6135 = vadd.f32 0.0, %v6134
      %v6136 = vpop.f32.mrb[0].mxu0
      %6137 = vmatprep.mubr.bf16.mxu0 0
      %6138 = vmatmul.mubr.bf16.gmra.mrb[0].mxu0 %v5998
      %v6139 = vpop.f32.mrb[0].mxu0
      %v6140 = vadd.f32 0.0, %v6139
      %v6141 = vpop.f32.mrb[0].mxu0
      %v6142 = vpop.f32.mrb[0].mxu0
      %v6143 = vadd.f32 0.0, %v6142
      %v6144 = vpop.f32.mrb[0].mxu0
      %6145 = vmatprep.mubr.bf16.mxu0 0
      %6146 = vmatmul.mubr.bf16.gmra.mrb[0].mxu0 %v6001
      %v6147 = vpop.f32.mrb[0].mxu0
      %v6148 = vadd.f32 0.0, %v6147
      %v6149 = vpop.f32.mrb[0].mxu0
      %v6150 = vpop.f32.mrb[0].mxu0
      %v6151 = vadd.f32 0.0, %v6150
      %v6152 = vpop.f32.mrb[0].mxu0
      %6153 = vmatprep.mubr.bf16.mxu0 0
      %6154 = vmatmul.mubr.bf16.gmra.mrb[0].mxu0 %v6004
      %v6155 = vpop.f32.mrb[0].mxu0
      %v6156 = vadd.f32 0.0, %v6155
      %v6157 = vpop.f32.mrb[0].mxu0
      %v6158 = vpop.f32.mrb[0].mxu0
      %v6159 = vadd.f32 0.0, %v6158
      %v6160 = vpop.f32.mrb[0].mxu0
      %6161 = vmatprep.mubr.bf16.mxu0 0
      %6162 = vmatmul.mubr.bf16.gmra.mrb[0].mxu0 %v6007
      %v6163 = vpop.f32.mrb[0].mxu0
      %v6164 = vadd.f32 0.0, %v6163
      %v6165 = vpop.f32.mrb[0].mxu0
      %v6166 = vpop.f32.mrb[0].mxu0
      %v6167 = vadd.f32 0.0, %v6166
      %v6168 = vpop.f32.mrb[0].mxu0
      %6169 = vdwg.mxu0
      %v6170 = vadd.f32 %v5848, %v6044
      %v6171 = vadd.f32 %v5849, %v6047
      %v6172 = vadd.f32 %v5850, %v6052
      %v6173 = vadd.f32 %v5851, %v6055
      %v6174 = vadd.f32 %v5852, %v6060
      %v6175 = vadd.f32 %v5853, %v6063
      %v6176 = vadd.f32 %v5854, %v6068
      %v6177 = vadd.f32 %v5855, %v6071
      %v6178 = vadd.f32 %v5856, %v6076
      %v6179 = vadd.f32 %v5857, %v6079
      %v6180 = vadd.f32 %v5858, %v6084
      %v6181 = vadd.f32 %v5859, %v6087
      %v6182 = vadd.f32 %v5860, %v6092
      %v6183 = vadd.f32 %v5861, %v6095
      %v6184 = vadd.f32 %v5862, %v6100
      %v6185 = vadd.f32 %v5863, %v6103
      %v6186 = vadd.f32 %v5864, %v6108
      %v6187 = vadd.f32 %v5865, %v6111
      %v6188 = vadd.f32 %v5866, %v6116
      %v6189 = vadd.f32 %v5867, %v6119
      %v6190 = vadd.f32 %v5868, %v6124
      %v6191 = vadd.f32 %v5869, %v6127
      %v6192 = vadd.f32 %v5870, %v6132
      %v6193 = vadd.f32 %v5871, %v6135
      %v6194 = vadd.f32 %v5872, %v6140
      %v6195 = vadd.f32 %v5873, %v6143
      %v6196 = vadd.f32 %v5874, %v6148
      %v6197 = vadd.f32 %v5875, %v6151
      %v6198 = vadd.f32 %v5876, %v6156
      %v6199 = vadd.f32 %v5877, %v6159
      %v6200 = vadd.f32 %v5878, %v6164
      %v6201 = vadd.f32 %v5879, %v6167
      %v6202 = vld [vmem:[%s5] sm:$0x1]
      %v6204 = vlaneseq
      %v6205 = vshrl.u32 %v6204, 7
      %v6206 = vsub.s32 0, %v6205
      %v6207 = vrot.slane %v6202, %v6206
      %v6209 = vmul.f32 %v6170, %v6207
      %v6210 = vmul.f32 %v6171, %v6207
      %v6211 = vmul.f32 %v6172, %v6207
      %v6212 = vmul.f32 %v6173, %v6207
      %v6213 = vmul.f32 %v6174, %v6207
      %v6214 = vmul.f32 %v6175, %v6207
      %v6215 = vmul.f32 %v6176, %v6207
      %v6216 = vmul.f32 %v6177, %v6207
      %v6217 = vmul.f32 %v6178, %v6207
      %v6218 = vmul.f32 %v6179, %v6207
      %v6219 = vmul.f32 %v6180, %v6207
      %v6220 = vmul.f32 %v6181, %v6207
      %v6221 = vmul.f32 %v6182, %v6207
      %v6222 = vmul.f32 %v6183, %v6207
      %v6223 = vmul.f32 %v6184, %v6207
      %v6224 = vmul.f32 %v6185, %v6207
      %v6225 = vmul.f32 %v6186, %v6207
      %v6226 = vmul.f32 %v6187, %v6207
      %v6227 = vmul.f32 %v6188, %v6207
      %v6228 = vmul.f32 %v6189, %v6207
      %v6229 = vmul.f32 %v6190, %v6207
      %v6230 = vmul.f32 %v6191, %v6207
      %v6231 = vmul.f32 %v6192, %v6207
      %v6232 = vmul.f32 %v6193, %v6207
      %v6233 = vmul.f32 %v6194, %v6207
      %v6234 = vmul.f32 %v6195, %v6207
      %v6235 = vmul.f32 %v6196, %v6207
      %v6236 = vmul.f32 %v6197, %v6207
      %v6237 = vmul.f32 %v6198, %v6207
      %v6238 = vmul.f32 %v6199, %v6207
      %v6239 = vmul.f32 %v6200, %v6207
      %v6240 = vmul.f32 %v6201, %v6207
      %v6241 = vld [vmem:[%s6] sm:$0x1]
      %v6243 = vlaneseq
      %v6244 = vshrl.u32 %v6243, 7
      %v6245 = vsub.s32 0, %v6244
      %v6246 = vrot.slane %v6241, %v6245
      %v6248 = vadd.f32 %v6209, %v6246
      %v6249 = vadd.f32 %v6210, %v6246
      %v6250 = vadd.f32 %v6211, %v6246
      %v6251 = vadd.f32 %v6212, %v6246
      %v6252 = vadd.f32 %v6213, %v6246
      %v6253 = vadd.f32 %v6214, %v6246
      %v6254 = vadd.f32 %v6215, %v6246
      %v6255 = vadd.f32 %v6216, %v6246
      %v6256 = vadd.f32 %v6217, %v6246
      %v6257 = vadd.f32 %v6218, %v6246
      %v6258 = vadd.f32 %v6219, %v6246
      %v6259 = vadd.f32 %v6220, %v6246
      %v6260 = vadd.f32 %v6221, %v6246
      %v6261 = vadd.f32 %v6222, %v6246
      %v6262 = vadd.f32 %v6223, %v6246
      %v6263 = vadd.f32 %v6224, %v6246
      %v6264 = vadd.f32 %v6225, %v6246
      %v6265 = vadd.f32 %v6226, %v6246
      %v6266 = vadd.f32 %v6227, %v6246
      %v6267 = vadd.f32 %v6228, %v6246
      %v6268 = vadd.f32 %v6229, %v6246
      %v6269 = vadd.f32 %v6230, %v6246
      %v6270 = vadd.f32 %v6231, %v6246
      %v6271 = vadd.f32 %v6232, %v6246
      %v6272 = vadd.f32 %v6233, %v6246
      %v6273 = vadd.f32 %v6234, %v6246
      %v6274 = vadd.f32 %v6235, %v6246
      %v6275 = vadd.f32 %v6236, %v6246
      %v6276 = vadd.f32 %v6237, %v6246
      %v6277 = vadd.f32 %v6238, %v6246
      %v6278 = vadd.f32 %v6239, %v6246
      %v6279 = vadd.f32 %v6240, %v6246
      %v6280 = vmax.f32 %v6248, 0.0
      %v6281 = vmax.f32 %v6249, 0.0
      %v6282 = vmax.f32 %v6250, 0.0
      %v6283 = vmax.f32 %v6251, 0.0
      %v6284 = vmax.f32 %v6252, 0.0
      %v6285 = vmax.f32 %v6253, 0.0
      %v6286 = vmax.f32 %v6254, 0.0
      %v6287 = vmax.f32 %v6255, 0.0
      %v6288 = vmax.f32 %v6256, 0.0
      %v6289 = vmax.f32 %v6257, 0.0
      %v6290 = vmax.f32 %v6258, 0.0
      %v6291 = vmax.f32 %v6259, 0.0
      %v6292 = vmax.f32 %v6260, 0.0
      %v6293 = vmax.f32 %v6261, 0.0
      %v6294 = vmax.f32 %v6262, 0.0
      %v6295 = vmax.f32 %v6263, 0.0
      %v6296 = vmax.f32 %v6264, 0.0
      %v6297 = vmax.f32 %v6265, 0.0
      %v6298 = vmax.f32 %v6266, 0.0
      %v6299 = vmax.f32 %v6267, 0.0
      %v6300 = vmax.f32 %v6268, 0.0
      %v6301 = vmax.f32 %v6269, 0.0
      %v6302 = vmax.f32 %v6270, 0.0
      %v6303 = vmax.f32 %v6271, 0.0
      %v6304 = vmax.f32 %v6272, 0.0
      %v6305 = vmax.f32 %v6273, 0.0
      %v6306 = vmax.f32 %v6274, 0.0
      %v6307 = vmax.f32 %v6275, 0.0
      %v6308 = vmax.f32 %v6276, 0.0
      %v6309 = vmax.f32 %v6277, 0.0
      %v6310 = vmax.f32 %v6278, 0.0
      %v6311 = vmax.f32 %v6279, 0.0
      %v6312 = vpack.c.bf16 %v6281, %v6280
      %v6313 = vpack.c.bf16 %v6283, %v6282
      %v6314 = vpack.c.bf16 %v6285, %v6284
      %v6315 = vpack.c.bf16 %v6287, %v6286
      %v6316 = vpack.c.bf16 %v6289, %v6288
      %v6317 = vpack.c.bf16 %v6291, %v6290
      %v6318 = vpack.c.bf16 %v6293, %v6292
      %v6319 = vpack.c.bf16 %v6295, %v6294
      %v6320 = vpack.c.bf16 %v6297, %v6296
      %v6321 = vpack.c.bf16 %v6299, %v6298
      %v6322 = vpack.c.bf16 %v6301, %v6300
      %v6323 = vpack.c.bf16 %v6303, %v6302
      %v6324 = vpack.c.bf16 %v6305, %v6304
      %v6325 = vpack.c.bf16 %v6307, %v6306
      %v6326 = vpack.c.bf16 %v6309, %v6308
      %v6327 = vpack.c.bf16 %v6311, %v6310
      %v6328 = vld [vmem:[%s7] sm:$0xf]
      %v6329 = vld [vmem:[%s7 + $0x4] sm:$0xf]
      %v6330 = vld [vmem:[%s7 + $0x8] sm:$0xf]
      %v6331 = vld [vmem:[%s7 + $0xc] sm:$0xf]
      %v6332 = vld [vmem:[%s7 + $0x10] sm:$0xf]
      %v6333 = vld [vmem:[%s7 + $0x14] sm:$0xf]
      %v6334 = vld [vmem:[%s7 + $0x18] sm:$0xf]
      %v6335 = vld [vmem:[%s7 + $0x1c] sm:$0xf]
      %v6336 = vld [vmem:[%s8] sm:$0x1]
      %v6338 = vlaneseq
      %v6339 = vshrl.u32 %v6338, 7
      %v6340 = vsub.s32 0, %v6339
      %v6341 = vrot.slane %v6336, %v6340
      %v6351 = vunpack.c.l.b16 %v6328
      %v6352 = vunpack.c.l.b16 %v6329
      %v6353 = vunpack.c.l.b16 %v6330
      %v6354 = vunpack.c.l.b16 %v6331
      %v6355 = vunpack.c.l.b16 %v6332
      %v6356 = vunpack.c.l.b16 %v6333
      %v6357 = vunpack.c.l.b16 %v6334
      %v6358 = vunpack.c.l.b16 %v6335
      %v6359 = vpack.c.b16 %v6352, %v6351
      %v6360 = vpack.c.b16 %v6354, %v6353
      %v6361 = vpack.c.b16 %v6356, %v6355
      %v6362 = vpack.c.b16 %v6358, %v6357
      %v6368 = vsel %vm471, %v6312, 0
      %v6371 = vsel %vm471, %v6313, 0
      %v6374 = vsel %vm471, %v6314, 0
      %v6377 = vsel %vm471, %v6315, 0
      %v6380 = vsel %vm471, %v6316, 0
      %v6383 = vsel %vm471, %v6317, 0
      %v6386 = vsel %vm471, %v6318, 0
      %v6389 = vsel %vm471, %v6319, 0
      %v6392 = vsel %vm471, %v6320, 0
      %v6395 = vsel %vm471, %v6321, 0
      %v6398 = vsel %vm471, %v6322, 0
      %v6401 = vsel %vm471, %v6323, 0
      %v6404 = vsel %vm471, %v6324, 0
      %v6407 = vsel %vm471, %v6325, 0
      %v6410 = vsel %vm471, %v6326, 0
      %v6413 = vsel %vm471, %v6327, 0
      %6415 = vmatprep.subr.bf16.mxu0 0
      %6416 = vmatpush1.bf16.msra.mxu0 %v6359
      %6417 = vmatprep.subr.bf16.mxu0 0
      %6418 = vmatpush1.bf16.msra.mxu0 %v6360
      %6419 = vmatprep.subr.bf16.mxu0 0
      %6420 = vmatpush1.bf16.msra.mxu0 %v6361
      %6421 = vmatprep.subr.bf16.mxu0 0
      %6422 = vmatpush1.bf16.msra.mxu0 %v6362
      %6423 = vmatprep.subr.bf16.mxu0 0
      %6424 = vmatpush1.bf16.msra.mxu0 0
      %6425 = vmatprep.subr.bf16.mxu0 0
      %6426 = vmatpush1.bf16.msra.mxu0 0
      %6427 = vmatprep.subr.bf16.mxu0 0
      %6428 = vmatpush1.bf16.msra.mxu0 0
      %6429 = vmatprep.subr.bf16.mxu0 0
      %6430 = vmatpush1.bf16.msra.mxu0 0
      %6431 = vmatprep.subr.bf16.mxu0 0
      %6432 = vmatpush1.bf16.msra.mxu0 0
      %6433 = vmatprep.subr.bf16.mxu0 0
      %6434 = vmatpush1.bf16.msra.mxu0 0
      %6435 = vmatprep.subr.bf16.mxu0 0
      %6436 = vmatpush1.bf16.msra.mxu0 0
      %6437 = vmatprep.subr.bf16.mxu0 0
      %6438 = vmatpush1.bf16.msra.mxu0 0
      %6439 = vmatprep.subr.bf16.mxu0 0
      %6440 = vmatpush1.bf16.msra.mxu0 0
      %6441 = vmatprep.subr.bf16.mxu0 0
      %6442 = vmatpush1.bf16.msra.mxu0 0
      %6443 = vmatprep.subr.bf16.mxu0 0
      %6444 = vmatpush1.bf16.msra.mxu0 0
      %6445 = vmatprep.subr.bf16.mxu0 0
      %6446 = vmatpush1.bf16.msra.mxu0 0
      %6447 = vmatprep.mubr.bf16.mxu0 0
      %6448 = vmatmul.mubr.bf16.gmra.mrb[0].mxu0 %v6368
      %v6449 = vpop.f32.mrb[0].mxu0
      %v6450 = vadd.f32 %v6341, %v6449
      %v6451 = vpop.f32.mrb[0].mxu0
      %v6452 = vpop.f32.mrb[0].mxu0
      %v6453 = vadd.f32 %v6341, %v6452
      %v6454 = vpop.f32.mrb[0].mxu0
      %6455 = vmatprep.mubr.bf16.mxu0 0
      %6456 = vmatmul.mubr.bf16.gmra.mrb[0].mxu0 %v6371
      %v6457 = vpop.f32.mrb[0].mxu0
      %v6458 = vadd.f32 %v6341, %v6457
      %v6459 = vpop.f32.mrb[0].mxu0
      %v6460 = vpop.f32.mrb[0].mxu0
      %v6461 = vadd.f32 %v6341, %v6460
      %v6462 = vpop.f32.mrb[0].mxu0
      %6463 = vmatprep.mubr.bf16.mxu0 0
      %6464 = vmatmul.mubr.bf16.gmra.mrb[0].mxu0 %v6374
      %v6465 = vpop.f32.mrb[0].mxu0
      %v6466 = vadd.f32 %v6341, %v6465
      %v6467 = vpop.f32.mrb[0].mxu0
      %v6468 = vpop.f32.mrb[0].mxu0
      %v6469 = vadd.f32 %v6341, %v6468
      %v6470 = vpop.f32.mrb[0].mxu0
      %6471 = vmatprep.mubr.bf16.mxu0 0
      %6472 = vmatmul.mubr.bf16.gmra.mrb[0].mxu0 %v6377
      %v6473 = vpop.f32.mrb[0].mxu0
      %v6474 = vadd.f32 %v6341, %v6473
      %v6475 = vpop.f32.mrb[0].mxu0
      %v6476 = vpop.f32.mrb[0].mxu0
      %v6477 = vadd.f32 %v6341, %v6476
      %v6478 = vpop.f32.mrb[0].mxu0
      %6479 = vmatprep.mubr.bf16.mxu0 0
      %6480 = vmatmul.mubr.bf16.gmra.mrb[0].mxu0 %v6380
      %v6481 = vpop.f32.mrb[0].mxu0
      %v6482 = vadd.f32 %v6341, %v6481
      %v6483 = vpop.f32.mrb[0].mxu0
      %v6484 = vpop.f32.mrb[0].mxu0
      %v6485 = vadd.f32 %v6341, %v6484
      %v6486 = vpop.f32.mrb[0].mxu0
      %6487 = vmatprep.mubr.bf16.mxu0 0
      %6488 = vmatmul.mubr.bf16.gmra.mrb[0].mxu0 %v6383
      %v6489 = vpop.f32.mrb[0].mxu0
      %v6490 = vadd.f32 %v6341, %v6489
      %v6491 = vpop.f32.mrb[0].mxu0
      %v6492 = vpop.f32.mrb[0].mxu0
      %v6493 = vadd.f32 %v6341, %v6492
      %v6494 = vpop.f32.mrb[0].mxu0
      %6495 = vmatprep.mubr.bf16.mxu0 0
      %6496 = vmatmul.mubr.bf16.gmra.mrb[0].mxu0 %v6386
      %v6497 = vpop.f32.mrb[0].mxu0
      %v6498 = vadd.f32 %v6341, %v6497
      %v6499 = vpop.f32.mrb[0].mxu0
      %v6500 = vpop.f32.mrb[0].mxu0
      %v6501 = vadd.f32 %v6341, %v6500
      %v6502 = vpop.f32.mrb[0].mxu0
      %6503 = vmatprep.mubr.bf16.mxu0 0
      %6504 = vmatmul.mubr.bf16.gmra.mrb[0].mxu0 %v6389
      %v6505 = vpop.f32.mrb[0].mxu0
      %v6506 = vadd.f32 %v6341, %v6505
      %v6507 = vpop.f32.mrb[0].mxu0
      %v6508 = vpop.f32.mrb[0].mxu0
      %v6509 = vadd.f32 %v6341, %v6508
      %v6510 = vpop.f32.mrb[0].mxu0
      %6511 = vmatprep.mubr.bf16.mxu0 0
      %6512 = vmatmul.mubr.bf16.gmra.mrb[0].mxu0 %v6392
      %v6513 = vpop.f32.mrb[0].mxu0
      %v6514 = vadd.f32 %v6341, %v6513
      %v6515 = vpop.f32.mrb[0].mxu0
      %v6516 = vpop.f32.mrb[0].mxu0
      %v6517 = vadd.f32 %v6341, %v6516
      %v6518 = vpop.f32.mrb[0].mxu0
      %6519 = vmatprep.mubr.bf16.mxu0 0
      %6520 = vmatmul.mubr.bf16.gmra.mrb[0].mxu0 %v6395
      %v6521 = vpop.f32.mrb[0].mxu0
      %v6522 = vadd.f32 %v6341, %v6521
      %v6523 = vpop.f32.mrb[0].mxu0
      %v6524 = vpop.f32.mrb[0].mxu0
      %v6525 = vadd.f32 %v6341, %v6524
      %v6526 = vpop.f32.mrb[0].mxu0
      %6527 = vmatprep.mubr.bf16.mxu0 0
      %6528 = vmatmul.mubr.bf16.gmra.mrb[0].mxu0 %v6398
      %v6529 = vpop.f32.mrb[0].mxu0
      %v6530 = vadd.f32 %v6341, %v6529
      %v6531 = vpop.f32.mrb[0].mxu0
      %v6532 = vpop.f32.mrb[0].mxu0
      %v6533 = vadd.f32 %v6341, %v6532
      %v6534 = vpop.f32.mrb[0].mxu0
      %6535 = vmatprep.mubr.bf16.mxu0 0
      %6536 = vmatmul.mubr.bf16.gmra.mrb[0].mxu0 %v6401
      %v6537 = vpop.f32.mrb[0].mxu0
      %v6538 = vadd.f32 %v6341, %v6537
      %v6539 = vpop.f32.mrb[0].mxu0
      %v6540 = vpop.f32.mrb[0].mxu0
      %v6541 = vadd.f32 %v6341, %v6540
      %v6542 = vpop.f32.mrb[0].mxu0
      %6543 = vmatprep.mubr.bf16.mxu0 0
      %6544 = vmatmul.mubr.bf16.gmra.mrb[0].mxu0 %v6404
      %v6545 = vpop.f32.mrb[0].mxu0
      %v6546 = vadd.f32 %v6341, %v6545
      %v6547 = vpop.f32.mrb[0].mxu0
      %v6548 = vpop.f32.mrb[0].mxu0
      %v6549 = vadd.f32 %v6341, %v6548
      %v6550 = vpop.f32.mrb[0].mxu0
      %6551 = vmatprep.mubr.bf16.mxu0 0
      %6552 = vmatmul.mubr.bf16.gmra.mrb[0].mxu0 %v6407
      %v6553 = vpop.f32.mrb[0].mxu0
      %v6554 = vadd.f32 %v6341, %v6553
      %v6555 = vpop.f32.mrb[0].mxu0
      %v6556 = vpop.f32.mrb[0].mxu0
      %v6557 = vadd.f32 %v6341, %v6556
      %v6558 = vpop.f32.mrb[0].mxu0
      %6559 = vmatprep.mubr.bf16.mxu0 0
      %6560 = vmatmul.mubr.bf16.gmra.mrb[0].mxu0 %v6410
      %v6561 = vpop.f32.mrb[0].mxu0
      %v6562 = vadd.f32 %v6341, %v6561
      %v6563 = vpop.f32.mrb[0].mxu0
      %v6564 = vpop.f32.mrb[0].mxu0
      %v6565 = vadd.f32 %v6341, %v6564
      %v6566 = vpop.f32.mrb[0].mxu0
      %6567 = vmatprep.mubr.bf16.mxu0 0
      %6568 = vmatmul.mubr.bf16.gmra.mrb[0].mxu0 %v6413
      %v6569 = vpop.f32.mrb[0].mxu0
      %v6570 = vadd.f32 %v6341, %v6569
      %v6571 = vpop.f32.mrb[0].mxu0
      %v6572 = vpop.f32.mrb[0].mxu0
      %v6573 = vadd.f32 %v6341, %v6572
      %v6574 = vpop.f32.mrb[0].mxu0
      %6575 = vdwg.mxu0
      %vm6576 = vcmask 130048
      %6577 = vst.msk [vmem:[%s332] sm:$0xff] %vm6576, %v6450
      %6578 = vst.msk [vmem:[%s332 + $0x8] sm:$0xff] %vm6576, %v6453
      %6579 = vst.msk [vmem:[%s332 + $0x10] sm:$0xff] %vm6576, %v6458
      %6580 = vst.msk [vmem:[%s332 + $0x18] sm:$0xff] %vm6576, %v6461
      %6581 = vst.msk [vmem:[%s332 + $0x20] sm:$0xff] %vm6576, %v6466
      %6582 = vst.msk [vmem:[%s332 + $0x28] sm:$0xff] %vm6576, %v6469
      %6583 = vst.msk [vmem:[%s332 + $0x30] sm:$0xff] %vm6576, %v6474
      %6584 = vst.msk [vmem:[%s332 + $0x38] sm:$0xff] %vm6576, %v6477
      %6585 = vst.msk [vmem:[%s332 + $0x40] sm:$0xff] %vm6576, %v6482
      %6586 = vst.msk [vmem:[%s332 + $0x48] sm:$0xff] %vm6576, %v6485
      %6587 = vst.msk [vmem:[%s332 + $0x50] sm:$0xff] %vm6576, %v6490
      %6588 = vst.msk [vmem:[%s332 + $0x58] sm:$0xff] %vm6576, %v6493
      %6589 = vst.msk [vmem:[%s332 + $0x60] sm:$0xff] %vm6576, %v6498
      %6590 = vst.msk [vmem:[%s332 + $0x68] sm:$0xff] %vm6576, %v6501
      %6591 = vst.msk [vmem:[%s332 + $0x70] sm:$0xff] %vm6576, %v6506
      %6592 = vst.msk [vmem:[%s332 + $0x78] sm:$0xff] %vm6576, %v6509
      %6593 = vst.msk [vmem:[%s332 + $0x80] sm:$0xff] %vm6576, %v6514
      %6594 = vst.msk [vmem:[%s332 + $0x88] sm:$0xff] %vm6576, %v6517
      %6595 = vst.msk [vmem:[%s332 + $0x90] sm:$0xff] %vm6576, %v6522
      %6596 = vst.msk [vmem:[%s332 + $0x98] sm:$0xff] %vm6576, %v6525
      %6597 = vst.msk [vmem:[%s332 + $0xa0] sm:$0xff] %vm6576, %v6530
      %6598 = vst.msk [vmem:[%s332 + $0xa8] sm:$0xff] %vm6576, %v6533
      %6599 = vst.msk [vmem:[%s332 + $0xb0] sm:$0xff] %vm6576, %v6538
      %6600 = vst.msk [vmem:[%s332 + $0xb8] sm:$0xff] %vm6576, %v6541
      %6601 = vst.msk [vmem:[%s332 + $0xc0] sm:$0xff] %vm6576, %v6546
      %6602 = vst.msk [vmem:[%s332 + $0xc8] sm:$0xff] %vm6576, %v6549
      %6603 = vst.msk [vmem:[%s332 + $0xd0] sm:$0xff] %vm6576, %v6554
      %6604 = vst.msk [vmem:[%s332 + $0xd8] sm:$0xff] %vm6576, %v6557
      %6605 = vst.msk [vmem:[%s332 + $0xe0] sm:$0xff] %vm6576, %v6562
      %6606 = vst.msk [vmem:[%s332 + $0xe8] sm:$0xff] %vm6576, %v6565
      %6607 = vst.msk [vmem:[%s332 + $0xf0] sm:$0xff] %vm6576, %v6570
      %6608 = vst.msk [vmem:[%s332 + $0xf8] sm:$0xff] %vm6576, %v6573
      %p6609 = scmp.lt.s32.totalorder %s20, 1
      %s6610 = scalar_select %p6609, %s20, 1
      %s6611 = smul.addr %s6610, 32
      %s6612 = smul.addr %s6611, 8
      %s6613 = scalar_lea.vmem %s9, %s6612
      // Predicated region
      $region57: #{block_type_c_forward.1} parent=55 // pred_check
        %p6614 = pneg %p232
      $region58: #{block_type_c_forward.1} parent=55 // pred_check_branch
        %6616 = sbr.rel (%p6614) target = $region60
      $region59: #{block_type_c_forward.1} parent=55 // pred_region
        _
      $region60: #{block_type_c_forward.1} parent=55 // pred_fallthru
        _
    $region56: #{block_type_c_forward.1} parent=5 // pred_fallthru
      _
    %p6617 = scmp.le.s32.totalorder 2, %s15
    // Predicated region
    $region61: #{block_type_c_forward.1} parent=5 // pred_check
      %p6618 = pneg %p6617
    $region62: #{block_type_c_forward.1} parent=5 // pred_check_branch
      %6620 = sbr.rel (%p6618) target = $region64
    $region63: #{block_type_c_forward.1} parent=5 // pred_region
      %s6621 = ssub.s32 %s15, 2
      // Predicated region
      $region65: #{block_type_c_forward.1} parent=63 // pred_check
        %p6622 = pneg %p238
      $region66: #{block_type_c_forward.1} parent=63 // pred_check_branch
        %6624 = sbr.rel (%p6622) target = $region68
      $region67: #{block_type_c_forward.1} parent=63 // pred_region
        %p6625 = scmp.lt.s32.totalorder %s21, 1
        %s6626 = scalar_select %p6625, %s21, 1
        %s6627 = smul.addr %s6626, 32
        %s6628 = smul.addr %s6627, 8
        %s6629 = scalar_lea.vmem %s9, %s6628
      $region68: #{block_type_c_forward.1} parent=63 // pred_fallthru
        _
    $region64: #{block_type_c_forward.1} parent=5 // pred_fallthru
      _
  $region6: #{block_type_c_forward.1} parent=0 // loop_footer
    %s19 = sadd.s32 1, %s15
  $region7: #{block_type_c_forward.1} parent=0 // loop_footer_branch
    %14 = sbr.rel target = $region3
  $region8: #{block_type_c_forward.1} parent=0 // loop_exit
    _

</llo_original>
